<compile_context>
chip_gen: v7x
topology: tpu7x:2x2x1
jax: 0.10.0
libtpu: 0.0.40
codegen_flags: <defaults>
</compile_context>

<pallas_src>
import functools

import jax
import jax.numpy as jnp
from jax import lax
from jax.experimental import pallas as pl
from jax.experimental.pallas import tpu as pltpu


# --------------------------------------------------------------------------
# Generation-aware VMEM budgets.
# --------------------------------------------------------------------------
def _vmem_budgets():
    cap = 64 * 1024 * 1024                      # conservative default (v7x-safe)
    try:
        info = pltpu.get_tpu_info()
        cap = int(getattr(info, "vmem_capacity_bytes", cap) or cap)
    except Exception:
        pass
    # Scoped limit: leave >=16 MiB headroom for Mosaic internal scratch.
    limit = min(cap * 3 // 4, cap - 16 * 1024 * 1024)
    # Per-grid-step working-set target (input/output double-buffers + acc).
    budget = max(12 * 1024 * 1024, (limit - 16 * 1024 * 1024) // 2)
    return limit, budget


def _row_chunk(H, W, Cin, Cout, *, pool=False, streams=1):
    """Largest row-chunk TH dividing H whose per-step working set fits budget."""
    _, budget = _vmem_budgets()
    for th in range(H, 0, -1):
        if H % th:
            continue
        if pool and th % 2:
            continue
        tho = th // 2 if pool else th
        est = (streams * 2 * (th + 2) * (W + 2) * Cin * 2   # dbl-buffered bf16 input(s)
               + streams * th * W * Cin * 2                 # live shifted-tap operand(s)
               + streams * th * W * Cout * 4                # f32 accumulator(s)
               + 2 * tho * W * Cout * 2                     # dbl-buffered bf16 output
               + 2 * (9 * Cin * Cout * 2 + Cout * 4))       # weights + bias
        if est <= budget:
            return th
    return 2 if pool else 1


# --------------------------------------------------------------------------
# Generic 3x3 "same" conv (+bias, ReLU, optional fused H-direction of the 2x2
# max-pool).  The input block is an H-and-W padded chunk; the nine taps are
# read as shifted views of the ref (bf16) and accumulated in f32 on the MXU.
# --------------------------------------------------------------------------
def _conv3x3_kernel(x_ref, w_ref, b_ref, o_ref, *, TH, W, relu, pool):
    Cin = x_ref.shape[-1]
    Cout = w_ref.shape[-1]
    acc = jnp.zeros((TH * W, Cout), jnp.float32)
    for dy in range(3):
        for dx in range(3):
            tap = x_ref[0, dy:dy + TH, dx:dx + W, :].reshape(TH * W, Cin)
            acc += jnp.dot(tap, w_ref[dy * 3 + dx],
                           preferred_element_type=jnp.float32)
    acc = acc + b_ref[...]
    if relu:
        acc = jnp.maximum(acc, 0.0)
    res = acc.reshape(TH, W, Cout)
    if pool:
        # H-direction of the 2x2 max-pool (leading-dim reshape + max only; the
        # W-direction half is finished in the wrapper to avoid sublane-splitting
        # reshapes / strided slices inside the kernel).
        res = jnp.max(res.reshape(TH // 2, 2, W, Cout), axis=1)
    o_ref[...] = res[None].astype(o_ref.dtype)


def _conv3x3_call(x_chunk, w9, b2, *, TH, relu, pool):
    B, _, Wp2, Cin = x_chunk.shape
    W = Wp2 - 2
    Cout = w9.shape[-1]
    THO = TH // 2 if pool else TH
    limit, _ = _vmem_budgets()
    kernel = functools.partial(_conv3x3_kernel, TH=TH, W=W, relu=relu, pool=pool)
    return pl.pallas_call(
        kernel,
        out_shape=jax.ShapeDtypeStruct((B, THO, W, Cout), jnp.bfloat16),
        grid=(B,),
        in_specs=[
            pl.BlockSpec((1, TH + 2, W + 2, Cin), lambda n: (n, 0, 0, 0)),
            pl.BlockSpec((9, Cin, Cout), lambda n: (0, 0, 0)),
            pl.BlockSpec((1, Cout), lambda n: (0, 0)),
        ],
        out_specs=pl.BlockSpec((1, THO, W, Cout), lambda n: (n, 0, 0, 0)),
        compiler_params=pltpu.CompilerParams(
            dimension_semantics=("parallel",),
            vmem_limit_bytes=limit),
    )(x_chunk, w9, b2)


def conv3x3(x, w, b, *, relu=True, pool=False):
    """x: (B, H, W, Cin) NHWC; w: (3, 3, Cin, Cout); b: (Cout,).

    Assumes W (and W/2 when pool=True) is a multiple of 8 so in-kernel
    (rows, W, C) <-> (rows*W, C) reshapes are pure retilings.
    """
    B, H, W, Cin = x.shape
    Cout = w.shape[-1]
    if pool:
        assert H % 2 == 0 and W % 2 == 0, "fused max-pool needs even H and W"
    xp = jnp.pad(x.astype(jnp.bfloat16), ((0, 0), (1, 1), (1, 1), (0, 0)))
    w9 = w.astype(jnp.bfloat16).reshape(9, Cin, Cout)
    b2 = b.astype(jnp.float32).reshape(1, Cout)

    TH = _row_chunk(H, W, Cin, Cout, pool=pool)
    T = H // TH
    outs = []
    for t in range(T):
        xc = xp if T == 1 else lax.slice_in_dim(xp, t * TH, t * TH + TH + 2, axis=1)
        outs.append(_conv3x3_call(xc, w9, b2, TH=TH, relu=relu, pool=pool))
    y = outs[0] if T == 1 else jnp.concatenate(outs, axis=1)

    if pool:
        # W-direction half of the 2x2 max-pool (cheap XLA pass on the bf16 map).
        B2, H2, _, C2 = y.shape
        y = jnp.max(y.reshape(B2, H2, W // 2, 2, C2), axis=3)
    return y


# --------------------------------------------------------------------------
# conv1_1 special case (Cin=3): im2col patches are built in the wrapper (XLA),
# the layer itself is one lane-packed matmul (K = 9*Cin = 27) + bias + ReLU.
# --------------------------------------------------------------------------
def _dense_relu_kernel(x_ref, w_ref, b_ref, o_ref, *, TH, W):
    K = x_ref.shape[-1]
    Cout = w_ref.shape[-1]
    acc = jnp.dot(x_ref[0].reshape(TH * W, K), w_ref[...],
                  preferred_element_type=jnp.float32)
    acc = jnp.maximum(acc + b_ref[...], 0.0)
    o_ref[...] = acc.reshape(1, TH, W, Cout).astype(o_ref.dtype)


def conv3x3_small_cin(x, w, b):
    B, H, W, Cin = x.shape
    Cout = w.shape[-1]
    xp = jnp.pad(x.astype(jnp.bfloat16), ((0, 0), (1, 1), (1, 1), (0, 0)))
    taps = [xp[:, dy:dy + H, dx:dx + W, :] for dy in range(3) for dx in range(3)]
    patches = jnp.concatenate(taps, axis=-1)             # (B, H, W, 9*Cin)
    K = 9 * Cin
    wk = w.astype(jnp.bfloat16).reshape(K, Cout)          # (dy, dx, c) ordering
    b2 = b.astype(jnp.float32).reshape(1, Cout)

    TH = _row_chunk(H, W, K, Cout, pool=False)
    T = H // TH
    limit, _ = _vmem_budgets()
    kernel = functools.partial(_dense_relu_kernel, TH=TH, W=W)
    return pl.pallas_call(
        kernel,
        out_shape=jax.ShapeDtypeStruct((B, H, W, Cout), jnp.bfloat16),
        grid=(B, T),
        in_specs=[
            pl.BlockSpec((1, TH, W, K), lambda n, t: (n, t, 0, 0)),
            pl.BlockSpec((K, Cout), lambda n, t: (0, 0)),
            pl.BlockSpec((1, Cout), lambda n, t: (0, 0)),
        ],
        out_specs=pl.BlockSpec((1, TH, W, Cout), lambda n, t: (n, t, 0, 0)),
        compiler_params=pltpu.CompilerParams(
            dimension_semantics=("parallel", "parallel"),
            vmem_limit_bytes=limit),
    )(patches, wk, b2)


# --------------------------------------------------------------------------
# Fused conv2_2 + perceptual squared-difference: the last VGG conv is applied
# to the output-features and target-features of conv2_1 and the squared
# difference is reduced to per-batch, per-lane partial sums, so the largest
# feature map never goes back to HBM.
# --------------------------------------------------------------------------
def _conv3x3_sqdiff_kernel(xo_ref, xt_ref, w_ref, b_ref, p_ref, *, TH, W):
    Cin = xo_ref.shape[-1]
    Cout = w_ref.shape[-1]

    def feats(x_ref):
        acc = jnp.zeros((TH * W, Cout), jnp.float32)
        for dy in range(3):
            for dx in range(3):
                tap = x_ref[0, dy:dy + TH, dx:dx + W, :].reshape(TH * W, Cin)
                acc += jnp.dot(tap, w_ref[dy * 3 + dx],
                               preferred_element_type=jnp.float32)
        return jnp.maximum(acc + b_ref[...], 0.0)

    d = feats(xo_ref) - feats(xt_ref)                     # (TH*W, Cout) f32
    p_ref[...] = jnp.sum(d * d, axis=0, keepdims=True).reshape(1, 1, Cout)


def conv2_2_feature_mse(fo, ft, w, b):
    N, H, W, Cin = fo.shape
    Cout = w.shape[-1]
    po = jnp.pad(fo.astype(jnp.bfloat16), ((0, 0), (1, 1), (1, 1), (0, 0)))
    pt = jnp.pad(ft.astype(jnp.bfloat16), ((0, 0), (1, 1), (1, 1), (0, 0)))
    w9 = w.astype(jnp.bfloat16).reshape(9, Cin, Cout)
    b2 = b.astype(jnp.float32).reshape(1, Cout)

    TH = _row_chunk(H, W, Cin, Cout, pool=False, streams=2)
    T = H // TH
    limit, _ = _vmem_budgets()
    kernel = functools.partial(_conv3x3_sqdiff_kernel, TH=TH, W=W)
    parts = []
    for t in range(T):
        oc = po if T == 1 else lax.slice_in_dim(po, t * TH, t * TH + TH + 2, axis=1)
        tc = pt if T == 1 else lax.slice_in_dim(pt, t * TH, t * TH + TH + 2, axis=1)
        parts.append(pl.pallas_call(
            kernel,
            out_shape=jax.ShapeDtypeStruct((N, 1, Cout), jnp.float32),
            grid=(N,),
            in_specs=[
                pl.BlockSpec((1, TH + 2, W + 2, Cin), lambda n: (n, 0, 0, 0)),
                pl.BlockSpec((1, TH + 2, W + 2, Cin), lambda n: (n, 0, 0, 0)),
                pl.BlockSpec((9, Cin, Cout), lambda n: (0, 0, 0)),
                pl.BlockSpec((1, Cout), lambda n: (0, 0)),
            ],
            out_specs=pl.BlockSpec((1, 1, Cout), lambda n: (n, 0, 0)),
            compiler_params=pltpu.CompilerParams(
                dimension_semantics=("parallel",),
                vmem_limit_bytes=limit),
        )(oc, tc, w9, b2))
    total = sum(jnp.sum(p) for p in parts)
    return total / (N * H * W * Cout)


# --------------------------------------------------------------------------
# Total-variation partial sums on the NCHW tensor, one (parallel) grid step
# per batch element with per-batch scalar outputs (no accumulating revisits).
# --------------------------------------------------------------------------
def _tv_kernel(x_ref, oh_ref, ow_ref):
    x = x_ref[0]                                          # (C, H, W) f32
    dh = x[:, 1:, :] - x[:, :-1, :]
    dw = x[:, :, 1:] - x[:, :, :-1]
    oh_ref[...] = jnp.sum(dh * dh).reshape(1, 1, 1)
    ow_ref[...] = jnp.sum(dw * dw).reshape(1, 1, 1)


def tv_loss(x_nchw):
    N, C, H, W = x_nchw.shape
    limit, _ = _vmem_budgets()
    h_tv, w_tv = pl.pallas_call(
        _tv_kernel,
        out_shape=(jax.ShapeDtypeStruct((N, 1, 1), jnp.float32),
                   jax.ShapeDtypeStruct((N, 1, 1), jnp.float32)),
        grid=(N,),
        in_specs=[pl.BlockSpec((1, C, H, W), lambda n: (n, 0, 0, 0))],
        out_specs=(pl.BlockSpec((1, 1, 1), lambda n: (n, 0, 0)),
                   pl.BlockSpec((1, 1, 1), lambda n: (n, 0, 0))),
        compiler_params=pltpu.CompilerParams(
            dimension_semantics=("parallel",),
            vmem_limit_bytes=limit),
    )(x_nchw.astype(jnp.float32))
    count_h = C * (H - 1) * W
    count_w = C * H * (W - 1)
    return 2.0 * (jnp.sum(h_tv) / count_h + jnp.sum(w_tv) / count_w) / N


# --------------------------------------------------------------------------
# VGG16 head (through relu2_1; conv2_2 is fused with the MSE) and the loss.
# --------------------------------------------------------------------------
def vgg_relu2_1(x_nhwc, params):
    x = conv3x3_small_cin(x_nhwc, params["conv1_1_w"], params["conv1_1_b"])
    x = conv3x3(x, params["conv1_2_w"], params["conv1_2_b"], relu=True, pool=True)
    x = conv3x3(x, params["conv2_1_w"], params["conv2_1_b"], relu=True)
    return x                                               # (B, H/2, W/2, 128) bf16


def init_vgg_params(key):
    cfg = [("conv1_1", 3, 64), ("conv1_2", 64, 64),
           ("conv2_1", 64, 128), ("conv2_2", 128, 128)]
    params = {}
    for i, (name, cin, cout) in enumerate(cfg):
        kw = jax.random.fold_in(key, i)
        std = (2.0 / (9 * cin)) ** 0.5                     # He init, deterministic
        params[name + "_w"] = std * jax.random.normal(kw, (3, 3, cin, cout),
                                                      jnp.float32)
        params[name + "_b"] = jnp.zeros((cout,), jnp.float32)
    return params


@jax.jit
def generator_loss(output_nchw, target_nchw, params):
    # NCHW (PyTorch) -> NHWC; output and target each run the stack separately
    # (no interleave / concat HBM passes).
    out = jnp.transpose(output_nchw, (0, 2, 3, 1))
    tgt = jnp.transpose(target_nchw, (0, 2, 3, 1))
    fo = vgg_relu2_1(out, params)
    ft = vgg_relu2_1(tgt, params)
    perceptual = conv2_2_feature_mse(fo, ft, params["conv2_2_w"],
                                     params["conv2_2_b"])
    tv = tv_loss(output_nchw)
    return perceptual + 0.1 * tv


# --------------------------------------------------------------------------
# Pure-JAX reference (mirrors the kernels' bf16/f32 precision choices).
# --------------------------------------------------------------------------
def _reference_loss(output_nchw, target_nchw, params):
    def conv(x, w, b, out_dtype=jnp.bfloat16):
        y = lax.conv_general_dilated(
            x.astype(jnp.bfloat16), w.astype(jnp.bfloat16), (1, 1), "SAME",
            dimension_numbers=("NHWC", "HWIO", "NHWC"),
            preferred_element_type=jnp.float32)
        return jnp.maximum(y + b.astype(jnp.float32), 0.0).astype(out_dtype)

    def feats(x):
        x = conv(x, params["conv1_1_w"], params["conv1_1_b"])
        x = conv(x, params["conv1_2_w"], params["conv1_2_b"])
        n, h, w, c = x.shape
        x = jnp.max(x.reshape(n, h // 2, 2, w // 2, 2, c), axis=(2, 4))
        x = conv(x, params["conv2_1_w"], params["conv2_1_b"])
        x = conv(x, params["conv2_2_w"], params["conv2_2_b"],
                 out_dtype=jnp.float32)
        return x

    out = jnp.transpose(output_nchw, (0, 2, 3, 1))
    tgt = jnp.transpose(target_nchw, (0, 2, 3, 1))
    perceptual = jnp.mean((feats(out) - feats(tgt)) ** 2)

    x = output_nchw.astype(jnp.float32)
    n, c, h, w = x.shape
    h_tv = jnp.sum((x[:, :, 1:, :] - x[:, :, :-1, :]) ** 2)
    w_tv = jnp.sum((x[:, :, :, 1:] - x[:, :, :, :-1]) ** 2)
    tv = 2.0 * (h_tv / (c * (h - 1) * w) + w_tv / (c * h * (w - 1))) / n
    return perceptual + 0.1 * tv


if __name__ == "__main__":
    key = jax.random.PRNGKey(0)
    k_out, k_tgt = jax.random.split(key)
    output = jax.random.normal(k_out, (2, 3, 16, 16), jnp.float32)   # NCHW
    target = jax.random.normal(k_tgt, (2, 3, 16, 16), jnp.float32)   # NCHW
    params = init_vgg_params(jax.random.PRNGKey(42))

    loss = generator_loss(output, target, params)
    jax.block_until_ready(loss)
    assert loss.shape == () and bool(jnp.isfinite(loss))

    # Check against a pure-JAX reference (loose tolerance for bf16 rounding and
    # accumulation-order differences).
    ref = float(jax.jit(_reference_loss)(output, target, params))
    assert abs(float(loss) - ref) <= 1e-2 + 5e-2 * abs(ref), (float(loss), ref)

    print("KERNEL_OK")
</pallas_src>

<mosaic_0001>
module attributes {stable_mosaic.version = 11 : i64} {
  func.func @_dense_relu_kernel(%arg0: i32, %arg1: i32, %arg2: memref<1x16x16x27xbf16, #tpu.memory_space<vmem>>, %arg3: memref<27x64xbf16, #tpu.memory_space<vmem>>, %arg4: memref<1x64xf32, #tpu.memory_space<vmem>>, %arg5: memref<1x16x16x64xbf16, #tpu.memory_space<vmem>>) attributes {dimension_semantics = [#tpu.dimension_semantics<parallel>, #tpu.dimension_semantics<parallel>], iteration_bounds = array<i64: 2, 1>, scalar_prefetch = 0 : i64, scratch_operands = 0 : i64, tpu.core_type = #tpu.core_type<tc>, window_params = [{transform_indices = @transform_0, window_bounds = array<i64: 1, 16, 16, 27>}, {pipeline_mode = #tpu.pipeline_mode<synchronous>, transform_indices = @transform_1, window_bounds = array<i64: 27, 64>}, {pipeline_mode = #tpu.pipeline_mode<synchronous>, transform_indices = @transform_2, window_bounds = array<i64: 1, 64>}, {transform_indices = @transform_3, window_bounds = array<i64: 1, 16, 16, 64>}]} {
    %c0 = arith.constant 0 : index
    %c0_0 = arith.constant 0 : index
    %c0_1 = arith.constant 0 : index
    %c0_2 = arith.constant 0 : index
    %0 = vector.load %arg2[%c0, %c0_0, %c0_1, %c0_2] : memref<1x16x16x27xbf16, #tpu.memory_space<vmem>>, vector<1x16x16x27xbf16>
    %1 = vector.shape_cast %0 : vector<1x16x16x27xbf16> to vector<16x16x27xbf16>
    %2 = vector.shape_cast %1 : vector<16x16x27xbf16> to vector<256x27xbf16>
    %c0_3 = arith.constant 0 : index
    %c0_4 = arith.constant 0 : index
    %3 = vector.load %arg3[%c0_3, %c0_4] : memref<27x64xbf16, #tpu.memory_space<vmem>>, vector<27x64xbf16>
    %cst = arith.constant dense<0.000000e+00> : vector<256x64xf32>
    %4 = tpu.matmul %2, %3, %cst {dimension_numbers = #tpu.dot_dimension_numbers<[1], [0], [0], [1], [0, 0, 1, 1], [], []>} : vector<256x27xbf16>, vector<27x64xbf16>, vector<256x64xf32> -> vector<256x64xf32>
    %c0_5 = arith.constant 0 : index
    %c0_6 = arith.constant 0 : index
    %5 = vector.load %arg4[%c0_5, %c0_6] : memref<1x64xf32, #tpu.memory_space<vmem>>, vector<1x64xf32>
    %6 = vector.broadcast %5 : vector<1x64xf32> to vector<256x64xf32>
    %7 = arith.addf %4, %6 : vector<256x64xf32>
    %cst_7 = arith.constant 0.000000e+00 : f32
    %8 = vector.broadcast %cst_7 : f32 to vector<256x64xf32>
    %9 = arith.maximumf %7, %8 : vector<256x64xf32>
    %10 = vector.shape_cast %9 : vector<256x64xf32> to vector<1x16x16x64xf32>
    %11 = arith.truncf %10 : vector<1x16x16x64xf32> to vector<1x16x16x64xbf16>
    %c0_8 = arith.constant 0 : index
    %c0_9 = arith.constant 0 : index
    %c0_10 = arith.constant 0 : index
    %c0_11 = arith.constant 0 : index
    %12 = vector.load %arg5[%c0_8, %c0_9, %c0_10, %c0_11] : memref<1x16x16x64xbf16, #tpu.memory_space<vmem>>, vector<1x16x16x64xbf16>
    tpu.vector_store %arg5[%c0_8, %c0_9, %c0_10, %c0_11], %11 {strides = array<i32>} : memref<1x16x16x64xbf16, #tpu.memory_space<vmem>>, vector<1x16x16x64xbf16>,
    return
  }
  func.func @transform_0(%arg0: i32, %arg1: i32) -> (i32, i32, i32, i32) {
    %c0_i32 = arith.constant 0 : i32
    %c0_i32_0 = arith.constant 0 : i32
    %c0_i32_1 = arith.constant 0 : i32
    return %arg0, %arg1, %c0_i32, %c0_i32_0 : i32, i32, i32, i32
  }
  func.func @transform_1(%arg0: i32, %arg1: i32) -> (i32, i32) {
    %c0_i32 = arith.constant 0 : i32
    %c0_i32_0 = arith.constant 0 : i32
    %c0_i32_1 = arith.constant 0 : i32
    return %c0_i32, %c0_i32_0 : i32, i32
  }
  func.func @transform_2(%arg0: i32, %arg1: i32) -> (i32, i32) {
    %c0_i32 = arith.constant 0 : i32
    %c0_i32_0 = arith.constant 0 : i32
    %c0_i32_1 = arith.constant 0 : i32
    return %c0_i32, %c0_i32_0 : i32, i32
  }
  func.func @transform_3(%arg0: i32, %arg1: i32) -> (i32, i32, i32, i32) {
    %c0_i32 = arith.constant 0 : i32
    %c0_i32_0 = arith.constant 0 : i32
    %c0_i32_1 = arith.constant 0 : i32
    return %arg0, %arg1, %c0_i32, %c0_i32_0 : i32, i32, i32, i32
  }
}

module attributes {stable_mosaic.version = 11 : i64} {
  func.func @_conv3x3_kernel(%arg0: i32, %arg1: memref<1x18x18x64xbf16, #tpu.memory_space<vmem>>, %arg2: memref<9x64x64xbf16, #tpu.memory_space<vmem>>, %arg3: memref<1x64xf32, #tpu.memory_space<vmem>>, %arg4: memref<1x8x16x64xbf16, #tpu.memory_space<vmem>>) attributes {dimension_semantics = [#tpu.dimension_semantics<parallel>], iteration_bounds = array<i64: 2>, scalar_prefetch = 0 : i64, scratch_operands = 0 : i64, tpu.core_type = #tpu.core_type<tc>, window_params = [{transform_indices = @transform_0, window_bounds = array<i64: 1, 18, 18, 64>}, {pipeline_mode = #tpu.pipeline_mode<synchronous>, transform_indices = @transform_1, window_bounds = array<i64: 9, 64, 64>}, {pipeline_mode = #tpu.pipeline_mode<synchronous>, transform_indices = @transform_2, window_bounds = array<i64: 1, 64>}, {transform_indices = @transform_3, window_bounds = array<i64: 1, 8, 16, 64>}]} {
    %cst = arith.constant 0.000000e+00 : f32
    %0 = vector.broadcast %cst : f32 to vector<256x64xf32>
    %c0 = arith.constant 0 : index
    %c0_0 = arith.constant 0 : index
    %c0_1 = arith.constant 0 : index
    %c0_2 = arith.constant 0 : index
    %1 = vector.load %arg1[%c0, %c0_0, %c0_1, %c0_2] : memref<1x18x18x64xbf16, #tpu.memory_space<vmem>>, vector<1x16x16x64xbf16>
    %2 = vector.shape_cast %1 : vector<1x16x16x64xbf16> to vector<16x16x64xbf16>
    %3 = vector.shape_cast %2 : vector<16x16x64xbf16> to vector<256x64xbf16>
    %c0_3 = arith.constant 0 : index
    %c0_4 = arith.constant 0 : index
    %c0_5 = arith.constant 0 : index
    %4 = vector.load %arg2[%c0_3, %c0_4, %c0_5] : memref<9x64x64xbf16, #tpu.memory_space<vmem>>, vector<1x64x64xbf16>
    %5 = vector.shape_cast %4 : vector<1x64x64xbf16> to vector<64x64xbf16>
    %cst_6 = arith.constant dense<0.000000e+00> : vector<256x64xf32>
    %6 = tpu.matmul %3, %5, %cst_6 {dimension_numbers = #tpu.dot_dimension_numbers<[1], [0], [0], [1], [0, 0, 1, 1], [], []>} : vector<256x64xbf16>, vector<64x64xbf16>, vector<256x64xf32> -> vector<256x64xf32>
    %7 = arith.addf %0, %6 : vector<256x64xf32>
    %c0_7 = arith.constant 0 : index
    %c0_8 = arith.constant 0 : index
    %c1 = arith.constant 1 : index
    %c0_9 = arith.constant 0 : index
    %8 = vector.load %arg1[%c0_7, %c0_8, %c1, %c0_9] : memref<1x18x18x64xbf16, #tpu.memory_space<vmem>>, vector<1x16x16x64xbf16>
    %9 = vector.shape_cast %8 : vector<1x16x16x64xbf16> to vector<16x16x64xbf16>
    %10 = vector.shape_cast %9 : vector<16x16x64xbf16> to vector<256x64xbf16>
    %c1_10 = arith.constant 1 : index
    %c0_11 = arith.constant 0 : index
    %c0_12 = arith.constant 0 : index
    %11 = vector.load %arg2[%c1_10, %c0_11, %c0_12] : memref<9x64x64xbf16, #tpu.memory_space<vmem>>, vector<1x64x64xbf16>
    %12 = vector.shape_cast %11 : vector<1x64x64xbf16> to vector<64x64xbf16>
    %cst_13 = arith.constant dense<0.000000e+00> : vector<256x64xf32>
    %13 = tpu.matmul %10, %12, %cst_13 {dimension_numbers = #tpu.dot_dimension_numbers<[1], [0], [0], [1], [0, 0, 1, 1], [], []>} : vector<256x64xbf16>, vector<64x64xbf16>, vector<256x64xf32> -> vector<256x64xf32>
    %14 = arith.addf %7, %13 : vector<256x64xf32>
    %c0_14 = arith.constant 0 : index
    %c0_15 = arith.constant 0 : index
    %c2 = arith.constant 2 : index
    %c0_16 = arith.constant 0 : index
    %15 = vector.load %arg1[%c0_14, %c0_15, %c2, %c0_16] : memref<1x18x18x64xbf16, #tpu.memory_space<vmem>>, vector<1x16x16x64xbf16>
    %16 = vector.shape_cast %15 : vector<1x16x16x64xbf16> to vector<16x16x64xbf16>
    %17 = vector.shape_cast %16 : vector<16x16x64xbf16> to vector<256x64xbf16>
    %c2_17 = arith.constant 2 : index
    %c0_18 = arith.constant 0 : index
    %c0_19 = arith.constant 0 : index
    %18 = vector.load %arg2[%c2_17, %c0_18, %c0_19] : memref<9x64x64xbf16, #tpu.memory_space<vmem>>, vector<1x64x64xbf16>
    %19 = vector.shape_cast %18 : vector<1x64x64xbf16> to vector<64x64xbf16>
    %cst_20 = arith.constant dense<0.000000e+00> : vector<256x64xf32>
    %20 = tpu.matmul %17, %19, %cst_20 {dimension_numbers = #tpu.dot_dimension_numbers<[1], [0], [0], [1], [0, 0, 1, 1], [], []>} : vector<256x64xbf16>, vector<64x64xbf16>, vector<256x64xf32> -> vector<256x64xf32>
    %21 = arith.addf %14, %20 : vector<256x64xf32>
    %c0_21 = arith.constant 0 : index
    %c1_22 = arith.constant 1 : index
    %c0_23 = arith.constant 0 : index
    %c0_24 = arith.constant 0 : index
    %22 = vector.load %arg1[%c0_21, %c1_22, %c0_23, %c0_24] : memref<1x18x18x64xbf16, #tpu.memory_space<vmem>>, vector<1x16x16x64xbf16>
    %23 = vector.shape_cast %22 : vector<1x16x16x64xbf16> to vector<16x16x64xbf16>
    %24 = vector.shape_cast %23 : vector<16x16x64xbf16> to vector<256x64xbf16>
    %c3 = arith.constant 3 : index
    %c0_25 = arith.constant 0 : index
    %c0_26 = arith.constant 0 : index
    %25 = vector.load %arg2[%c3, %c0_25, %c0_26] : memref<9x64x64xbf16, #tpu.memory_space<vmem>>, vector<1x64x64xbf16>
    %26 = vector.shape_cast %25 : vector<1x64x64xbf16> to vector<64x64xbf16>
    %cst_27 = arith.constant dense<0.000000e+00> : vector<256x64xf32>
    %27 = tpu.matmul %24, %26, %cst_27 {dimension_numbers = #tpu.dot_dimension_numbers<[1], [0], [0], [1], [0, 0, 1, 1], [], []>} : vector<256x64xbf16>, vector<64x64xbf16>, vector<256x64xf32> -> vector<256x64xf32>
    %28 = arith.addf %21, %27 : vector<256x64xf32>
    %c0_28 = arith.constant 0 : index
    %c1_29 = arith.constant 1 : index
    %c1_30 = arith.constant 1 : index
    %c0_31 = arith.constant 0 : index
    %29 = vector.load %arg1[%c0_28, %c1_29, %c1_30, %c0_31] : memref<1x18x18x64xbf16, #tpu.memory_space<vmem>>, vector<1x16x16x64xbf16>
    %30 = vector.shape_cast %29 : vector<1x16x16x64xbf16> to vector<16x16x64xbf16>
    %31 = vector.shape_cast %30 : vector<16x16x64xbf16> to vector<256x64xbf16>
    %c4 = arith.constant 4 : index
    %c0_32 = arith.constant 0 : index
    %c0_33 = arith.constant 0 : index
    %32 = vector.load %arg2[%c4, %c0_32, %c0_33] : memref<9x64x64xbf16, #tpu.memory_space<vmem>>, vector<1x64x64xbf16>
    %33 = vector.shape_cast %32 : vector<1x64x64xbf16> to vector<64x64xbf16>
    %cst_34 = arith.constant dense<0.000000e+00> : vector<256x64xf32>
    %34 = tpu.matmul %31, %33, %cst_34 {dimension_numbers = #tpu.dot_dimension_numbers<[1], [0], [0], [1], [0, 0, 1, 1], [], []>} : vector<256x64xbf16>, vector<64x64xbf16>, vector<256x64xf32> -> vector<256x64xf32>
    %35 = arith.addf %28, %34 : vector<256x64xf32>
    %c0_35 = arith.constant 0 : index
    %c1_36 = arith.constant 1 : index
    %c2_37 = arith.constant 2 : index
    %c0_38 = arith.constant 0 : index
    %36 = vector.load %arg1[%c0_35, %c1_36, %c2_37, %c0_38] : memref<1x18x18x64xbf16, #tpu.memory_space<vmem>>, vector<1x16x16x64xbf16>
    %37 = vector.shape_cast %36 : vector<1x16x16x64xbf16> to vector<16x16x64xbf16>
    %38 = vector.shape_cast %37 : vector<16x16x64xbf16> to vector<256x64xbf16>
    %c5 = arith.constant 5 : index
    %c0_39 = arith.constant 0 : index
    %c0_40 = arith.constant 0 : index
    %39 = vector.load %arg2[%c5, %c0_39, %c0_40] : memref<9x64x64xbf16, #tpu.memory_space<vmem>>, vector<1x64x64xbf16>
    %40 = vector.shape_cast %39 : vector<1x64x64xbf16> to vector<64x64xbf16>
    %cst_41 = arith.constant dense<0.000000e+00> : vector<256x64xf32>
    %41 = tpu.matmul %38, %40, %cst_41 {dimension_numbers = #tpu.dot_dimension_numbers<[1], [0], [0], [1], [0, 0, 1, 1], [], []>} : vector<256x64xbf16>, vector<64x64xbf16>, vector<256x64xf32> -> vector<256x64xf32>
    %42 = arith.addf %35, %41 : vector<256x64xf32>
    %c0_42 = arith.constant 0 : index
    %c2_43 = arith.constant 2 : index
    %c0_44 = arith.constant 0 : index
    %c0_45 = arith.constant 0 : index
    %43 = vector.load %arg1[%c0_42, %c2_43, %c0_44, %c0_45] : memref<1x18x18x64xbf16, #tpu.memory_space<vmem>>, vector<1x16x16x64xbf16>
    %44 = vector.shape_cast %43 : vector<1x16x16x64xbf16> to vector<16x16x64xbf16>
    %45 = vector.shape_cast %44 : vector<16x16x64xbf16> to vector<256x64xbf16>
    %c6 = arith.constant 6 : index
    %c0_46 = arith.constant 0 : index
    %c0_47 = arith.constant 0 : index
    %46 = vector.load %arg2[%c6, %c0_46, %c0_47] : memref<9x64x64xbf16, #tpu.memory_space<vmem>>, vector<1x64x64xbf16>
    %47 = vector.shape_cast %46 : vector<1x64x64xbf16> to vector<64x64xbf16>
    %cst_48 = arith.constant dense<0.000000e+00> : vector<256x64xf32>
    %48 = tpu.matmul %45, %47, %cst_48 {dimension_numbers = #tpu.dot_dimension_numbers<[1], [0], [0], [1], [0, 0, 1, 1], [], []>} : vector<256x64xbf16>, vector<64x64xbf16>, vector<256x64xf32> -> vector<256x64xf32>
    %49 = arith.addf %42, %48 : vector<256x64xf32>
    %c0_49 = arith.constant 0 : index
    %c2_50 = arith.constant 2 : index
    %c1_51 = arith.constant 1 : index
    %c0_52 = arith.constant 0 : index
    %50 = vector.load %arg1[%c0_49, %c2_50, %c1_51, %c0_52] : memref<1x18x18x64xbf16, #tpu.memory_space<vmem>>, vector<1x16x16x64xbf16>
    %51 = vector.shape_cast %50 : vector<1x16x16x64xbf16> to vector<16x16x64xbf16>
    %52 = vector.shape_cast %51 : vector<16x16x64xbf16> to vector<256x64xbf16>
    %c7 = arith.constant 7 : index
    %c0_53 = arith.constant 0 : index
    %c0_54 = arith.constant 0 : index
    %53 = vector.load %arg2[%c7, %c0_53, %c0_54] : memref<9x64x64xbf16, #tpu.memory_space<vmem>>, vector<1x64x64xbf16>
    %54 = vector.shape_cast %53 : vector<1x64x64xbf16> to vector<64x64xbf16>
    %cst_55 = arith.constant dense<0.000000e+00> : vector<256x64xf32>
    %55 = tpu.matmul %52, %54, %cst_55 {dimension_numbers = #tpu.dot_dimension_numbers<[1], [0], [0], [1], [0, 0, 1, 1], [], []>} : vector<256x64xbf16>, vector<64x64xbf16>, vector<256x64xf32> -> vector<256x64xf32>
    %56 = arith.addf %49, %55 : vector<256x64xf32>
    %c0_56 = arith.constant 0 : index
    %c2_57 = arith.constant 2 : index
    %c2_58 = arith.constant 2 : index
    %c0_59 = arith.constant 0 : index
    %57 = vector.load %arg1[%c0_56, %c2_57, %c2_58, %c0_59] : memref<1x18x18x64xbf16, #tpu.memory_space<vmem>>, vector<1x16x16x64xbf16>
    %58 = vector.shape_cast %57 : vector<1x16x16x64xbf16> to vector<16x16x64xbf16>
    %59 = vector.shape_cast %58 : vector<16x16x64xbf16> to vector<256x64xbf16>
    %c8 = arith.constant 8 : index
    %c0_60 = arith.constant 0 : index
    %c0_61 = arith.constant 0 : index
    %60 = vector.load %arg2[%c8, %c0_60, %c0_61] : memref<9x64x64xbf16, #tpu.memory_space<vmem>>, vector<1x64x64xbf16>
    %61 = vector.shape_cast %60 : vector<1x64x64xbf16> to vector<64x64xbf16>
    %cst_62 = arith.constant dense<0.000000e+00> : vector<256x64xf32>
    %62 = tpu.matmul %59, %61, %cst_62 {dimension_numbers = #tpu.dot_dimension_numbers<[1], [0], [0], [1], [0, 0, 1, 1], [], []>} : vector<256x64xbf16>, vector<64x64xbf16>, vector<256x64xf32> -> vector<256x64xf32>
    %63 = arith.addf %56, %62 : vector<256x64xf32>
    %c0_63 = arith.constant 0 : index
    %c0_64 = arith.constant 0 : index
    %64 = vector.load %arg3[%c0_63, %c0_64] : memref<1x64xf32, #tpu.memory_space<vmem>>, vector<1x64xf32>
    %65 = vector.broadcast %64 : vector<1x64xf32> to vector<256x64xf32>
    %66 = arith.addf %63, %65 : vector<256x64xf32>
    %cst_65 = arith.constant 0.000000e+00 : f32
    %67 = vector.broadcast %cst_65 : f32 to vector<256x64xf32>
    %68 = arith.maximumf %66, %67 : vector<256x64xf32>
    %69 = vector.shape_cast %68 : vector<256x64xf32> to vector<16x16x64xf32>
    %70 = vector.shape_cast %69 : vector<16x16x64xf32> to vector<8x2x16x64xf32>
    %cst_66 = arith.constant dense<0xFF800000> : vector<8x16x64xf32>
    %71 = vector.multi_reduction <maximumf>, %70, %cst_66 [1] : vector<8x2x16x64xf32> to vector<8x16x64xf32>
    %72 = vector.shape_cast %71 : vector<8x16x64xf32> to vector<1x8x16x64xf32>
    %73 = arith.truncf %72 : vector<1x8x16x64xf32> to vector<1x8x16x64xbf16>
    %c0_67 = arith.constant 0 : index
    %c0_68 = arith.constant 0 : index
    %c0_69 = arith.constant 0 : index
    %c0_70 = arith.constant 0 : index
    %74 = vector.load %arg4[%c0_67, %c0_68, %c0_69, %c0_70] : memref<1x8x16x64xbf16, #tpu.memory_space<vmem>>, vector<1x8x16x64xbf16>
    tpu.vector_store %arg4[%c0_67, %c0_68, %c0_69, %c0_70], %73 {strides = array<i32>} : memref<1x8x16x64xbf16, #tpu.memory_space<vmem>>, vector<1x8x16x64xbf16>,
    return
  }
  func.func @transform_0(%arg0: i32) -> (i32, i32, i32, i32) {
    %c0_i32 = arith.constant 0 : i32
    %c0_i32_0 = arith.constant 0 : i32
    %c0_i32_1 = arith.constant 0 : i32
    %c0_i32_2 = arith.constant 0 : i32
    return %arg0, %c0_i32, %c0_i32_0, %c0_i32_1 : i32, i32, i32, i32
  }
  func.func @transform_1(%arg0: i32) -> (i32, i32, i32) {
    %c0_i32 = arith.constant 0 : i32
    %c0_i32_0 = arith.constant 0 : i32
    %c0_i32_1 = arith.constant 0 : i32
    %c0_i32_2 = arith.constant 0 : i32
    return %c0_i32, %c0_i32_0, %c0_i32_1 : i32, i32, i32
  }
  func.func @transform_2(%arg0: i32) -> (i32, i32) {
    %c0_i32 = arith.constant 0 : i32
    %c0_i32_0 = arith.constant 0 : i32
    %c0_i32_1 = arith.constant 0 : i32
    return %c0_i32, %c0_i32_0 : i32, i32
  }
  func.func @transform_3(%arg0: i32) -> (i32, i32, i32, i32) {
    %c0_i32 = arith.constant 0 : i32
    %c0_i32_0 = arith.constant 0 : i32
    %c0_i32_1 = arith.constant 0 : i32
    %c0_i32_2 = arith.constant 0 : i32
    return %arg0, %c0_i32, %c0_i32_0, %c0_i32_1 : i32, i32, i32, i32
  }
}

module attributes {stable_mosaic.version = 11 : i64} {
  func.func @_conv3x3_kernel(%arg0: i32, %arg1: memref<1x10x10x64xbf16, #tpu.memory_space<vmem>>, %arg2: memref<9x64x128xbf16, #tpu.memory_space<vmem>>, %arg3: memref<1x128xf32, #tpu.memory_space<vmem>>, %arg4: memref<1x8x8x128xbf16, #tpu.memory_space<vmem>>) attributes {dimension_semantics = [#tpu.dimension_semantics<parallel>], iteration_bounds = array<i64: 2>, scalar_prefetch = 0 : i64, scratch_operands = 0 : i64, tpu.core_type = #tpu.core_type<tc>, window_params = [{transform_indices = @transform_0, window_bounds = array<i64: 1, 10, 10, 64>}, {pipeline_mode = #tpu.pipeline_mode<synchronous>, transform_indices = @transform_1, window_bounds = array<i64: 9, 64, 128>}, {pipeline_mode = #tpu.pipeline_mode<synchronous>, transform_indices = @transform_2, window_bounds = array<i64: 1, 128>}, {transform_indices = @transform_3, window_bounds = array<i64: 1, 8, 8, 128>}]} {
    %cst = arith.constant 0.000000e+00 : f32
    %0 = vector.broadcast %cst : f32 to vector<64x128xf32>
    %c0 = arith.constant 0 : index
    %c0_0 = arith.constant 0 : index
    %c0_1 = arith.constant 0 : index
    %c0_2 = arith.constant 0 : index
    %1 = vector.load %arg1[%c0, %c0_0, %c0_1, %c0_2] : memref<1x10x10x64xbf16, #tpu.memory_space<vmem>>, vector<1x8x8x64xbf16>
    %2 = vector.shape_cast %1 : vector<1x8x8x64xbf16> to vector<8x8x64xbf16>
    %3 = vector.shape_cast %2 : vector<8x8x64xbf16> to vector<64x64xbf16>
    %c0_3 = arith.constant 0 : index
    %c0_4 = arith.constant 0 : index
    %c0_5 = arith.constant 0 : index
    %4 = vector.load %arg2[%c0_3, %c0_4, %c0_5] : memref<9x64x128xbf16, #tpu.memory_space<vmem>>, vector<1x64x128xbf16>
    %5 = vector.shape_cast %4 : vector<1x64x128xbf16> to vector<64x128xbf16>
    %cst_6 = arith.constant dense<0.000000e+00> : vector<64x128xf32>
    %6 = tpu.matmul %3, %5, %cst_6 {dimension_numbers = #tpu.dot_dimension_numbers<[1], [0], [0], [1], [0, 0, 1, 1], [], []>} : vector<64x64xbf16>, vector<64x128xbf16>, vector<64x128xf32> -> vector<64x128xf32>
    %7 = arith.addf %0, %6 : vector<64x128xf32>
    %c0_7 = arith.constant 0 : index
    %c0_8 = arith.constant 0 : index
    %c1 = arith.constant 1 : index
    %c0_9 = arith.constant 0 : index
    %8 = vector.load %arg1[%c0_7, %c0_8, %c1, %c0_9] : memref<1x10x10x64xbf16, #tpu.memory_space<vmem>>, vector<1x8x8x64xbf16>
    %9 = vector.shape_cast %8 : vector<1x8x8x64xbf16> to vector<8x8x64xbf16>
    %10 = vector.shape_cast %9 : vector<8x8x64xbf16> to vector<64x64xbf16>
    %c1_10 = arith.constant 1 : index
    %c0_11 = arith.constant 0 : index
    %c0_12 = arith.constant 0 : index
    %11 = vector.load %arg2[%c1_10, %c0_11, %c0_12] : memref<9x64x128xbf16, #tpu.memory_space<vmem>>, vector<1x64x128xbf16>
    %12 = vector.shape_cast %11 : vector<1x64x128xbf16> to vector<64x128xbf16>
    %cst_13 = arith.constant dense<0.000000e+00> : vector<64x128xf32>
    %13 = tpu.matmul %10, %12, %cst_13 {dimension_numbers = #tpu.dot_dimension_numbers<[1], [0], [0], [1], [0, 0, 1, 1], [], []>} : vector<64x64xbf16>, vector<64x128xbf16>, vector<64x128xf32> -> vector<64x128xf32>
    %14 = arith.addf %7, %13 : vector<64x128xf32>
    %c0_14 = arith.constant 0 : index
    %c0_15 = arith.constant 0 : index
    %c2 = arith.constant 2 : index
    %c0_16 = arith.constant 0 : index
    %15 = vector.load %arg1[%c0_14, %c0_15, %c2, %c0_16] : memref<1x10x10x64xbf16, #tpu.memory_space<vmem>>, vector<1x8x8x64xbf16>
    %16 = vector.shape_cast %15 : vector<1x8x8x64xbf16> to vector<8x8x64xbf16>
    %17 = vector.shape_cast %16 : vector<8x8x64xbf16> to vector<64x64xbf16>
    %c2_17 = arith.constant 2 : index
    %c0_18 = arith.constant 0 : index
    %c0_19 = arith.constant 0 : index
    %18 = vector.load %arg2[%c2_17, %c0_18, %c0_19] : memref<9x64x128xbf16, #tpu.memory_space<vmem>>, vector<1x64x128xbf16>
    %19 = vector.shape_cast %18 : vector<1x64x128xbf16> to vector<64x128xbf16>
    %cst_20 = arith.constant dense<0.000000e+00> : vector<64x128xf32>
    %20 = tpu.matmul %17, %19, %cst_20 {dimension_numbers = #tpu.dot_dimension_numbers<[1], [0], [0], [1], [0, 0, 1, 1], [], []>} : vector<64x64xbf16>, vector<64x128xbf16>, vector<64x128xf32> -> vector<64x128xf32>
    %21 = arith.addf %14, %20 : vector<64x128xf32>
    %c0_21 = arith.constant 0 : index
    %c1_22 = arith.constant 1 : index
    %c0_23 = arith.constant 0 : index
    %c0_24 = arith.constant 0 : index
    %22 = vector.load %arg1[%c0_21, %c1_22, %c0_23, %c0_24] : memref<1x10x10x64xbf16, #tpu.memory_space<vmem>>, vector<1x8x8x64xbf16>
    %23 = vector.shape_cast %22 : vector<1x8x8x64xbf16> to vector<8x8x64xbf16>
    %24 = vector.shape_cast %23 : vector<8x8x64xbf16> to vector<64x64xbf16>
    %c3 = arith.constant 3 : index
    %c0_25 = arith.constant 0 : index
    %c0_26 = arith.constant 0 : index
    %25 = vector.load %arg2[%c3, %c0_25, %c0_26] : memref<9x64x128xbf16, #tpu.memory_space<vmem>>, vector<1x64x128xbf16>
    %26 = vector.shape_cast %25 : vector<1x64x128xbf16> to vector<64x128xbf16>
    %cst_27 = arith.constant dense<0.000000e+00> : vector<64x128xf32>
    %27 = tpu.matmul %24, %26, %cst_27 {dimension_numbers = #tpu.dot_dimension_numbers<[1], [0], [0], [1], [0, 0, 1, 1], [], []>} : vector<64x64xbf16>, vector<64x128xbf16>, vector<64x128xf32> -> vector<64x128xf32>
    %28 = arith.addf %21, %27 : vector<64x128xf32>
    %c0_28 = arith.constant 0 : index
    %c1_29 = arith.constant 1 : index
    %c1_30 = arith.constant 1 : index
    %c0_31 = arith.constant 0 : index
    %29 = vector.load %arg1[%c0_28, %c1_29, %c1_30, %c0_31] : memref<1x10x10x64xbf16, #tpu.memory_space<vmem>>, vector<1x8x8x64xbf16>
    %30 = vector.shape_cast %29 : vector<1x8x8x64xbf16> to vector<8x8x64xbf16>
    %31 = vector.shape_cast %30 : vector<8x8x64xbf16> to vector<64x64xbf16>
    %c4 = arith.constant 4 : index
    %c0_32 = arith.constant 0 : index
    %c0_33 = arith.constant 0 : index
    %32 = vector.load %arg2[%c4, %c0_32, %c0_33] : memref<9x64x128xbf16, #tpu.memory_space<vmem>>, vector<1x64x128xbf16>
    %33 = vector.shape_cast %32 : vector<1x64x128xbf16> to vector<64x128xbf16>
    %cst_34 = arith.constant dense<0.000000e+00> : vector<64x128xf32>
    %34 = tpu.matmul %31, %33, %cst_34 {dimension_numbers = #tpu.dot_dimension_numbers<[1], [0], [0], [1], [0, 0, 1, 1], [], []>} : vector<64x64xbf16>, vector<64x128xbf16>, vector<64x128xf32> -> vector<64x128xf32>
    %35 = arith.addf %28, %34 : vector<64x128xf32>
    %c0_35 = arith.constant 0 : index
    %c1_36 = arith.constant 1 : index
    %c2_37 = arith.constant 2 : index
    %c0_38 = arith.constant 0 : index
    %36 = vector.load %arg1[%c0_35, %c1_36, %c2_37, %c0_38] : memref<1x10x10x64xbf16, #tpu.memory_space<vmem>>, vector<1x8x8x64xbf16>
    %37 = vector.shape_cast %36 : vector<1x8x8x64xbf16> to vector<8x8x64xbf16>
    %38 = vector.shape_cast %37 : vector<8x8x64xbf16> to vector<64x64xbf16>
    %c5 = arith.constant 5 : index
    %c0_39 = arith.constant 0 : index
    %c0_40 = arith.constant 0 : index
    %39 = vector.load %arg2[%c5, %c0_39, %c0_40] : memref<9x64x128xbf16, #tpu.memory_space<vmem>>, vector<1x64x128xbf16>
    %40 = vector.shape_cast %39 : vector<1x64x128xbf16> to vector<64x128xbf16>
    %cst_41 = arith.constant dense<0.000000e+00> : vector<64x128xf32>
    %41 = tpu.matmul %38, %40, %cst_41 {dimension_numbers = #tpu.dot_dimension_numbers<[1], [0], [0], [1], [0, 0, 1, 1], [], []>} : vector<64x64xbf16>, vector<64x128xbf16>, vector<64x128xf32> -> vector<64x128xf32>
    %42 = arith.addf %35, %41 : vector<64x128xf32>
    %c0_42 = arith.constant 0 : index
    %c2_43 = arith.constant 2 : index
    %c0_44 = arith.constant 0 : index
    %c0_45 = arith.constant 0 : index
    %43 = vector.load %arg1[%c0_42, %c2_43, %c0_44, %c0_45] : memref<1x10x10x64xbf16, #tpu.memory_space<vmem>>, vector<1x8x8x64xbf16>
    %44 = vector.shape_cast %43 : vector<1x8x8x64xbf16> to vector<8x8x64xbf16>
    %45 = vector.shape_cast %44 : vector<8x8x64xbf16> to vector<64x64xbf16>
    %c6 = arith.constant 6 : index
    %c0_46 = arith.constant 0 : index
    %c0_47 = arith.constant 0 : index
    %46 = vector.load %arg2[%c6, %c0_46, %c0_47] : memref<9x64x128xbf16, #tpu.memory_space<vmem>>, vector<1x64x128xbf16>
    %47 = vector.shape_cast %46 : vector<1x64x128xbf16> to vector<64x128xbf16>
    %cst_48 = arith.constant dense<0.000000e+00> : vector<64x128xf32>
    %48 = tpu.matmul %45, %47, %cst_48 {dimension_numbers = #tpu.dot_dimension_numbers<[1], [0], [0], [1], [0, 0, 1, 1], [], []>} : vector<64x64xbf16>, vector<64x128xbf16>, vector<64x128xf32> -> vector<64x128xf32>
    %49 = arith.addf %42, %48 : vector<64x128xf32>
    %c0_49 = arith.constant 0 : index
    %c2_50 = arith.constant 2 : index
    %c1_51 = arith.constant 1 : index
    %c0_52 = arith.constant 0 : index
    %50 = vector.load %arg1[%c0_49, %c2_50, %c1_51, %c0_52] : memref<1x10x10x64xbf16, #tpu.memory_space<vmem>>, vector<1x8x8x64xbf16>
    %51 = vector.shape_cast %50 : vector<1x8x8x64xbf16> to vector<8x8x64xbf16>
    %52 = vector.shape_cast %51 : vector<8x8x64xbf16> to vector<64x64xbf16>
    %c7 = arith.constant 7 : index
    %c0_53 = arith.constant 0 : index
    %c0_54 = arith.constant 0 : index
    %53 = vector.load %arg2[%c7, %c0_53, %c0_54] : memref<9x64x128xbf16, #tpu.memory_space<vmem>>, vector<1x64x128xbf16>
    %54 = vector.shape_cast %53 : vector<1x64x128xbf16> to vector<64x128xbf16>
    %cst_55 = arith.constant dense<0.000000e+00> : vector<64x128xf32>
    %55 = tpu.matmul %52, %54, %cst_55 {dimension_numbers = #tpu.dot_dimension_numbers<[1], [0], [0], [1], [0, 0, 1, 1], [], []>} : vector<64x64xbf16>, vector<64x128xbf16>, vector<64x128xf32> -> vector<64x128xf32>
    %56 = arith.addf %49, %55 : vector<64x128xf32>
    %c0_56 = arith.constant 0 : index
    %c2_57 = arith.constant 2 : index
    %c2_58 = arith.constant 2 : index
    %c0_59 = arith.constant 0 : index
    %57 = vector.load %arg1[%c0_56, %c2_57, %c2_58, %c0_59] : memref<1x10x10x64xbf16, #tpu.memory_space<vmem>>, vector<1x8x8x64xbf16>
    %58 = vector.shape_cast %57 : vector<1x8x8x64xbf16> to vector<8x8x64xbf16>
    %59 = vector.shape_cast %58 : vector<8x8x64xbf16> to vector<64x64xbf16>
    %c8 = arith.constant 8 : index
    %c0_60 = arith.constant 0 : index
    %c0_61 = arith.constant 0 : index
    %60 = vector.load %arg2[%c8, %c0_60, %c0_61] : memref<9x64x128xbf16, #tpu.memory_space<vmem>>, vector<1x64x128xbf16>
    %61 = vector.shape_cast %60 : vector<1x64x128xbf16> to vector<64x128xbf16>
    %cst_62 = arith.constant dense<0.000000e+00> : vector<64x128xf32>
    %62 = tpu.matmul %59, %61, %cst_62 {dimension_numbers = #tpu.dot_dimension_numbers<[1], [0], [0], [1], [0, 0, 1, 1], [], []>} : vector<64x64xbf16>, vector<64x128xbf16>, vector<64x128xf32> -> vector<64x128xf32>
    %63 = arith.addf %56, %62 : vector<64x128xf32>
    %c0_63 = arith.constant 0 : index
    %c0_64 = arith.constant 0 : index
    %64 = vector.load %arg3[%c0_63, %c0_64] : memref<1x128xf32, #tpu.memory_space<vmem>>, vector<1x128xf32>
    %65 = vector.broadcast %64 : vector<1x128xf32> to vector<64x128xf32>
    %66 = arith.addf %63, %65 : vector<64x128xf32>
    %cst_65 = arith.constant 0.000000e+00 : f32
    %67 = vector.broadcast %cst_65 : f32 to vector<64x128xf32>
    %68 = arith.maximumf %66, %67 : vector<64x128xf32>
    %69 = vector.shape_cast %68 : vector<64x128xf32> to vector<8x8x128xf32>
    %70 = vector.shape_cast %69 : vector<8x8x128xf32> to vector<1x8x8x128xf32>
    %71 = arith.truncf %70 : vector<1x8x8x128xf32> to vector<1x8x8x128xbf16>
    %c0_66 = arith.constant 0 : index
    %c0_67 = arith.constant 0 : index
    %c0_68 = arith.constant 0 : index
    %c0_69 = arith.constant 0 : index
    %72 = vector.load %arg4[%c0_66, %c0_67, %c0_68, %c0_69] : memref<1x8x8x128xbf16, #tpu.memory_space<vmem>>, vector<1x8x8x128xbf16>
    tpu.vector_store %arg4[%c0_66, %c0_67, %c0_68, %c0_69], %71 {strides = array<i32>} : memref<1x8x8x128xbf16, #tpu.memory_space<vmem>>, vector<1x8x8x128xbf16>,
    return
  }
  func.func @transform_0(%arg0: i32) -> (i32, i32, i32, i32) {
    %c0_i32 = arith.constant 0 : i32
    %c0_i32_0 = arith.constant 0 : i32
    %c0_i32_1 = arith.constant 0 : i32
    %c0_i32_2 = arith.constant 0 : i32
    return %arg0, %c0_i32, %c0_i32_0, %c0_i32_1 : i32, i32, i32, i32
  }
  func.func @transform_1(%arg0: i32) -> (i32, i32, i32) {
    %c0_i32 = arith.constant 0 : i32
    %c0_i32_0 = arith.constant 0 : i32
    %c0_i32_1 = arith.constant 0 : i32
    %c0_i32_2 = arith.constant 0 : i32
    return %c0_i32, %c0_i32_0, %c0_i32_1 : i32, i32, i32
  }
  func.func @transform_2(%arg0: i32) -> (i32, i32) {
    %c0_i32 = arith.constant 0 : i32
    %c0_i32_0 = arith.constant 0 : i32
    %c0_i32_1 = arith.constant 0 : i32
    return %c0_i32, %c0_i32_0 : i32, i32
  }
  func.func @transform_3(%arg0: i32) -> (i32, i32, i32, i32) {
    %c0_i32 = arith.constant 0 : i32
    %c0_i32_0 = arith.constant 0 : i32
    %c0_i32_1 = arith.constant 0 : i32
    %c0_i32_2 = arith.constant 0 : i32
    return %arg0, %c0_i32, %c0_i32_0, %c0_i32_1 : i32, i32, i32, i32
  }
}

module attributes {stable_mosaic.version = 11 : i64} {
  func.func @_conv3x3_sqdiff_kernel(%arg0: i32, %arg1: memref<1x10x10x128xbf16, #tpu.memory_space<vmem>>, %arg2: memref<1x10x10x128xbf16, #tpu.memory_space<vmem>>, %arg3: memref<9x128x128xbf16, #tpu.memory_space<vmem>>, %arg4: memref<1x128xf32, #tpu.memory_space<vmem>>, %arg5: memref<1x1x128xf32, #tpu.memory_space<vmem>>) attributes {dimension_semantics = [#tpu.dimension_semantics<parallel>], iteration_bounds = array<i64: 2>, scalar_prefetch = 0 : i64, scratch_operands = 0 : i64, tpu.core_type = #tpu.core_type<tc>, window_params = [{transform_indices = @transform_0, window_bounds = array<i64: 1, 10, 10, 128>}, {transform_indices = @transform_1, window_bounds = array<i64: 1, 10, 10, 128>}, {pipeline_mode = #tpu.pipeline_mode<synchronous>, transform_indices = @transform_2, window_bounds = array<i64: 9, 128, 128>}, {pipeline_mode = #tpu.pipeline_mode<synchronous>, transform_indices = @transform_3, window_bounds = array<i64: 1, 128>}, {transform_indices = @transform_4, window_bounds = array<i64: 1, 1, 128>}]} {
    %cst = arith.constant 0.000000e+00 : f32
    %0 = vector.broadcast %cst : f32 to vector<64x128xf32>
    %c0 = arith.constant 0 : index
    %c0_0 = arith.constant 0 : index
    %c0_1 = arith.constant 0 : index
    %c0_2 = arith.constant 0 : index
    %1 = vector.load %arg1[%c0, %c0_0, %c0_1, %c0_2] : memref<1x10x10x128xbf16, #tpu.memory_space<vmem>>, vector<1x8x8x128xbf16>
    %2 = vector.shape_cast %1 : vector<1x8x8x128xbf16> to vector<8x8x128xbf16>
    %3 = vector.shape_cast %2 : vector<8x8x128xbf16> to vector<64x128xbf16>
    %c0_3 = arith.constant 0 : index
    %c0_4 = arith.constant 0 : index
    %c0_5 = arith.constant 0 : index
    %4 = vector.load %arg3[%c0_3, %c0_4, %c0_5] : memref<9x128x128xbf16, #tpu.memory_space<vmem>>, vector<1x128x128xbf16>
    %5 = vector.shape_cast %4 : vector<1x128x128xbf16> to vector<128x128xbf16>
    %cst_6 = arith.constant dense<0.000000e+00> : vector<64x128xf32>
    %6 = tpu.matmul %3, %5, %cst_6 {dimension_numbers = #tpu.dot_dimension_numbers<[1], [0], [0], [1], [0, 0, 1, 1], [], []>} : vector<64x128xbf16>, vector<128x128xbf16>, vector<64x128xf32> -> vector<64x128xf32>
    %7 = arith.addf %0, %6 : vector<64x128xf32>
    %c0_7 = arith.constant 0 : index
    %c0_8 = arith.constant 0 : index
    %c1 = arith.constant 1 : index
    %c0_9 = arith.constant 0 : index
    %8 = vector.load %arg1[%c0_7, %c0_8, %c1, %c0_9] : memref<1x10x10x128xbf16, #tpu.memory_space<vmem>>, vector<1x8x8x128xbf16>
    %9 = vector.shape_cast %8 : vector<1x8x8x128xbf16> to vector<8x8x128xbf16>
    %10 = vector.shape_cast %9 : vector<8x8x128xbf16> to vector<64x128xbf16>
    %c1_10 = arith.constant 1 : index
    %c0_11 = arith.constant 0 : index
    %c0_12 = arith.constant 0 : index
    %11 = vector.load %arg3[%c1_10, %c0_11, %c0_12] : memref<9x128x128xbf16, #tpu.memory_space<vmem>>, vector<1x128x128xbf16>
    %12 = vector.shape_cast %11 : vector<1x128x128xbf16> to vector<128x128xbf16>
    %cst_13 = arith.constant dense<0.000000e+00> : vector<64x128xf32>
    %13 = tpu.matmul %10, %12, %cst_13 {dimension_numbers = #tpu.dot_dimension_numbers<[1], [0], [0], [1], [0, 0, 1, 1], [], []>} : vector<64x128xbf16>, vector<128x128xbf16>, vector<64x128xf32> -> vector<64x128xf32>
    %14 = arith.addf %7, %13 : vector<64x128xf32>
    %c0_14 = arith.constant 0 : index
    %c0_15 = arith.constant 0 : index
    %c2 = arith.constant 2 : index
    %c0_16 = arith.constant 0 : index
    %15 = vector.load %arg1[%c0_14, %c0_15, %c2, %c0_16] : memref<1x10x10x128xbf16, #tpu.memory_space<vmem>>, vector<1x8x8x128xbf16>
    %16 = vector.shape_cast %15 : vector<1x8x8x128xbf16> to vector<8x8x128xbf16>
    %17 = vector.shape_cast %16 : vector<8x8x128xbf16> to vector<64x128xbf16>
    %c2_17 = arith.constant 2 : index
    %c0_18 = arith.constant 0 : index
    %c0_19 = arith.constant 0 : index
    %18 = vector.load %arg3[%c2_17, %c0_18, %c0_19] : memref<9x128x128xbf16, #tpu.memory_space<vmem>>, vector<1x128x128xbf16>
    %19 = vector.shape_cast %18 : vector<1x128x128xbf16> to vector<128x128xbf16>
    %cst_20 = arith.constant dense<0.000000e+00> : vector<64x128xf32>
    %20 = tpu.matmul %17, %19, %cst_20 {dimension_numbers = #tpu.dot_dimension_numbers<[1], [0], [0], [1], [0, 0, 1, 1], [], []>} : vector<64x128xbf16>, vector<128x128xbf16>, vector<64x128xf32> -> vector<64x128xf32>
    %21 = arith.addf %14, %20 : vector<64x128xf32>
    %c0_21 = arith.constant 0 : index
    %c1_22 = arith.constant 1 : index
    %c0_23 = arith.constant 0 : index
    %c0_24 = arith.constant 0 : index
    %22 = vector.load %arg1[%c0_21, %c1_22, %c0_23, %c0_24] : memref<1x10x10x128xbf16, #tpu.memory_space<vmem>>, vector<1x8x8x128xbf16>
    %23 = vector.shape_cast %22 : vector<1x8x8x128xbf16> to vector<8x8x128xbf16>
    %24 = vector.shape_cast %23 : vector<8x8x128xbf16> to vector<64x128xbf16>
    %c3 = arith.constant 3 : index
    %c0_25 = arith.constant 0 : index
    %c0_26 = arith.constant 0 : index
    %25 = vector.load %arg3[%c3, %c0_25, %c0_26] : memref<9x128x128xbf16, #tpu.memory_space<vmem>>, vector<1x128x128xbf16>
    %26 = vector.shape_cast %25 : vector<1x128x128xbf16> to vector<128x128xbf16>
    %cst_27 = arith.constant dense<0.000000e+00> : vector<64x128xf32>
    %27 = tpu.matmul %24, %26, %cst_27 {dimension_numbers = #tpu.dot_dimension_numbers<[1], [0], [0], [1], [0, 0, 1, 1], [], []>} : vector<64x128xbf16>, vector<128x128xbf16>, vector<64x128xf32> -> vector<64x128xf32>
    %28 = arith.addf %21, %27 : vector<64x128xf32>
    %c0_28 = arith.constant 0 : index
    %c1_29 = arith.constant 1 : index
    %c1_30 = arith.constant 1 : index
    %c0_31 = arith.constant 0 : index
    %29 = vector.load %arg1[%c0_28, %c1_29, %c1_30, %c0_31] : memref<1x10x10x128xbf16, #tpu.memory_space<vmem>>, vector<1x8x8x128xbf16>
    %30 = vector.shape_cast %29 : vector<1x8x8x128xbf16> to vector<8x8x128xbf16>
    %31 = vector.shape_cast %30 : vector<8x8x128xbf16> to vector<64x128xbf16>
    %c4 = arith.constant 4 : index
    %c0_32 = arith.constant 0 : index
    %c0_33 = arith.constant 0 : index
    %32 = vector.load %arg3[%c4, %c0_32, %c0_33] : memref<9x128x128xbf16, #tpu.memory_space<vmem>>, vector<1x128x128xbf16>
    %33 = vector.shape_cast %32 : vector<1x128x128xbf16> to vector<128x128xbf16>
    %cst_34 = arith.constant dense<0.000000e+00> : vector<64x128xf32>
    %34 = tpu.matmul %31, %33, %cst_34 {dimension_numbers = #tpu.dot_dimension_numbers<[1], [0], [0], [1], [0, 0, 1, 1], [], []>} : vector<64x128xbf16>, vector<128x128xbf16>, vector<64x128xf32> -> vector<64x128xf32>
    %35 = arith.addf %28, %34 : vector<64x128xf32>
    %c0_35 = arith.constant 0 : index
    %c1_36 = arith.constant 1 : index
    %c2_37 = arith.constant 2 : index
    %c0_38 = arith.constant 0 : index
    %36 = vector.load %arg1[%c0_35, %c1_36, %c2_37, %c0_38] : memref<1x10x10x128xbf16, #tpu.memory_space<vmem>>, vector<1x8x8x128xbf16>
    %37 = vector.shape_cast %36 : vector<1x8x8x128xbf16> to vector<8x8x128xbf16>
    %38 = vector.shape_cast %37 : vector<8x8x128xbf16> to vector<64x128xbf16>
    %c5 = arith.constant 5 : index
    %c0_39 = arith.constant 0 : index
    %c0_40 = arith.constant 0 : index
    %39 = vector.load %arg3[%c5, %c0_39, %c0_40] : memref<9x128x128xbf16, #tpu.memory_space<vmem>>, vector<1x128x128xbf16>
    %40 = vector.shape_cast %39 : vector<1x128x128xbf16> to vector<128x128xbf16>
    %cst_41 = arith.constant dense<0.000000e+00> : vector<64x128xf32>
    %41 = tpu.matmul %38, %40, %cst_41 {dimension_numbers = #tpu.dot_dimension_numbers<[1], [0], [0], [1], [0, 0, 1, 1], [], []>} : vector<64x128xbf16>, vector<128x128xbf16>, vector<64x128xf32> -> vector<64x128xf32>
    %42 = arith.addf %35, %41 : vector<64x128xf32>
    %c0_42 = arith.constant 0 : index
    %c2_43 = arith.constant 2 : index
    %c0_44 = arith.constant 0 : index
    %c0_45 = arith.constant 0 : index
    %43 = vector.load %arg1[%c0_42, %c2_43, %c0_44, %c0_45] : memref<1x10x10x128xbf16, #tpu.memory_space<vmem>>, vector<1x8x8x128xbf16>
    %44 = vector.shape_cast %43 : vector<1x8x8x128xbf16> to vector<8x8x128xbf16>
    %45 = vector.shape_cast %44 : vector<8x8x128xbf16> to vector<64x128xbf16>
    %c6 = arith.constant 6 : index
    %c0_46 = arith.constant 0 : index
    %c0_47 = arith.constant 0 : index
    %46 = vector.load %arg3[%c6, %c0_46, %c0_47] : memref<9x128x128xbf16, #tpu.memory_space<vmem>>, vector<1x128x128xbf16>
    %47 = vector.shape_cast %46 : vector<1x128x128xbf16> to vector<128x128xbf16>
    %cst_48 = arith.constant dense<0.000000e+00> : vector<64x128xf32>
    %48 = tpu.matmul %45, %47, %cst_48 {dimension_numbers = #tpu.dot_dimension_numbers<[1], [0], [0], [1], [0, 0, 1, 1], [], []>} : vector<64x128xbf16>, vector<128x128xbf16>, vector<64x128xf32> -> vector<64x128xf32>
    %49 = arith.addf %42, %48 : vector<64x128xf32>
    %c0_49 = arith.constant 0 : index
    %c2_50 = arith.constant 2 : index
    %c1_51 = arith.constant 1 : index
    %c0_52 = arith.constant 0 : index
    %50 = vector.load %arg1[%c0_49, %c2_50, %c1_51, %c0_52] : memref<1x10x10x128xbf16, #tpu.memory_space<vmem>>, vector<1x8x8x128xbf16>
    %51 = vector.shape_cast %50 : vector<1x8x8x128xbf16> to vector<8x8x128xbf16>
    %52 = vector.shape_cast %51 : vector<8x8x128xbf16> to vector<64x128xbf16>
    %c7 = arith.constant 7 : index
    %c0_53 = arith.constant 0 : index
    %c0_54 = arith.constant 0 : index
    %53 = vector.load %arg3[%c7, %c0_53, %c0_54] : memref<9x128x128xbf16, #tpu.memory_space<vmem>>, vector<1x128x128xbf16>
    %54 = vector.shape_cast %53 : vector<1x128x128xbf16> to vector<128x128xbf16>
    %cst_55 = arith.constant dense<0.000000e+00> : vector<64x128xf32>
    %55 = tpu.matmul %52, %54, %cst_55 {dimension_numbers = #tpu.dot_dimension_numbers<[1], [0], [0], [1], [0, 0, 1, 1], [], []>} : vector<64x128xbf16>, vector<128x128xbf16>, vector<64x128xf32> -> vector<64x128xf32>
    %56 = arith.addf %49, %55 : vector<64x128xf32>
    %c0_56 = arith.constant 0 : index
    %c2_57 = arith.constant 2 : index
    %c2_58 = arith.constant 2 : index
    %c0_59 = arith.constant 0 : index
    %57 = vector.load %arg1[%c0_56, %c2_57, %c2_58, %c0_59] : memref<1x10x10x128xbf16, #tpu.memory_space<vmem>>, vector<1x8x8x128xbf16>
    %58 = vector.shape_cast %57 : vector<1x8x8x128xbf16> to vector<8x8x128xbf16>
    %59 = vector.shape_cast %58 : vector<8x8x128xbf16> to vector<64x128xbf16>
    %c8 = arith.constant 8 : index
    %c0_60 = arith.constant 0 : index
    %c0_61 = arith.constant 0 : index
    %60 = vector.load %arg3[%c8, %c0_60, %c0_61] : memref<9x128x128xbf16, #tpu.memory_space<vmem>>, vector<1x128x128xbf16>
    %61 = vector.shape_cast %60 : vector<1x128x128xbf16> to vector<128x128xbf16>
    %cst_62 = arith.constant dense<0.000000e+00> : vector<64x128xf32>
    %62 = tpu.matmul %59, %61, %cst_62 {dimension_numbers = #tpu.dot_dimension_numbers<[1], [0], [0], [1], [0, 0, 1, 1], [], []>} : vector<64x128xbf16>, vector<128x128xbf16>, vector<64x128xf32> -> vector<64x128xf32>
    %63 = arith.addf %56, %62 : vector<64x128xf32>
    %c0_63 = arith.constant 0 : index
    %c0_64 = arith.constant 0 : index
    %64 = vector.load %arg4[%c0_63, %c0_64] : memref<1x128xf32, #tpu.memory_space<vmem>>, vector<1x128xf32>
    %65 = vector.broadcast %64 : vector<1x128xf32> to vector<64x128xf32>
    %66 = arith.addf %63, %65 : vector<64x128xf32>
    %cst_65 = arith.constant 0.000000e+00 : f32
    %67 = vector.broadcast %cst_65 : f32 to vector<64x128xf32>
    %68 = arith.maximumf %66, %67 : vector<64x128xf32>
    %cst_66 = arith.constant 0.000000e+00 : f32
    %69 = vector.broadcast %cst_66 : f32 to vector<64x128xf32>
    %c0_67 = arith.constant 0 : index
    %c0_68 = arith.constant 0 : index
    %c0_69 = arith.constant 0 : index
    %c0_70 = arith.constant 0 : index
    %70 = vector.load %arg2[%c0_67, %c0_68, %c0_69, %c0_70] : memref<1x10x10x128xbf16, #tpu.memory_space<vmem>>, vector<1x8x8x128xbf16>
    %71 = vector.shape_cast %70 : vector<1x8x8x128xbf16> to vector<8x8x128xbf16>
    %72 = vector.shape_cast %71 : vector<8x8x128xbf16> to vector<64x128xbf16>
    %c0_71 = arith.constant 0 : index
    %c0_72 = arith.constant 0 : index
    %c0_73 = arith.constant 0 : index
    %73 = vector.load %arg3[%c0_71, %c0_72, %c0_73] : memref<9x128x128xbf16, #tpu.memory_space<vmem>>, vector<1x128x128xbf16>
    %74 = vector.shape_cast %73 : vector<1x128x128xbf16> to vector<128x128xbf16>
    %cst_74 = arith.constant dense<0.000000e+00> : vector<64x128xf32>
    %75 = tpu.matmul %72, %74, %cst_74 {dimension_numbers = #tpu.dot_dimension_numbers<[1], [0], [0], [1], [0, 0, 1, 1], [], []>} : vector<64x128xbf16>, vector<128x128xbf16>, vector<64x128xf32> -> vector<64x128xf32>
    %76 = arith.addf %69, %75 : vector<64x128xf32>
    %c0_75 = arith.constant 0 : index
    %c0_76 = arith.constant 0 : index
    %c1_77 = arith.constant 1 : index
    %c0_78 = arith.constant 0 : index
    %77 = vector.load %arg2[%c0_75, %c0_76, %c1_77, %c0_78] : memref<1x10x10x128xbf16, #tpu.memory_space<vmem>>, vector<1x8x8x128xbf16>
    %78 = vector.shape_cast %77 : vector<1x8x8x128xbf16> to vector<8x8x128xbf16>
    %79 = vector.shape_cast %78 : vector<8x8x128xbf16> to vector<64x128xbf16>
    %c1_79 = arith.constant 1 : index
    %c0_80 = arith.constant 0 : index
    %c0_81 = arith.constant 0 : index
    %80 = vector.load %arg3[%c1_79, %c0_80, %c0_81] : memref<9x128x128xbf16, #tpu.memory_space<vmem>>, vector<1x128x128xbf16>
    %81 = vector.shape_cast %80 : vector<1x128x128xbf16> to vector<128x128xbf16>
    %cst_82 = arith.constant dense<0.000000e+00> : vector<64x128xf32>
    %82 = tpu.matmul %79, %81, %cst_82 {dimension_numbers = #tpu.dot_dimension_numbers<[1], [0], [0], [1], [0, 0, 1, 1], [], []>} : vector<64x128xbf16>, vector<128x128xbf16>, vector<64x128xf32> -> vector<64x128xf32>
    %83 = arith.addf %76, %82 : vector<64x128xf32>
    %c0_83 = arith.constant 0 : index
    %c0_84 = arith.constant 0 : index
    %c2_85 = arith.constant 2 : index
    %c0_86 = arith.constant 0 : index
    %84 = vector.load %arg2[%c0_83, %c0_84, %c2_85, %c0_86] : memref<1x10x10x128xbf16, #tpu.memory_space<vmem>>, vector<1x8x8x128xbf16>
    %85 = vector.shape_cast %84 : vector<1x8x8x128xbf16> to vector<8x8x128xbf16>
    %86 = vector.shape_cast %85 : vector<8x8x128xbf16> to vector<64x128xbf16>
    %c2_87 = arith.constant 2 : index
    %c0_88 = arith.constant 0 : index
    %c0_89 = arith.constant 0 : index
    %87 = vector.load %arg3[%c2_87, %c0_88, %c0_89] : memref<9x128x128xbf16, #tpu.memory_space<vmem>>, vector<1x128x128xbf16>
    %88 = vector.shape_cast %87 : vector<1x128x128xbf16> to vector<128x128xbf16>
    %cst_90 = arith.constant dense<0.000000e+00> : vector<64x128xf32>
    %89 = tpu.matmul %86, %88, %cst_90 {dimension_numbers = #tpu.dot_dimension_numbers<[1], [0], [0], [1], [0, 0, 1, 1], [], []>} : vector<64x128xbf16>, vector<128x128xbf16>, vector<64x128xf32> -> vector<64x128xf32>
    %90 = arith.addf %83, %89 : vector<64x128xf32>
    %c0_91 = arith.constant 0 : index
    %c1_92 = arith.constant 1 : index
    %c0_93 = arith.constant 0 : index
    %c0_94 = arith.constant 0 : index
    %91 = vector.load %arg2[%c0_91, %c1_92, %c0_93, %c0_94] : memref<1x10x10x128xbf16, #tpu.memory_space<vmem>>, vector<1x8x8x128xbf16>
    %92 = vector.shape_cast %91 : vector<1x8x8x128xbf16> to vector<8x8x128xbf16>
    %93 = vector.shape_cast %92 : vector<8x8x128xbf16> to vector<64x128xbf16>
    %c3_95 = arith.constant 3 : index
    %c0_96 = arith.constant 0 : index
    %c0_97 = arith.constant 0 : index
    %94 = vector.load %arg3[%c3_95, %c0_96, %c0_97] : memref<9x128x128xbf16, #tpu.memory_space<vmem>>, vector<1x128x128xbf16>
    %95 = vector.shape_cast %94 : vector<1x128x128xbf16> to vector<128x128xbf16>
    %cst_98 = arith.constant dense<0.000000e+00> : vector<64x128xf32>
    %96 = tpu.matmul %93, %95, %cst_98 {dimension_numbers = #tpu.dot_dimension_numbers<[1], [0], [0], [1], [0, 0, 1, 1], [], []>} : vector<64x128xbf16>, vector<128x128xbf16>, vector<64x128xf32> -> vector<64x128xf32>
    %97 = arith.addf %90, %96 : vector<64x128xf32>
    %c0_99 = arith.constant 0 : index
    %c1_100 = arith.constant 1 : index
    %c1_101 = arith.constant 1 : index
    %c0_102 = arith.constant 0 : index
    %98 = vector.load %arg2[%c0_99, %c1_100, %c1_101, %c0_102] : memref<1x10x10x128xbf16, #tpu.memory_space<vmem>>, vector<1x8x8x128xbf16>
    %99 = vector.shape_cast %98 : vector<1x8x8x128xbf16> to vector<8x8x128xbf16>
    %100 = vector.shape_cast %99 : vector<8x8x128xbf16> to vector<64x128xbf16>
    %c4_103 = arith.constant 4 : index
    %c0_104 = arith.constant 0 : index
    %c0_105 = arith.constant 0 : index
    %101 = vector.load %arg3[%c4_103, %c0_104, %c0_105] : memref<9x128x128xbf16, #tpu.memory_space<vmem>>, vector<1x128x128xbf16>
    %102 = vector.shape_cast %101 : vector<1x128x128xbf16> to vector<128x128xbf16>
    %cst_106 = arith.constant dense<0.000000e+00> : vector<64x128xf32>
    %103 = tpu.matmul %100, %102, %cst_106 {dimension_numbers = #tpu.dot_dimension_numbers<[1], [0], [0], [1], [0, 0, 1, 1], [], []>} : vector<64x128xbf16>, vector<128x128xbf16>, vector<64x128xf32> -> vector<64x128xf32>
    %104 = arith.addf %97, %103 : vector<64x128xf32>
    %c0_107 = arith.constant 0 : index
    %c1_108 = arith.constant 1 : index
    %c2_109 = arith.constant 2 : index
    %c0_110 = arith.constant 0 : index
    %105 = vector.load %arg2[%c0_107, %c1_108, %c2_109, %c0_110] : memref<1x10x10x128xbf16, #tpu.memory_space<vmem>>, vector<1x8x8x128xbf16>
    %106 = vector.shape_cast %105 : vector<1x8x8x128xbf16> to vector<8x8x128xbf16>
    %107 = vector.shape_cast %106 : vector<8x8x128xbf16> to vector<64x128xbf16>
    %c5_111 = arith.constant 5 : index
    %c0_112 = arith.constant 0 : index
    %c0_113 = arith.constant 0 : index
    %108 = vector.load %arg3[%c5_111, %c0_112, %c0_113] : memref<9x128x128xbf16, #tpu.memory_space<vmem>>, vector<1x128x128xbf16>
    %109 = vector.shape_cast %108 : vector<1x128x128xbf16> to vector<128x128xbf16>
    %cst_114 = arith.constant dense<0.000000e+00> : vector<64x128xf32>
    %110 = tpu.matmul %107, %109, %cst_114 {dimension_numbers = #tpu.dot_dimension_numbers<[1], [0], [0], [1], [0, 0, 1, 1], [], []>} : vector<64x128xbf16>, vector<128x128xbf16>, vector<64x128xf32> -> vector<64x128xf32>
    %111 = arith.addf %104, %110 : vector<64x128xf32>
    %c0_115 = arith.constant 0 : index
    %c2_116 = arith.constant 2 : index
    %c0_117 = arith.constant 0 : index
    %c0_118 = arith.constant 0 : index
    %112 = vector.load %arg2[%c0_115, %c2_116, %c0_117, %c0_118] : memref<1x10x10x128xbf16, #tpu.memory_space<vmem>>, vector<1x8x8x128xbf16>
    %113 = vector.shape_cast %112 : vector<1x8x8x128xbf16> to vector<8x8x128xbf16>
    %114 = vector.shape_cast %113 : vector<8x8x128xbf16> to vector<64x128xbf16>
    %c6_119 = arith.constant 6 : index
    %c0_120 = arith.constant 0 : index
    %c0_121 = arith.constant 0 : index
    %115 = vector.load %arg3[%c6_119, %c0_120, %c0_121] : memref<9x128x128xbf16, #tpu.memory_space<vmem>>, vector<1x128x128xbf16>
    %116 = vector.shape_cast %115 : vector<1x128x128xbf16> to vector<128x128xbf16>
    %cst_122 = arith.constant dense<0.000000e+00> : vector<64x128xf32>
    %117 = tpu.matmul %114, %116, %cst_122 {dimension_numbers = #tpu.dot_dimension_numbers<[1], [0], [0], [1], [0, 0, 1, 1], [], []>} : vector<64x128xbf16>, vector<128x128xbf16>, vector<64x128xf32> -> vector<64x128xf32>
    %118 = arith.addf %111, %117 : vector<64x128xf32>
    %c0_123 = arith.constant 0 : index
    %c2_124 = arith.constant 2 : index
    %c1_125 = arith.constant 1 : index
    %c0_126 = arith.constant 0 : index
    %119 = vector.load %arg2[%c0_123, %c2_124, %c1_125, %c0_126] : memref<1x10x10x128xbf16, #tpu.memory_space<vmem>>, vector<1x8x8x128xbf16>
    %120 = vector.shape_cast %119 : vector<1x8x8x128xbf16> to vector<8x8x128xbf16>
    %121 = vector.shape_cast %120 : vector<8x8x128xbf16> to vector<64x128xbf16>
    %c7_127 = arith.constant 7 : index
    %c0_128 = arith.constant 0 : index
    %c0_129 = arith.constant 0 : index
    %122 = vector.load %arg3[%c7_127, %c0_128, %c0_129] : memref<9x128x128xbf16, #tpu.memory_space<vmem>>, vector<1x128x128xbf16>
    %123 = vector.shape_cast %122 : vector<1x128x128xbf16> to vector<128x128xbf16>
    %cst_130 = arith.constant dense<0.000000e+00> : vector<64x128xf32>
    %124 = tpu.matmul %121, %123, %cst_130 {dimension_numbers = #tpu.dot_dimension_numbers<[1], [0], [0], [1], [0, 0, 1, 1], [], []>} : vector<64x128xbf16>, vector<128x128xbf16>, vector<64x128xf32> -> vector<64x128xf32>
    %125 = arith.addf %118, %124 : vector<64x128xf32>
    %c0_131 = arith.constant 0 : index
    %c2_132 = arith.constant 2 : index
    %c2_133 = arith.constant 2 : index
    %c0_134 = arith.constant 0 : index
    %126 = vector.load %arg2[%c0_131, %c2_132, %c2_133, %c0_134] : memref<1x10x10x128xbf16, #tpu.memory_space<vmem>>, vector<1x8x8x128xbf16>
    %127 = vector.shape_cast %126 : vector<1x8x8x128xbf16> to vector<8x8x128xbf16>
    %128 = vector.shape_cast %127 : vector<8x8x128xbf16> to vector<64x128xbf16>
    %c8_135 = arith.constant 8 : index
    %c0_136 = arith.constant 0 : index
    %c0_137 = arith.constant 0 : index
    %129 = vector.load %arg3[%c8_135, %c0_136, %c0_137] : memref<9x128x128xbf16, #tpu.memory_space<vmem>>, vector<1x128x128xbf16>
    %130 = vector.shape_cast %129 : vector<1x128x128xbf16> to vector<128x128xbf16>
    %cst_138 = arith.constant dense<0.000000e+00> : vector<64x128xf32>
    %131 = tpu.matmul %128, %130, %cst_138 {dimension_numbers = #tpu.dot_dimension_numbers<[1], [0], [0], [1], [0, 0, 1, 1], [], []>} : vector<64x128xbf16>, vector<128x128xbf16>, vector<64x128xf32> -> vector<64x128xf32>
    %132 = arith.addf %125, %131 : vector<64x128xf32>
    %c0_139 = arith.constant 0 : index
    %c0_140 = arith.constant 0 : index
    %133 = vector.load %arg4[%c0_139, %c0_140] : memref<1x128xf32, #tpu.memory_space<vmem>>, vector<1x128xf32>
    %134 = vector.broadcast %133 : vector<1x128xf32> to vector<64x128xf32>
    %135 = arith.addf %132, %134 : vector<64x128xf32>
    %cst_141 = arith.constant 0.000000e+00 : f32
    %136 = vector.broadcast %cst_141 : f32 to vector<64x128xf32>
    %137 = arith.maximumf %135, %136 : vector<64x128xf32>
    %138 = arith.subf %68, %137 : vector<64x128xf32>
    %139 = arith.mulf %138, %138 : vector<64x128xf32>
    %cst_142 = arith.constant dense<0.000000e+00> : vector<128xf32>
    %140 = vector.multi_reduction <add>, %139, %cst_142 [0] : vector<64x128xf32> to vector<128xf32>
    %141 = vector.shape_cast %140 : vector<128xf32> to vector<1x128xf32>
    %142 = vector.shape_cast %141 : vector<1x128xf32> to vector<1x1x128xf32>
    %c0_143 = arith.constant 0 : index
    %c0_144 = arith.constant 0 : index
    %c0_145 = arith.constant 0 : index
    %143 = vector.load %arg5[%c0_143, %c0_144, %c0_145] : memref<1x1x128xf32, #tpu.memory_space<vmem>>, vector<1x1x128xf32>
    tpu.vector_store %arg5[%c0_143, %c0_144, %c0_145], %142 {strides = array<i32>} : memref<1x1x128xf32, #tpu.memory_space<vmem>>, vector<1x1x128xf32>,
    return
  }
  func.func @transform_0(%arg0: i32) -> (i32, i32, i32, i32) {
    %c0_i32 = arith.constant 0 : i32
    %c0_i32_0 = arith.constant 0 : i32
    %c0_i32_1 = arith.constant 0 : i32
    %c0_i32_2 = arith.constant 0 : i32
    return %arg0, %c0_i32, %c0_i32_0, %c0_i32_1 : i32, i32, i32, i32
  }
  func.func @transform_1(%arg0: i32) -> (i32, i32, i32, i32) {
    %c0_i32 = arith.constant 0 : i32
    %c0_i32_0 = arith.constant 0 : i32
    %c0_i32_1 = arith.constant 0 : i32
    %c0_i32_2 = arith.constant 0 : i32
    return %arg0, %c0_i32, %c0_i32_0, %c0_i32_1 : i32, i32, i32, i32
  }
  func.func @transform_2(%arg0: i32) -> (i32, i32, i32) {
    %c0_i32 = arith.constant 0 : i32
    %c0_i32_0 = arith.constant 0 : i32
    %c0_i32_1 = arith.constant 0 : i32
    %c0_i32_2 = arith.constant 0 : i32
    return %c0_i32, %c0_i32_0, %c0_i32_1 : i32, i32, i32
  }
  func.func @transform_3(%arg0: i32) -> (i32, i32) {
    %c0_i32 = arith.constant 0 : i32
    %c0_i32_0 = arith.constant 0 : i32
    %c0_i32_1 = arith.constant 0 : i32
    return %c0_i32, %c0_i32_0 : i32, i32
  }
  func.func @transform_4(%arg0: i32) -> (i32, i32, i32) {
    %c0_i32 = arith.constant 0 : i32
    %c0_i32_0 = arith.constant 0 : i32
    %c0_i32_1 = arith.constant 0 : i32
    return %arg0, %c0_i32, %c0_i32_0 : i32, i32, i32
  }
}

module attributes {stable_mosaic.version = 11 : i64} {
  func.func @_tv_kernel(%arg0: i32, %arg1: memref<1x3x16x16xf32, #tpu.memory_space<vmem>>, %arg2: memref<1x1x1xf32, #tpu.memory_space<vmem>>, %arg3: memref<1x1x1xf32, #tpu.memory_space<vmem>>) attributes {dimension_semantics = [#tpu.dimension_semantics<parallel>], iteration_bounds = array<i64: 2>, scalar_prefetch = 0 : i64, scratch_operands = 0 : i64, tpu.core_type = #tpu.core_type<tc>, window_params = [{transform_indices = @transform_0, window_bounds = array<i64: 1, 3, 16, 16>}, {transform_indices = @transform_1, window_bounds = array<i64: 1, 1, 1>}, {transform_indices = @transform_2, window_bounds = array<i64: 1, 1, 1>}]} {
    %c0 = arith.constant 0 : index
    %c0_0 = arith.constant 0 : index
    %c0_1 = arith.constant 0 : index
    %c0_2 = arith.constant 0 : index
    %0 = vector.load %arg1[%c0, %c0_0, %c0_1, %c0_2] : memref<1x3x16x16xf32, #tpu.memory_space<vmem>>, vector<1x3x16x16xf32>
    %1 = vector.shape_cast %0 : vector<1x3x16x16xf32> to vector<3x16x16xf32>
    %2 = vector.extract_strided_slice %1 {offsets = [0, 1, 0], sizes = [3, 15, 16], strides = [1, 1, 1]} : vector<3x16x16xf32> to vector<3x15x16xf32>
    %3 = vector.extract_strided_slice %1 {offsets = [0, 0, 0], sizes = [3, 15, 16], strides = [1, 1, 1]} : vector<3x16x16xf32> to vector<3x15x16xf32>
    %4 = arith.subf %2, %3 : vector<3x15x16xf32>
    %5 = vector.extract_strided_slice %1 {offsets = [0, 0, 1], sizes = [3, 16, 15], strides = [1, 1, 1]} : vector<3x16x16xf32> to vector<3x16x15xf32>
    %6 = vector.extract_strided_slice %1 {offsets = [0, 0, 0], sizes = [3, 16, 15], strides = [1, 1, 1]} : vector<3x16x16xf32> to vector<3x16x15xf32>
    %7 = arith.subf %5, %6 : vector<3x16x15xf32>
    %8 = arith.mulf %4, %4 : vector<3x15x16xf32>
    %9 = vector.shape_cast %8 : vector<3x15x16xf32> to vector<1x3x15x16xf32>
    %cst = arith.constant dense<0.000000e+00> : vector<1xf32>
    %10 = vector.multi_reduction <add>, %9, %cst [1, 2, 3] : vector<1x3x15x16xf32> to vector<1xf32>
    %11 = vector.shape_cast %10 : vector<1xf32> to vector<1x1x1x1xf32>
    %12 = vector.extract %11[0, 0, 0, 0] : f32 from vector<1x1x1x1xf32>
    %13 = vector.broadcast %12 : f32 to vector<1x1x1xf32>
    %c0_3 = arith.constant 0 : index
    %c0_4 = arith.constant 0 : index
    %c0_5 = arith.constant 0 : index
    %14 = vector.load %arg2[%c0_3, %c0_4, %c0_5] : memref<1x1x1xf32, #tpu.memory_space<vmem>>, vector<1x1x1xf32>
    tpu.vector_store %arg2[%c0_3, %c0_4, %c0_5], %13 {strides = array<i32>} : memref<1x1x1xf32, #tpu.memory_space<vmem>>, vector<1x1x1xf32>,
    %15 = arith.mulf %7, %7 : vector<3x16x15xf32>
    %16 = vector.shape_cast %15 : vector<3x16x15xf32> to vector<1x3x16x15xf32>
    %cst_6 = arith.constant dense<0.000000e+00> : vector<1xf32>
    %17 = vector.multi_reduction <add>, %16, %cst_6 [1, 2, 3] : vector<1x3x16x15xf32> to vector<1xf32>
    %18 = vector.shape_cast %17 : vector<1xf32> to vector<1x1x1x1xf32>
    %19 = vector.extract %18[0, 0, 0, 0] : f32 from vector<1x1x1x1xf32>
    %20 = vector.broadcast %19 : f32 to vector<1x1x1xf32>
    %c0_7 = arith.constant 0 : index
    %c0_8 = arith.constant 0 : index
    %c0_9 = arith.constant 0 : index
    %21 = vector.load %arg3[%c0_7, %c0_8, %c0_9] : memref<1x1x1xf32, #tpu.memory_space<vmem>>, vector<1x1x1xf32>
    tpu.vector_store %arg3[%c0_7, %c0_8, %c0_9], %20 {strides = array<i32>} : memref<1x1x1xf32, #tpu.memory_space<vmem>>, vector<1x1x1xf32>,
    return
  }
  func.func @transform_0(%arg0: i32) -> (i32, i32, i32, i32) {
    %c0_i32 = arith.constant 0 : i32
    %c0_i32_0 = arith.constant 0 : i32
    %c0_i32_1 = arith.constant 0 : i32
    %c0_i32_2 = arith.constant 0 : i32
    return %arg0, %c0_i32, %c0_i32_0, %c0_i32_1 : i32, i32, i32, i32
  }
  func.func @transform_1(%arg0: i32) -> (i32, i32, i32) {
    %c0_i32 = arith.constant 0 : i32
    %c0_i32_0 = arith.constant 0 : i32
    %c0_i32_1 = arith.constant 0 : i32
    return %arg0, %c0_i32, %c0_i32_0 : i32, i32, i32
  }
  func.func @transform_2(%arg0: i32) -> (i32, i32, i32) {
    %c0_i32 = arith.constant 0 : i32
    %c0_i32_0 = arith.constant 0 : i32
    %c0_i32_1 = arith.constant 0 : i32
    return %arg0, %c0_i32, %c0_i32_0 : i32, i32, i32
  }
}

</mosaic_0001>

<llo_original>
// kernel: generator_loss.11
$region0: #{generator_loss.11}
  #allocation0 [shape = 'u32[]', space=smem, size = 0x4, offset = 0x4, fixed_abs, tag = 'smem constant byte address 0x4 - core index']
  #allocation1 [shape = 'u32[144,128]{1,0:T(1,128)}', space=vmem, size = 0x12000, scoped, tag = 'internal scratch']
  %s0 = inlined_call_operand.vmem [shape: bf16[2,16,16,27], index: 0, kind: input, shape index: {}]
  %s1 = inlined_call_operand.vmem [shape: bf16[27,64], index: 1, kind: input, shape index: {}]
  %s2 = inlined_call_operand.vmem [shape: f32[1,64], index: 2, kind: input, shape index: {}]
  %s3 = inlined_call_operand.vmem [shape: bf16[2,16,16,64], index: 3, kind: output, shape index: {}]
  %s4 = sld [smem:[#allocation0]]
  $region45: #{generator_loss.11} parent=0
    _
  %s6 = ssub.s32 1, %s4
  %s7 = scalar_select 0, %s6, %s4
  loop: start=0, step=1, limit=4
  $region2: #{generator_loss.11} parent=0 // loop_pre_header
    _
  $region3: #{generator_loss.11} parent=0 // loop_header
    %s9 = sphi 0, %s13
    %p10 = scmp.ge.s32.totalorder %s9, 4
    %s16 = sphi 0, %s28
    %s17 = sphi 0, %s24
    %s18 = sphi 0, %s16
    %s19 = sphi 0, %s17
    %s20 = sphi 0, %s18
    %s21 = sphi 0, %s19
    %s33 = sphi 0, %s35
    %s36 = sphi 0, %s33
    %s37 = sphi 0, %s36
    %s53 = sphi 0, %s37
    %s57 = sphi 0, %s57
    %s59 = sphi 0, %s57
    %s60 = sphi 0, %s59
    %s74 = sphi 0, %s60
    %s78 = sphi 0, %s78
    %s80 = sphi 0, %s78
    %s81 = sphi 0, %s80
    %s95 = sphi 0, %s81
    %s103 = sphi 0, %s105
    %s106 = sphi 0, %s103
    %s107 = sphi 0, %s106
    %s123 = sphi 0, %s107
  $region4: #{generator_loss.11} parent=0 // loop_header_branch
    %12 = sbr.rel (%p10) target = $region8
  $region5: #{generator_loss.11} parent=0 // loop_body
    %s14 = ssub.s32 %s9, 1
    %s15 = ssub.s32 %s9, 2
    %s22 = sadd.s32 1, %s17
    %p23 = scmp.ge.s32.totalorder %s22, 1
    %s24 = scalar_select %p23, 0, %s22
    %s25 = sadd.s32 1, %s16
    %s26 = scalar_select %p23, %s25, %s16
    %p27 = scmp.ge.s32.totalorder %s26, 2
    %s28 = scalar_select %p27, 0, %s26
    %s29 = ssub.s32 %s16, %s28
    %s30 = ssub.s32 %s17, %s24
    %s31 = sor.u32 %s29, %s30
    %p32 = scmp.eq.s32.totalorder %s31, 0
    %s34 = sadd.s32 %s33, 1
    %s35 = scalar_select %p32, %s33, %s34
    %p38 = pneg %p32
    %p39 = scmp.eq.s32.totalorder %s9, 1
    %p40 = por %p38, %p39
    %p41 = scmp.ne.s32.totalorder %s33, %s36
    %p42 = scmp.eq.s32.totalorder %s9, 0
    %p43 = por %p41, %p42
    %p44 = scmp.ne.s32.totalorder %s33, %s36
    %p45 = scmp.eq.s32.totalorder %s14, 1
    %p46 = por %p44, %p45
    %p47 = scmp.ne.s32.totalorder %s36, %s37
    %p48 = scmp.eq.s32.totalorder %s14, 0
    %p49 = por %p47, %p48
    %p50 = scmp.ne.s32.totalorder %s36, %s37
    %p51 = scmp.eq.s32.totalorder %s15, 1
    %p52 = por %p50, %p51
    %p54 = scmp.ne.s32.totalorder %s37, %s53
    %p55 = scmp.eq.s32.totalorder %s15, 0
    %p56 = por %p54, %p55
    %s58 = sadd.s32 %s57, 1
    %p61 = scmp.eq.s32.totalorder %s9, 1
    %p62 = scmp.ne.s32.totalorder %s57, %s59
    %p63 = scmp.eq.s32.totalorder %s9, 0
    %p64 = por %p62, %p63
    %p65 = scmp.ne.s32.totalorder %s57, %s59
    %p66 = scmp.eq.s32.totalorder %s14, 1
    %p67 = por %p65, %p66
    %p68 = scmp.ne.s32.totalorder %s59, %s60
    %p69 = scmp.eq.s32.totalorder %s14, 0
    %p70 = por %p68, %p69
    %p71 = scmp.ne.s32.totalorder %s59, %s60
    %p72 = scmp.eq.s32.totalorder %s15, 1
    %p73 = por %p71, %p72
    %p75 = scmp.ne.s32.totalorder %s60, %s74
    %p76 = scmp.eq.s32.totalorder %s15, 0
    %p77 = por %p75, %p76
    %s79 = sadd.s32 %s78, 1
    %p82 = scmp.eq.s32.totalorder %s9, 1
    %p83 = scmp.ne.s32.totalorder %s78, %s80
    %p84 = scmp.eq.s32.totalorder %s9, 0
    %p85 = por %p83, %p84
    %p86 = scmp.ne.s32.totalorder %s78, %s80
    %p87 = scmp.eq.s32.totalorder %s14, 1
    %p88 = por %p86, %p87
    %p89 = scmp.ne.s32.totalorder %s80, %s81
    %p90 = scmp.eq.s32.totalorder %s14, 0
    %p91 = por %p89, %p90
    %p92 = scmp.ne.s32.totalorder %s80, %s81
    %p93 = scmp.eq.s32.totalorder %s15, 1
    %p94 = por %p92, %p93
    %p96 = scmp.ne.s32.totalorder %s81, %s95
    %p97 = scmp.eq.s32.totalorder %s15, 0
    %p98 = por %p96, %p97
    %s99 = ssub.s32 %s16, %s28
    %s100 = ssub.s32 %s17, %s24
    %s101 = sor.u32 %s99, %s100
    %p102 = scmp.eq.s32.totalorder %s101, 0
    %s104 = sadd.s32 %s103, 1
    %s105 = scalar_select %p102, %s103, %s104
    %p108 = pneg %p102
    %p109 = scmp.eq.s32.totalorder %s9, 1
    %p110 = por %p108, %p109
    %p111 = scmp.ne.s32.totalorder %s103, %s106
    %p112 = scmp.eq.s32.totalorder %s9, 0
    %p113 = por %p111, %p112
    %p114 = scmp.ne.s32.totalorder %s103, %s106
    %p115 = scmp.eq.s32.totalorder %s14, 1
    %p116 = por %p114, %p115
    %p117 = scmp.ne.s32.totalorder %s106, %s107
    %p118 = scmp.eq.s32.totalorder %s14, 0
    %p119 = por %p117, %p118
    %p120 = scmp.ne.s32.totalorder %s106, %s107
    %p121 = scmp.eq.s32.totalorder %s15, 1
    %p122 = por %p120, %p121
    %p124 = scmp.ne.s32.totalorder %s107, %s123
    %p125 = scmp.eq.s32.totalorder %s15, 0
    %p126 = por %p124, %p125
    %p127 = scmp.le.s32.totalorder 1, %s9
    %p128 = scmp.lt.s32.totalorder %s9, 3
    %p129 = pnand %p127, %p128
    %p130 = pneg %p129
    // Predicated region
    $region9: #{generator_loss.11} parent=5 // pred_check
      _
    $region10: #{generator_loss.11} parent=5 // pred_check_branch
      %132 = sbr.rel (%p129) target = $region12
    $region11: #{generator_loss.11} parent=5 // pred_region
      %s133 = ssub.s32 %s9, 1
      // Predicated region
      $region13: #{generator_loss.11} parent=11 // pred_check
        %p134 = pneg %p70
      $region14: #{generator_loss.11} parent=11 // pred_check_branch
        %136 = sbr.rel (%p134) target = $region16
      $region15: #{generator_loss.11} parent=11 // pred_region
        _
      $region16: #{generator_loss.11} parent=11 // pred_fallthru
        _
      // Predicated region
      $region17: #{generator_loss.11} parent=11 // pred_check
        %p137 = pneg %p91
      $region18: #{generator_loss.11} parent=11 // pred_check_branch
        %139 = sbr.rel (%p137) target = $region20
      $region19: #{generator_loss.11} parent=11 // pred_region
        _
      $region20: #{generator_loss.11} parent=11 // pred_fallthru
        _
    $region12: #{generator_loss.11} parent=5 // pred_fallthru
      _
    %p140 = scmp.lt.s32.totalorder %s9, 2
    // Predicated region
    $region21: #{generator_loss.11} parent=5 // pred_check
      %p141 = pneg %p140
    $region22: #{generator_loss.11} parent=5 // pred_check_branch
      %143 = sbr.rel (%p141) target = $region24
    $region23: #{generator_loss.11} parent=5 // pred_region
      // Predicated region
      $region25: #{generator_loss.11} parent=23 // pred_check
        %p144 = pneg %p43
      $region26: #{generator_loss.11} parent=23 // pred_check_branch
        %146 = sbr.rel (%p144) target = $region28
      $region27: #{generator_loss.11} parent=23 // pred_region
        %s147 = smul.u32 16, %s17
        %p148 = scmp.lt.s32.totalorder %s16, 1
        %s149 = scalar_select %p148, %s16, 1
        %p150 = scmp.lt.s32.totalorder %s147, 15
        %s151 = scalar_select %p150, %s147, 15
        %s152 = smul.addr %s151, 2
        %s153 = smul.addr %s149, 32
        %s154 = sadd.s32 %s152, %s153
        %s155 = smul.addr %s154, 4
        %s156 = scalar_lea.vmem %s0, %s155
        %s157 = smul.u32 16, %s17
      $region28: #{generator_loss.11} parent=23 // pred_fallthru
        _
    $region24: #{generator_loss.11} parent=5 // pred_fallthru
      _
    %p158 = scmp.le.s32.totalorder 1, %s9
    %p159 = scmp.lt.s32.totalorder %s9, 3
    %p160 = pnand %p158, %p159
    %p161 = pneg %p160
    // Predicated region
    $region29: #{generator_loss.11} parent=5 // pred_check
      _
    $region30: #{generator_loss.11} parent=5 // pred_check_branch
      %163 = sbr.rel (%p160) target = $region32
    $region31: #{generator_loss.11} parent=5 // pred_region
      %s164 = ssub.s32 %s9, 1
      %s165 = smul.u32 16, %s19
      %p166 = scmp.lt.s32.totalorder %s18, 1
      %s167 = scalar_select %p166, %s18, 1
      %p168 = scmp.lt.s32.totalorder %s165, 15
      %s169 = scalar_select %p168, %s165, 15
      %s170 = smul.addr %s169, 2
      %s171 = smul.addr %s167, 32
      %s172 = sadd.s32 %s170, %s171
      %s173 = smul.addr %s172, 4
      %s174 = scalar_lea.vmem %s0, %s173
      %p175 = pneg %p49
      %p176 = pneg %p46
      %p177 = pneg %p70
      %p178 = pneg %p67
      %p179 = pneg %p91
      %p180 = pneg %p88
      %p181 = pneg %p119
      %p182 = pneg %p116
      %s183 = smul.u32 16, %s19
      %p184 = scmp.lt.s32.totalorder %s18, 1
      %s185 = scalar_select %p184, %s18, 1
      %p186 = scmp.lt.s32.totalorder %s183, 15
      %s187 = scalar_select %p186, %s183, 15
      %s188 = smul.addr %s187, 2
      %s189 = smul.addr %s185, 32
      %s190 = sadd.s32 %s188, %s189
      %s191 = smul.addr %s190, 4
      %s192 = scalar_lea.vmem %s3, %s191
      %s193 = smul.u32 16, %s19
      %p194 = scmp.lt.s32.totalorder %s18, 1
      %s195 = scalar_select %p194, %s18, 1
      %p196 = scmp.lt.s32.totalorder %s193, 15
      %s197 = scalar_select %p196, %s193, 15
      %s198 = smul.addr %s197, 2
      %s199 = smul.addr %s195, 32
      %s200 = sadd.s32 %s198, %s199
      %s201 = smul.addr %s200, 4
      %s202 = scalar_lea.vmem %s0, %s201
      %s203 = smul.u32 16, %s19
      %s204 = smul.u32 16, %s19
      %p205 = scmp.lt.s32.totalorder %s18, 1
      %s206 = scalar_select %p205, %s18, 1
      %p207 = scmp.lt.s32.totalorder %s204, 15
      %s208 = scalar_select %p207, %s204, 15
      %s209 = smul.addr %s208, 2
      %s210 = smul.addr %s206, 32
      %s211 = sadd.s32 %s209, %s210
      %s212 = smul.addr %s211, 4
      %s213 = scalar_lea.vmem %s3, %s212
      %s214 = smul.u32 16, %s19
      %v216 = vld [vmem:[%s202] sm:$0xf]
      %v217 = vld [vmem:[%s202 + $0x4] sm:$0xf]
      %v218 = vld [vmem:[%s202 + $0x8] sm:$0xf]
      %v219 = vld [vmem:[%s202 + $0xc] sm:$0xf]
      %v220 = vld [vmem:[%s202 + $0x10] sm:$0xf]
      %v221 = vld [vmem:[%s202 + $0x14] sm:$0xf]
      %v222 = vld [vmem:[%s202 + $0x18] sm:$0xf]
      %v223 = vld [vmem:[%s202 + $0x1c] sm:$0xf]
      %v224 = vld [vmem:[%s202 + $0x20] sm:$0xf]
      %v225 = vld [vmem:[%s202 + $0x24] sm:$0xf]
      %v226 = vld [vmem:[%s202 + $0x28] sm:$0xf]
      %v227 = vld [vmem:[%s202 + $0x2c] sm:$0xf]
      %v228 = vld [vmem:[%s202 + $0x30] sm:$0xf]
      %v229 = vld [vmem:[%s202 + $0x34] sm:$0xf]
      %v230 = vld [vmem:[%s202 + $0x38] sm:$0xf]
      %v231 = vld [vmem:[%s202 + $0x3c] sm:$0xf]
      %v232 = vld [vmem:[%s202 + $0x40] sm:$0xf]
      %v233 = vld [vmem:[%s202 + $0x44] sm:$0xf]
      %v234 = vld [vmem:[%s202 + $0x48] sm:$0xf]
      %v235 = vld [vmem:[%s202 + $0x4c] sm:$0xf]
      %v236 = vld [vmem:[%s202 + $0x50] sm:$0xf]
      %v237 = vld [vmem:[%s202 + $0x54] sm:$0xf]
      %v238 = vld [vmem:[%s202 + $0x58] sm:$0xf]
      %v239 = vld [vmem:[%s202 + $0x5c] sm:$0xf]
      %v240 = vld [vmem:[%s202 + $0x60] sm:$0xf]
      %v241 = vld [vmem:[%s202 + $0x64] sm:$0xf]
      %v242 = vld [vmem:[%s202 + $0x68] sm:$0xf]
      %v243 = vld [vmem:[%s202 + $0x6c] sm:$0xf]
      %v244 = vld [vmem:[%s202 + $0x70] sm:$0xf]
      %v245 = vld [vmem:[%s202 + $0x74] sm:$0xf]
      %v246 = vld [vmem:[%s202 + $0x78] sm:$0xf]
      %v247 = vld [vmem:[%s202 + $0x7c] sm:$0xf]
      %v248 = vld [vmem:[%s1] sm:$0xf]
      %v249 = vld [vmem:[%s1 + $0x4] sm:$0xf]
      %v250 = vld [vmem:[%s1 + $0x8] sm:$0xf]
      %v251 = vld [vmem:[%s1 + $0xc] sm:$0x3]
      %v252 = vld [vmem:[%s2] sm:$0x1]
      %v254 = vlaneseq
      %v255 = vshrl.u32 %v254, 7
      %v256 = vsub.s32 0, %v255
      %v257 = vrot.slane %v252, %v256
      %v291 = vunpack.c.l.b16 %v216
      %v292 = vunpack.c.l.b16 %v217
      %v293 = vunpack.c.l.b16 %v218
      %v294 = vunpack.c.l.b16 %v219
      %v295 = vunpack.c.l.b16 %v220
      %v296 = vunpack.c.l.b16 %v221
      %v297 = vunpack.c.l.b16 %v222
      %v298 = vunpack.c.l.b16 %v223
      %v299 = vunpack.c.l.b16 %v224
      %v300 = vunpack.c.l.b16 %v225
      %v301 = vunpack.c.l.b16 %v226
      %v302 = vunpack.c.l.b16 %v227
      %v303 = vunpack.c.l.b16 %v228
      %v304 = vunpack.c.l.b16 %v229
      %v305 = vunpack.c.l.b16 %v230
      %v306 = vunpack.c.l.b16 %v231
      %v307 = vunpack.c.l.b16 %v232
      %v308 = vunpack.c.l.b16 %v233
      %v309 = vunpack.c.l.b16 %v234
      %v310 = vunpack.c.l.b16 %v235
      %v311 = vunpack.c.l.b16 %v236
      %v312 = vunpack.c.l.b16 %v237
      %v313 = vunpack.c.l.b16 %v238
      %v314 = vunpack.c.l.b16 %v239
      %v315 = vunpack.c.l.b16 %v240
      %v316 = vunpack.c.l.b16 %v241
      %v317 = vunpack.c.l.b16 %v242
      %v318 = vunpack.c.l.b16 %v243
      %v319 = vunpack.c.l.b16 %v244
      %v320 = vunpack.c.l.b16 %v245
      %v321 = vunpack.c.l.b16 %v246
      %v322 = vunpack.c.l.b16 %v247
      %v323 = vpack.c.b16 %v292, %v291
      %v324 = vpack.c.b16 %v294, %v293
      %v325 = vpack.c.b16 %v296, %v295
      %v326 = vpack.c.b16 %v298, %v297
      %v327 = vpack.c.b16 %v300, %v299
      %v328 = vpack.c.b16 %v302, %v301
      %v329 = vpack.c.b16 %v304, %v303
      %v330 = vpack.c.b16 %v306, %v305
      %v331 = vpack.c.b16 %v308, %v307
      %v332 = vpack.c.b16 %v310, %v309
      %v333 = vpack.c.b16 %v312, %v311
      %v334 = vpack.c.b16 %v314, %v313
      %v335 = vpack.c.b16 %v316, %v315
      %v336 = vpack.c.b16 %v318, %v317
      %v337 = vpack.c.b16 %v320, %v319
      %v338 = vpack.c.b16 %v322, %v321
      %v343 = vunpack.c.l.b16 %v248
      %v344 = vunpack.c.l.b16 %v249
      %v345 = vunpack.c.l.b16 %v250
      %v346 = vunpack.c.l.b16 %v251
      %v347 = vpack.c.b16 %v344, %v343
      %v348 = vpack.c.b16 %v346, %v345
      %vm350 = vcmask 220160
      %v352 = vsel %vm350, %v323, 0
      %v355 = vsel %vm350, %v324, 0
      %v358 = vsel %vm350, %v325, 0
      %v361 = vsel %vm350, %v326, 0
      %v364 = vsel %vm350, %v327, 0
      %v367 = vsel %vm350, %v328, 0
      %v370 = vsel %vm350, %v329, 0
      %v373 = vsel %vm350, %v330, 0
      %v376 = vsel %vm350, %v331, 0
      %v379 = vsel %vm350, %v332, 0
      %v382 = vsel %vm350, %v333, 0
      %v385 = vsel %vm350, %v334, 0
      %v388 = vsel %vm350, %v335, 0
      %v391 = vsel %vm350, %v336, 0
      %v394 = vsel %vm350, %v337, 0
      %v397 = vsel %vm350, %v338, 0
      %vm399 = vcmask 1044480
      %vm400 = vcmask 1045504
      %v401 = vsel %vm399, 4294967295, 65535
      %v402 = vsel %vm400, %v401, 0
      %v404 = vand.u32 %v348, %v402
      %406 = vmatprep.subr.bf16.mxu0 0
      %407 = vmatpush1.bf16.msra.mxu0 %v347
      %408 = vmatprep.subr.bf16.mxu0 0
      %409 = vmatpush1.bf16.msra.mxu0 %v404
      %410 = vmatprep.subr.bf16.mxu0 0
      %411 = vmatpush1.bf16.msra.mxu0 0
      %412 = vmatprep.subr.bf16.mxu0 0
      %413 = vmatpush1.bf16.msra.mxu0 0
      %414 = vmatprep.subr.bf16.mxu0 0
      %415 = vmatpush1.bf16.msra.mxu0 0
      %416 = vmatprep.subr.bf16.mxu0 0
      %417 = vmatpush1.bf16.msra.mxu0 0
      %418 = vmatprep.subr.bf16.mxu0 0
      %419 = vmatpush1.bf16.msra.mxu0 0
      %420 = vmatprep.subr.bf16.mxu0 0
      %421 = vmatpush1.bf16.msra.mxu0 0
      %422 = vmatprep.subr.bf16.mxu0 0
      %423 = vmatpush1.bf16.msra.mxu0 0
      %424 = vmatprep.subr.bf16.mxu0 0
      %425 = vmatpush1.bf16.msra.mxu0 0
      %426 = vmatprep.subr.bf16.mxu0 0
      %427 = vmatpush1.bf16.msra.mxu0 0
      %428 = vmatprep.subr.bf16.mxu0 0
      %429 = vmatpush1.bf16.msra.mxu0 0
      %430 = vmatprep.subr.bf16.mxu0 0
      %431 = vmatpush1.bf16.msra.mxu0 0
      %432 = vmatprep.subr.bf16.mxu0 0
      %433 = vmatpush1.bf16.msra.mxu0 0
      %434 = vmatprep.subr.bf16.mxu0 0
      %435 = vmatpush1.bf16.msra.mxu0 0
      %436 = vmatprep.subr.bf16.mxu0 0
      %437 = vmatpush1.bf16.msra.mxu0 0
      %438 = vmatprep.mubr.bf16.mxu0 0
      %439 = vmatmul.mubr.bf16.gmra.mrb[0].mxu0 %v352
      %v440 = vpop.f32.mrb[0].mxu0
      %v441 = vadd.f32 %v257, %v440
      %v442 = vpop.f32.mrb[0].mxu0
      %v443 = vpop.f32.mrb[0].mxu0
      %v444 = vadd.f32 %v257, %v443
      %v445 = vpop.f32.mrb[0].mxu0
      %446 = vmatprep.mubr.bf16.mxu0 0
      %447 = vmatmul.mubr.bf16.gmra.mrb[0].mxu0 %v355
      %v448 = vpop.f32.mrb[0].mxu0
      %v449 = vadd.f32 %v257, %v448
      %v450 = vpop.f32.mrb[0].mxu0
      %v451 = vpop.f32.mrb[0].mxu0
      %v452 = vadd.f32 %v257, %v451
      %v453 = vpop.f32.mrb[0].mxu0
      %454 = vmatprep.mubr.bf16.mxu0 0
      %455 = vmatmul.mubr.bf16.gmra.mrb[0].mxu0 %v358
      %v456 = vpop.f32.mrb[0].mxu0
      %v457 = vadd.f32 %v257, %v456
      %v458 = vpop.f32.mrb[0].mxu0
      %v459 = vpop.f32.mrb[0].mxu0
      %v460 = vadd.f32 %v257, %v459
      %v461 = vpop.f32.mrb[0].mxu0
      %462 = vmatprep.mubr.bf16.mxu0 0
      %463 = vmatmul.mubr.bf16.gmra.mrb[0].mxu0 %v361
      %v464 = vpop.f32.mrb[0].mxu0
      %v465 = vadd.f32 %v257, %v464
      %v466 = vpop.f32.mrb[0].mxu0
      %v467 = vpop.f32.mrb[0].mxu0
      %v468 = vadd.f32 %v257, %v467
      %v469 = vpop.f32.mrb[0].mxu0
      %470 = vmatprep.mubr.bf16.mxu0 0
      %471 = vmatmul.mubr.bf16.gmra.mrb[0].mxu0 %v364
      %v472 = vpop.f32.mrb[0].mxu0
      %v473 = vadd.f32 %v257, %v472
      %v474 = vpop.f32.mrb[0].mxu0
      %v475 = vpop.f32.mrb[0].mxu0
      %v476 = vadd.f32 %v257, %v475
      %v477 = vpop.f32.mrb[0].mxu0
      %478 = vmatprep.mubr.bf16.mxu0 0
      %479 = vmatmul.mubr.bf16.gmra.mrb[0].mxu0 %v367
      %v480 = vpop.f32.mrb[0].mxu0
      %v481 = vadd.f32 %v257, %v480
      %v482 = vpop.f32.mrb[0].mxu0
      %v483 = vpop.f32.mrb[0].mxu0
      %v484 = vadd.f32 %v257, %v483
      %v485 = vpop.f32.mrb[0].mxu0
      %486 = vmatprep.mubr.bf16.mxu0 0
      %487 = vmatmul.mubr.bf16.gmra.mrb[0].mxu0 %v370
      %v488 = vpop.f32.mrb[0].mxu0
      %v489 = vadd.f32 %v257, %v488
      %v490 = vpop.f32.mrb[0].mxu0
      %v491 = vpop.f32.mrb[0].mxu0
      %v492 = vadd.f32 %v257, %v491
      %v493 = vpop.f32.mrb[0].mxu0
      %494 = vmatprep.mubr.bf16.mxu0 0
      %495 = vmatmul.mubr.bf16.gmra.mrb[0].mxu0 %v373
      %v496 = vpop.f32.mrb[0].mxu0
      %v497 = vadd.f32 %v257, %v496
      %v498 = vpop.f32.mrb[0].mxu0
      %v499 = vpop.f32.mrb[0].mxu0
      %v500 = vadd.f32 %v257, %v499
      %v501 = vpop.f32.mrb[0].mxu0
      %502 = vmatprep.mubr.bf16.mxu0 0
      %503 = vmatmul.mubr.bf16.gmra.mrb[0].mxu0 %v376
      %v504 = vpop.f32.mrb[0].mxu0
      %v505 = vadd.f32 %v257, %v504
      %v506 = vpop.f32.mrb[0].mxu0
      %v507 = vpop.f32.mrb[0].mxu0
      %v508 = vadd.f32 %v257, %v507
      %v509 = vpop.f32.mrb[0].mxu0
      %510 = vmatprep.mubr.bf16.mxu0 0
      %511 = vmatmul.mubr.bf16.gmra.mrb[0].mxu0 %v379
      %v512 = vpop.f32.mrb[0].mxu0
      %v513 = vadd.f32 %v257, %v512
      %v514 = vpop.f32.mrb[0].mxu0
      %v515 = vpop.f32.mrb[0].mxu0
      %v516 = vadd.f32 %v257, %v515
      %v517 = vpop.f32.mrb[0].mxu0
      %518 = vmatprep.mubr.bf16.mxu0 0
      %519 = vmatmul.mubr.bf16.gmra.mrb[0].mxu0 %v382
      %v520 = vpop.f32.mrb[0].mxu0
      %v521 = vadd.f32 %v257, %v520
      %v522 = vpop.f32.mrb[0].mxu0
      %v523 = vpop.f32.mrb[0].mxu0
      %v524 = vadd.f32 %v257, %v523
      %v525 = vpop.f32.mrb[0].mxu0
      %526 = vmatprep.mubr.bf16.mxu0 0
      %527 = vmatmul.mubr.bf16.gmra.mrb[0].mxu0 %v385
      %v528 = vpop.f32.mrb[0].mxu0
      %v529 = vadd.f32 %v257, %v528
      %v530 = vpop.f32.mrb[0].mxu0
      %v531 = vpop.f32.mrb[0].mxu0
      %v532 = vadd.f32 %v257, %v531
      %v533 = vpop.f32.mrb[0].mxu0
      %534 = vmatprep.mubr.bf16.mxu0 0
      %535 = vmatmul.mubr.bf16.gmra.mrb[0].mxu0 %v388
      %v536 = vpop.f32.mrb[0].mxu0
      %v537 = vadd.f32 %v257, %v536
      %v538 = vpop.f32.mrb[0].mxu0
      %v539 = vpop.f32.mrb[0].mxu0
      %v540 = vadd.f32 %v257, %v539
      %v541 = vpop.f32.mrb[0].mxu0
      %542 = vmatprep.mubr.bf16.mxu0 0
      %543 = vmatmul.mubr.bf16.gmra.mrb[0].mxu0 %v391
      %v544 = vpop.f32.mrb[0].mxu0
      %v545 = vadd.f32 %v257, %v544
      %v546 = vpop.f32.mrb[0].mxu0
      %v547 = vpop.f32.mrb[0].mxu0
      %v548 = vadd.f32 %v257, %v547
      %v549 = vpop.f32.mrb[0].mxu0
      %550 = vmatprep.mubr.bf16.mxu0 0
      %551 = vmatmul.mubr.bf16.gmra.mrb[0].mxu0 %v394
      %v552 = vpop.f32.mrb[0].mxu0
      %v553 = vadd.f32 %v257, %v552
      %v554 = vpop.f32.mrb[0].mxu0
      %v555 = vpop.f32.mrb[0].mxu0
      %v556 = vadd.f32 %v257, %v555
      %v557 = vpop.f32.mrb[0].mxu0
      %558 = vmatprep.mubr.bf16.mxu0 0
      %559 = vmatmul.mubr.bf16.gmra.mrb[0].mxu0 %v397
      %v560 = vpop.f32.mrb[0].mxu0
      %v561 = vadd.f32 %v257, %v560
      %v562 = vpop.f32.mrb[0].mxu0
      %v563 = vpop.f32.mrb[0].mxu0
      %v564 = vadd.f32 %v257, %v563
      %v565 = vpop.f32.mrb[0].mxu0
      %566 = vdwg.mxu0
      %v567 = vmax.f32 %v441, 0.0
      %v568 = vmax.f32 %v444, 0.0
      %v569 = vmax.f32 %v449, 0.0
      %v570 = vmax.f32 %v452, 0.0
      %v571 = vmax.f32 %v457, 0.0
      %v572 = vmax.f32 %v460, 0.0
      %v573 = vmax.f32 %v465, 0.0
      %v574 = vmax.f32 %v468, 0.0
      %v575 = vmax.f32 %v473, 0.0
      %v576 = vmax.f32 %v476, 0.0
      %v577 = vmax.f32 %v481, 0.0
      %v578 = vmax.f32 %v484, 0.0
      %v579 = vmax.f32 %v489, 0.0
      %v580 = vmax.f32 %v492, 0.0
      %v581 = vmax.f32 %v497, 0.0
      %v582 = vmax.f32 %v500, 0.0
      %v583 = vmax.f32 %v505, 0.0
      %v584 = vmax.f32 %v508, 0.0
      %v585 = vmax.f32 %v513, 0.0
      %v586 = vmax.f32 %v516, 0.0
      %v587 = vmax.f32 %v521, 0.0
      %v588 = vmax.f32 %v524, 0.0
      %v589 = vmax.f32 %v529, 0.0
      %v590 = vmax.f32 %v532, 0.0
      %v591 = vmax.f32 %v537, 0.0
      %v592 = vmax.f32 %v540, 0.0
      %v593 = vmax.f32 %v545, 0.0
      %v594 = vmax.f32 %v548, 0.0
      %v595 = vmax.f32 %v553, 0.0
      %v596 = vmax.f32 %v556, 0.0
      %v597 = vmax.f32 %v561, 0.0
      %v598 = vmax.f32 %v564, 0.0
      %v599 = vpack.c.bf16 %v568, %v567
      %v600 = vpack.c.bf16 %v570, %v569
      %v601 = vpack.c.bf16 %v572, %v571
      %v602 = vpack.c.bf16 %v574, %v573
      %v603 = vpack.c.bf16 %v576, %v575
      %v604 = vpack.c.bf16 %v578, %v577
      %v605 = vpack.c.bf16 %v580, %v579
      %v606 = vpack.c.bf16 %v582, %v581
      %v607 = vpack.c.bf16 %v584, %v583
      %v608 = vpack.c.bf16 %v586, %v585
      %v609 = vpack.c.bf16 %v588, %v587
      %v610 = vpack.c.bf16 %v590, %v589
      %v611 = vpack.c.bf16 %v592, %v591
      %v612 = vpack.c.bf16 %v594, %v593
      %v613 = vpack.c.bf16 %v596, %v595
      %v614 = vpack.c.bf16 %v598, %v597
      %v631 = vunpack.c.l.b16 %v599
      %v632 = vunpack.c.h.b16 %v599
      %v633 = vunpack.c.l.b16 %v600
      %v634 = vunpack.c.h.b16 %v600
      %v635 = vunpack.c.l.b16 %v601
      %v636 = vunpack.c.h.b16 %v601
      %v637 = vunpack.c.l.b16 %v602
      %v638 = vunpack.c.h.b16 %v602
      %v639 = vunpack.c.l.b16 %v603
      %v640 = vunpack.c.h.b16 %v603
      %v641 = vunpack.c.l.b16 %v604
      %v642 = vunpack.c.h.b16 %v604
      %v643 = vunpack.c.l.b16 %v605
      %v644 = vunpack.c.h.b16 %v605
      %v645 = vunpack.c.l.b16 %v606
      %v646 = vunpack.c.h.b16 %v606
      %v647 = vunpack.c.l.b16 %v607
      %v648 = vunpack.c.h.b16 %v607
      %v649 = vunpack.c.l.b16 %v608
      %v650 = vunpack.c.h.b16 %v608
      %v651 = vunpack.c.l.b16 %v609
      %v652 = vunpack.c.h.b16 %v609
      %v653 = vunpack.c.l.b16 %v610
      %v654 = vunpack.c.h.b16 %v610
      %v655 = vunpack.c.l.b16 %v611
      %v656 = vunpack.c.h.b16 %v611
      %v657 = vunpack.c.l.b16 %v612
      %v658 = vunpack.c.h.b16 %v612
      %v659 = vunpack.c.l.b16 %v613
      %v660 = vunpack.c.h.b16 %v613
      %v661 = vunpack.c.l.b16 %v614
      %v662 = vunpack.c.h.b16 %v614
      %v663 = vpack.c.b16 %v631, %v631
      %v664 = vpack.c.b16 %v632, %v632
      %v665 = vpack.c.b16 %v633, %v633
      %v666 = vpack.c.b16 %v634, %v634
      %v667 = vpack.c.b16 %v635, %v635
      %v668 = vpack.c.b16 %v636, %v636
      %v669 = vpack.c.b16 %v637, %v637
      %v670 = vpack.c.b16 %v638, %v638
      %v671 = vpack.c.b16 %v639, %v639
      %v672 = vpack.c.b16 %v640, %v640
      %v673 = vpack.c.b16 %v641, %v641
      %v674 = vpack.c.b16 %v642, %v642
      %v675 = vpack.c.b16 %v643, %v643
      %v676 = vpack.c.b16 %v644, %v644
      %v677 = vpack.c.b16 %v645, %v645
      %v678 = vpack.c.b16 %v646, %v646
      %v679 = vpack.c.b16 %v647, %v647
      %v680 = vpack.c.b16 %v648, %v648
      %v681 = vpack.c.b16 %v649, %v649
      %v682 = vpack.c.b16 %v650, %v650
      %v683 = vpack.c.b16 %v651, %v651
      %v684 = vpack.c.b16 %v652, %v652
      %v685 = vpack.c.b16 %v653, %v653
      %v686 = vpack.c.b16 %v654, %v654
      %v687 = vpack.c.b16 %v655, %v655
      %v688 = vpack.c.b16 %v656, %v656
      %v689 = vpack.c.b16 %v657, %v657
      %v690 = vpack.c.b16 %v658, %v658
      %v691 = vpack.c.b16 %v659, %v659
      %v692 = vpack.c.b16 %v660, %v660
      %v693 = vpack.c.b16 %v661, %v661
      %v694 = vpack.c.b16 %v662, %v662
      %vm727 = vcmask 519168
      %728 = vst.msk [vmem:[%s213] sm:$0xf] %vm727, %v663
      %729 = vst.msk [vmem:[%s213 + $0x4] sm:$0xf] %vm727, %v664
      %730 = vst.msk [vmem:[%s213 + $0x8] sm:$0xf] %vm727, %v665
      %731 = vst.msk [vmem:[%s213 + $0xc] sm:$0xf] %vm727, %v666
      %732 = vst.msk [vmem:[%s213 + $0x10] sm:$0xf] %vm727, %v667
      %733 = vst.msk [vmem:[%s213 + $0x14] sm:$0xf] %vm727, %v668
      %734 = vst.msk [vmem:[%s213 + $0x18] sm:$0xf] %vm727, %v669
      %735 = vst.msk [vmem:[%s213 + $0x1c] sm:$0xf] %vm727, %v670
      %736 = vst.msk [vmem:[%s213 + $0x20] sm:$0xf] %vm727, %v671
      %737 = vst.msk [vmem:[%s213 + $0x24] sm:$0xf] %vm727, %v672
      %738 = vst.msk [vmem:[%s213 + $0x28] sm:$0xf] %vm727, %v673
      %739 = vst.msk [vmem:[%s213 + $0x2c] sm:$0xf] %vm727, %v674
      %740 = vst.msk [vmem:[%s213 + $0x30] sm:$0xf] %vm727, %v675
      %741 = vst.msk [vmem:[%s213 + $0x34] sm:$0xf] %vm727, %v676
      %742 = vst.msk [vmem:[%s213 + $0x38] sm:$0xf] %vm727, %v677
      %743 = vst.msk [vmem:[%s213 + $0x3c] sm:$0xf] %vm727, %v678
      %744 = vst.msk [vmem:[%s213 + $0x40] sm:$0xf] %vm727, %v679
      %745 = vst.msk [vmem:[%s213 + $0x44] sm:$0xf] %vm727, %v680
      %746 = vst.msk [vmem:[%s213 + $0x48] sm:$0xf] %vm727, %v681
      %747 = vst.msk [vmem:[%s213 + $0x4c] sm:$0xf] %vm727, %v682
      %748 = vst.msk [vmem:[%s213 + $0x50] sm:$0xf] %vm727, %v683
      %749 = vst.msk [vmem:[%s213 + $0x54] sm:$0xf] %vm727, %v684
      %750 = vst.msk [vmem:[%s213 + $0x58] sm:$0xf] %vm727, %v685
      %751 = vst.msk [vmem:[%s213 + $0x5c] sm:$0xf] %vm727, %v686
      %752 = vst.msk [vmem:[%s213 + $0x60] sm:$0xf] %vm727, %v687
      %753 = vst.msk [vmem:[%s213 + $0x64] sm:$0xf] %vm727, %v688
      %754 = vst.msk [vmem:[%s213 + $0x68] sm:$0xf] %vm727, %v689
      %755 = vst.msk [vmem:[%s213 + $0x6c] sm:$0xf] %vm727, %v690
      %756 = vst.msk [vmem:[%s213 + $0x70] sm:$0xf] %vm727, %v691
      %757 = vst.msk [vmem:[%s213 + $0x74] sm:$0xf] %vm727, %v692
      %758 = vst.msk [vmem:[%s213 + $0x78] sm:$0xf] %vm727, %v693
      %759 = vst.msk [vmem:[%s213 + $0x7c] sm:$0xf] %vm727, %v694
      %s760 = smul.u32 16, %s19
      %p761 = scmp.lt.s32.totalorder %s18, 1
      %s762 = scalar_select %p761, %s18, 1
      %p763 = scmp.lt.s32.totalorder %s760, 15
      %s764 = scalar_select %p763, %s760, 15
      %s765 = smul.addr %s764, 2
      %s766 = smul.addr %s762, 32
      %s767 = sadd.s32 %s765, %s766
      %s768 = smul.addr %s767, 4
      %s769 = scalar_lea.vmem %s3, %s768
      // Predicated region
      $region33: #{generator_loss.11} parent=31 // pred_check
        %p770 = pneg %p116
      $region34: #{generator_loss.11} parent=31 // pred_check_branch
        %772 = sbr.rel (%p770) target = $region36
      $region35: #{generator_loss.11} parent=31 // pred_region
        %s773 = smul.u32 16, %s19
      $region36: #{generator_loss.11} parent=31 // pred_fallthru
        _
    $region32: #{generator_loss.11} parent=5 // pred_fallthru
      _
    %p774 = scmp.le.s32.totalorder 2, %s9
    // Predicated region
    $region37: #{generator_loss.11} parent=5 // pred_check
      %p775 = pneg %p774
    $region38: #{generator_loss.11} parent=5 // pred_check_branch
      %777 = sbr.rel (%p775) target = $region40
    $region39: #{generator_loss.11} parent=5 // pred_region
      %s778 = ssub.s32 %s9, 2
      // Predicated region
      $region41: #{generator_loss.11} parent=39 // pred_check
        %p779 = pneg %p122
      $region42: #{generator_loss.11} parent=39 // pred_check_branch
        %781 = sbr.rel (%p779) target = $region44
      $region43: #{generator_loss.11} parent=39 // pred_region
        %s782 = smul.u32 16, %s21
        %p783 = scmp.lt.s32.totalorder %s20, 1
        %s784 = scalar_select %p783, %s20, 1
        %p785 = scmp.lt.s32.totalorder %s782, 15
        %s786 = scalar_select %p785, %s782, 15
        %s787 = smul.addr %s786, 2
        %s788 = smul.addr %s784, 32
        %s789 = sadd.s32 %s787, %s788
        %s790 = smul.addr %s789, 4
        %s791 = scalar_lea.vmem %s3, %s790
      $region44: #{generator_loss.11} parent=39 // pred_fallthru
        _
    $region40: #{generator_loss.11} parent=5 // pred_fallthru
      _
  $region6: #{generator_loss.11} parent=0 // loop_footer
    %s13 = sadd.s32 1, %s9
  $region7: #{generator_loss.11} parent=0 // loop_footer_branch
    %8 = sbr.rel target = $region3
  $region8: #{generator_loss.11} parent=0 // loop_exit
    _

// kernel: generator_loss.13
$region0: #{generator_loss.13}
  #allocation0 [shape = 'u32[]', space=smem, size = 0x4, offset = 0x4, fixed_abs, tag = 'smem constant byte address 0x4 - core index']
  #allocation1 [shape = 'u32[144,128]{1,0:T(1,128)}', space=vmem, size = 0x12000, scoped, tag = 'internal scratch']
  %s0 = inlined_call_operand.vmem [shape: bf16[2,10,10,64], index: 0, kind: input, shape index: {}]
  %s1 = inlined_call_operand.vmem [shape: bf16[9,64,128], index: 1, kind: input, shape index: {}]
  %s2 = inlined_call_operand.vmem [shape: f32[1,128], index: 2, kind: input, shape index: {}]
  %s3 = inlined_call_operand.vmem [shape: bf16[2,8,8,128], index: 3, kind: output, shape index: {}]
  %s4 = sld [smem:[#allocation0]]
  $region45: #{generator_loss.13} parent=0
    _
  %s6 = ssub.s32 1, %s4
  %s7 = scalar_select 0, %s6, %s4
  loop: start=0, step=1, limit=4
  $region2: #{generator_loss.13} parent=0 // loop_pre_header
    _
  $region3: #{generator_loss.13} parent=0 // loop_header
    %s9 = sphi 0, %s13
    %p10 = scmp.ge.s32.totalorder %s9, 4
    %s19 = sphi 0, %s21
    %s22 = sphi 0, %s19
    %s23 = sphi 0, %s22
    %s39 = sphi 0, %s23
    %s43 = sphi 0, %s43
    %s45 = sphi 0, %s43
    %s46 = sphi 0, %s45
    %s60 = sphi 0, %s46
    %s64 = sphi 0, %s64
    %s66 = sphi 0, %s64
    %s67 = sphi 0, %s66
    %s81 = sphi 0, %s67
    %s87 = sphi 0, %s89
    %s90 = sphi 0, %s87
    %s91 = sphi 0, %s90
    %s107 = sphi 0, %s91
  $region4: #{generator_loss.13} parent=0 // loop_header_branch
    %12 = sbr.rel (%p10) target = $region8
  $region5: #{generator_loss.13} parent=0 // loop_body
    %s14 = ssub.s32 %s9, 1
    %s15 = ssub.s32 %s9, 2
    %s16 = sadd.s32 %s9, 1
    %s17 = ssub.s32 %s9, %s16
    %p18 = scmp.eq.s32.totalorder %s17, 0
    %s20 = sadd.s32 %s19, 1
    %s21 = scalar_select %p18, %s19, %s20
    %p24 = pneg %p18
    %p25 = scmp.eq.s32.totalorder %s9, 1
    %p26 = por %p24, %p25
    %p27 = scmp.ne.s32.totalorder %s19, %s22
    %p28 = scmp.eq.s32.totalorder %s9, 0
    %p29 = por %p27, %p28
    %p30 = scmp.ne.s32.totalorder %s19, %s22
    %p31 = scmp.eq.s32.totalorder %s14, 1
    %p32 = por %p30, %p31
    %p33 = scmp.ne.s32.totalorder %s22, %s23
    %p34 = scmp.eq.s32.totalorder %s14, 0
    %p35 = por %p33, %p34
    %p36 = scmp.ne.s32.totalorder %s22, %s23
    %p37 = scmp.eq.s32.totalorder %s15, 1
    %p38 = por %p36, %p37
    %p40 = scmp.ne.s32.totalorder %s23, %s39
    %p41 = scmp.eq.s32.totalorder %s15, 0
    %p42 = por %p40, %p41
    %s44 = sadd.s32 %s43, 1
    %p47 = scmp.eq.s32.totalorder %s9, 1
    %p48 = scmp.ne.s32.totalorder %s43, %s45
    %p49 = scmp.eq.s32.totalorder %s9, 0
    %p50 = por %p48, %p49
    %p51 = scmp.ne.s32.totalorder %s43, %s45
    %p52 = scmp.eq.s32.totalorder %s14, 1
    %p53 = por %p51, %p52
    %p54 = scmp.ne.s32.totalorder %s45, %s46
    %p55 = scmp.eq.s32.totalorder %s14, 0
    %p56 = por %p54, %p55
    %p57 = scmp.ne.s32.totalorder %s45, %s46
    %p58 = scmp.eq.s32.totalorder %s15, 1
    %p59 = por %p57, %p58
    %p61 = scmp.ne.s32.totalorder %s46, %s60
    %p62 = scmp.eq.s32.totalorder %s15, 0
    %p63 = por %p61, %p62
    %s65 = sadd.s32 %s64, 1
    %p68 = scmp.eq.s32.totalorder %s9, 1
    %p69 = scmp.ne.s32.totalorder %s64, %s66
    %p70 = scmp.eq.s32.totalorder %s9, 0
    %p71 = por %p69, %p70
    %p72 = scmp.ne.s32.totalorder %s64, %s66
    %p73 = scmp.eq.s32.totalorder %s14, 1
    %p74 = por %p72, %p73
    %p75 = scmp.ne.s32.totalorder %s66, %s67
    %p76 = scmp.eq.s32.totalorder %s14, 0
    %p77 = por %p75, %p76
    %p78 = scmp.ne.s32.totalorder %s66, %s67
    %p79 = scmp.eq.s32.totalorder %s15, 1
    %p80 = por %p78, %p79
    %p82 = scmp.ne.s32.totalorder %s67, %s81
    %p83 = scmp.eq.s32.totalorder %s15, 0
    %p84 = por %p82, %p83
    %s85 = ssub.s32 %s9, %s16
    %p86 = scmp.eq.s32.totalorder %s85, 0
    %s88 = sadd.s32 %s87, 1
    %s89 = scalar_select %p86, %s87, %s88
    %p92 = pneg %p86
    %p93 = scmp.eq.s32.totalorder %s9, 1
    %p94 = por %p92, %p93
    %p95 = scmp.ne.s32.totalorder %s87, %s90
    %p96 = scmp.eq.s32.totalorder %s9, 0
    %p97 = por %p95, %p96
    %p98 = scmp.ne.s32.totalorder %s87, %s90
    %p99 = scmp.eq.s32.totalorder %s14, 1
    %p100 = por %p98, %p99
    %p101 = scmp.ne.s32.totalorder %s90, %s91
    %p102 = scmp.eq.s32.totalorder %s14, 0
    %p103 = por %p101, %p102
    %p104 = scmp.ne.s32.totalorder %s90, %s91
    %p105 = scmp.eq.s32.totalorder %s15, 1
    %p106 = por %p104, %p105
    %p108 = scmp.ne.s32.totalorder %s91, %s107
    %p109 = scmp.eq.s32.totalorder %s15, 0
    %p110 = por %p108, %p109
    %p111 = scmp.le.s32.totalorder 1, %s9
    %p112 = scmp.lt.s32.totalorder %s9, 3
    %p113 = pnand %p111, %p112
    %p114 = pneg %p113
    // Predicated region
    $region9: #{generator_loss.13} parent=5 // pred_check
      _
    $region10: #{generator_loss.13} parent=5 // pred_check_branch
      %116 = sbr.rel (%p113) target = $region12
    $region11: #{generator_loss.13} parent=5 // pred_region
      %s117 = ssub.s32 %s9, 1
      // Predicated region
      $region13: #{generator_loss.13} parent=11 // pred_check
        %p118 = pneg %p56
      $region14: #{generator_loss.13} parent=11 // pred_check_branch
        %120 = sbr.rel (%p118) target = $region16
      $region15: #{generator_loss.13} parent=11 // pred_region
        _
      $region16: #{generator_loss.13} parent=11 // pred_fallthru
        _
      // Predicated region
      $region17: #{generator_loss.13} parent=11 // pred_check
        %p121 = pneg %p77
      $region18: #{generator_loss.13} parent=11 // pred_check_branch
        %123 = sbr.rel (%p121) target = $region20
      $region19: #{generator_loss.13} parent=11 // pred_region
        _
      $region20: #{generator_loss.13} parent=11 // pred_fallthru
        _
    $region12: #{generator_loss.13} parent=5 // pred_fallthru
      _
    %p124 = scmp.lt.s32.totalorder %s9, 2
    // Predicated region
    $region21: #{generator_loss.13} parent=5 // pred_check
      %p125 = pneg %p124
    $region22: #{generator_loss.13} parent=5 // pred_check_branch
      %127 = sbr.rel (%p125) target = $region24
    $region23: #{generator_loss.13} parent=5 // pred_region
      // Predicated region
      $region25: #{generator_loss.13} parent=23 // pred_check
        %p128 = pneg %p29
      $region26: #{generator_loss.13} parent=23 // pred_check_branch
        %130 = sbr.rel (%p128) target = $region28
      $region27: #{generator_loss.13} parent=23 // pred_region
        %p131 = scmp.lt.s32.totalorder %s9, 1
        %s132 = scalar_select %p131, %s9, 1
        %s133 = smul.addr %s132, 20
        %s134 = smul.addr %s133, 4
        %s135 = scalar_lea.vmem %s0, %s134
      $region28: #{generator_loss.13} parent=23 // pred_fallthru
        _
    $region24: #{generator_loss.13} parent=5 // pred_fallthru
      _
    %p136 = scmp.le.s32.totalorder 1, %s9
    %p137 = scmp.lt.s32.totalorder %s9, 3
    %p138 = pnand %p136, %p137
    %p139 = pneg %p138
    // Predicated region
    $region29: #{generator_loss.13} parent=5 // pred_check
      _
    $region30: #{generator_loss.13} parent=5 // pred_check_branch
      %141 = sbr.rel (%p138) target = $region32
    $region31: #{generator_loss.13} parent=5 // pred_region
      %s142 = ssub.s32 %s9, 1
      %p143 = scmp.lt.s32.totalorder %s14, 1
      %s144 = scalar_select %p143, %s14, 1
      %s145 = smul.addr %s144, 20
      %s146 = smul.addr %s145, 4
      %s147 = scalar_lea.vmem %s0, %s146
      %p148 = pneg %p35
      %p149 = pneg %p32
      %p150 = pneg %p56
      %p151 = pneg %p53
      %p152 = pneg %p77
      %p153 = pneg %p74
      %p154 = pneg %p103
      %p155 = pneg %p100
      %p156 = scmp.lt.s32.totalorder %s14, 1
      %s157 = scalar_select %p156, %s14, 1
      %s158 = smul.addr %s157, 8
      %s159 = smul.addr %s158, 4
      %s160 = scalar_lea.vmem %s3, %s159
      %p161 = scmp.lt.s32.totalorder %s14, 1
      %s162 = scalar_select %p161, %s14, 1
      %s163 = smul.addr %s162, 20
      %s164 = smul.addr %s163, 4
      %s165 = scalar_lea.vmem %s0, %s164
      %p166 = scmp.lt.s32.totalorder %s14, 1
      %s167 = scalar_select %p166, %s14, 1
      %s168 = smul.addr %s167, 8
      %s169 = smul.addr %s168, 4
      %s170 = scalar_lea.vmem %s3, %s169
      %v172 = vld [vmem:[%s165] sm:$0xf]
      %v173 = vld [vmem:[%s165 + $0x8] sm:$0xf]
      %v174 = vld [vmem:[%s165 + $0x10] sm:$0xf]
      %v175 = vld [vmem:[%s165 + $0x18] sm:$0xf]
      %v176 = vld [vmem:[%s165 + $0x20] sm:$0xf]
      %v177 = vld [vmem:[%s165 + $0x28] sm:$0xf]
      %v178 = vld [vmem:[%s165 + $0x30] sm:$0xf]
      %v179 = vld [vmem:[%s165 + $0x38] sm:$0xf]
      %v180 = vld [vmem:[%s1] sm:$0xf]
      %v181 = vld [vmem:[%s1 + $0x4] sm:$0xf]
      %v182 = vld [vmem:[%s1 + $0x8] sm:$0xf]
      %v183 = vld [vmem:[%s1 + $0xc] sm:$0xf]
      %v184 = vld [vmem:[%s1 + $0x10] sm:$0xf]
      %v185 = vld [vmem:[%s1 + $0x14] sm:$0xf]
      %v186 = vld [vmem:[%s1 + $0x18] sm:$0xf]
      %v187 = vld [vmem:[%s1 + $0x1c] sm:$0xf]
      %v188 = vld [vmem:[%s165 + $0x4] sm:$0x1]
      %v189 = vld [vmem:[%s165 + $0xc] sm:$0x1]
      %v190 = vld [vmem:[%s165 + $0x14] sm:$0x1]
      %v191 = vld [vmem:[%s165 + $0x1c] sm:$0x1]
      %v192 = vld [vmem:[%s165 + $0x24] sm:$0x1]
      %v193 = vld [vmem:[%s165 + $0x2c] sm:$0x1]
      %v194 = vld [vmem:[%s165 + $0x34] sm:$0x1]
      %v195 = vld [vmem:[%s165 + $0x3c] sm:$0x1]
      %vm196 = vsmask.f32 3328
      %vm197 = vsmask.f32 7440
      %vm198 = vmor %vm196, %vm197
      %v200 = vshrl.u32 %v172, 16
      %v202 = vrot.slane %v200, 4
      %v203 = vshll.u32 %v172, 16
      %v205 = vrot.slane %v203, 5
      %v206 = vor.u32 %v202, %v205
      %v207 = vrot.slane %v206, 4
      %v209 = vshll.u32 %v188, 16
      %v211 = vrot.slane %v209, 5
      %v212 = vsel %vm198, %v207, %v211
      %v214 = vshrl.u32 %v173, 16
      %v216 = vrot.slane %v214, 4
      %v217 = vshll.u32 %v173, 16
      %v219 = vrot.slane %v217, 5
      %v220 = vor.u32 %v216, %v219
      %v221 = vrot.slane %v220, 4
      %v223 = vshll.u32 %v189, 16
      %v225 = vrot.slane %v223, 5
      %v226 = vsel %vm198, %v221, %v225
      %v228 = vshrl.u32 %v174, 16
      %v230 = vrot.slane %v228, 4
      %v231 = vshll.u32 %v174, 16
      %v233 = vrot.slane %v231, 5
      %v234 = vor.u32 %v230, %v233
      %v235 = vrot.slane %v234, 4
      %v237 = vshll.u32 %v190, 16
      %v239 = vrot.slane %v237, 5
      %v240 = vsel %vm198, %v235, %v239
      %v242 = vshrl.u32 %v175, 16
      %v244 = vrot.slane %v242, 4
      %v245 = vshll.u32 %v175, 16
      %v247 = vrot.slane %v245, 5
      %v248 = vor.u32 %v244, %v247
      %v249 = vrot.slane %v248, 4
      %v251 = vshll.u32 %v191, 16
      %v253 = vrot.slane %v251, 5
      %v254 = vsel %vm198, %v249, %v253
      %v256 = vshrl.u32 %v176, 16
      %v258 = vrot.slane %v256, 4
      %v259 = vshll.u32 %v176, 16
      %v261 = vrot.slane %v259, 5
      %v262 = vor.u32 %v258, %v261
      %v263 = vrot.slane %v262, 4
      %v265 = vshll.u32 %v192, 16
      %v267 = vrot.slane %v265, 5
      %v268 = vsel %vm198, %v263, %v267
      %v270 = vshrl.u32 %v177, 16
      %v272 = vrot.slane %v270, 4
      %v273 = vshll.u32 %v177, 16
      %v275 = vrot.slane %v273, 5
      %v276 = vor.u32 %v272, %v275
      %v277 = vrot.slane %v276, 4
      %v279 = vshll.u32 %v193, 16
      %v281 = vrot.slane %v279, 5
      %v282 = vsel %vm198, %v277, %v281
      %v284 = vshrl.u32 %v178, 16
      %v286 = vrot.slane %v284, 4
      %v287 = vshll.u32 %v178, 16
      %v289 = vrot.slane %v287, 5
      %v290 = vor.u32 %v286, %v289
      %v291 = vrot.slane %v290, 4
      %v293 = vshll.u32 %v194, 16
      %v295 = vrot.slane %v293, 5
      %v296 = vsel %vm198, %v291, %v295
      %v298 = vshrl.u32 %v179, 16
      %v300 = vrot.slane %v298, 4
      %v301 = vshll.u32 %v179, 16
      %v303 = vrot.slane %v301, 5
      %v304 = vor.u32 %v300, %v303
      %v305 = vrot.slane %v304, 4
      %v307 = vshll.u32 %v195, 16
      %v309 = vrot.slane %v307, 5
      %v310 = vsel %vm198, %v305, %v309
      %s311 = scalar_lea.vmem %s1, 32
      %v312 = vld [vmem:[%s311] sm:$0xf]
      %v313 = vld [vmem:[%s311 + $0x4] sm:$0xf]
      %v314 = vld [vmem:[%s311 + $0x8] sm:$0xf]
      %v315 = vld [vmem:[%s311 + $0xc] sm:$0xf]
      %v316 = vld [vmem:[%s311 + $0x10] sm:$0xf]
      %v317 = vld [vmem:[%s311 + $0x14] sm:$0xf]
      %v318 = vld [vmem:[%s311 + $0x18] sm:$0xf]
      %v319 = vld [vmem:[%s311 + $0x1c] sm:$0xf]
      %v320 = vunpack.c.l.b16 %v212
      %v321 = vunpack.c.l.b16 %v226
      %v322 = vunpack.c.l.b16 %v240
      %v323 = vunpack.c.l.b16 %v254
      %v324 = vunpack.c.l.b16 %v268
      %v325 = vunpack.c.l.b16 %v282
      %v326 = vunpack.c.l.b16 %v296
      %v327 = vunpack.c.l.b16 %v310
      %v328 = vpack.c.b16 %v321, %v320
      %v329 = vpack.c.b16 %v323, %v322
      %v330 = vpack.c.b16 %v325, %v324
      %v331 = vpack.c.b16 %v327, %v326
      %v340 = vunpack.c.l.b16 %v312
      %v341 = vunpack.c.l.b16 %v313
      %v342 = vunpack.c.l.b16 %v314
      %v343 = vunpack.c.l.b16 %v315
      %v344 = vunpack.c.l.b16 %v316
      %v345 = vunpack.c.l.b16 %v317
      %v346 = vunpack.c.l.b16 %v318
      %v347 = vunpack.c.l.b16 %v319
      %v348 = vpack.c.b16 %v341, %v340
      %v349 = vpack.c.b16 %v343, %v342
      %v350 = vpack.c.b16 %v345, %v344
      %v351 = vpack.c.b16 %v347, %v346
      %vm356 = vcmask 523264
      %v358 = vsel %vm356, %v328, 0
      %v361 = vsel %vm356, %v329, 0
      %v364 = vsel %vm356, %v330, 0
      %v367 = vsel %vm356, %v331, 0
      %369 = vmatprep.subr.bf16.mxu0 0
      %370 = vmatpush1.bf16.msra.mxu0 %v348
      %371 = vmatprep.subr.bf16.mxu0 0
      %372 = vmatpush1.bf16.msra.mxu0 %v349
      %373 = vmatprep.subr.bf16.mxu0 0
      %374 = vmatpush1.bf16.msra.mxu0 %v350
      %375 = vmatprep.subr.bf16.mxu0 0
      %376 = vmatpush1.bf16.msra.mxu0 %v351
      %377 = vmatprep.subr.bf16.mxu0 0
      %378 = vmatpush1.bf16.msra.mxu0 0
      %379 = vmatprep.subr.bf16.mxu0 0
      %380 = vmatpush1.bf16.msra.mxu0 0
      %381 = vmatprep.subr.bf16.mxu0 0
      %382 = vmatpush1.bf16.msra.mxu0 0
      %383 = vmatprep.subr.bf16.mxu0 0
      %384 = vmatpush1.bf16.msra.mxu0 0
      %385 = vmatprep.subr.bf16.mxu0 0
      %386 = vmatpush1.bf16.msra.mxu0 0
      %387 = vmatprep.subr.bf16.mxu0 0
      %388 = vmatpush1.bf16.msra.mxu0 0
      %389 = vmatprep.subr.bf16.mxu0 0
      %390 = vmatpush1.bf16.msra.mxu0 0
      %391 = vmatprep.subr.bf16.mxu0 0
      %392 = vmatpush1.bf16.msra.mxu0 0
      %393 = vmatprep.subr.bf16.mxu0 0
      %394 = vmatpush1.bf16.msra.mxu0 0
      %395 = vmatprep.subr.bf16.mxu0 0
      %396 = vmatpush1.bf16.msra.mxu0 0
      %397 = vmatprep.subr.bf16.mxu0 0
      %398 = vmatpush1.bf16.msra.mxu0 0
      %399 = vmatprep.subr.bf16.mxu0 0
      %400 = vmatpush1.bf16.msra.mxu0 0
      %401 = vmatprep.mubr.bf16.mxu0 0
      %402 = vmatmul.mubr.bf16.gmra.mrb[0].mxu0 %v358
      %v403 = vpop.f32.mrb[0].mxu0
      %v404 = vadd.f32 0.0, %v403
      %v405 = vpop.f32.mrb[0].mxu0
      %v406 = vpop.f32.mrb[0].mxu0
      %v407 = vadd.f32 0.0, %v406
      %v408 = vpop.f32.mrb[0].mxu0
      %409 = vmatprep.mubr.bf16.mxu0 0
      %410 = vmatmul.mubr.bf16.gmra.mrb[0].mxu0 %v361
      %v411 = vpop.f32.mrb[0].mxu0
      %v412 = vadd.f32 0.0, %v411
      %v413 = vpop.f32.mrb[0].mxu0
      %v414 = vpop.f32.mrb[0].mxu0
      %v415 = vadd.f32 0.0, %v414
      %v416 = vpop.f32.mrb[0].mxu0
      %417 = vmatprep.mubr.bf16.mxu0 0
      %418 = vmatmul.mubr.bf16.gmra.mrb[0].mxu0 %v364
      %v419 = vpop.f32.mrb[0].mxu0
      %v420 = vadd.f32 0.0, %v419
      %v421 = vpop.f32.mrb[0].mxu0
      %v422 = vpop.f32.mrb[0].mxu0
      %v423 = vadd.f32 0.0, %v422
      %v424 = vpop.f32.mrb[0].mxu0
      %425 = vmatprep.mubr.bf16.mxu0 0
      %426 = vmatmul.mubr.bf16.gmra.mrb[0].mxu0 %v367
      %v427 = vpop.f32.mrb[0].mxu0
      %v428 = vadd.f32 0.0, %v427
      %v429 = vpop.f32.mrb[0].mxu0
      %v430 = vpop.f32.mrb[0].mxu0
      %v431 = vadd.f32 0.0, %v430
      %v432 = vpop.f32.mrb[0].mxu0
      %433 = vdwg.mxu0
      %v442 = vunpack.c.l.b16 %v172
      %v443 = vunpack.c.l.b16 %v173
      %v444 = vunpack.c.l.b16 %v174
      %v445 = vunpack.c.l.b16 %v175
      %v446 = vunpack.c.l.b16 %v176
      %v447 = vunpack.c.l.b16 %v177
      %v448 = vunpack.c.l.b16 %v178
      %v449 = vunpack.c.l.b16 %v179
      %v450 = vpack.c.b16 %v443, %v442
      %v451 = vpack.c.b16 %v445, %v444
      %v452 = vpack.c.b16 %v447, %v446
      %v453 = vpack.c.b16 %v449, %v448
      %v462 = vunpack.c.l.b16 %v180
      %v463 = vunpack.c.l.b16 %v181
      %v464 = vunpack.c.l.b16 %v182
      %v465 = vunpack.c.l.b16 %v183
      %v466 = vunpack.c.l.b16 %v184
      %v467 = vunpack.c.l.b16 %v185
      %v468 = vunpack.c.l.b16 %v186
      %v469 = vunpack.c.l.b16 %v187
      %v470 = vpack.c.b16 %v463, %v462
      %v471 = vpack.c.b16 %v465, %v464
      %v472 = vpack.c.b16 %v467, %v466
      %v473 = vpack.c.b16 %v469, %v468
      %v479 = vsel %vm356, %v450, 0
      %v482 = vsel %vm356, %v451, 0
      %v485 = vsel %vm356, %v452, 0
      %v488 = vsel %vm356, %v453, 0
      %490 = vmatprep.subr.bf16.mxu0 0
      %491 = vmatpush1.bf16.msra.mxu0 %v470
      %492 = vmatprep.subr.bf16.mxu0 0
      %493 = vmatpush1.bf16.msra.mxu0 %v471
      %494 = vmatprep.subr.bf16.mxu0 0
      %495 = vmatpush1.bf16.msra.mxu0 %v472
      %496 = vmatprep.subr.bf16.mxu0 0
      %497 = vmatpush1.bf16.msra.mxu0 %v473
      %498 = vmatprep.subr.bf16.mxu0 0
      %499 = vmatpush1.bf16.msra.mxu0 0
      %500 = vmatprep.subr.bf16.mxu0 0
      %501 = vmatpush1.bf16.msra.mxu0 0
      %502 = vmatprep.subr.bf16.mxu0 0
      %503 = vmatpush1.bf16.msra.mxu0 0
      %504 = vmatprep.subr.bf16.mxu0 0
      %505 = vmatpush1.bf16.msra.mxu0 0
      %506 = vmatprep.subr.bf16.mxu0 0
      %507 = vmatpush1.bf16.msra.mxu0 0
      %508 = vmatprep.subr.bf16.mxu0 0
      %509 = vmatpush1.bf16.msra.mxu0 0
      %510 = vmatprep.subr.bf16.mxu0 0
      %511 = vmatpush1.bf16.msra.mxu0 0
      %512 = vmatprep.subr.bf16.mxu0 0
      %513 = vmatpush1.bf16.msra.mxu0 0
      %514 = vmatprep.subr.bf16.mxu0 0
      %515 = vmatpush1.bf16.msra.mxu0 0
      %516 = vmatprep.subr.bf16.mxu0 0
      %517 = vmatpush1.bf16.msra.mxu0 0
      %518 = vmatprep.subr.bf16.mxu0 0
      %519 = vmatpush1.bf16.msra.mxu0 0
      %520 = vmatprep.subr.bf16.mxu0 0
      %521 = vmatpush1.bf16.msra.mxu0 0
      %522 = vmatprep.mubr.bf16.mxu0 0
      %523 = vmatmul.mubr.bf16.gmra.mrb[0].mxu0 %v479
      %v524 = vpop.f32.mrb[0].mxu0
      %v525 = vadd.f32 %v404, %v524
      %v526 = vpop.f32.mrb[0].mxu0
      %v527 = vpop.f32.mrb[0].mxu0
      %v528 = vadd.f32 %v407, %v527
      %v529 = vpop.f32.mrb[0].mxu0
      %530 = vmatprep.mubr.bf16.mxu0 0
      %531 = vmatmul.mubr.bf16.gmra.mrb[0].mxu0 %v482
      %v532 = vpop.f32.mrb[0].mxu0
      %v533 = vadd.f32 %v412, %v532
      %v534 = vpop.f32.mrb[0].mxu0
      %v535 = vpop.f32.mrb[0].mxu0
      %v536 = vadd.f32 %v415, %v535
      %v537 = vpop.f32.mrb[0].mxu0
      %538 = vmatprep.mubr.bf16.mxu0 0
      %539 = vmatmul.mubr.bf16.gmra.mrb[0].mxu0 %v485
      %v540 = vpop.f32.mrb[0].mxu0
      %v541 = vadd.f32 %v420, %v540
      %v542 = vpop.f32.mrb[0].mxu0
      %v543 = vpop.f32.mrb[0].mxu0
      %v544 = vadd.f32 %v423, %v543
      %v545 = vpop.f32.mrb[0].mxu0
      %546 = vmatprep.mubr.bf16.mxu0 0
      %547 = vmatmul.mubr.bf16.gmra.mrb[0].mxu0 %v488
      %v548 = vpop.f32.mrb[0].mxu0
      %v549 = vadd.f32 %v428, %v548
      %v550 = vpop.f32.mrb[0].mxu0
      %v551 = vpop.f32.mrb[0].mxu0
      %v552 = vadd.f32 %v431, %v551
      %v553 = vpop.f32.mrb[0].mxu0
      %554 = vdwg.mxu0
      %v555 = vld [vmem:[%s165] sm:$0xe]
      %v556 = vld [vmem:[%s165 + $0x8] sm:$0xe]
      %v557 = vld [vmem:[%s165 + $0x10] sm:$0xe]
      %v558 = vld [vmem:[%s165 + $0x18] sm:$0xe]
      %v559 = vld [vmem:[%s165 + $0x20] sm:$0xe]
      %v560 = vld [vmem:[%s165 + $0x28] sm:$0xe]
      %v561 = vld [vmem:[%s165 + $0x30] sm:$0xe]
      %v562 = vld [vmem:[%s165 + $0x38] sm:$0xe]
      %vm579 = vcmask 1042432
      %vm580 = vcmask 1046532
      %vm581 = vmor %vm579, %vm580
      %v582 = vrot.slane %v555, 5
      %v583 = vrot.slane %v582, 4
      %v584 = vrot.slane %v188, 5
      %v585 = vsel %vm581, %v583, %v584
      %v586 = vrot.slane %v556, 5
      %v587 = vrot.slane %v586, 4
      %v588 = vrot.slane %v189, 5
      %v589 = vsel %vm581, %v587, %v588
      %v590 = vrot.slane %v557, 5
      %v591 = vrot.slane %v590, 4
      %v592 = vrot.slane %v190, 5
      %v593 = vsel %vm581, %v591, %v592
      %v594 = vrot.slane %v558, 5
      %v595 = vrot.slane %v594, 4
      %v596 = vrot.slane %v191, 5
      %v597 = vsel %vm581, %v595, %v596
      %v598 = vrot.slane %v559, 5
      %v599 = vrot.slane %v598, 4
      %v600 = vrot.slane %v192, 5
      %v601 = vsel %vm581, %v599, %v600
      %v602 = vrot.slane %v560, 5
      %v603 = vrot.slane %v602, 4
      %v604 = vrot.slane %v193, 5
      %v605 = vsel %vm581, %v603, %v604
      %v606 = vrot.slane %v561, 5
      %v607 = vrot.slane %v606, 4
      %v608 = vrot.slane %v194, 5
      %v609 = vsel %vm581, %v607, %v608
      %v610 = vrot.slane %v562, 5
      %v611 = vrot.slane %v610, 4
      %v612 = vrot.slane %v195, 5
      %v613 = vsel %vm581, %v611, %v612
      %s614 = scalar_lea.vmem %s1, 64
      %v615 = vld [vmem:[%s614] sm:$0xf]
      %v616 = vld [vmem:[%s614 + $0x4] sm:$0xf]
      %v617 = vld [vmem:[%s614 + $0x8] sm:$0xf]
      %v618 = vld [vmem:[%s614 + $0xc] sm:$0xf]
      %v619 = vld [vmem:[%s614 + $0x10] sm:$0xf]
      %v620 = vld [vmem:[%s614 + $0x14] sm:$0xf]
      %v621 = vld [vmem:[%s614 + $0x18] sm:$0xf]
      %v622 = vld [vmem:[%s614 + $0x1c] sm:$0xf]
      %v623 = vunpack.c.l.b16 %v585
      %v624 = vunpack.c.l.b16 %v589
      %v625 = vunpack.c.l.b16 %v593
      %v626 = vunpack.c.l.b16 %v597
      %v627 = vunpack.c.l.b16 %v601
      %v628 = vunpack.c.l.b16 %v605
      %v629 = vunpack.c.l.b16 %v609
      %v630 = vunpack.c.l.b16 %v613
      %v631 = vpack.c.b16 %v624, %v623
      %v632 = vpack.c.b16 %v626, %v625
      %v633 = vpack.c.b16 %v628, %v627
      %v634 = vpack.c.b16 %v630, %v629
      %v643 = vunpack.c.l.b16 %v615
      %v644 = vunpack.c.l.b16 %v616
      %v645 = vunpack.c.l.b16 %v617
      %v646 = vunpack.c.l.b16 %v618
      %v647 = vunpack.c.l.b16 %v619
      %v648 = vunpack.c.l.b16 %v620
      %v649 = vunpack.c.l.b16 %v621
      %v650 = vunpack.c.l.b16 %v622
      %v651 = vpack.c.b16 %v644, %v643
      %v652 = vpack.c.b16 %v646, %v645
      %v653 = vpack.c.b16 %v648, %v647
      %v654 = vpack.c.b16 %v650, %v649
      %v660 = vsel %vm356, %v631, 0
      %v663 = vsel %vm356, %v632, 0
      %v666 = vsel %vm356, %v633, 0
      %v669 = vsel %vm356, %v634, 0
      %671 = vmatprep.subr.bf16.mxu0 0
      %672 = vmatpush1.bf16.msra.mxu0 %v651
      %673 = vmatprep.subr.bf16.mxu0 0
      %674 = vmatpush1.bf16.msra.mxu0 %v652
      %675 = vmatprep.subr.bf16.mxu0 0
      %676 = vmatpush1.bf16.msra.mxu0 %v653
      %677 = vmatprep.subr.bf16.mxu0 0
      %678 = vmatpush1.bf16.msra.mxu0 %v654
      %679 = vmatprep.subr.bf16.mxu0 0
      %680 = vmatpush1.bf16.msra.mxu0 0
      %681 = vmatprep.subr.bf16.mxu0 0
      %682 = vmatpush1.bf16.msra.mxu0 0
      %683 = vmatprep.subr.bf16.mxu0 0
      %684 = vmatpush1.bf16.msra.mxu0 0
      %685 = vmatprep.subr.bf16.mxu0 0
      %686 = vmatpush1.bf16.msra.mxu0 0
      %687 = vmatprep.subr.bf16.mxu0 0
      %688 = vmatpush1.bf16.msra.mxu0 0
      %689 = vmatprep.subr.bf16.mxu0 0
      %690 = vmatpush1.bf16.msra.mxu0 0
      %691 = vmatprep.subr.bf16.mxu0 0
      %692 = vmatpush1.bf16.msra.mxu0 0
      %693 = vmatprep.subr.bf16.mxu0 0
      %694 = vmatpush1.bf16.msra.mxu0 0
      %695 = vmatprep.subr.bf16.mxu0 0
      %696 = vmatpush1.bf16.msra.mxu0 0
      %697 = vmatprep.subr.bf16.mxu0 0
      %698 = vmatpush1.bf16.msra.mxu0 0
      %699 = vmatprep.subr.bf16.mxu0 0
      %700 = vmatpush1.bf16.msra.mxu0 0
      %701 = vmatprep.subr.bf16.mxu0 0
      %702 = vmatpush1.bf16.msra.mxu0 0
      %703 = vmatprep.mubr.bf16.mxu0 0
      %704 = vmatmul.mubr.bf16.gmra.mrb[0].mxu0 %v660
      %v705 = vpop.f32.mrb[0].mxu0
      %v706 = vadd.f32 0.0, %v705
      %v707 = vpop.f32.mrb[0].mxu0
      %v708 = vpop.f32.mrb[0].mxu0
      %v709 = vadd.f32 0.0, %v708
      %v710 = vpop.f32.mrb[0].mxu0
      %711 = vmatprep.mubr.bf16.mxu0 0
      %712 = vmatmul.mubr.bf16.gmra.mrb[0].mxu0 %v663
      %v713 = vpop.f32.mrb[0].mxu0
      %v714 = vadd.f32 0.0, %v713
      %v715 = vpop.f32.mrb[0].mxu0
      %v716 = vpop.f32.mrb[0].mxu0
      %v717 = vadd.f32 0.0, %v716
      %v718 = vpop.f32.mrb[0].mxu0
      %719 = vmatprep.mubr.bf16.mxu0 0
      %720 = vmatmul.mubr.bf16.gmra.mrb[0].mxu0 %v666
      %v721 = vpop.f32.mrb[0].mxu0
      %v722 = vadd.f32 0.0, %v721
      %v723 = vpop.f32.mrb[0].mxu0
      %v724 = vpop.f32.mrb[0].mxu0
      %v725 = vadd.f32 0.0, %v724
      %v726 = vpop.f32.mrb[0].mxu0
      %727 = vmatprep.mubr.bf16.mxu0 0
      %728 = vmatmul.mubr.bf16.gmra.mrb[0].mxu0 %v669
      %v729 = vpop.f32.mrb[0].mxu0
      %v730 = vadd.f32 0.0, %v729
      %v731 = vpop.f32.mrb[0].mxu0
      %v732 = vpop.f32.mrb[0].mxu0
      %v733 = vadd.f32 0.0, %v732
      %v734 = vpop.f32.mrb[0].mxu0
      %735 = vdwg.mxu0
      %v736 = vadd.f32 %v525, %v706
      %v737 = vadd.f32 %v528, %v709
      %v738 = vadd.f32 %v533, %v714
      %v739 = vadd.f32 %v536, %v717
      %v740 = vadd.f32 %v541, %v722
      %v741 = vadd.f32 %v544, %v725
      %v742 = vadd.f32 %v549, %v730
      %v743 = vadd.f32 %v552, %v733
      %s744 = scalar_lea.vmem %s165, 8
      %v745 = vld [vmem:[%s744] sm:$0xf]
      %v746 = vld [vmem:[%s744 + $0x8] sm:$0xf]
      %v747 = vld [vmem:[%s744 + $0x10] sm:$0xf]
      %v748 = vld [vmem:[%s744 + $0x18] sm:$0xf]
      %v749 = vld [vmem:[%s744 + $0x20] sm:$0xf]
      %v750 = vld [vmem:[%s744 + $0x28] sm:$0xf]
      %v751 = vld [vmem:[%s744 + $0x30] sm:$0xf]
      %v752 = vld [vmem:[%s744 + $0x38] sm:$0xf]
      %s753 = scalar_lea.vmem %s1, 96
      %v754 = vld [vmem:[%s753] sm:$0xf]
      %v755 = vld [vmem:[%s753 + $0x4] sm:$0xf]
      %v756 = vld [vmem:[%s753 + $0x8] sm:$0xf]
      %v757 = vld [vmem:[%s753 + $0xc] sm:$0xf]
      %v758 = vld [vmem:[%s753 + $0x10] sm:$0xf]
      %v759 = vld [vmem:[%s753 + $0x14] sm:$0xf]
      %v760 = vld [vmem:[%s753 + $0x18] sm:$0xf]
      %v761 = vld [vmem:[%s753 + $0x1c] sm:$0xf]
      %v770 = vunpack.c.l.b16 %v745
      %v771 = vunpack.c.l.b16 %v746
      %v772 = vunpack.c.l.b16 %v747
      %v773 = vunpack.c.l.b16 %v748
      %v774 = vunpack.c.l.b16 %v749
      %v775 = vunpack.c.l.b16 %v750
      %v776 = vunpack.c.l.b16 %v751
      %v777 = vunpack.c.l.b16 %v752
      %v778 = vpack.c.b16 %v771, %v770
      %v779 = vpack.c.b16 %v773, %v772
      %v780 = vpack.c.b16 %v775, %v774
      %v781 = vpack.c.b16 %v777, %v776
      %v790 = vunpack.c.l.b16 %v754
      %v791 = vunpack.c.l.b16 %v755
      %v792 = vunpack.c.l.b16 %v756
      %v793 = vunpack.c.l.b16 %v757
      %v794 = vunpack.c.l.b16 %v758
      %v795 = vunpack.c.l.b16 %v759
      %v796 = vunpack.c.l.b16 %v760
      %v797 = vunpack.c.l.b16 %v761
      %v798 = vpack.c.b16 %v791, %v790
      %v799 = vpack.c.b16 %v793, %v792
      %v800 = vpack.c.b16 %v795, %v794
      %v801 = vpack.c.b16 %v797, %v796
      %v807 = vsel %vm356, %v778, 0
      %v810 = vsel %vm356, %v779, 0
      %v813 = vsel %vm356, %v780, 0
      %v816 = vsel %vm356, %v781, 0
      %818 = vmatprep.subr.bf16.mxu0 0
      %819 = vmatpush1.bf16.msra.mxu0 %v798
      %820 = vmatprep.subr.bf16.mxu0 0
      %821 = vmatpush1.bf16.msra.mxu0 %v799
      %822 = vmatprep.subr.bf16.mxu0 0
      %823 = vmatpush1.bf16.msra.mxu0 %v800
      %824 = vmatprep.subr.bf16.mxu0 0
      %825 = vmatpush1.bf16.msra.mxu0 %v801
      %826 = vmatprep.subr.bf16.mxu0 0
      %827 = vmatpush1.bf16.msra.mxu0 0
      %828 = vmatprep.subr.bf16.mxu0 0
      %829 = vmatpush1.bf16.msra.mxu0 0
      %830 = vmatprep.subr.bf16.mxu0 0
      %831 = vmatpush1.bf16.msra.mxu0 0
      %832 = vmatprep.subr.bf16.mxu0 0
      %833 = vmatpush1.bf16.msra.mxu0 0
      %834 = vmatprep.subr.bf16.mxu0 0
      %835 = vmatpush1.bf16.msra.mxu0 0
      %836 = vmatprep.subr.bf16.mxu0 0
      %837 = vmatpush1.bf16.msra.mxu0 0
      %838 = vmatprep.subr.bf16.mxu0 0
      %839 = vmatpush1.bf16.msra.mxu0 0
      %840 = vmatprep.subr.bf16.mxu0 0
      %841 = vmatpush1.bf16.msra.mxu0 0
      %842 = vmatprep.subr.bf16.mxu0 0
      %843 = vmatpush1.bf16.msra.mxu0 0
      %844 = vmatprep.subr.bf16.mxu0 0
      %845 = vmatpush1.bf16.msra.mxu0 0
      %846 = vmatprep.subr.bf16.mxu0 0
      %847 = vmatpush1.bf16.msra.mxu0 0
      %848 = vmatprep.subr.bf16.mxu0 0
      %849 = vmatpush1.bf16.msra.mxu0 0
      %850 = vmatprep.mubr.bf16.mxu0 0
      %851 = vmatmul.mubr.bf16.gmra.mrb[0].mxu0 %v807
      %v852 = vpop.f32.mrb[0].mxu0
      %v853 = vadd.f32 0.0, %v852
      %v854 = vpop.f32.mrb[0].mxu0
      %v855 = vpop.f32.mrb[0].mxu0
      %v856 = vadd.f32 0.0, %v855
      %v857 = vpop.f32.mrb[0].mxu0
      %858 = vmatprep.mubr.bf16.mxu0 0
      %859 = vmatmul.mubr.bf16.gmra.mrb[0].mxu0 %v810
      %v860 = vpop.f32.mrb[0].mxu0
      %v861 = vadd.f32 0.0, %v860
      %v862 = vpop.f32.mrb[0].mxu0
      %v863 = vpop.f32.mrb[0].mxu0
      %v864 = vadd.f32 0.0, %v863
      %v865 = vpop.f32.mrb[0].mxu0
      %866 = vmatprep.mubr.bf16.mxu0 0
      %867 = vmatmul.mubr.bf16.gmra.mrb[0].mxu0 %v813
      %v868 = vpop.f32.mrb[0].mxu0
      %v869 = vadd.f32 0.0, %v868
      %v870 = vpop.f32.mrb[0].mxu0
      %v871 = vpop.f32.mrb[0].mxu0
      %v872 = vadd.f32 0.0, %v871
      %v873 = vpop.f32.mrb[0].mxu0
      %874 = vmatprep.mubr.bf16.mxu0 0
      %875 = vmatmul.mubr.bf16.gmra.mrb[0].mxu0 %v816
      %v876 = vpop.f32.mrb[0].mxu0
      %v877 = vadd.f32 0.0, %v876
      %v878 = vpop.f32.mrb[0].mxu0
      %v879 = vpop.f32.mrb[0].mxu0
      %v880 = vadd.f32 0.0, %v879
      %v881 = vpop.f32.mrb[0].mxu0
      %882 = vdwg.mxu0
      %v883 = vadd.f32 %v736, %v853
      %v884 = vadd.f32 %v737, %v856
      %v885 = vadd.f32 %v738, %v861
      %v886 = vadd.f32 %v739, %v864
      %v887 = vadd.f32 %v740, %v869
      %v888 = vadd.f32 %v741, %v872
      %v889 = vadd.f32 %v742, %v877
      %v890 = vadd.f32 %v743, %v880
      %v891 = vld [vmem:[%s744] sm:$0xf]
      %v892 = vld [vmem:[%s744 + $0x4] sm:$0x1]
      %v893 = vld [vmem:[%s744 + $0x8] sm:$0xf]
      %v894 = vld [vmem:[%s744 + $0xc] sm:$0x1]
      %v895 = vld [vmem:[%s744 + $0x10] sm:$0xf]
      %v896 = vld [vmem:[%s744 + $0x14] sm:$0x1]
      %v897 = vld [vmem:[%s744 + $0x18] sm:$0xf]
      %v898 = vld [vmem:[%s744 + $0x1c] sm:$0x1]
      %v899 = vld [vmem:[%s744 + $0x20] sm:$0xf]
      %v900 = vld [vmem:[%s744 + $0x24] sm:$0x1]
      %v901 = vld [vmem:[%s744 + $0x28] sm:$0xf]
      %v902 = vld [vmem:[%s744 + $0x2c] sm:$0x1]
      %v903 = vld [vmem:[%s744 + $0x30] sm:$0xf]
      %v904 = vld [vmem:[%s744 + $0x34] sm:$0x1]
      %v905 = vld [vmem:[%s744 + $0x38] sm:$0xf]
      %v906 = vld [vmem:[%s744 + $0x3c] sm:$0x1]
      %v908 = vshrl.u32 %v891, 16
      %v910 = vrot.slane %v908, 4
      %v911 = vshll.u32 %v891, 16
      %v913 = vrot.slane %v911, 5
      %v914 = vor.u32 %v910, %v913
      %v915 = vrot.slane %v914, 4
      %v917 = vshll.u32 %v892, 16
      %v919 = vrot.slane %v917, 5
      %v920 = vsel %vm198, %v915, %v919
      %v922 = vshrl.u32 %v893, 16
      %v924 = vrot.slane %v922, 4
      %v925 = vshll.u32 %v893, 16
      %v927 = vrot.slane %v925, 5
      %v928 = vor.u32 %v924, %v927
      %v929 = vrot.slane %v928, 4
      %v931 = vshll.u32 %v894, 16
      %v933 = vrot.slane %v931, 5
      %v934 = vsel %vm198, %v929, %v933
      %v936 = vshrl.u32 %v895, 16
      %v938 = vrot.slane %v936, 4
      %v939 = vshll.u32 %v895, 16
      %v941 = vrot.slane %v939, 5
      %v942 = vor.u32 %v938, %v941
      %v943 = vrot.slane %v942, 4
      %v945 = vshll.u32 %v896, 16
      %v947 = vrot.slane %v945, 5
      %v948 = vsel %vm198, %v943, %v947
      %v950 = vshrl.u32 %v897, 16
      %v952 = vrot.slane %v950, 4
      %v953 = vshll.u32 %v897, 16
      %v955 = vrot.slane %v953, 5
      %v956 = vor.u32 %v952, %v955
      %v957 = vrot.slane %v956, 4
      %v959 = vshll.u32 %v898, 16
      %v961 = vrot.slane %v959, 5
      %v962 = vsel %vm198, %v957, %v961
      %v964 = vshrl.u32 %v899, 16
      %v966 = vrot.slane %v964, 4
      %v967 = vshll.u32 %v899, 16
      %v969 = vrot.slane %v967, 5
      %v970 = vor.u32 %v966, %v969
      %v971 = vrot.slane %v970, 4
      %v973 = vshll.u32 %v900, 16
      %v975 = vrot.slane %v973, 5
      %v976 = vsel %vm198, %v971, %v975
      %v978 = vshrl.u32 %v901, 16
      %v980 = vrot.slane %v978, 4
      %v981 = vshll.u32 %v901, 16
      %v983 = vrot.slane %v981, 5
      %v984 = vor.u32 %v980, %v983
      %v985 = vrot.slane %v984, 4
      %v987 = vshll.u32 %v902, 16
      %v989 = vrot.slane %v987, 5
      %v990 = vsel %vm198, %v985, %v989
      %v992 = vshrl.u32 %v903, 16
      %v994 = vrot.slane %v992, 4
      %v995 = vshll.u32 %v903, 16
      %v997 = vrot.slane %v995, 5
      %v998 = vor.u32 %v994, %v997
      %v999 = vrot.slane %v998, 4
      %v1001 = vshll.u32 %v904, 16
      %v1003 = vrot.slane %v1001, 5
      %v1004 = vsel %vm198, %v999, %v1003
      %v1006 = vshrl.u32 %v905, 16
      %v1008 = vrot.slane %v1006, 4
      %v1009 = vshll.u32 %v905, 16
      %v1011 = vrot.slane %v1009, 5
      %v1012 = vor.u32 %v1008, %v1011
      %v1013 = vrot.slane %v1012, 4
      %v1015 = vshll.u32 %v906, 16
      %v1017 = vrot.slane %v1015, 5
      %v1018 = vsel %vm198, %v1013, %v1017
      %s1019 = scalar_lea.vmem %s1, 128
      %v1020 = vld [vmem:[%s1019] sm:$0xf]
      %v1021 = vld [vmem:[%s1019 + $0x4] sm:$0xf]
      %v1022 = vld [vmem:[%s1019 + $0x8] sm:$0xf]
      %v1023 = vld [vmem:[%s1019 + $0xc] sm:$0xf]
      %v1024 = vld [vmem:[%s1019 + $0x10] sm:$0xf]
      %v1025 = vld [vmem:[%s1019 + $0x14] sm:$0xf]
      %v1026 = vld [vmem:[%s1019 + $0x18] sm:$0xf]
      %v1027 = vld [vmem:[%s1019 + $0x1c] sm:$0xf]
      %v1028 = vunpack.c.l.b16 %v920
      %v1029 = vunpack.c.l.b16 %v934
      %v1030 = vunpack.c.l.b16 %v948
      %v1031 = vunpack.c.l.b16 %v962
      %v1032 = vunpack.c.l.b16 %v976
      %v1033 = vunpack.c.l.b16 %v990
      %v1034 = vunpack.c.l.b16 %v1004
      %v1035 = vunpack.c.l.b16 %v1018
      %v1036 = vpack.c.b16 %v1029, %v1028
      %v1037 = vpack.c.b16 %v1031, %v1030
      %v1038 = vpack.c.b16 %v1033, %v1032
      %v1039 = vpack.c.b16 %v1035, %v1034
      %v1048 = vunpack.c.l.b16 %v1020
      %v1049 = vunpack.c.l.b16 %v1021
      %v1050 = vunpack.c.l.b16 %v1022
      %v1051 = vunpack.c.l.b16 %v1023
      %v1052 = vunpack.c.l.b16 %v1024
      %v1053 = vunpack.c.l.b16 %v1025
      %v1054 = vunpack.c.l.b16 %v1026
      %v1055 = vunpack.c.l.b16 %v1027
      %v1056 = vpack.c.b16 %v1049, %v1048
      %v1057 = vpack.c.b16 %v1051, %v1050
      %v1058 = vpack.c.b16 %v1053, %v1052
      %v1059 = vpack.c.b16 %v1055, %v1054
      %v1065 = vsel %vm356, %v1036, 0
      %v1068 = vsel %vm356, %v1037, 0
      %v1071 = vsel %vm356, %v1038, 0
      %v1074 = vsel %vm356, %v1039, 0
      %1076 = vmatprep.subr.bf16.mxu0 0
      %1077 = vmatpush1.bf16.msra.mxu0 %v1056
      %1078 = vmatprep.subr.bf16.mxu0 0
      %1079 = vmatpush1.bf16.msra.mxu0 %v1057
      %1080 = vmatprep.subr.bf16.mxu0 0
      %1081 = vmatpush1.bf16.msra.mxu0 %v1058
      %1082 = vmatprep.subr.bf16.mxu0 0
      %1083 = vmatpush1.bf16.msra.mxu0 %v1059
      %1084 = vmatprep.subr.bf16.mxu0 0
      %1085 = vmatpush1.bf16.msra.mxu0 0
      %1086 = vmatprep.subr.bf16.mxu0 0
      %1087 = vmatpush1.bf16.msra.mxu0 0
      %1088 = vmatprep.subr.bf16.mxu0 0
      %1089 = vmatpush1.bf16.msra.mxu0 0
      %1090 = vmatprep.subr.bf16.mxu0 0
      %1091 = vmatpush1.bf16.msra.mxu0 0
      %1092 = vmatprep.subr.bf16.mxu0 0
      %1093 = vmatpush1.bf16.msra.mxu0 0
      %1094 = vmatprep.subr.bf16.mxu0 0
      %1095 = vmatpush1.bf16.msra.mxu0 0
      %1096 = vmatprep.subr.bf16.mxu0 0
      %1097 = vmatpush1.bf16.msra.mxu0 0
      %1098 = vmatprep.subr.bf16.mxu0 0
      %1099 = vmatpush1.bf16.msra.mxu0 0
      %1100 = vmatprep.subr.bf16.mxu0 0
      %1101 = vmatpush1.bf16.msra.mxu0 0
      %1102 = vmatprep.subr.bf16.mxu0 0
      %1103 = vmatpush1.bf16.msra.mxu0 0
      %1104 = vmatprep.subr.bf16.mxu0 0
      %1105 = vmatpush1.bf16.msra.mxu0 0
      %1106 = vmatprep.subr.bf16.mxu0 0
      %1107 = vmatpush1.bf16.msra.mxu0 0
      %1108 = vmatprep.mubr.bf16.mxu0 0
      %1109 = vmatmul.mubr.bf16.gmra.mrb[0].mxu0 %v1065
      %v1110 = vpop.f32.mrb[0].mxu0
      %v1111 = vadd.f32 0.0, %v1110
      %v1112 = vpop.f32.mrb[0].mxu0
      %v1113 = vpop.f32.mrb[0].mxu0
      %v1114 = vadd.f32 0.0, %v1113
      %v1115 = vpop.f32.mrb[0].mxu0
      %1116 = vmatprep.mubr.bf16.mxu0 0
      %1117 = vmatmul.mubr.bf16.gmra.mrb[0].mxu0 %v1068
      %v1118 = vpop.f32.mrb[0].mxu0
      %v1119 = vadd.f32 0.0, %v1118
      %v1120 = vpop.f32.mrb[0].mxu0
      %v1121 = vpop.f32.mrb[0].mxu0
      %v1122 = vadd.f32 0.0, %v1121
      %v1123 = vpop.f32.mrb[0].mxu0
      %1124 = vmatprep.mubr.bf16.mxu0 0
      %1125 = vmatmul.mubr.bf16.gmra.mrb[0].mxu0 %v1071
      %v1126 = vpop.f32.mrb[0].mxu0
      %v1127 = vadd.f32 0.0, %v1126
      %v1128 = vpop.f32.mrb[0].mxu0
      %v1129 = vpop.f32.mrb[0].mxu0
      %v1130 = vadd.f32 0.0, %v1129
      %v1131 = vpop.f32.mrb[0].mxu0
      %1132 = vmatprep.mubr.bf16.mxu0 0
      %1133 = vmatmul.mubr.bf16.gmra.mrb[0].mxu0 %v1074
      %v1134 = vpop.f32.mrb[0].mxu0
      %v1135 = vadd.f32 0.0, %v1134
      %v1136 = vpop.f32.mrb[0].mxu0
      %v1137 = vpop.f32.mrb[0].mxu0
      %v1138 = vadd.f32 0.0, %v1137
      %v1139 = vpop.f32.mrb[0].mxu0
      %1140 = vdwg.mxu0
      %v1141 = vadd.f32 %v883, %v1111
      %v1142 = vadd.f32 %v884, %v1114
      %v1143 = vadd.f32 %v885, %v1119
      %v1144 = vadd.f32 %v886, %v1122
      %v1145 = vadd.f32 %v887, %v1127
      %v1146 = vadd.f32 %v888, %v1130
      %v1147 = vadd.f32 %v889, %v1135
      %v1148 = vadd.f32 %v890, %v1138
      %v1149 = vld [vmem:[%s744] sm:$0xe]
      %v1150 = vld [vmem:[%s744 + $0x8] sm:$0xe]
      %v1151 = vld [vmem:[%s744 + $0x10] sm:$0xe]
      %v1152 = vld [vmem:[%s744 + $0x18] sm:$0xe]
      %v1153 = vld [vmem:[%s744 + $0x20] sm:$0xe]
      %v1154 = vld [vmem:[%s744 + $0x28] sm:$0xe]
      %v1155 = vld [vmem:[%s744 + $0x30] sm:$0xe]
      %v1156 = vld [vmem:[%s744 + $0x38] sm:$0xe]
      %v1173 = vrot.slane %v1149, 5
      %v1174 = vrot.slane %v1173, 4
      %v1175 = vrot.slane %v892, 5
      %v1176 = vsel %vm581, %v1174, %v1175
      %v1177 = vrot.slane %v1150, 5
      %v1178 = vrot.slane %v1177, 4
      %v1179 = vrot.slane %v894, 5
      %v1180 = vsel %vm581, %v1178, %v1179
      %v1181 = vrot.slane %v1151, 5
      %v1182 = vrot.slane %v1181, 4
      %v1183 = vrot.slane %v896, 5
      %v1184 = vsel %vm581, %v1182, %v1183
      %v1185 = vrot.slane %v1152, 5
      %v1186 = vrot.slane %v1185, 4
      %v1187 = vrot.slane %v898, 5
      %v1188 = vsel %vm581, %v1186, %v1187
      %v1189 = vrot.slane %v1153, 5
      %v1190 = vrot.slane %v1189, 4
      %v1191 = vrot.slane %v900, 5
      %v1192 = vsel %vm581, %v1190, %v1191
      %v1193 = vrot.slane %v1154, 5
      %v1194 = vrot.slane %v1193, 4
      %v1195 = vrot.slane %v902, 5
      %v1196 = vsel %vm581, %v1194, %v1195
      %v1197 = vrot.slane %v1155, 5
      %v1198 = vrot.slane %v1197, 4
      %v1199 = vrot.slane %v904, 5
      %v1200 = vsel %vm581, %v1198, %v1199
      %v1201 = vrot.slane %v1156, 5
      %v1202 = vrot.slane %v1201, 4
      %v1203 = vrot.slane %v906, 5
      %v1204 = vsel %vm581, %v1202, %v1203
      %s1205 = scalar_lea.vmem %s1, 160
      %v1206 = vld [vmem:[%s1205] sm:$0xf]
      %v1207 = vld [vmem:[%s1205 + $0x4] sm:$0xf]
      %v1208 = vld [vmem:[%s1205 + $0x8] sm:$0xf]
      %v1209 = vld [vmem:[%s1205 + $0xc] sm:$0xf]
      %v1210 = vld [vmem:[%s1205 + $0x10] sm:$0xf]
      %v1211 = vld [vmem:[%s1205 + $0x14] sm:$0xf]
      %v1212 = vld [vmem:[%s1205 + $0x18] sm:$0xf]
      %v1213 = vld [vmem:[%s1205 + $0x1c] sm:$0xf]
      %v1214 = vunpack.c.l.b16 %v1176
      %v1215 = vunpack.c.l.b16 %v1180
      %v1216 = vunpack.c.l.b16 %v1184
      %v1217 = vunpack.c.l.b16 %v1188
      %v1218 = vunpack.c.l.b16 %v1192
      %v1219 = vunpack.c.l.b16 %v1196
      %v1220 = vunpack.c.l.b16 %v1200
      %v1221 = vunpack.c.l.b16 %v1204
      %v1222 = vpack.c.b16 %v1215, %v1214
      %v1223 = vpack.c.b16 %v1217, %v1216
      %v1224 = vpack.c.b16 %v1219, %v1218
      %v1225 = vpack.c.b16 %v1221, %v1220
      %v1234 = vunpack.c.l.b16 %v1206
      %v1235 = vunpack.c.l.b16 %v1207
      %v1236 = vunpack.c.l.b16 %v1208
      %v1237 = vunpack.c.l.b16 %v1209
      %v1238 = vunpack.c.l.b16 %v1210
      %v1239 = vunpack.c.l.b16 %v1211
      %v1240 = vunpack.c.l.b16 %v1212
      %v1241 = vunpack.c.l.b16 %v1213
      %v1242 = vpack.c.b16 %v1235, %v1234
      %v1243 = vpack.c.b16 %v1237, %v1236
      %v1244 = vpack.c.b16 %v1239, %v1238
      %v1245 = vpack.c.b16 %v1241, %v1240
      %v1251 = vsel %vm356, %v1222, 0
      %v1254 = vsel %vm356, %v1223, 0
      %v1257 = vsel %vm356, %v1224, 0
      %v1260 = vsel %vm356, %v1225, 0
      %1262 = vmatprep.subr.bf16.mxu0 0
      %1263 = vmatpush1.bf16.msra.mxu0 %v1242
      %1264 = vmatprep.subr.bf16.mxu0 0
      %1265 = vmatpush1.bf16.msra.mxu0 %v1243
      %1266 = vmatprep.subr.bf16.mxu0 0
      %1267 = vmatpush1.bf16.msra.mxu0 %v1244
      %1268 = vmatprep.subr.bf16.mxu0 0
      %1269 = vmatpush1.bf16.msra.mxu0 %v1245
      %1270 = vmatprep.subr.bf16.mxu0 0
      %1271 = vmatpush1.bf16.msra.mxu0 0
      %1272 = vmatprep.subr.bf16.mxu0 0
      %1273 = vmatpush1.bf16.msra.mxu0 0
      %1274 = vmatprep.subr.bf16.mxu0 0
      %1275 = vmatpush1.bf16.msra.mxu0 0
      %1276 = vmatprep.subr.bf16.mxu0 0
      %1277 = vmatpush1.bf16.msra.mxu0 0
      %1278 = vmatprep.subr.bf16.mxu0 0
      %1279 = vmatpush1.bf16.msra.mxu0 0
      %1280 = vmatprep.subr.bf16.mxu0 0
      %1281 = vmatpush1.bf16.msra.mxu0 0
      %1282 = vmatprep.subr.bf16.mxu0 0
      %1283 = vmatpush1.bf16.msra.mxu0 0
      %1284 = vmatprep.subr.bf16.mxu0 0
      %1285 = vmatpush1.bf16.msra.mxu0 0
      %1286 = vmatprep.subr.bf16.mxu0 0
      %1287 = vmatpush1.bf16.msra.mxu0 0
      %1288 = vmatprep.subr.bf16.mxu0 0
      %1289 = vmatpush1.bf16.msra.mxu0 0
      %1290 = vmatprep.subr.bf16.mxu0 0
      %1291 = vmatpush1.bf16.msra.mxu0 0
      %1292 = vmatprep.subr.bf16.mxu0 0
      %1293 = vmatpush1.bf16.msra.mxu0 0
      %1294 = vmatprep.mubr.bf16.mxu0 0
      %1295 = vmatmul.mubr.bf16.gmra.mrb[0].mxu0 %v1251
      %v1296 = vpop.f32.mrb[0].mxu0
      %v1297 = vadd.f32 0.0, %v1296
      %v1298 = vpop.f32.mrb[0].mxu0
      %v1299 = vpop.f32.mrb[0].mxu0
      %v1300 = vadd.f32 0.0, %v1299
      %v1301 = vpop.f32.mrb[0].mxu0
      %1302 = vmatprep.mubr.bf16.mxu0 0
      %1303 = vmatmul.mubr.bf16.gmra.mrb[0].mxu0 %v1254
      %v1304 = vpop.f32.mrb[0].mxu0
      %v1305 = vadd.f32 0.0, %v1304
      %v1306 = vpop.f32.mrb[0].mxu0
      %v1307 = vpop.f32.mrb[0].mxu0
      %v1308 = vadd.f32 0.0, %v1307
      %v1309 = vpop.f32.mrb[0].mxu0
      %1310 = vmatprep.mubr.bf16.mxu0 0
      %1311 = vmatmul.mubr.bf16.gmra.mrb[0].mxu0 %v1257
      %v1312 = vpop.f32.mrb[0].mxu0
      %v1313 = vadd.f32 0.0, %v1312
      %v1314 = vpop.f32.mrb[0].mxu0
      %v1315 = vpop.f32.mrb[0].mxu0
      %v1316 = vadd.f32 0.0, %v1315
      %v1317 = vpop.f32.mrb[0].mxu0
      %1318 = vmatprep.mubr.bf16.mxu0 0
      %1319 = vmatmul.mubr.bf16.gmra.mrb[0].mxu0 %v1260
      %v1320 = vpop.f32.mrb[0].mxu0
      %v1321 = vadd.f32 0.0, %v1320
      %v1322 = vpop.f32.mrb[0].mxu0
      %v1323 = vpop.f32.mrb[0].mxu0
      %v1324 = vadd.f32 0.0, %v1323
      %v1325 = vpop.f32.mrb[0].mxu0
      %1326 = vdwg.mxu0
      %v1327 = vadd.f32 %v1141, %v1297
      %v1328 = vadd.f32 %v1142, %v1300
      %v1329 = vadd.f32 %v1143, %v1305
      %v1330 = vadd.f32 %v1144, %v1308
      %v1331 = vadd.f32 %v1145, %v1313
      %v1332 = vadd.f32 %v1146, %v1316
      %v1333 = vadd.f32 %v1147, %v1321
      %v1334 = vadd.f32 %v1148, %v1324
      %s1335 = scalar_lea.vmem %s165, 16
      %v1336 = vld [vmem:[%s1335] sm:$0xf]
      %v1337 = vld [vmem:[%s1335 + $0x8] sm:$0xf]
      %v1338 = vld [vmem:[%s1335 + $0x10] sm:$0xf]
      %v1339 = vld [vmem:[%s1335 + $0x18] sm:$0xf]
      %v1340 = vld [vmem:[%s1335 + $0x20] sm:$0xf]
      %v1341 = vld [vmem:[%s1335 + $0x28] sm:$0xf]
      %v1342 = vld [vmem:[%s1335 + $0x30] sm:$0xf]
      %v1343 = vld [vmem:[%s1335 + $0x38] sm:$0xf]
      %s1344 = scalar_lea.vmem %s1, 192
      %v1345 = vld [vmem:[%s1344] sm:$0xf]
      %v1346 = vld [vmem:[%s1344 + $0x4] sm:$0xf]
      %v1347 = vld [vmem:[%s1344 + $0x8] sm:$0xf]
      %v1348 = vld [vmem:[%s1344 + $0xc] sm:$0xf]
      %v1349 = vld [vmem:[%s1344 + $0x10] sm:$0xf]
      %v1350 = vld [vmem:[%s1344 + $0x14] sm:$0xf]
      %v1351 = vld [vmem:[%s1344 + $0x18] sm:$0xf]
      %v1352 = vld [vmem:[%s1344 + $0x1c] sm:$0xf]
      %v1361 = vunpack.c.l.b16 %v1336
      %v1362 = vunpack.c.l.b16 %v1337
      %v1363 = vunpack.c.l.b16 %v1338
      %v1364 = vunpack.c.l.b16 %v1339
      %v1365 = vunpack.c.l.b16 %v1340
      %v1366 = vunpack.c.l.b16 %v1341
      %v1367 = vunpack.c.l.b16 %v1342
      %v1368 = vunpack.c.l.b16 %v1343
      %v1369 = vpack.c.b16 %v1362, %v1361
      %v1370 = vpack.c.b16 %v1364, %v1363
      %v1371 = vpack.c.b16 %v1366, %v1365
      %v1372 = vpack.c.b16 %v1368, %v1367
      %v1381 = vunpack.c.l.b16 %v1345
      %v1382 = vunpack.c.l.b16 %v1346
      %v1383 = vunpack.c.l.b16 %v1347
      %v1384 = vunpack.c.l.b16 %v1348
      %v1385 = vunpack.c.l.b16 %v1349
      %v1386 = vunpack.c.l.b16 %v1350
      %v1387 = vunpack.c.l.b16 %v1351
      %v1388 = vunpack.c.l.b16 %v1352
      %v1389 = vpack.c.b16 %v1382, %v1381
      %v1390 = vpack.c.b16 %v1384, %v1383
      %v1391 = vpack.c.b16 %v1386, %v1385
      %v1392 = vpack.c.b16 %v1388, %v1387
      %v1398 = vsel %vm356, %v1369, 0
      %v1401 = vsel %vm356, %v1370, 0
      %v1404 = vsel %vm356, %v1371, 0
      %v1407 = vsel %vm356, %v1372, 0
      %1409 = vmatprep.subr.bf16.mxu0 0
      %1410 = vmatpush1.bf16.msra.mxu0 %v1389
      %1411 = vmatprep.subr.bf16.mxu0 0
      %1412 = vmatpush1.bf16.msra.mxu0 %v1390
      %1413 = vmatprep.subr.bf16.mxu0 0
      %1414 = vmatpush1.bf16.msra.mxu0 %v1391
      %1415 = vmatprep.subr.bf16.mxu0 0
      %1416 = vmatpush1.bf16.msra.mxu0 %v1392
      %1417 = vmatprep.subr.bf16.mxu0 0
      %1418 = vmatpush1.bf16.msra.mxu0 0
      %1419 = vmatprep.subr.bf16.mxu0 0
      %1420 = vmatpush1.bf16.msra.mxu0 0
      %1421 = vmatprep.subr.bf16.mxu0 0
      %1422 = vmatpush1.bf16.msra.mxu0 0
      %1423 = vmatprep.subr.bf16.mxu0 0
      %1424 = vmatpush1.bf16.msra.mxu0 0
      %1425 = vmatprep.subr.bf16.mxu0 0
      %1426 = vmatpush1.bf16.msra.mxu0 0
      %1427 = vmatprep.subr.bf16.mxu0 0
      %1428 = vmatpush1.bf16.msra.mxu0 0
      %1429 = vmatprep.subr.bf16.mxu0 0
      %1430 = vmatpush1.bf16.msra.mxu0 0
      %1431 = vmatprep.subr.bf16.mxu0 0
      %1432 = vmatpush1.bf16.msra.mxu0 0
      %1433 = vmatprep.subr.bf16.mxu0 0
      %1434 = vmatpush1.bf16.msra.mxu0 0
      %1435 = vmatprep.subr.bf16.mxu0 0
      %1436 = vmatpush1.bf16.msra.mxu0 0
      %1437 = vmatprep.subr.bf16.mxu0 0
      %1438 = vmatpush1.bf16.msra.mxu0 0
      %1439 = vmatprep.subr.bf16.mxu0 0
      %1440 = vmatpush1.bf16.msra.mxu0 0
      %1441 = vmatprep.mubr.bf16.mxu0 0
      %1442 = vmatmul.mubr.bf16.gmra.mrb[0].mxu0 %v1398
      %v1443 = vpop.f32.mrb[0].mxu0
      %v1444 = vadd.f32 0.0, %v1443
      %v1445 = vpop.f32.mrb[0].mxu0
      %v1446 = vpop.f32.mrb[0].mxu0
      %v1447 = vadd.f32 0.0, %v1446
      %v1448 = vpop.f32.mrb[0].mxu0
      %1449 = vmatprep.mubr.bf16.mxu0 0
      %1450 = vmatmul.mubr.bf16.gmra.mrb[0].mxu0 %v1401
      %v1451 = vpop.f32.mrb[0].mxu0
      %v1452 = vadd.f32 0.0, %v1451
      %v1453 = vpop.f32.mrb[0].mxu0
      %v1454 = vpop.f32.mrb[0].mxu0
      %v1455 = vadd.f32 0.0, %v1454
      %v1456 = vpop.f32.mrb[0].mxu0
      %1457 = vmatprep.mubr.bf16.mxu0 0
      %1458 = vmatmul.mubr.bf16.gmra.mrb[0].mxu0 %v1404
      %v1459 = vpop.f32.mrb[0].mxu0
      %v1460 = vadd.f32 0.0, %v1459
      %v1461 = vpop.f32.mrb[0].mxu0
      %v1462 = vpop.f32.mrb[0].mxu0
      %v1463 = vadd.f32 0.0, %v1462
      %v1464 = vpop.f32.mrb[0].mxu0
      %1465 = vmatprep.mubr.bf16.mxu0 0
      %1466 = vmatmul.mubr.bf16.gmra.mrb[0].mxu0 %v1407
      %v1467 = vpop.f32.mrb[0].mxu0
      %v1468 = vadd.f32 0.0, %v1467
      %v1469 = vpop.f32.mrb[0].mxu0
      %v1470 = vpop.f32.mrb[0].mxu0
      %v1471 = vadd.f32 0.0, %v1470
      %v1472 = vpop.f32.mrb[0].mxu0
      %1473 = vdwg.mxu0
      %v1474 = vadd.f32 %v1327, %v1444
      %v1475 = vadd.f32 %v1328, %v1447
      %v1476 = vadd.f32 %v1329, %v1452
      %v1477 = vadd.f32 %v1330, %v1455
      %v1478 = vadd.f32 %v1331, %v1460
      %v1479 = vadd.f32 %v1332, %v1463
      %v1480 = vadd.f32 %v1333, %v1468
      %v1481 = vadd.f32 %v1334, %v1471
      %v1482 = vld [vmem:[%s1335] sm:$0xf]
      %v1483 = vld [vmem:[%s1335 + $0x4] sm:$0x1]
      %v1484 = vld [vmem:[%s1335 + $0x8] sm:$0xf]
      %v1485 = vld [vmem:[%s1335 + $0xc] sm:$0x1]
      %v1486 = vld [vmem:[%s1335 + $0x10] sm:$0xf]
      %v1487 = vld [vmem:[%s1335 + $0x14] sm:$0x1]
      %v1488 = vld [vmem:[%s1335 + $0x18] sm:$0xf]
      %v1489 = vld [vmem:[%s1335 + $0x1c] sm:$0x1]
      %v1490 = vld [vmem:[%s1335 + $0x20] sm:$0xf]
      %v1491 = vld [vmem:[%s1335 + $0x24] sm:$0x1]
      %v1492 = vld [vmem:[%s1335 + $0x28] sm:$0xf]
      %v1493 = vld [vmem:[%s1335 + $0x2c] sm:$0x1]
      %v1494 = vld [vmem:[%s1335 + $0x30] sm:$0xf]
      %v1495 = vld [vmem:[%s1335 + $0x34] sm:$0x1]
      %v1496 = vld [vmem:[%s1335 + $0x38] sm:$0xf]
      %v1497 = vld [vmem:[%s1335 + $0x3c] sm:$0x1]
      %v1499 = vshrl.u32 %v1482, 16
      %v1501 = vrot.slane %v1499, 4
      %v1502 = vshll.u32 %v1482, 16
      %v1504 = vrot.slane %v1502, 5
      %v1505 = vor.u32 %v1501, %v1504
      %v1506 = vrot.slane %v1505, 4
      %v1508 = vshll.u32 %v1483, 16
      %v1510 = vrot.slane %v1508, 5
      %v1511 = vsel %vm198, %v1506, %v1510
      %v1513 = vshrl.u32 %v1484, 16
      %v1515 = vrot.slane %v1513, 4
      %v1516 = vshll.u32 %v1484, 16
      %v1518 = vrot.slane %v1516, 5
      %v1519 = vor.u32 %v1515, %v1518
      %v1520 = vrot.slane %v1519, 4
      %v1522 = vshll.u32 %v1485, 16
      %v1524 = vrot.slane %v1522, 5
      %v1525 = vsel %vm198, %v1520, %v1524
      %v1527 = vshrl.u32 %v1486, 16
      %v1529 = vrot.slane %v1527, 4
      %v1530 = vshll.u32 %v1486, 16
      %v1532 = vrot.slane %v1530, 5
      %v1533 = vor.u32 %v1529, %v1532
      %v1534 = vrot.slane %v1533, 4
      %v1536 = vshll.u32 %v1487, 16
      %v1538 = vrot.slane %v1536, 5
      %v1539 = vsel %vm198, %v1534, %v1538
      %v1541 = vshrl.u32 %v1488, 16
      %v1543 = vrot.slane %v1541, 4
      %v1544 = vshll.u32 %v1488, 16
      %v1546 = vrot.slane %v1544, 5
      %v1547 = vor.u32 %v1543, %v1546
      %v1548 = vrot.slane %v1547, 4
      %v1550 = vshll.u32 %v1489, 16
      %v1552 = vrot.slane %v1550, 5
      %v1553 = vsel %vm198, %v1548, %v1552
      %v1555 = vshrl.u32 %v1490, 16
      %v1557 = vrot.slane %v1555, 4
      %v1558 = vshll.u32 %v1490, 16
      %v1560 = vrot.slane %v1558, 5
      %v1561 = vor.u32 %v1557, %v1560
      %v1562 = vrot.slane %v1561, 4
      %v1564 = vshll.u32 %v1491, 16
      %v1566 = vrot.slane %v1564, 5
      %v1567 = vsel %vm198, %v1562, %v1566
      %v1569 = vshrl.u32 %v1492, 16
      %v1571 = vrot.slane %v1569, 4
      %v1572 = vshll.u32 %v1492, 16
      %v1574 = vrot.slane %v1572, 5
      %v1575 = vor.u32 %v1571, %v1574
      %v1576 = vrot.slane %v1575, 4
      %v1578 = vshll.u32 %v1493, 16
      %v1580 = vrot.slane %v1578, 5
      %v1581 = vsel %vm198, %v1576, %v1580
      %v1583 = vshrl.u32 %v1494, 16
      %v1585 = vrot.slane %v1583, 4
      %v1586 = vshll.u32 %v1494, 16
      %v1588 = vrot.slane %v1586, 5
      %v1589 = vor.u32 %v1585, %v1588
      %v1590 = vrot.slane %v1589, 4
      %v1592 = vshll.u32 %v1495, 16
      %v1594 = vrot.slane %v1592, 5
      %v1595 = vsel %vm198, %v1590, %v1594
      %v1597 = vshrl.u32 %v1496, 16
      %v1599 = vrot.slane %v1597, 4
      %v1600 = vshll.u32 %v1496, 16
      %v1602 = vrot.slane %v1600, 5
      %v1603 = vor.u32 %v1599, %v1602
      %v1604 = vrot.slane %v1603, 4
      %v1606 = vshll.u32 %v1497, 16
      %v1608 = vrot.slane %v1606, 5
      %v1609 = vsel %vm198, %v1604, %v1608
      %s1610 = scalar_lea.vmem %s1, 224
      %v1611 = vld [vmem:[%s1610] sm:$0xf]
      %v1612 = vld [vmem:[%s1610 + $0x4] sm:$0xf]
      %v1613 = vld [vmem:[%s1610 + $0x8] sm:$0xf]
      %v1614 = vld [vmem:[%s1610 + $0xc] sm:$0xf]
      %v1615 = vld [vmem:[%s1610 + $0x10] sm:$0xf]
      %v1616 = vld [vmem:[%s1610 + $0x14] sm:$0xf]
      %v1617 = vld [vmem:[%s1610 + $0x18] sm:$0xf]
      %v1618 = vld [vmem:[%s1610 + $0x1c] sm:$0xf]
      %v1619 = vunpack.c.l.b16 %v1511
      %v1620 = vunpack.c.l.b16 %v1525
      %v1621 = vunpack.c.l.b16 %v1539
      %v1622 = vunpack.c.l.b16 %v1553
      %v1623 = vunpack.c.l.b16 %v1567
      %v1624 = vunpack.c.l.b16 %v1581
      %v1625 = vunpack.c.l.b16 %v1595
      %v1626 = vunpack.c.l.b16 %v1609
      %v1627 = vpack.c.b16 %v1620, %v1619
      %v1628 = vpack.c.b16 %v1622, %v1621
      %v1629 = vpack.c.b16 %v1624, %v1623
      %v1630 = vpack.c.b16 %v1626, %v1625
      %v1639 = vunpack.c.l.b16 %v1611
      %v1640 = vunpack.c.l.b16 %v1612
      %v1641 = vunpack.c.l.b16 %v1613
      %v1642 = vunpack.c.l.b16 %v1614
      %v1643 = vunpack.c.l.b16 %v1615
      %v1644 = vunpack.c.l.b16 %v1616
      %v1645 = vunpack.c.l.b16 %v1617
      %v1646 = vunpack.c.l.b16 %v1618
      %v1647 = vpack.c.b16 %v1640, %v1639
      %v1648 = vpack.c.b16 %v1642, %v1641
      %v1649 = vpack.c.b16 %v1644, %v1643
      %v1650 = vpack.c.b16 %v1646, %v1645
      %v1656 = vsel %vm356, %v1627, 0
      %v1659 = vsel %vm356, %v1628, 0
      %v1662 = vsel %vm356, %v1629, 0
      %v1665 = vsel %vm356, %v1630, 0
      %1667 = vmatprep.subr.bf16.mxu0 0
      %1668 = vmatpush1.bf16.msra.mxu0 %v1647
      %1669 = vmatprep.subr.bf16.mxu0 0
      %1670 = vmatpush1.bf16.msra.mxu0 %v1648
      %1671 = vmatprep.subr.bf16.mxu0 0
      %1672 = vmatpush1.bf16.msra.mxu0 %v1649
      %1673 = vmatprep.subr.bf16.mxu0 0
      %1674 = vmatpush1.bf16.msra.mxu0 %v1650
      %1675 = vmatprep.subr.bf16.mxu0 0
      %1676 = vmatpush1.bf16.msra.mxu0 0
      %1677 = vmatprep.subr.bf16.mxu0 0
      %1678 = vmatpush1.bf16.msra.mxu0 0
      %1679 = vmatprep.subr.bf16.mxu0 0
      %1680 = vmatpush1.bf16.msra.mxu0 0
      %1681 = vmatprep.subr.bf16.mxu0 0
      %1682 = vmatpush1.bf16.msra.mxu0 0
      %1683 = vmatprep.subr.bf16.mxu0 0
      %1684 = vmatpush1.bf16.msra.mxu0 0
      %1685 = vmatprep.subr.bf16.mxu0 0
      %1686 = vmatpush1.bf16.msra.mxu0 0
      %1687 = vmatprep.subr.bf16.mxu0 0
      %1688 = vmatpush1.bf16.msra.mxu0 0
      %1689 = vmatprep.subr.bf16.mxu0 0
      %1690 = vmatpush1.bf16.msra.mxu0 0
      %1691 = vmatprep.subr.bf16.mxu0 0
      %1692 = vmatpush1.bf16.msra.mxu0 0
      %1693 = vmatprep.subr.bf16.mxu0 0
      %1694 = vmatpush1.bf16.msra.mxu0 0
      %1695 = vmatprep.subr.bf16.mxu0 0
      %1696 = vmatpush1.bf16.msra.mxu0 0
      %1697 = vmatprep.subr.bf16.mxu0 0
      %1698 = vmatpush1.bf16.msra.mxu0 0
      %1699 = vmatprep.mubr.bf16.mxu0 0
      %1700 = vmatmul.mubr.bf16.gmra.mrb[0].mxu0 %v1656
      %v1701 = vpop.f32.mrb[0].mxu0
      %v1702 = vadd.f32 0.0, %v1701
      %v1703 = vpop.f32.mrb[0].mxu0
      %v1704 = vpop.f32.mrb[0].mxu0
      %v1705 = vadd.f32 0.0, %v1704
      %v1706 = vpop.f32.mrb[0].mxu0
      %1707 = vmatprep.mubr.bf16.mxu0 0
      %1708 = vmatmul.mubr.bf16.gmra.mrb[0].mxu0 %v1659
      %v1709 = vpop.f32.mrb[0].mxu0
      %v1710 = vadd.f32 0.0, %v1709
      %v1711 = vpop.f32.mrb[0].mxu0
      %v1712 = vpop.f32.mrb[0].mxu0
      %v1713 = vadd.f32 0.0, %v1712
      %v1714 = vpop.f32.mrb[0].mxu0
      %1715 = vmatprep.mubr.bf16.mxu0 0
      %1716 = vmatmul.mubr.bf16.gmra.mrb[0].mxu0 %v1662
      %v1717 = vpop.f32.mrb[0].mxu0
      %v1718 = vadd.f32 0.0, %v1717
      %v1719 = vpop.f32.mrb[0].mxu0
      %v1720 = vpop.f32.mrb[0].mxu0
      %v1721 = vadd.f32 0.0, %v1720
      %v1722 = vpop.f32.mrb[0].mxu0
      %1723 = vmatprep.mubr.bf16.mxu0 0
      %1724 = vmatmul.mubr.bf16.gmra.mrb[0].mxu0 %v1665
      %v1725 = vpop.f32.mrb[0].mxu0
      %v1726 = vadd.f32 0.0, %v1725
      %v1727 = vpop.f32.mrb[0].mxu0
      %v1728 = vpop.f32.mrb[0].mxu0
      %v1729 = vadd.f32 0.0, %v1728
      %v1730 = vpop.f32.mrb[0].mxu0
      %1731 = vdwg.mxu0
      %v1732 = vadd.f32 %v1474, %v1702
      %v1733 = vadd.f32 %v1475, %v1705
      %v1734 = vadd.f32 %v1476, %v1710
      %v1735 = vadd.f32 %v1477, %v1713
      %v1736 = vadd.f32 %v1478, %v1718
      %v1737 = vadd.f32 %v1479, %v1721
      %v1738 = vadd.f32 %v1480, %v1726
      %v1739 = vadd.f32 %v1481, %v1729
      %v1740 = vld [vmem:[%s1335] sm:$0xe]
      %v1741 = vld [vmem:[%s1335 + $0x8] sm:$0xe]
      %v1742 = vld [vmem:[%s1335 + $0x10] sm:$0xe]
      %v1743 = vld [vmem:[%s1335 + $0x18] sm:$0xe]
      %v1744 = vld [vmem:[%s1335 + $0x20] sm:$0xe]
      %v1745 = vld [vmem:[%s1335 + $0x28] sm:$0xe]
      %v1746 = vld [vmem:[%s1335 + $0x30] sm:$0xe]
      %v1747 = vld [vmem:[%s1335 + $0x38] sm:$0xe]
      %v1764 = vrot.slane %v1740, 5
      %v1765 = vrot.slane %v1764, 4
      %v1766 = vrot.slane %v1483, 5
      %v1767 = vsel %vm581, %v1765, %v1766
      %v1768 = vrot.slane %v1741, 5
      %v1769 = vrot.slane %v1768, 4
      %v1770 = vrot.slane %v1485, 5
      %v1771 = vsel %vm581, %v1769, %v1770
      %v1772 = vrot.slane %v1742, 5
      %v1773 = vrot.slane %v1772, 4
      %v1774 = vrot.slane %v1487, 5
      %v1775 = vsel %vm581, %v1773, %v1774
      %v1776 = vrot.slane %v1743, 5
      %v1777 = vrot.slane %v1776, 4
      %v1778 = vrot.slane %v1489, 5
      %v1779 = vsel %vm581, %v1777, %v1778
      %v1780 = vrot.slane %v1744, 5
      %v1781 = vrot.slane %v1780, 4
      %v1782 = vrot.slane %v1491, 5
      %v1783 = vsel %vm581, %v1781, %v1782
      %v1784 = vrot.slane %v1745, 5
      %v1785 = vrot.slane %v1784, 4
      %v1786 = vrot.slane %v1493, 5
      %v1787 = vsel %vm581, %v1785, %v1786
      %v1788 = vrot.slane %v1746, 5
      %v1789 = vrot.slane %v1788, 4
      %v1790 = vrot.slane %v1495, 5
      %v1791 = vsel %vm581, %v1789, %v1790
      %v1792 = vrot.slane %v1747, 5
      %v1793 = vrot.slane %v1792, 4
      %v1794 = vrot.slane %v1497, 5
      %v1795 = vsel %vm581, %v1793, %v1794
      %s1796 = scalar_lea.vmem %s1, 256
      %v1797 = vld [vmem:[%s1796] sm:$0xf]
      %v1798 = vld [vmem:[%s1796 + $0x4] sm:$0xf]
      %v1799 = vld [vmem:[%s1796 + $0x8] sm:$0xf]
      %v1800 = vld [vmem:[%s1796 + $0xc] sm:$0xf]
      %v1801 = vld [vmem:[%s1796 + $0x10] sm:$0xf]
      %v1802 = vld [vmem:[%s1796 + $0x14] sm:$0xf]
      %v1803 = vld [vmem:[%s1796 + $0x18] sm:$0xf]
      %v1804 = vld [vmem:[%s1796 + $0x1c] sm:$0xf]
      %v1805 = vunpack.c.l.b16 %v1767
      %v1806 = vunpack.c.l.b16 %v1771
      %v1807 = vunpack.c.l.b16 %v1775
      %v1808 = vunpack.c.l.b16 %v1779
      %v1809 = vunpack.c.l.b16 %v1783
      %v1810 = vunpack.c.l.b16 %v1787
      %v1811 = vunpack.c.l.b16 %v1791
      %v1812 = vunpack.c.l.b16 %v1795
      %v1813 = vpack.c.b16 %v1806, %v1805
      %v1814 = vpack.c.b16 %v1808, %v1807
      %v1815 = vpack.c.b16 %v1810, %v1809
      %v1816 = vpack.c.b16 %v1812, %v1811
      %v1825 = vunpack.c.l.b16 %v1797
      %v1826 = vunpack.c.l.b16 %v1798
      %v1827 = vunpack.c.l.b16 %v1799
      %v1828 = vunpack.c.l.b16 %v1800
      %v1829 = vunpack.c.l.b16 %v1801
      %v1830 = vunpack.c.l.b16 %v1802
      %v1831 = vunpack.c.l.b16 %v1803
      %v1832 = vunpack.c.l.b16 %v1804
      %v1833 = vpack.c.b16 %v1826, %v1825
      %v1834 = vpack.c.b16 %v1828, %v1827
      %v1835 = vpack.c.b16 %v1830, %v1829
      %v1836 = vpack.c.b16 %v1832, %v1831
      %v1842 = vsel %vm356, %v1813, 0
      %v1845 = vsel %vm356, %v1814, 0
      %v1848 = vsel %vm356, %v1815, 0
      %v1851 = vsel %vm356, %v1816, 0
      %1853 = vmatprep.subr.bf16.mxu0 0
      %1854 = vmatpush1.bf16.msra.mxu0 %v1833
      %1855 = vmatprep.subr.bf16.mxu0 0
      %1856 = vmatpush1.bf16.msra.mxu0 %v1834
      %1857 = vmatprep.subr.bf16.mxu0 0
      %1858 = vmatpush1.bf16.msra.mxu0 %v1835
      %1859 = vmatprep.subr.bf16.mxu0 0
      %1860 = vmatpush1.bf16.msra.mxu0 %v1836
      %1861 = vmatprep.subr.bf16.mxu0 0
      %1862 = vmatpush1.bf16.msra.mxu0 0
      %1863 = vmatprep.subr.bf16.mxu0 0
      %1864 = vmatpush1.bf16.msra.mxu0 0
      %1865 = vmatprep.subr.bf16.mxu0 0
      %1866 = vmatpush1.bf16.msra.mxu0 0
      %1867 = vmatprep.subr.bf16.mxu0 0
      %1868 = vmatpush1.bf16.msra.mxu0 0
      %1869 = vmatprep.subr.bf16.mxu0 0
      %1870 = vmatpush1.bf16.msra.mxu0 0
      %1871 = vmatprep.subr.bf16.mxu0 0
      %1872 = vmatpush1.bf16.msra.mxu0 0
      %1873 = vmatprep.subr.bf16.mxu0 0
      %1874 = vmatpush1.bf16.msra.mxu0 0
      %1875 = vmatprep.subr.bf16.mxu0 0
      %1876 = vmatpush1.bf16.msra.mxu0 0
      %1877 = vmatprep.subr.bf16.mxu0 0
      %1878 = vmatpush1.bf16.msra.mxu0 0
      %1879 = vmatprep.subr.bf16.mxu0 0
      %1880 = vmatpush1.bf16.msra.mxu0 0
      %1881 = vmatprep.subr.bf16.mxu0 0
      %1882 = vmatpush1.bf16.msra.mxu0 0
      %1883 = vmatprep.subr.bf16.mxu0 0
      %1884 = vmatpush1.bf16.msra.mxu0 0
      %1885 = vmatprep.mubr.bf16.mxu0 0
      %1886 = vmatmul.mubr.bf16.gmra.mrb[0].mxu0 %v1842
      %v1887 = vpop.f32.mrb[0].mxu0
      %v1888 = vadd.f32 0.0, %v1887
      %v1889 = vpop.f32.mrb[0].mxu0
      %v1890 = vpop.f32.mrb[0].mxu0
      %v1891 = vadd.f32 0.0, %v1890
      %v1892 = vpop.f32.mrb[0].mxu0
      %1893 = vmatprep.mubr.bf16.mxu0 0
      %1894 = vmatmul.mubr.bf16.gmra.mrb[0].mxu0 %v1845
      %v1895 = vpop.f32.mrb[0].mxu0
      %v1896 = vadd.f32 0.0, %v1895
      %v1897 = vpop.f32.mrb[0].mxu0
      %v1898 = vpop.f32.mrb[0].mxu0
      %v1899 = vadd.f32 0.0, %v1898
      %v1900 = vpop.f32.mrb[0].mxu0
      %1901 = vmatprep.mubr.bf16.mxu0 0
      %1902 = vmatmul.mubr.bf16.gmra.mrb[0].mxu0 %v1848
      %v1903 = vpop.f32.mrb[0].mxu0
      %v1904 = vadd.f32 0.0, %v1903
      %v1905 = vpop.f32.mrb[0].mxu0
      %v1906 = vpop.f32.mrb[0].mxu0
      %v1907 = vadd.f32 0.0, %v1906
      %v1908 = vpop.f32.mrb[0].mxu0
      %1909 = vmatprep.mubr.bf16.mxu0 0
      %1910 = vmatmul.mubr.bf16.gmra.mrb[0].mxu0 %v1851
      %v1911 = vpop.f32.mrb[0].mxu0
      %v1912 = vadd.f32 0.0, %v1911
      %v1913 = vpop.f32.mrb[0].mxu0
      %v1914 = vpop.f32.mrb[0].mxu0
      %v1915 = vadd.f32 0.0, %v1914
      %v1916 = vpop.f32.mrb[0].mxu0
      %1917 = vdwg.mxu0
      %v1918 = vadd.f32 %v1732, %v1888
      %v1919 = vadd.f32 %v1733, %v1891
      %v1920 = vadd.f32 %v1734, %v1896
      %v1921 = vadd.f32 %v1735, %v1899
      %v1922 = vadd.f32 %v1736, %v1904
      %v1923 = vadd.f32 %v1737, %v1907
      %v1924 = vadd.f32 %v1738, %v1912
      %v1925 = vadd.f32 %v1739, %v1915
      %v1926 = vld [vmem:[%s2] sm:$0x1]
      %v1928 = vlaneseq
      %v1929 = vshrl.u32 %v1928, 7
      %v1930 = vsub.s32 0, %v1929
      %v1931 = vrot.slane %v1926, %v1930
      %v1933 = vadd.f32 %v1918, %v1931
      %v1934 = vadd.f32 %v1919, %v1931
      %v1935 = vadd.f32 %v1920, %v1931
      %v1936 = vadd.f32 %v1921, %v1931
      %v1937 = vadd.f32 %v1922, %v1931
      %v1938 = vadd.f32 %v1923, %v1931
      %v1939 = vadd.f32 %v1924, %v1931
      %v1940 = vadd.f32 %v1925, %v1931
      %v1941 = vmax.f32 %v1933, 0.0
      %v1942 = vmax.f32 %v1934, 0.0
      %v1943 = vmax.f32 %v1935, 0.0
      %v1944 = vmax.f32 %v1936, 0.0
      %v1945 = vmax.f32 %v1937, 0.0
      %v1946 = vmax.f32 %v1938, 0.0
      %v1947 = vmax.f32 %v1939, 0.0
      %v1948 = vmax.f32 %v1940, 0.0
      %v1949 = vpack.c.bf16 %v1941, %v1941
      %v1950 = vpack.c.bf16 %v1942, %v1942
      %v1951 = vpack.c.bf16 %v1943, %v1943
      %v1952 = vpack.c.bf16 %v1944, %v1944
      %v1953 = vpack.c.bf16 %v1945, %v1945
      %v1954 = vpack.c.bf16 %v1946, %v1946
      %v1955 = vpack.c.bf16 %v1947, %v1947
      %v1956 = vpack.c.bf16 %v1948, %v1948
      %1957 = vst [vmem:[%s170] sm:$0xf] %v1949
      %1958 = vst [vmem:[%s170 + $0x4] sm:$0xf] %v1950
      %1959 = vst [vmem:[%s170 + $0x8] sm:$0xf] %v1951
      %1960 = vst [vmem:[%s170 + $0xc] sm:$0xf] %v1952
      %1961 = vst [vmem:[%s170 + $0x10] sm:$0xf] %v1953
      %1962 = vst [vmem:[%s170 + $0x14] sm:$0xf] %v1954
      %1963 = vst [vmem:[%s170 + $0x18] sm:$0xf] %v1955
      %1964 = vst [vmem:[%s170 + $0x1c] sm:$0xf] %v1956
      %p1965 = scmp.lt.s32.totalorder %s14, 1
      %s1966 = scalar_select %p1965, %s14, 1
      %s1967 = smul.addr %s1966, 8
      %s1968 = smul.addr %s1967, 4
      %s1969 = scalar_lea.vmem %s3, %s1968
      // Predicated region
      $region33: #{generator_loss.13} parent=31 // pred_check
        %p1970 = pneg %p100
      $region34: #{generator_loss.13} parent=31 // pred_check_branch
        %1972 = sbr.rel (%p1970) target = $region36
      $region35: #{generator_loss.13} parent=31 // pred_region
        _
      $region36: #{generator_loss.13} parent=31 // pred_fallthru
        _
    $region32: #{generator_loss.13} parent=5 // pred_fallthru
      _
    %p1973 = scmp.le.s32.totalorder 2, %s9
    // Predicated region
    $region37: #{generator_loss.13} parent=5 // pred_check
      %p1974 = pneg %p1973
    $region38: #{generator_loss.13} parent=5 // pred_check_branch
      %1976 = sbr.rel (%p1974) target = $region40
    $region39: #{generator_loss.13} parent=5 // pred_region
      %s1977 = ssub.s32 %s9, 2
      // Predicated region
      $region41: #{generator_loss.13} parent=39 // pred_check
        %p1978 = pneg %p106
      $region42: #{generator_loss.13} parent=39 // pred_check_branch
        %1980 = sbr.rel (%p1978) target = $region44
      $region43: #{generator_loss.13} parent=39 // pred_region
        %p1981 = scmp.lt.s32.totalorder %s15, 1
        %s1982 = scalar_select %p1981, %s15, 1
        %s1983 = smul.addr %s1982, 8
        %s1984 = smul.addr %s1983, 4
        %s1985 = scalar_lea.vmem %s3, %s1984
      $region44: #{generator_loss.13} parent=39 // pred_fallthru
        _
    $region40: #{generator_loss.13} parent=5 // pred_fallthru
      _
  $region6: #{generator_loss.13} parent=0 // loop_footer
    %s13 = sadd.s32 1, %s9
  $region7: #{generator_loss.13} parent=0 // loop_footer_branch
    %8 = sbr.rel target = $region3
  $region8: #{generator_loss.13} parent=0 // loop_exit
    _

// kernel: generator_loss.15
$region0: #{generator_loss.15}
  #allocation0 [shape = 'u32[]', space=smem, size = 0x4, offset = 0x4, fixed_abs, tag = 'smem constant byte address 0x4 - core index']
  #allocation1 [shape = 'u32[144,128]{1,0:T(1,128)}', space=vmem, size = 0x12000, scoped, tag = 'internal scratch']
  %s0 = inlined_call_operand.vmem [shape: f32[2,3,16,16], index: 0, kind: input, shape index: {}]
  %s1 = inlined_call_operand.vmem [shape: f32[2,1,1], index: 1, kind: output, shape index: {0}]
  %s2 = inlined_call_operand.vmem [shape: f32[2,1,1], index: 2, kind: output, shape index: {1}]
  %3 = xla_tuple %s1, %s2
  %s4 = sld [smem:[#allocation0]]
  $region45: #{generator_loss.15} parent=0
    _
  %s6 = ssub.s32 1, %s4
  %s7 = scalar_select 0, %s6, %s4
  loop: start=0, step=1, limit=4
  $region2: #{generator_loss.15} parent=0 // loop_pre_header
    _
  $region3: #{generator_loss.15} parent=0 // loop_header
    %s9 = sphi 0, %s13
    %p10 = scmp.ge.s32.totalorder %s9, 4
    %s19 = sphi 0, %s21
    %s22 = sphi 0, %s19
    %s23 = sphi 0, %s22
    %s39 = sphi 0, %s23
    %s45 = sphi 0, %s47
    %s48 = sphi 0, %s45
    %s49 = sphi 0, %s48
    %s65 = sphi 0, %s49
    %s71 = sphi 0, %s73
    %s74 = sphi 0, %s71
    %s75 = sphi 0, %s74
    %s91 = sphi 0, %s75
  $region4: #{generator_loss.15} parent=0 // loop_header_branch
    %12 = sbr.rel (%p10) target = $region8
  $region5: #{generator_loss.15} parent=0 // loop_body
    %s14 = ssub.s32 %s9, 1
    %s15 = ssub.s32 %s9, 2
    %s16 = sadd.s32 %s9, 1
    %s17 = ssub.s32 %s9, %s16
    %p18 = scmp.eq.s32.totalorder %s17, 0
    %s20 = sadd.s32 %s19, 1
    %s21 = scalar_select %p18, %s19, %s20
    %p24 = pneg %p18
    %p25 = scmp.eq.s32.totalorder %s9, 1
    %p26 = por %p24, %p25
    %p27 = scmp.ne.s32.totalorder %s19, %s22
    %p28 = scmp.eq.s32.totalorder %s9, 0
    %p29 = por %p27, %p28
    %p30 = scmp.ne.s32.totalorder %s19, %s22
    %p31 = scmp.eq.s32.totalorder %s14, 1
    %p32 = por %p30, %p31
    %p33 = scmp.ne.s32.totalorder %s22, %s23
    %p34 = scmp.eq.s32.totalorder %s14, 0
    %p35 = por %p33, %p34
    %p36 = scmp.ne.s32.totalorder %s22, %s23
    %p37 = scmp.eq.s32.totalorder %s15, 1
    %p38 = por %p36, %p37
    %p40 = scmp.ne.s32.totalorder %s23, %s39
    %p41 = scmp.eq.s32.totalorder %s15, 0
    %p42 = por %p40, %p41
    %s43 = ssub.s32 %s9, %s16
    %p44 = scmp.eq.s32.totalorder %s43, 0
    %s46 = sadd.s32 %s45, 1
    %s47 = scalar_select %p44, %s45, %s46
    %p50 = pneg %p44
    %p51 = scmp.eq.s32.totalorder %s9, 1
    %p52 = por %p50, %p51
    %p53 = scmp.ne.s32.totalorder %s45, %s48
    %p54 = scmp.eq.s32.totalorder %s9, 0
    %p55 = por %p53, %p54
    %p56 = scmp.ne.s32.totalorder %s45, %s48
    %p57 = scmp.eq.s32.totalorder %s14, 1
    %p58 = por %p56, %p57
    %p59 = scmp.ne.s32.totalorder %s48, %s49
    %p60 = scmp.eq.s32.totalorder %s14, 0
    %p61 = por %p59, %p60
    %p62 = scmp.ne.s32.totalorder %s48, %s49
    %p63 = scmp.eq.s32.totalorder %s15, 1
    %p64 = por %p62, %p63
    %p66 = scmp.ne.s32.totalorder %s49, %s65
    %p67 = scmp.eq.s32.totalorder %s15, 0
    %p68 = por %p66, %p67
    %s69 = ssub.s32 %s9, %s16
    %p70 = scmp.eq.s32.totalorder %s69, 0
    %s72 = sadd.s32 %s71, 1
    %s73 = scalar_select %p70, %s71, %s72
    %p76 = pneg %p70
    %p77 = scmp.eq.s32.totalorder %s9, 1
    %p78 = por %p76, %p77
    %p79 = scmp.ne.s32.totalorder %s71, %s74
    %p80 = scmp.eq.s32.totalorder %s9, 0
    %p81 = por %p79, %p80
    %p82 = scmp.ne.s32.totalorder %s71, %s74
    %p83 = scmp.eq.s32.totalorder %s14, 1
    %p84 = por %p82, %p83
    %p85 = scmp.ne.s32.totalorder %s74, %s75
    %p86 = scmp.eq.s32.totalorder %s14, 0
    %p87 = por %p85, %p86
    %p88 = scmp.ne.s32.totalorder %s74, %s75
    %p89 = scmp.eq.s32.totalorder %s15, 1
    %p90 = por %p88, %p89
    %p92 = scmp.ne.s32.totalorder %s75, %s91
    %p93 = scmp.eq.s32.totalorder %s15, 0
    %p94 = por %p92, %p93
    %p95 = scmp.le.s32.totalorder 1, %s9
    %p96 = scmp.lt.s32.totalorder %s9, 3
    %p97 = pnand %p95, %p96
    %p98 = pneg %p97
    // Predicated region
    $region9: #{generator_loss.15} parent=5 // pred_check
      _
    $region10: #{generator_loss.15} parent=5 // pred_check_branch
      %100 = sbr.rel (%p97) target = $region12
    $region11: #{generator_loss.15} parent=5 // pred_region
      %s101 = ssub.s32 %s9, 1
    $region12: #{generator_loss.15} parent=5 // pred_fallthru
      _
    %p102 = scmp.lt.s32.totalorder %s9, 2
    // Predicated region
    $region13: #{generator_loss.15} parent=5 // pred_check
      %p103 = pneg %p102
    $region14: #{generator_loss.15} parent=5 // pred_check_branch
      %105 = sbr.rel (%p103) target = $region16
    $region15: #{generator_loss.15} parent=5 // pred_region
      // Predicated region
      $region17: #{generator_loss.15} parent=15 // pred_check
        %p106 = pneg %p29
      $region18: #{generator_loss.15} parent=15 // pred_check_branch
        %108 = sbr.rel (%p106) target = $region20
      $region19: #{generator_loss.15} parent=15 // pred_region
        %p109 = scmp.lt.s32.totalorder %s9, 1
        %s110 = scalar_select %p109, %s9, 1
        %s111 = smul.addr %s110, 6
        %s112 = smul.addr %s111, 8
        %s113 = scalar_lea.vmem %s0, %s112
      $region20: #{generator_loss.15} parent=15 // pred_fallthru
        _
    $region16: #{generator_loss.15} parent=5 // pred_fallthru
      _
    %p114 = scmp.le.s32.totalorder 1, %s9
    %p115 = scmp.lt.s32.totalorder %s9, 3
    %p116 = pnand %p114, %p115
    %p117 = pneg %p116
    // Predicated region
    $region21: #{generator_loss.15} parent=5 // pred_check
      _
    $region22: #{generator_loss.15} parent=5 // pred_check_branch
      %119 = sbr.rel (%p116) target = $region24
    $region23: #{generator_loss.15} parent=5 // pred_region
      %s120 = ssub.s32 %s9, 1
      %p121 = scmp.lt.s32.totalorder %s14, 1
      %s122 = scalar_select %p121, %s14, 1
      %s123 = smul.addr %s122, 6
      %s124 = smul.addr %s123, 8
      %s125 = scalar_lea.vmem %s0, %s124
      %p126 = pneg %p35
      %p127 = pneg %p32
      %p128 = pneg %p61
      %p129 = pneg %p58
      %p130 = scmp.lt.s32.totalorder %s14, 1
      %s131 = scalar_select %p130, %s14, 1
      %s132 = scalar_lea.vmem %s1, %s131
      %p133 = pneg %p87
      %p134 = pneg %p84
      %p135 = scmp.lt.s32.totalorder %s14, 1
      %s136 = scalar_select %p135, %s14, 1
      %s137 = scalar_lea.vmem %s2, %s136
      %p138 = scmp.lt.s32.totalorder %s14, 1
      %s139 = scalar_select %p138, %s14, 1
      %s140 = smul.addr %s139, 6
      %s141 = smul.addr %s140, 8
      %s142 = scalar_lea.vmem %s0, %s141
      %p143 = scmp.lt.s32.totalorder %s14, 1
      %s144 = scalar_select %p143, %s14, 1
      %s145 = scalar_lea.vmem %s1, %s144
      %p146 = scmp.lt.s32.totalorder %s14, 1
      %s147 = scalar_select %p146, %s14, 1
      %s148 = scalar_lea.vmem %s2, %s147
      %v149 = vld [vmem:[%s142] sm:$0xff]
      %v150 = vld [vmem:[%s142 + $0x8] sm:$0xff]
      %v151 = vld [vmem:[%s142 + $0x10] sm:$0xff]
      %v152 = vld [vmem:[%s142 + $0x18] sm:$0xff]
      %v153 = vld [vmem:[%s142 + $0x20] sm:$0xff]
      %v154 = vld [vmem:[%s142 + $0x28] sm:$0xff]
      %vm161 = vcmask 1040384
      %v162 = vrot.slane %v149, 7
      %v163 = vrot.slane %v150, 7
      %v164 = vsel %vm161, %v162, %v163
      %v165 = vrot.slane %v151, 7
      %v166 = vrot.slane %v152, 7
      %v167 = vsel %vm161, %v165, %v166
      %v168 = vrot.slane %v153, 7
      %v169 = vrot.slane %v154, 7
      %v170 = vsel %vm161, %v168, %v169
      %v177 = vsub.f32 %v149, %v162
      %v178 = vsub.f32 %v150, %v164
      %v179 = vsub.f32 %v151, %v165
      %v180 = vsub.f32 %v152, %v167
      %v181 = vsub.f32 %v153, %v168
      %v182 = vsub.f32 %v154, %v170
      %183 = vrot.lane.b32.xlu0 %v149, 1
      %v184 = vpop.permute.xlu0 %183
      %185 = vrot.lane.b32.xlu0 %v150, 1
      %v186 = vpop.permute.xlu0 %185
      %187 = vrot.lane.b32.xlu0 %v151, 1
      %v188 = vpop.permute.xlu0 %187
      %189 = vrot.lane.b32.xlu0 %v152, 1
      %v190 = vpop.permute.xlu0 %189
      %191 = vrot.lane.b32.xlu0 %v153, 1
      %v192 = vpop.permute.xlu0 %191
      %193 = vrot.lane.b32.xlu0 %v154, 1
      %v194 = vpop.permute.xlu0 %193
      %v201 = vsub.f32 %v149, %v184
      %v202 = vsub.f32 %v150, %v186
      %v203 = vsub.f32 %v151, %v188
      %v204 = vsub.f32 %v152, %v190
      %v205 = vsub.f32 %v153, %v192
      %v206 = vsub.f32 %v154, %v194
      %v207 = vmul.f32 %v177, %v177
      %v208 = vmul.f32 %v178, %v178
      %v209 = vmul.f32 %v179, %v179
      %v210 = vmul.f32 %v180, %v180
      %v211 = vmul.f32 %v181, %v181
      %v212 = vmul.f32 %v182, %v182
      %vm219 = vcmask 1046528
      %v220 = vrot.slane %v207, 1
      %v221 = vrot.slane %v208, 1
      %v222 = vsel %vm219, %v220, %v221
      %v223 = vrot.slane %v209, 1
      %v224 = vrot.slane %v210, 1
      %v225 = vsel %vm219, %v223, %v224
      %v226 = vrot.slane %v211, 1
      %v227 = vrot.slane %v212, 1
      %v228 = vsel %vm219, %v226, %v227
      %vm235 = vcmask 130048
      %v236 = vsel %vm235, %v222, 0.0
      %vm237 = vcmask 129024
      %v238 = vsel %vm237, %v221, 0.0
      %v239 = vadd.f32 %v236, %v238
      %v240 = vsel %vm235, %v225, 0.0
      %v241 = vadd.f32 %v239, %v240
      %v242 = vsel %vm237, %v224, 0.0
      %v243 = vadd.f32 %v241, %v242
      %v244 = vsel %vm235, %v228, 0.0
      %v245 = vadd.f32 %v243, %v244
      %v246 = vsel %vm237, %v227, 0.0
      %v247 = vadd.f32 %v245, %v246
      %248 = vadd.xlane.f32.xlu0 %v247
      %v249 = vpop.xlane.xlu0 %248
      %v250 = vrot.slane %v249, 4
      %v251 = vadd.f32 %v249, %v250
      %v252 = vrot.slane %v251, 2
      %v253 = vadd.f32 %v251, %v252
      %v254 = vrot.slane %v253, 1
      %v255 = vadd.f32 %v253, %v254
      %s256 = vtos %v255
      %v257 = vstv %s256
      %vm258 = vcmask 0
      %259 = vst.msk [vmem:[%s145] sm:$0x1] %vm258, %v257
      %v260 = vmul.f32 %v201, %v201
      %v261 = vmul.f32 %v202, %v202
      %v262 = vmul.f32 %v203, %v203
      %v263 = vmul.f32 %v204, %v204
      %v264 = vmul.f32 %v205, %v205
      %v265 = vmul.f32 %v206, %v206
      %272 = vrot.lane.b32.xlu0 %v260, 127
      %v273 = vpop.permute.xlu0 %272
      %274 = vrot.lane.b32.xlu0 %v261, 127
      %v275 = vpop.permute.xlu0 %274
      %276 = vrot.lane.b32.xlu0 %v262, 127
      %v277 = vpop.permute.xlu0 %276
      %278 = vrot.lane.b32.xlu0 %v263, 127
      %v279 = vpop.permute.xlu0 %278
      %280 = vrot.lane.b32.xlu0 %v264, 127
      %v281 = vpop.permute.xlu0 %280
      %282 = vrot.lane.b32.xlu0 %v265, 127
      %v283 = vpop.permute.xlu0 %282
      %vm290 = vcmask 121856
      %v291 = vsel %vm290, %v273, 0.0
      %v292 = vsel %vm290, %v275, 0.0
      %v293 = vadd.f32 %v291, %v292
      %v294 = vsel %vm290, %v277, 0.0
      %v295 = vadd.f32 %v293, %v294
      %v296 = vsel %vm290, %v279, 0.0
      %v297 = vadd.f32 %v295, %v296
      %v298 = vsel %vm290, %v281, 0.0
      %v299 = vadd.f32 %v297, %v298
      %v300 = vsel %vm290, %v283, 0.0
      %v301 = vadd.f32 %v299, %v300
      %302 = vadd.xlane.f32.xlu0 %v301
      %v303 = vpop.xlane.xlu0 %302
      %v304 = vrot.slane %v303, 4
      %v305 = vadd.f32 %v303, %v304
      %v306 = vrot.slane %v305, 2
      %v307 = vadd.f32 %v305, %v306
      %v308 = vrot.slane %v307, 1
      %v309 = vadd.f32 %v307, %v308
      %s310 = vtos %v309
      %v311 = vstv %s310
      %312 = vst.msk [vmem:[%s148] sm:$0x1] %vm258, %v311
      %p313 = scmp.lt.s32.totalorder %s14, 1
      %s314 = scalar_select %p313, %s14, 1
      %s315 = scalar_lea.vmem %s1, %s314
      %p316 = scmp.lt.s32.totalorder %s14, 1
      %s317 = scalar_select %p316, %s14, 1
      %s318 = scalar_lea.vmem %s2, %s317
      // Predicated region
      $region25: #{generator_loss.15} parent=23 // pred_check
        %p319 = pneg %p58
      $region26: #{generator_loss.15} parent=23 // pred_check_branch
        %321 = sbr.rel (%p319) target = $region28
      $region27: #{generator_loss.15} parent=23 // pred_region
        _
      $region28: #{generator_loss.15} parent=23 // pred_fallthru
        _
      // Predicated region
      $region29: #{generator_loss.15} parent=23 // pred_check
        %p322 = pneg %p84
      $region30: #{generator_loss.15} parent=23 // pred_check_branch
        %324 = sbr.rel (%p322) target = $region32
      $region31: #{generator_loss.15} parent=23 // pred_region
        _
      $region32: #{generator_loss.15} parent=23 // pred_fallthru
        _
    $region24: #{generator_loss.15} parent=5 // pred_fallthru
      _
    %p325 = scmp.le.s32.totalorder 2, %s9
    // Predicated region
    $region33: #{generator_loss.15} parent=5 // pred_check
      %p326 = pneg %p325
    $region34: #{generator_loss.15} parent=5 // pred_check_branch
      %328 = sbr.rel (%p326) target = $region36
    $region35: #{generator_loss.15} parent=5 // pred_region
      %s329 = ssub.s32 %s9, 2
      // Predicated region
      $region37: #{generator_loss.15} parent=35 // pred_check
        %p330 = pneg %p64
      $region38: #{generator_loss.15} parent=35 // pred_check_branch
        %332 = sbr.rel (%p330) target = $region40
      $region39: #{generator_loss.15} parent=35 // pred_region
        %p333 = scmp.lt.s32.totalorder %s15, 1
        %s334 = scalar_select %p333, %s15, 1
        %s335 = scalar_lea.vmem %s1, %s334
      $region40: #{generator_loss.15} parent=35 // pred_fallthru
        _
      // Predicated region
      $region41: #{generator_loss.15} parent=35 // pred_check
        %p336 = pneg %p90
      $region42: #{generator_loss.15} parent=35 // pred_check_branch
        %338 = sbr.rel (%p336) target = $region44
      $region43: #{generator_loss.15} parent=35 // pred_region
        %p339 = scmp.lt.s32.totalorder %s15, 1
        %s340 = scalar_select %p339, %s15, 1
        %s341 = scalar_lea.vmem %s2, %s340
      $region44: #{generator_loss.15} parent=35 // pred_fallthru
        _
    $region36: #{generator_loss.15} parent=5 // pred_fallthru
      _
  $region6: #{generator_loss.15} parent=0 // loop_footer
    %s13 = sadd.s32 1, %s9
  $region7: #{generator_loss.15} parent=0 // loop_footer_branch
    %8 = sbr.rel target = $region3
  $region8: #{generator_loss.15} parent=0 // loop_exit
    _

// kernel: generator_loss.12
$region0: #{generator_loss.12}
  #allocation0 [shape = 'u32[]', space=smem, size = 0x4, offset = 0x4, fixed_abs, tag = 'smem constant byte address 0x4 - core index']
  #allocation1 [shape = 'u32[144,128]{1,0:T(1,128)}', space=vmem, size = 0x12000, scoped, tag = 'internal scratch']
  %s0 = inlined_call_operand.vmem [shape: bf16[2,18,18,64], index: 0, kind: input, shape index: {}]
  %s1 = inlined_call_operand.vmem [shape: bf16[9,64,64], index: 1, kind: input, shape index: {}]
  %s2 = inlined_call_operand.vmem [shape: f32[1,64], index: 2, kind: input, shape index: {}]
  %s3 = inlined_call_operand.vmem [shape: bf16[2,8,16,64], index: 3, kind: output, shape index: {}]
  %s4 = sld [smem:[#allocation0]]
  $region45: #{generator_loss.12} parent=0
    _
  %s6 = ssub.s32 1, %s4
  %s7 = scalar_select 0, %s6, %s4
  loop: start=0, step=1, limit=4
  $region2: #{generator_loss.12} parent=0 // loop_pre_header
    _
  $region3: #{generator_loss.12} parent=0 // loop_header
    %s9 = sphi 0, %s13
    %p10 = scmp.ge.s32.totalorder %s9, 4
    %s19 = sphi 0, %s21
    %s22 = sphi 0, %s19
    %s23 = sphi 0, %s22
    %s39 = sphi 0, %s23
    %s43 = sphi 0, %s43
    %s45 = sphi 0, %s43
    %s46 = sphi 0, %s45
    %s60 = sphi 0, %s46
    %s64 = sphi 0, %s64
    %s66 = sphi 0, %s64
    %s67 = sphi 0, %s66
    %s81 = sphi 0, %s67
    %s87 = sphi 0, %s89
    %s90 = sphi 0, %s87
    %s91 = sphi 0, %s90
    %s107 = sphi 0, %s91
  $region4: #{generator_loss.12} parent=0 // loop_header_branch
    %12 = sbr.rel (%p10) target = $region8
  $region5: #{generator_loss.12} parent=0 // loop_body
    %s14 = ssub.s32 %s9, 1
    %s15 = ssub.s32 %s9, 2
    %s16 = sadd.s32 %s9, 1
    %s17 = ssub.s32 %s9, %s16
    %p18 = scmp.eq.s32.totalorder %s17, 0
    %s20 = sadd.s32 %s19, 1
    %s21 = scalar_select %p18, %s19, %s20
    %p24 = pneg %p18
    %p25 = scmp.eq.s32.totalorder %s9, 1
    %p26 = por %p24, %p25
    %p27 = scmp.ne.s32.totalorder %s19, %s22
    %p28 = scmp.eq.s32.totalorder %s9, 0
    %p29 = por %p27, %p28
    %p30 = scmp.ne.s32.totalorder %s19, %s22
    %p31 = scmp.eq.s32.totalorder %s14, 1
    %p32 = por %p30, %p31
    %p33 = scmp.ne.s32.totalorder %s22, %s23
    %p34 = scmp.eq.s32.totalorder %s14, 0
    %p35 = por %p33, %p34
    %p36 = scmp.ne.s32.totalorder %s22, %s23
    %p37 = scmp.eq.s32.totalorder %s15, 1
    %p38 = por %p36, %p37
    %p40 = scmp.ne.s32.totalorder %s23, %s39
    %p41 = scmp.eq.s32.totalorder %s15, 0
    %p42 = por %p40, %p41
    %s44 = sadd.s32 %s43, 1
    %p47 = scmp.eq.s32.totalorder %s9, 1
    %p48 = scmp.ne.s32.totalorder %s43, %s45
    %p49 = scmp.eq.s32.totalorder %s9, 0
    %p50 = por %p48, %p49
    %p51 = scmp.ne.s32.totalorder %s43, %s45
    %p52 = scmp.eq.s32.totalorder %s14, 1
    %p53 = por %p51, %p52
    %p54 = scmp.ne.s32.totalorder %s45, %s46
    %p55 = scmp.eq.s32.totalorder %s14, 0
    %p56 = por %p54, %p55
    %p57 = scmp.ne.s32.totalorder %s45, %s46
    %p58 = scmp.eq.s32.totalorder %s15, 1
    %p59 = por %p57, %p58
    %p61 = scmp.ne.s32.totalorder %s46, %s60
    %p62 = scmp.eq.s32.totalorder %s15, 0
    %p63 = por %p61, %p62
    %s65 = sadd.s32 %s64, 1
    %p68 = scmp.eq.s32.totalorder %s9, 1
    %p69 = scmp.ne.s32.totalorder %s64, %s66
    %p70 = scmp.eq.s32.totalorder %s9, 0
    %p71 = por %p69, %p70
    %p72 = scmp.ne.s32.totalorder %s64, %s66
    %p73 = scmp.eq.s32.totalorder %s14, 1
    %p74 = por %p72, %p73
    %p75 = scmp.ne.s32.totalorder %s66, %s67
    %p76 = scmp.eq.s32.totalorder %s14, 0
    %p77 = por %p75, %p76
    %p78 = scmp.ne.s32.totalorder %s66, %s67
    %p79 = scmp.eq.s32.totalorder %s15, 1
    %p80 = por %p78, %p79
    %p82 = scmp.ne.s32.totalorder %s67, %s81
    %p83 = scmp.eq.s32.totalorder %s15, 0
    %p84 = por %p82, %p83
    %s85 = ssub.s32 %s9, %s16
    %p86 = scmp.eq.s32.totalorder %s85, 0
    %s88 = sadd.s32 %s87, 1
    %s89 = scalar_select %p86, %s87, %s88
    %p92 = pneg %p86
    %p93 = scmp.eq.s32.totalorder %s9, 1
    %p94 = por %p92, %p93
    %p95 = scmp.ne.s32.totalorder %s87, %s90
    %p96 = scmp.eq.s32.totalorder %s9, 0
    %p97 = por %p95, %p96
    %p98 = scmp.ne.s32.totalorder %s87, %s90
    %p99 = scmp.eq.s32.totalorder %s14, 1
    %p100 = por %p98, %p99
    %p101 = scmp.ne.s32.totalorder %s90, %s91
    %p102 = scmp.eq.s32.totalorder %s14, 0
    %p103 = por %p101, %p102
    %p104 = scmp.ne.s32.totalorder %s90, %s91
    %p105 = scmp.eq.s32.totalorder %s15, 1
    %p106 = por %p104, %p105
    %p108 = scmp.ne.s32.totalorder %s91, %s107
    %p109 = scmp.eq.s32.totalorder %s15, 0
    %p110 = por %p108, %p109
    %p111 = scmp.le.s32.totalorder 1, %s9
    %p112 = scmp.lt.s32.totalorder %s9, 3
    %p113 = pnand %p111, %p112
    %p114 = pneg %p113
    // Predicated region
    $region9: #{generator_loss.12} parent=5 // pred_check
      _
    $region10: #{generator_loss.12} parent=5 // pred_check_branch
      %116 = sbr.rel (%p113) target = $region12
    $region11: #{generator_loss.12} parent=5 // pred_region
      %s117 = ssub.s32 %s9, 1
      // Predicated region
      $region13: #{generator_loss.12} parent=11 // pred_check
        %p118 = pneg %p56
      $region14: #{generator_loss.12} parent=11 // pred_check_branch
        %120 = sbr.rel (%p118) target = $region16
      $region15: #{generator_loss.12} parent=11 // pred_region
        _
      $region16: #{generator_loss.12} parent=11 // pred_fallthru
        _
      // Predicated region
      $region17: #{generator_loss.12} parent=11 // pred_check
        %p121 = pneg %p77
      $region18: #{generator_loss.12} parent=11 // pred_check_branch
        %123 = sbr.rel (%p121) target = $region20
      $region19: #{generator_loss.12} parent=11 // pred_region
        _
      $region20: #{generator_loss.12} parent=11 // pred_fallthru
        _
    $region12: #{generator_loss.12} parent=5 // pred_fallthru
      _
    %p124 = scmp.lt.s32.totalorder %s9, 2
    // Predicated region
    $region21: #{generator_loss.12} parent=5 // pred_check
      %p125 = pneg %p124
    $region22: #{generator_loss.12} parent=5 // pred_check_branch
      %127 = sbr.rel (%p125) target = $region24
    $region23: #{generator_loss.12} parent=5 // pred_region
      // Predicated region
      $region25: #{generator_loss.12} parent=23 // pred_check
        %p128 = pneg %p29
      $region26: #{generator_loss.12} parent=23 // pred_check_branch
        %130 = sbr.rel (%p128) target = $region28
      $region27: #{generator_loss.12} parent=23 // pred_region
        %p131 = scmp.lt.s32.totalorder %s9, 1
        %s132 = scalar_select %p131, %s9, 1
        %s133 = smul.addr %s132, 54
        %s134 = smul.addr %s133, 4
        %s135 = scalar_lea.vmem %s0, %s134
      $region28: #{generator_loss.12} parent=23 // pred_fallthru
        _
    $region24: #{generator_loss.12} parent=5 // pred_fallthru
      _
    %p136 = scmp.le.s32.totalorder 1, %s9
    %p137 = scmp.lt.s32.totalorder %s9, 3
    %p138 = pnand %p136, %p137
    %p139 = pneg %p138
    // Predicated region
    $region29: #{generator_loss.12} parent=5 // pred_check
      _
    $region30: #{generator_loss.12} parent=5 // pred_check_branch
      %141 = sbr.rel (%p138) target = $region32
    $region31: #{generator_loss.12} parent=5 // pred_region
      %s142 = ssub.s32 %s9, 1
      %p143 = scmp.lt.s32.totalorder %s14, 1
      %s144 = scalar_select %p143, %s14, 1
      %s145 = smul.addr %s144, 54
      %s146 = smul.addr %s145, 4
      %s147 = scalar_lea.vmem %s0, %s146
      %p148 = pneg %p35
      %p149 = pneg %p32
      %p150 = pneg %p56
      %p151 = pneg %p53
      %p152 = pneg %p77
      %p153 = pneg %p74
      %p154 = pneg %p103
      %p155 = pneg %p100
      %p156 = scmp.lt.s32.totalorder %s14, 1
      %s157 = scalar_select %p156, %s14, 1
      %s158 = smul.addr %s157, 16
      %s159 = smul.addr %s158, 4
      %s160 = scalar_lea.vmem %s3, %s159
      %p161 = scmp.lt.s32.totalorder %s14, 1
      %s162 = scalar_select %p161, %s14, 1
      %s163 = smul.addr %s162, 54
      %s164 = smul.addr %s163, 4
      %s165 = scalar_lea.vmem %s0, %s164
      %p166 = scmp.lt.s32.totalorder %s14, 1
      %s167 = scalar_select %p166, %s14, 1
      %s168 = smul.addr %s167, 16
      %s169 = smul.addr %s168, 4
      %s170 = scalar_lea.vmem %s3, %s169
      %v172 = vld [vmem:[%s165] sm:$0xf]
      %v173 = vld [vmem:[%s165 + $0x4] sm:$0xf]
      %v174 = vld [vmem:[%s165 + $0xc] sm:$0xf]
      %v175 = vld [vmem:[%s165 + $0x10] sm:$0xf]
      %v176 = vld [vmem:[%s165 + $0x18] sm:$0xf]
      %v177 = vld [vmem:[%s165 + $0x1c] sm:$0xf]
      %v178 = vld [vmem:[%s165 + $0x24] sm:$0xf]
      %v179 = vld [vmem:[%s165 + $0x28] sm:$0xf]
      %v180 = vld [vmem:[%s165 + $0x30] sm:$0xf]
      %v181 = vld [vmem:[%s165 + $0x34] sm:$0xf]
      %v182 = vld [vmem:[%s165 + $0x3c] sm:$0xf]
      %v183 = vld [vmem:[%s165 + $0x40] sm:$0xf]
      %v184 = vld [vmem:[%s165 + $0x48] sm:$0xf]
      %v185 = vld [vmem:[%s165 + $0x4c] sm:$0xf]
      %v186 = vld [vmem:[%s165 + $0x54] sm:$0xf]
      %v187 = vld [vmem:[%s165 + $0x58] sm:$0xf]
      %v188 = vld [vmem:[%s165 + $0x60] sm:$0xf]
      %v189 = vld [vmem:[%s165 + $0x64] sm:$0xf]
      %v190 = vld [vmem:[%s165 + $0x6c] sm:$0xf]
      %v191 = vld [vmem:[%s165 + $0x70] sm:$0xf]
      %v192 = vld [vmem:[%s165 + $0x78] sm:$0xf]
      %v193 = vld [vmem:[%s165 + $0x7c] sm:$0xf]
      %v194 = vld [vmem:[%s165 + $0x84] sm:$0xf]
      %v195 = vld [vmem:[%s165 + $0x88] sm:$0xf]
      %v196 = vld [vmem:[%s165 + $0x90] sm:$0xf]
      %v197 = vld [vmem:[%s165 + $0x94] sm:$0xf]
      %v198 = vld [vmem:[%s165 + $0x9c] sm:$0xf]
      %v199 = vld [vmem:[%s165 + $0xa0] sm:$0xf]
      %v200 = vld [vmem:[%s165 + $0xa8] sm:$0xf]
      %v201 = vld [vmem:[%s165 + $0xac] sm:$0xf]
      %v202 = vld [vmem:[%s165 + $0xb4] sm:$0xf]
      %v203 = vld [vmem:[%s165 + $0xb8] sm:$0xf]
      %v204 = vld [vmem:[%s1] sm:$0xf]
      %v205 = vld [vmem:[%s1 + $0x4] sm:$0xf]
      %v206 = vld [vmem:[%s1 + $0x8] sm:$0xf]
      %v207 = vld [vmem:[%s1 + $0xc] sm:$0xf]
      %v208 = vld [vmem:[%s1 + $0x10] sm:$0xf]
      %v209 = vld [vmem:[%s1 + $0x14] sm:$0xf]
      %v210 = vld [vmem:[%s1 + $0x18] sm:$0xf]
      %v211 = vld [vmem:[%s1 + $0x1c] sm:$0xf]
      %v212 = vld [vmem:[%s165 + $0x8] sm:$0x1]
      %v213 = vld [vmem:[%s165 + $0x14] sm:$0x1]
      %v214 = vld [vmem:[%s165 + $0x20] sm:$0x1]
      %v215 = vld [vmem:[%s165 + $0x2c] sm:$0x1]
      %v216 = vld [vmem:[%s165 + $0x38] sm:$0x1]
      %v217 = vld [vmem:[%s165 + $0x44] sm:$0x1]
      %v218 = vld [vmem:[%s165 + $0x50] sm:$0x1]
      %v219 = vld [vmem:[%s165 + $0x5c] sm:$0x1]
      %v220 = vld [vmem:[%s165 + $0x68] sm:$0x1]
      %v221 = vld [vmem:[%s165 + $0x74] sm:$0x1]
      %v222 = vld [vmem:[%s165 + $0x80] sm:$0x1]
      %v223 = vld [vmem:[%s165 + $0x8c] sm:$0x1]
      %v224 = vld [vmem:[%s165 + $0x98] sm:$0x1]
      %v225 = vld [vmem:[%s165 + $0xa4] sm:$0x1]
      %v226 = vld [vmem:[%s165 + $0xb0] sm:$0x1]
      %v227 = vld [vmem:[%s165 + $0xbc] sm:$0x1]
      %vm228 = vsmask.f32 3328
      %vm229 = vsmask.f32 7440
      %vm230 = vmor %vm228, %vm229
      %v232 = vshrl.u32 %v172, 16
      %v234 = vrot.slane %v232, 4
      %v235 = vshll.u32 %v172, 16
      %v237 = vrot.slane %v235, 5
      %v238 = vor.u32 %v234, %v237
      %v239 = vrot.slane %v238, 4
      %v241 = vshll.u32 %v173, 16
      %v243 = vrot.slane %v241, 5
      %v244 = vsel %vm230, %v239, %v243
      %v245 = vshrl.u32 %v173, 16
      %v247 = vrot.slane %v245, 4
      %v248 = vor.u32 %v247, %v243
      %v249 = vrot.slane %v248, 4
      %v251 = vshll.u32 %v212, 16
      %v253 = vrot.slane %v251, 5
      %v254 = vsel %vm230, %v249, %v253
      %v256 = vshrl.u32 %v174, 16
      %v258 = vrot.slane %v256, 4
      %v259 = vshll.u32 %v174, 16
      %v261 = vrot.slane %v259, 5
      %v262 = vor.u32 %v258, %v261
      %v263 = vrot.slane %v262, 4
      %v265 = vshll.u32 %v175, 16
      %v267 = vrot.slane %v265, 5
      %v268 = vsel %vm230, %v263, %v267
      %v269 = vshrl.u32 %v175, 16
      %v271 = vrot.slane %v269, 4
      %v272 = vor.u32 %v271, %v267
      %v273 = vrot.slane %v272, 4
      %v275 = vshll.u32 %v213, 16
      %v277 = vrot.slane %v275, 5
      %v278 = vsel %vm230, %v273, %v277
      %v280 = vshrl.u32 %v176, 16
      %v282 = vrot.slane %v280, 4
      %v283 = vshll.u32 %v176, 16
      %v285 = vrot.slane %v283, 5
      %v286 = vor.u32 %v282, %v285
      %v287 = vrot.slane %v286, 4
      %v289 = vshll.u32 %v177, 16
      %v291 = vrot.slane %v289, 5
      %v292 = vsel %vm230, %v287, %v291
      %v293 = vshrl.u32 %v177, 16
      %v295 = vrot.slane %v293, 4
      %v296 = vor.u32 %v295, %v291
      %v297 = vrot.slane %v296, 4
      %v299 = vshll.u32 %v214, 16
      %v301 = vrot.slane %v299, 5
      %v302 = vsel %vm230, %v297, %v301
      %v304 = vshrl.u32 %v178, 16
      %v306 = vrot.slane %v304, 4
      %v307 = vshll.u32 %v178, 16
      %v309 = vrot.slane %v307, 5
      %v310 = vor.u32 %v306, %v309
      %v311 = vrot.slane %v310, 4
      %v313 = vshll.u32 %v179, 16
      %v315 = vrot.slane %v313, 5
      %v316 = vsel %vm230, %v311, %v315
      %v317 = vshrl.u32 %v179, 16
      %v319 = vrot.slane %v317, 4
      %v320 = vor.u32 %v319, %v315
      %v321 = vrot.slane %v320, 4
      %v323 = vshll.u32 %v215, 16
      %v325 = vrot.slane %v323, 5
      %v326 = vsel %vm230, %v321, %v325
      %v328 = vshrl.u32 %v180, 16
      %v330 = vrot.slane %v328, 4
      %v331 = vshll.u32 %v180, 16
      %v333 = vrot.slane %v331, 5
      %v334 = vor.u32 %v330, %v333
      %v335 = vrot.slane %v334, 4
      %v337 = vshll.u32 %v181, 16
      %v339 = vrot.slane %v337, 5
      %v340 = vsel %vm230, %v335, %v339
      %v341 = vshrl.u32 %v181, 16
      %v343 = vrot.slane %v341, 4
      %v344 = vor.u32 %v343, %v339
      %v345 = vrot.slane %v344, 4
      %v347 = vshll.u32 %v216, 16
      %v349 = vrot.slane %v347, 5
      %v350 = vsel %vm230, %v345, %v349
      %v352 = vshrl.u32 %v182, 16
      %v354 = vrot.slane %v352, 4
      %v355 = vshll.u32 %v182, 16
      %v357 = vrot.slane %v355, 5
      %v358 = vor.u32 %v354, %v357
      %v359 = vrot.slane %v358, 4
      %v361 = vshll.u32 %v183, 16
      %v363 = vrot.slane %v361, 5
      %v364 = vsel %vm230, %v359, %v363
      %v365 = vshrl.u32 %v183, 16
      %v367 = vrot.slane %v365, 4
      %v368 = vor.u32 %v367, %v363
      %v369 = vrot.slane %v368, 4
      %v371 = vshll.u32 %v217, 16
      %v373 = vrot.slane %v371, 5
      %v374 = vsel %vm230, %v369, %v373
      %v376 = vshrl.u32 %v184, 16
      %v378 = vrot.slane %v376, 4
      %v379 = vshll.u32 %v184, 16
      %v381 = vrot.slane %v379, 5
      %v382 = vor.u32 %v378, %v381
      %v383 = vrot.slane %v382, 4
      %v385 = vshll.u32 %v185, 16
      %v387 = vrot.slane %v385, 5
      %v388 = vsel %vm230, %v383, %v387
      %v389 = vshrl.u32 %v185, 16
      %v391 = vrot.slane %v389, 4
      %v392 = vor.u32 %v391, %v387
      %v393 = vrot.slane %v392, 4
      %v395 = vshll.u32 %v218, 16
      %v397 = vrot.slane %v395, 5
      %v398 = vsel %vm230, %v393, %v397
      %v400 = vshrl.u32 %v186, 16
      %v402 = vrot.slane %v400, 4
      %v403 = vshll.u32 %v186, 16
      %v405 = vrot.slane %v403, 5
      %v406 = vor.u32 %v402, %v405
      %v407 = vrot.slane %v406, 4
      %v409 = vshll.u32 %v187, 16
      %v411 = vrot.slane %v409, 5
      %v412 = vsel %vm230, %v407, %v411
      %v413 = vshrl.u32 %v187, 16
      %v415 = vrot.slane %v413, 4
      %v416 = vor.u32 %v415, %v411
      %v417 = vrot.slane %v416, 4
      %v419 = vshll.u32 %v219, 16
      %v421 = vrot.slane %v419, 5
      %v422 = vsel %vm230, %v417, %v421
      %v424 = vshrl.u32 %v188, 16
      %v426 = vrot.slane %v424, 4
      %v427 = vshll.u32 %v188, 16
      %v429 = vrot.slane %v427, 5
      %v430 = vor.u32 %v426, %v429
      %v431 = vrot.slane %v430, 4
      %v433 = vshll.u32 %v189, 16
      %v435 = vrot.slane %v433, 5
      %v436 = vsel %vm230, %v431, %v435
      %v437 = vshrl.u32 %v189, 16
      %v439 = vrot.slane %v437, 4
      %v440 = vor.u32 %v439, %v435
      %v441 = vrot.slane %v440, 4
      %v443 = vshll.u32 %v220, 16
      %v445 = vrot.slane %v443, 5
      %v446 = vsel %vm230, %v441, %v445
      %v448 = vshrl.u32 %v190, 16
      %v450 = vrot.slane %v448, 4
      %v451 = vshll.u32 %v190, 16
      %v453 = vrot.slane %v451, 5
      %v454 = vor.u32 %v450, %v453
      %v455 = vrot.slane %v454, 4
      %v457 = vshll.u32 %v191, 16
      %v459 = vrot.slane %v457, 5
      %v460 = vsel %vm230, %v455, %v459
      %v461 = vshrl.u32 %v191, 16
      %v463 = vrot.slane %v461, 4
      %v464 = vor.u32 %v463, %v459
      %v465 = vrot.slane %v464, 4
      %v467 = vshll.u32 %v221, 16
      %v469 = vrot.slane %v467, 5
      %v470 = vsel %vm230, %v465, %v469
      %v472 = vshrl.u32 %v192, 16
      %v474 = vrot.slane %v472, 4
      %v475 = vshll.u32 %v192, 16
      %v477 = vrot.slane %v475, 5
      %v478 = vor.u32 %v474, %v477
      %v479 = vrot.slane %v478, 4
      %v481 = vshll.u32 %v193, 16
      %v483 = vrot.slane %v481, 5
      %v484 = vsel %vm230, %v479, %v483
      %v485 = vshrl.u32 %v193, 16
      %v487 = vrot.slane %v485, 4
      %v488 = vor.u32 %v487, %v483
      %v489 = vrot.slane %v488, 4
      %v491 = vshll.u32 %v222, 16
      %v493 = vrot.slane %v491, 5
      %v494 = vsel %vm230, %v489, %v493
      %v496 = vshrl.u32 %v194, 16
      %v498 = vrot.slane %v496, 4
      %v499 = vshll.u32 %v194, 16
      %v501 = vrot.slane %v499, 5
      %v502 = vor.u32 %v498, %v501
      %v503 = vrot.slane %v502, 4
      %v505 = vshll.u32 %v195, 16
      %v507 = vrot.slane %v505, 5
      %v508 = vsel %vm230, %v503, %v507
      %v509 = vshrl.u32 %v195, 16
      %v511 = vrot.slane %v509, 4
      %v512 = vor.u32 %v511, %v507
      %v513 = vrot.slane %v512, 4
      %v515 = vshll.u32 %v223, 16
      %v517 = vrot.slane %v515, 5
      %v518 = vsel %vm230, %v513, %v517
      %v520 = vshrl.u32 %v196, 16
      %v522 = vrot.slane %v520, 4
      %v523 = vshll.u32 %v196, 16
      %v525 = vrot.slane %v523, 5
      %v526 = vor.u32 %v522, %v525
      %v527 = vrot.slane %v526, 4
      %v529 = vshll.u32 %v197, 16
      %v531 = vrot.slane %v529, 5
      %v532 = vsel %vm230, %v527, %v531
      %v533 = vshrl.u32 %v197, 16
      %v535 = vrot.slane %v533, 4
      %v536 = vor.u32 %v535, %v531
      %v537 = vrot.slane %v536, 4
      %v539 = vshll.u32 %v224, 16
      %v541 = vrot.slane %v539, 5
      %v542 = vsel %vm230, %v537, %v541
      %v544 = vshrl.u32 %v198, 16
      %v546 = vrot.slane %v544, 4
      %v547 = vshll.u32 %v198, 16
      %v549 = vrot.slane %v547, 5
      %v550 = vor.u32 %v546, %v549
      %v551 = vrot.slane %v550, 4
      %v553 = vshll.u32 %v199, 16
      %v555 = vrot.slane %v553, 5
      %v556 = vsel %vm230, %v551, %v555
      %v557 = vshrl.u32 %v199, 16
      %v559 = vrot.slane %v557, 4
      %v560 = vor.u32 %v559, %v555
      %v561 = vrot.slane %v560, 4
      %v563 = vshll.u32 %v225, 16
      %v565 = vrot.slane %v563, 5
      %v566 = vsel %vm230, %v561, %v565
      %v568 = vshrl.u32 %v200, 16
      %v570 = vrot.slane %v568, 4
      %v571 = vshll.u32 %v200, 16
      %v573 = vrot.slane %v571, 5
      %v574 = vor.u32 %v570, %v573
      %v575 = vrot.slane %v574, 4
      %v577 = vshll.u32 %v201, 16
      %v579 = vrot.slane %v577, 5
      %v580 = vsel %vm230, %v575, %v579
      %v581 = vshrl.u32 %v201, 16
      %v583 = vrot.slane %v581, 4
      %v584 = vor.u32 %v583, %v579
      %v585 = vrot.slane %v584, 4
      %v587 = vshll.u32 %v226, 16
      %v589 = vrot.slane %v587, 5
      %v590 = vsel %vm230, %v585, %v589
      %v592 = vshrl.u32 %v202, 16
      %v594 = vrot.slane %v592, 4
      %v595 = vshll.u32 %v202, 16
      %v597 = vrot.slane %v595, 5
      %v598 = vor.u32 %v594, %v597
      %v599 = vrot.slane %v598, 4
      %v601 = vshll.u32 %v203, 16
      %v603 = vrot.slane %v601, 5
      %v604 = vsel %vm230, %v599, %v603
      %v605 = vshrl.u32 %v203, 16
      %v607 = vrot.slane %v605, 4
      %v608 = vor.u32 %v607, %v603
      %v609 = vrot.slane %v608, 4
      %v611 = vshll.u32 %v227, 16
      %v613 = vrot.slane %v611, 5
      %v614 = vsel %vm230, %v609, %v613
      %s615 = scalar_lea.vmem %s1, 32
      %v616 = vld [vmem:[%s615] sm:$0xf]
      %v617 = vld [vmem:[%s615 + $0x4] sm:$0xf]
      %v618 = vld [vmem:[%s615 + $0x8] sm:$0xf]
      %v619 = vld [vmem:[%s615 + $0xc] sm:$0xf]
      %v620 = vld [vmem:[%s615 + $0x10] sm:$0xf]
      %v621 = vld [vmem:[%s615 + $0x14] sm:$0xf]
      %v622 = vld [vmem:[%s615 + $0x18] sm:$0xf]
      %v623 = vld [vmem:[%s615 + $0x1c] sm:$0xf]
      %v624 = vunpack.c.l.b16 %v244
      %v625 = vunpack.c.l.b16 %v254
      %v626 = vunpack.c.l.b16 %v268
      %v627 = vunpack.c.l.b16 %v278
      %v628 = vunpack.c.l.b16 %v292
      %v629 = vunpack.c.l.b16 %v302
      %v630 = vunpack.c.l.b16 %v316
      %v631 = vunpack.c.l.b16 %v326
      %v632 = vunpack.c.l.b16 %v340
      %v633 = vunpack.c.l.b16 %v350
      %v634 = vunpack.c.l.b16 %v364
      %v635 = vunpack.c.l.b16 %v374
      %v636 = vunpack.c.l.b16 %v388
      %v637 = vunpack.c.l.b16 %v398
      %v638 = vunpack.c.l.b16 %v412
      %v639 = vunpack.c.l.b16 %v422
      %v640 = vunpack.c.l.b16 %v436
      %v641 = vunpack.c.l.b16 %v446
      %v642 = vunpack.c.l.b16 %v460
      %v643 = vunpack.c.l.b16 %v470
      %v644 = vunpack.c.l.b16 %v484
      %v645 = vunpack.c.l.b16 %v494
      %v646 = vunpack.c.l.b16 %v508
      %v647 = vunpack.c.l.b16 %v518
      %v648 = vunpack.c.l.b16 %v532
      %v649 = vunpack.c.l.b16 %v542
      %v650 = vunpack.c.l.b16 %v556
      %v651 = vunpack.c.l.b16 %v566
      %v652 = vunpack.c.l.b16 %v580
      %v653 = vunpack.c.l.b16 %v590
      %v654 = vunpack.c.l.b16 %v604
      %v655 = vunpack.c.l.b16 %v614
      %v656 = vpack.c.b16 %v625, %v624
      %v657 = vpack.c.b16 %v627, %v626
      %v658 = vpack.c.b16 %v629, %v628
      %v659 = vpack.c.b16 %v631, %v630
      %v660 = vpack.c.b16 %v633, %v632
      %v661 = vpack.c.b16 %v635, %v634
      %v662 = vpack.c.b16 %v637, %v636
      %v663 = vpack.c.b16 %v639, %v638
      %v664 = vpack.c.b16 %v641, %v640
      %v665 = vpack.c.b16 %v643, %v642
      %v666 = vpack.c.b16 %v645, %v644
      %v667 = vpack.c.b16 %v647, %v646
      %v668 = vpack.c.b16 %v649, %v648
      %v669 = vpack.c.b16 %v651, %v650
      %v670 = vpack.c.b16 %v653, %v652
      %v671 = vpack.c.b16 %v655, %v654
      %v680 = vunpack.c.l.b16 %v616
      %v681 = vunpack.c.l.b16 %v617
      %v682 = vunpack.c.l.b16 %v618
      %v683 = vunpack.c.l.b16 %v619
      %v684 = vunpack.c.l.b16 %v620
      %v685 = vunpack.c.l.b16 %v621
      %v686 = vunpack.c.l.b16 %v622
      %v687 = vunpack.c.l.b16 %v623
      %v688 = vpack.c.b16 %v681, %v680
      %v689 = vpack.c.b16 %v683, %v682
      %v690 = vpack.c.b16 %v685, %v684
      %v691 = vpack.c.b16 %v687, %v686
      %vm696 = vcmask 523264
      %v698 = vsel %vm696, %v656, 0
      %v701 = vsel %vm696, %v657, 0
      %v704 = vsel %vm696, %v658, 0
      %v707 = vsel %vm696, %v659, 0
      %v710 = vsel %vm696, %v660, 0
      %v713 = vsel %vm696, %v661, 0
      %v716 = vsel %vm696, %v662, 0
      %v719 = vsel %vm696, %v663, 0
      %v722 = vsel %vm696, %v664, 0
      %v725 = vsel %vm696, %v665, 0
      %v728 = vsel %vm696, %v666, 0
      %v731 = vsel %vm696, %v667, 0
      %v734 = vsel %vm696, %v668, 0
      %v737 = vsel %vm696, %v669, 0
      %v740 = vsel %vm696, %v670, 0
      %v743 = vsel %vm696, %v671, 0
      %745 = vmatprep.subr.bf16.mxu0 0
      %746 = vmatpush1.bf16.msra.mxu0 %v688
      %747 = vmatprep.subr.bf16.mxu0 0
      %748 = vmatpush1.bf16.msra.mxu0 %v689
      %749 = vmatprep.subr.bf16.mxu0 0
      %750 = vmatpush1.bf16.msra.mxu0 %v690
      %751 = vmatprep.subr.bf16.mxu0 0
      %752 = vmatpush1.bf16.msra.mxu0 %v691
      %753 = vmatprep.subr.bf16.mxu0 0
      %754 = vmatpush1.bf16.msra.mxu0 0
      %755 = vmatprep.subr.bf16.mxu0 0
      %756 = vmatpush1.bf16.msra.mxu0 0
      %757 = vmatprep.subr.bf16.mxu0 0
      %758 = vmatpush1.bf16.msra.mxu0 0
      %759 = vmatprep.subr.bf16.mxu0 0
      %760 = vmatpush1.bf16.msra.mxu0 0
      %761 = vmatprep.subr.bf16.mxu0 0
      %762 = vmatpush1.bf16.msra.mxu0 0
      %763 = vmatprep.subr.bf16.mxu0 0
      %764 = vmatpush1.bf16.msra.mxu0 0
      %765 = vmatprep.subr.bf16.mxu0 0
      %766 = vmatpush1.bf16.msra.mxu0 0
      %767 = vmatprep.subr.bf16.mxu0 0
      %768 = vmatpush1.bf16.msra.mxu0 0
      %769 = vmatprep.subr.bf16.mxu0 0
      %770 = vmatpush1.bf16.msra.mxu0 0
      %771 = vmatprep.subr.bf16.mxu0 0
      %772 = vmatpush1.bf16.msra.mxu0 0
      %773 = vmatprep.subr.bf16.mxu0 0
      %774 = vmatpush1.bf16.msra.mxu0 0
      %775 = vmatprep.subr.bf16.mxu0 0
      %776 = vmatpush1.bf16.msra.mxu0 0
      %777 = vmatprep.mubr.bf16.mxu0 0
      %778 = vmatmul.mubr.bf16.gmra.mrb[0].mxu0 %v698
      %v779 = vpop.f32.mrb[0].mxu0
      %v780 = vadd.f32 0.0, %v779
      %v781 = vpop.f32.mrb[0].mxu0
      %v782 = vpop.f32.mrb[0].mxu0
      %v783 = vadd.f32 0.0, %v782
      %v784 = vpop.f32.mrb[0].mxu0
      %785 = vmatprep.mubr.bf16.mxu0 0
      %786 = vmatmul.mubr.bf16.gmra.mrb[0].mxu0 %v701
      %v787 = vpop.f32.mrb[0].mxu0
      %v788 = vadd.f32 0.0, %v787
      %v789 = vpop.f32.mrb[0].mxu0
      %v790 = vpop.f32.mrb[0].mxu0
      %v791 = vadd.f32 0.0, %v790
      %v792 = vpop.f32.mrb[0].mxu0
      %793 = vmatprep.mubr.bf16.mxu0 0
      %794 = vmatmul.mubr.bf16.gmra.mrb[0].mxu0 %v704
      %v795 = vpop.f32.mrb[0].mxu0
      %v796 = vadd.f32 0.0, %v795
      %v797 = vpop.f32.mrb[0].mxu0
      %v798 = vpop.f32.mrb[0].mxu0
      %v799 = vadd.f32 0.0, %v798
      %v800 = vpop.f32.mrb[0].mxu0
      %801 = vmatprep.mubr.bf16.mxu0 0
      %802 = vmatmul.mubr.bf16.gmra.mrb[0].mxu0 %v707
      %v803 = vpop.f32.mrb[0].mxu0
      %v804 = vadd.f32 0.0, %v803
      %v805 = vpop.f32.mrb[0].mxu0
      %v806 = vpop.f32.mrb[0].mxu0
      %v807 = vadd.f32 0.0, %v806
      %v808 = vpop.f32.mrb[0].mxu0
      %809 = vmatprep.mubr.bf16.mxu0 0
      %810 = vmatmul.mubr.bf16.gmra.mrb[0].mxu0 %v710
      %v811 = vpop.f32.mrb[0].mxu0
      %v812 = vadd.f32 0.0, %v811
      %v813 = vpop.f32.mrb[0].mxu0
      %v814 = vpop.f32.mrb[0].mxu0
      %v815 = vadd.f32 0.0, %v814
      %v816 = vpop.f32.mrb[0].mxu0
      %817 = vmatprep.mubr.bf16.mxu0 0
      %818 = vmatmul.mubr.bf16.gmra.mrb[0].mxu0 %v713
      %v819 = vpop.f32.mrb[0].mxu0
      %v820 = vadd.f32 0.0, %v819
      %v821 = vpop.f32.mrb[0].mxu0
      %v822 = vpop.f32.mrb[0].mxu0
      %v823 = vadd.f32 0.0, %v822
      %v824 = vpop.f32.mrb[0].mxu0
      %825 = vmatprep.mubr.bf16.mxu0 0
      %826 = vmatmul.mubr.bf16.gmra.mrb[0].mxu0 %v716
      %v827 = vpop.f32.mrb[0].mxu0
      %v828 = vadd.f32 0.0, %v827
      %v829 = vpop.f32.mrb[0].mxu0
      %v830 = vpop.f32.mrb[0].mxu0
      %v831 = vadd.f32 0.0, %v830
      %v832 = vpop.f32.mrb[0].mxu0
      %833 = vmatprep.mubr.bf16.mxu0 0
      %834 = vmatmul.mubr.bf16.gmra.mrb[0].mxu0 %v719
      %v835 = vpop.f32.mrb[0].mxu0
      %v836 = vadd.f32 0.0, %v835
      %v837 = vpop.f32.mrb[0].mxu0
      %v838 = vpop.f32.mrb[0].mxu0
      %v839 = vadd.f32 0.0, %v838
      %v840 = vpop.f32.mrb[0].mxu0
      %841 = vmatprep.mubr.bf16.mxu0 0
      %842 = vmatmul.mubr.bf16.gmra.mrb[0].mxu0 %v722
      %v843 = vpop.f32.mrb[0].mxu0
      %v844 = vadd.f32 0.0, %v843
      %v845 = vpop.f32.mrb[0].mxu0
      %v846 = vpop.f32.mrb[0].mxu0
      %v847 = vadd.f32 0.0, %v846
      %v848 = vpop.f32.mrb[0].mxu0
      %849 = vmatprep.mubr.bf16.mxu0 0
      %850 = vmatmul.mubr.bf16.gmra.mrb[0].mxu0 %v725
      %v851 = vpop.f32.mrb[0].mxu0
      %v852 = vadd.f32 0.0, %v851
      %v853 = vpop.f32.mrb[0].mxu0
      %v854 = vpop.f32.mrb[0].mxu0
      %v855 = vadd.f32 0.0, %v854
      %v856 = vpop.f32.mrb[0].mxu0
      %857 = vmatprep.mubr.bf16.mxu0 0
      %858 = vmatmul.mubr.bf16.gmra.mrb[0].mxu0 %v728
      %v859 = vpop.f32.mrb[0].mxu0
      %v860 = vadd.f32 0.0, %v859
      %v861 = vpop.f32.mrb[0].mxu0
      %v862 = vpop.f32.mrb[0].mxu0
      %v863 = vadd.f32 0.0, %v862
      %v864 = vpop.f32.mrb[0].mxu0
      %865 = vmatprep.mubr.bf16.mxu0 0
      %866 = vmatmul.mubr.bf16.gmra.mrb[0].mxu0 %v731
      %v867 = vpop.f32.mrb[0].mxu0
      %v868 = vadd.f32 0.0, %v867
      %v869 = vpop.f32.mrb[0].mxu0
      %v870 = vpop.f32.mrb[0].mxu0
      %v871 = vadd.f32 0.0, %v870
      %v872 = vpop.f32.mrb[0].mxu0
      %873 = vmatprep.mubr.bf16.mxu0 0
      %874 = vmatmul.mubr.bf16.gmra.mrb[0].mxu0 %v734
      %v875 = vpop.f32.mrb[0].mxu0
      %v876 = vadd.f32 0.0, %v875
      %v877 = vpop.f32.mrb[0].mxu0
      %v878 = vpop.f32.mrb[0].mxu0
      %v879 = vadd.f32 0.0, %v878
      %v880 = vpop.f32.mrb[0].mxu0
      %881 = vmatprep.mubr.bf16.mxu0 0
      %882 = vmatmul.mubr.bf16.gmra.mrb[0].mxu0 %v737
      %v883 = vpop.f32.mrb[0].mxu0
      %v884 = vadd.f32 0.0, %v883
      %v885 = vpop.f32.mrb[0].mxu0
      %v886 = vpop.f32.mrb[0].mxu0
      %v887 = vadd.f32 0.0, %v886
      %v888 = vpop.f32.mrb[0].mxu0
      %889 = vmatprep.mubr.bf16.mxu0 0
      %890 = vmatmul.mubr.bf16.gmra.mrb[0].mxu0 %v740
      %v891 = vpop.f32.mrb[0].mxu0
      %v892 = vadd.f32 0.0, %v891
      %v893 = vpop.f32.mrb[0].mxu0
      %v894 = vpop.f32.mrb[0].mxu0
      %v895 = vadd.f32 0.0, %v894
      %v896 = vpop.f32.mrb[0].mxu0
      %897 = vmatprep.mubr.bf16.mxu0 0
      %898 = vmatmul.mubr.bf16.gmra.mrb[0].mxu0 %v743
      %v899 = vpop.f32.mrb[0].mxu0
      %v900 = vadd.f32 0.0, %v899
      %v901 = vpop.f32.mrb[0].mxu0
      %v902 = vpop.f32.mrb[0].mxu0
      %v903 = vadd.f32 0.0, %v902
      %v904 = vpop.f32.mrb[0].mxu0
      %905 = vdwg.mxu0
      %v938 = vunpack.c.l.b16 %v172
      %v939 = vunpack.c.l.b16 %v173
      %v940 = vunpack.c.l.b16 %v174
      %v941 = vunpack.c.l.b16 %v175
      %v942 = vunpack.c.l.b16 %v176
      %v943 = vunpack.c.l.b16 %v177
      %v944 = vunpack.c.l.b16 %v178
      %v945 = vunpack.c.l.b16 %v179
      %v946 = vunpack.c.l.b16 %v180
      %v947 = vunpack.c.l.b16 %v181
      %v948 = vunpack.c.l.b16 %v182
      %v949 = vunpack.c.l.b16 %v183
      %v950 = vunpack.c.l.b16 %v184
      %v951 = vunpack.c.l.b16 %v185
      %v952 = vunpack.c.l.b16 %v186
      %v953 = vunpack.c.l.b16 %v187
      %v954 = vunpack.c.l.b16 %v188
      %v955 = vunpack.c.l.b16 %v189
      %v956 = vunpack.c.l.b16 %v190
      %v957 = vunpack.c.l.b16 %v191
      %v958 = vunpack.c.l.b16 %v192
      %v959 = vunpack.c.l.b16 %v193
      %v960 = vunpack.c.l.b16 %v194
      %v961 = vunpack.c.l.b16 %v195
      %v962 = vunpack.c.l.b16 %v196
      %v963 = vunpack.c.l.b16 %v197
      %v964 = vunpack.c.l.b16 %v198
      %v965 = vunpack.c.l.b16 %v199
      %v966 = vunpack.c.l.b16 %v200
      %v967 = vunpack.c.l.b16 %v201
      %v968 = vunpack.c.l.b16 %v202
      %v969 = vunpack.c.l.b16 %v203
      %v970 = vpack.c.b16 %v939, %v938
      %v971 = vpack.c.b16 %v941, %v940
      %v972 = vpack.c.b16 %v943, %v942
      %v973 = vpack.c.b16 %v945, %v944
      %v974 = vpack.c.b16 %v947, %v946
      %v975 = vpack.c.b16 %v949, %v948
      %v976 = vpack.c.b16 %v951, %v950
      %v977 = vpack.c.b16 %v953, %v952
      %v978 = vpack.c.b16 %v955, %v954
      %v979 = vpack.c.b16 %v957, %v956
      %v980 = vpack.c.b16 %v959, %v958
      %v981 = vpack.c.b16 %v961, %v960
      %v982 = vpack.c.b16 %v963, %v962
      %v983 = vpack.c.b16 %v965, %v964
      %v984 = vpack.c.b16 %v967, %v966
      %v985 = vpack.c.b16 %v969, %v968
      %v994 = vunpack.c.l.b16 %v204
      %v995 = vunpack.c.l.b16 %v205
      %v996 = vunpack.c.l.b16 %v206
      %v997 = vunpack.c.l.b16 %v207
      %v998 = vunpack.c.l.b16 %v208
      %v999 = vunpack.c.l.b16 %v209
      %v1000 = vunpack.c.l.b16 %v210
      %v1001 = vunpack.c.l.b16 %v211
      %v1002 = vpack.c.b16 %v995, %v994
      %v1003 = vpack.c.b16 %v997, %v996
      %v1004 = vpack.c.b16 %v999, %v998
      %v1005 = vpack.c.b16 %v1001, %v1000
      %v1011 = vsel %vm696, %v970, 0
      %v1014 = vsel %vm696, %v971, 0
      %v1017 = vsel %vm696, %v972, 0
      %v1020 = vsel %vm696, %v973, 0
      %v1023 = vsel %vm696, %v974, 0
      %v1026 = vsel %vm696, %v975, 0
      %v1029 = vsel %vm696, %v976, 0
      %v1032 = vsel %vm696, %v977, 0
      %v1035 = vsel %vm696, %v978, 0
      %v1038 = vsel %vm696, %v979, 0
      %v1041 = vsel %vm696, %v980, 0
      %v1044 = vsel %vm696, %v981, 0
      %v1047 = vsel %vm696, %v982, 0
      %v1050 = vsel %vm696, %v983, 0
      %v1053 = vsel %vm696, %v984, 0
      %v1056 = vsel %vm696, %v985, 0
      %1058 = vmatprep.subr.bf16.mxu0 0
      %1059 = vmatpush1.bf16.msra.mxu0 %v1002
      %1060 = vmatprep.subr.bf16.mxu0 0
      %1061 = vmatpush1.bf16.msra.mxu0 %v1003
      %1062 = vmatprep.subr.bf16.mxu0 0
      %1063 = vmatpush1.bf16.msra.mxu0 %v1004
      %1064 = vmatprep.subr.bf16.mxu0 0
      %1065 = vmatpush1.bf16.msra.mxu0 %v1005
      %1066 = vmatprep.subr.bf16.mxu0 0
      %1067 = vmatpush1.bf16.msra.mxu0 0
      %1068 = vmatprep.subr.bf16.mxu0 0
      %1069 = vmatpush1.bf16.msra.mxu0 0
      %1070 = vmatprep.subr.bf16.mxu0 0
      %1071 = vmatpush1.bf16.msra.mxu0 0
      %1072 = vmatprep.subr.bf16.mxu0 0
      %1073 = vmatpush1.bf16.msra.mxu0 0
      %1074 = vmatprep.subr.bf16.mxu0 0
      %1075 = vmatpush1.bf16.msra.mxu0 0
      %1076 = vmatprep.subr.bf16.mxu0 0
      %1077 = vmatpush1.bf16.msra.mxu0 0
      %1078 = vmatprep.subr.bf16.mxu0 0
      %1079 = vmatpush1.bf16.msra.mxu0 0
      %1080 = vmatprep.subr.bf16.mxu0 0
      %1081 = vmatpush1.bf16.msra.mxu0 0
      %1082 = vmatprep.subr.bf16.mxu0 0
      %1083 = vmatpush1.bf16.msra.mxu0 0
      %1084 = vmatprep.subr.bf16.mxu0 0
      %1085 = vmatpush1.bf16.msra.mxu0 0
      %1086 = vmatprep.subr.bf16.mxu0 0
      %1087 = vmatpush1.bf16.msra.mxu0 0
      %1088 = vmatprep.subr.bf16.mxu0 0
      %1089 = vmatpush1.bf16.msra.mxu0 0
      %1090 = vmatprep.mubr.bf16.mxu0 0
      %1091 = vmatmul.mubr.bf16.gmra.mrb[0].mxu0 %v1011
      %v1092 = vpop.f32.mrb[0].mxu0
      %v1093 = vadd.f32 %v780, %v1092
      %v1094 = vpop.f32.mrb[0].mxu0
      %v1095 = vpop.f32.mrb[0].mxu0
      %v1096 = vadd.f32 %v783, %v1095
      %v1097 = vpop.f32.mrb[0].mxu0
      %1098 = vmatprep.mubr.bf16.mxu0 0
      %1099 = vmatmul.mubr.bf16.gmra.mrb[0].mxu0 %v1014
      %v1100 = vpop.f32.mrb[0].mxu0
      %v1101 = vadd.f32 %v788, %v1100
      %v1102 = vpop.f32.mrb[0].mxu0
      %v1103 = vpop.f32.mrb[0].mxu0
      %v1104 = vadd.f32 %v791, %v1103
      %v1105 = vpop.f32.mrb[0].mxu0
      %1106 = vmatprep.mubr.bf16.mxu0 0
      %1107 = vmatmul.mubr.bf16.gmra.mrb[0].mxu0 %v1017
      %v1108 = vpop.f32.mrb[0].mxu0
      %v1109 = vadd.f32 %v796, %v1108
      %v1110 = vpop.f32.mrb[0].mxu0
      %v1111 = vpop.f32.mrb[0].mxu0
      %v1112 = vadd.f32 %v799, %v1111
      %v1113 = vpop.f32.mrb[0].mxu0
      %1114 = vmatprep.mubr.bf16.mxu0 0
      %1115 = vmatmul.mubr.bf16.gmra.mrb[0].mxu0 %v1020
      %v1116 = vpop.f32.mrb[0].mxu0
      %v1117 = vadd.f32 %v804, %v1116
      %v1118 = vpop.f32.mrb[0].mxu0
      %v1119 = vpop.f32.mrb[0].mxu0
      %v1120 = vadd.f32 %v807, %v1119
      %v1121 = vpop.f32.mrb[0].mxu0
      %1122 = vmatprep.mubr.bf16.mxu0 0
      %1123 = vmatmul.mubr.bf16.gmra.mrb[0].mxu0 %v1023
      %v1124 = vpop.f32.mrb[0].mxu0
      %v1125 = vadd.f32 %v812, %v1124
      %v1126 = vpop.f32.mrb[0].mxu0
      %v1127 = vpop.f32.mrb[0].mxu0
      %v1128 = vadd.f32 %v815, %v1127
      %v1129 = vpop.f32.mrb[0].mxu0
      %1130 = vmatprep.mubr.bf16.mxu0 0
      %1131 = vmatmul.mubr.bf16.gmra.mrb[0].mxu0 %v1026
      %v1132 = vpop.f32.mrb[0].mxu0
      %v1133 = vadd.f32 %v820, %v1132
      %v1134 = vpop.f32.mrb[0].mxu0
      %v1135 = vpop.f32.mrb[0].mxu0
      %v1136 = vadd.f32 %v823, %v1135
      %v1137 = vpop.f32.mrb[0].mxu0
      %1138 = vmatprep.mubr.bf16.mxu0 0
      %1139 = vmatmul.mubr.bf16.gmra.mrb[0].mxu0 %v1029
      %v1140 = vpop.f32.mrb[0].mxu0
      %v1141 = vadd.f32 %v828, %v1140
      %v1142 = vpop.f32.mrb[0].mxu0
      %v1143 = vpop.f32.mrb[0].mxu0
      %v1144 = vadd.f32 %v831, %v1143
      %v1145 = vpop.f32.mrb[0].mxu0
      %1146 = vmatprep.mubr.bf16.mxu0 0
      %1147 = vmatmul.mubr.bf16.gmra.mrb[0].mxu0 %v1032
      %v1148 = vpop.f32.mrb[0].mxu0
      %v1149 = vadd.f32 %v836, %v1148
      %v1150 = vpop.f32.mrb[0].mxu0
      %v1151 = vpop.f32.mrb[0].mxu0
      %v1152 = vadd.f32 %v839, %v1151
      %v1153 = vpop.f32.mrb[0].mxu0
      %1154 = vmatprep.mubr.bf16.mxu0 0
      %1155 = vmatmul.mubr.bf16.gmra.mrb[0].mxu0 %v1035
      %v1156 = vpop.f32.mrb[0].mxu0
      %v1157 = vadd.f32 %v844, %v1156
      %v1158 = vpop.f32.mrb[0].mxu0
      %v1159 = vpop.f32.mrb[0].mxu0
      %v1160 = vadd.f32 %v847, %v1159
      %v1161 = vpop.f32.mrb[0].mxu0
      %1162 = vmatprep.mubr.bf16.mxu0 0
      %1163 = vmatmul.mubr.bf16.gmra.mrb[0].mxu0 %v1038
      %v1164 = vpop.f32.mrb[0].mxu0
      %v1165 = vadd.f32 %v852, %v1164
      %v1166 = vpop.f32.mrb[0].mxu0
      %v1167 = vpop.f32.mrb[0].mxu0
      %v1168 = vadd.f32 %v855, %v1167
      %v1169 = vpop.f32.mrb[0].mxu0
      %1170 = vmatprep.mubr.bf16.mxu0 0
      %1171 = vmatmul.mubr.bf16.gmra.mrb[0].mxu0 %v1041
      %v1172 = vpop.f32.mrb[0].mxu0
      %v1173 = vadd.f32 %v860, %v1172
      %v1174 = vpop.f32.mrb[0].mxu0
      %v1175 = vpop.f32.mrb[0].mxu0
      %v1176 = vadd.f32 %v863, %v1175
      %v1177 = vpop.f32.mrb[0].mxu0
      %1178 = vmatprep.mubr.bf16.mxu0 0
      %1179 = vmatmul.mubr.bf16.gmra.mrb[0].mxu0 %v1044
      %v1180 = vpop.f32.mrb[0].mxu0
      %v1181 = vadd.f32 %v868, %v1180
      %v1182 = vpop.f32.mrb[0].mxu0
      %v1183 = vpop.f32.mrb[0].mxu0
      %v1184 = vadd.f32 %v871, %v1183
      %v1185 = vpop.f32.mrb[0].mxu0
      %1186 = vmatprep.mubr.bf16.mxu0 0
      %1187 = vmatmul.mubr.bf16.gmra.mrb[0].mxu0 %v1047
      %v1188 = vpop.f32.mrb[0].mxu0
      %v1189 = vadd.f32 %v876, %v1188
      %v1190 = vpop.f32.mrb[0].mxu0
      %v1191 = vpop.f32.mrb[0].mxu0
      %v1192 = vadd.f32 %v879, %v1191
      %v1193 = vpop.f32.mrb[0].mxu0
      %1194 = vmatprep.mubr.bf16.mxu0 0
      %1195 = vmatmul.mubr.bf16.gmra.mrb[0].mxu0 %v1050
      %v1196 = vpop.f32.mrb[0].mxu0
      %v1197 = vadd.f32 %v884, %v1196
      %v1198 = vpop.f32.mrb[0].mxu0
      %v1199 = vpop.f32.mrb[0].mxu0
      %v1200 = vadd.f32 %v887, %v1199
      %v1201 = vpop.f32.mrb[0].mxu0
      %1202 = vmatprep.mubr.bf16.mxu0 0
      %1203 = vmatmul.mubr.bf16.gmra.mrb[0].mxu0 %v1053
      %v1204 = vpop.f32.mrb[0].mxu0
      %v1205 = vadd.f32 %v892, %v1204
      %v1206 = vpop.f32.mrb[0].mxu0
      %v1207 = vpop.f32.mrb[0].mxu0
      %v1208 = vadd.f32 %v895, %v1207
      %v1209 = vpop.f32.mrb[0].mxu0
      %1210 = vmatprep.mubr.bf16.mxu0 0
      %1211 = vmatmul.mubr.bf16.gmra.mrb[0].mxu0 %v1056
      %v1212 = vpop.f32.mrb[0].mxu0
      %v1213 = vadd.f32 %v900, %v1212
      %v1214 = vpop.f32.mrb[0].mxu0
      %v1215 = vpop.f32.mrb[0].mxu0
      %v1216 = vadd.f32 %v903, %v1215
      %v1217 = vpop.f32.mrb[0].mxu0
      %1218 = vdwg.mxu0
      %v1219 = vld [vmem:[%s165] sm:$0xe]
      %v1220 = vld [vmem:[%s165 + $0xc] sm:$0xe]
      %v1221 = vld [vmem:[%s165 + $0x18] sm:$0xe]
      %v1222 = vld [vmem:[%s165 + $0x24] sm:$0xe]
      %v1223 = vld [vmem:[%s165 + $0x30] sm:$0xe]
      %v1224 = vld [vmem:[%s165 + $0x3c] sm:$0xe]
      %v1225 = vld [vmem:[%s165 + $0x48] sm:$0xe]
      %v1226 = vld [vmem:[%s165 + $0x54] sm:$0xe]
      %v1227 = vld [vmem:[%s165 + $0x60] sm:$0xe]
      %v1228 = vld [vmem:[%s165 + $0x6c] sm:$0xe]
      %v1229 = vld [vmem:[%s165 + $0x78] sm:$0xe]
      %v1230 = vld [vmem:[%s165 + $0x84] sm:$0xe]
      %v1231 = vld [vmem:[%s165 + $0x90] sm:$0xe]
      %v1232 = vld [vmem:[%s165 + $0x9c] sm:$0xe]
      %v1233 = vld [vmem:[%s165 + $0xa8] sm:$0xe]
      %v1234 = vld [vmem:[%s165 + $0xb4] sm:$0xe]
      %vm1267 = vcmask 1042432
      %vm1268 = vcmask 1046532
      %vm1269 = vmor %vm1267, %vm1268
      %v1270 = vrot.slane %v1219, 5
      %v1271 = vrot.slane %v1270, 4
      %v1272 = vrot.slane %v173, 5
      %v1273 = vsel %vm1269, %v1271, %v1272
      %v1274 = vrot.slane %v1272, 4
      %v1275 = vrot.slane %v212, 5
      %v1276 = vsel %vm1269, %v1274, %v1275
      %v1277 = vrot.slane %v1220, 5
      %v1278 = vrot.slane %v1277, 4
      %v1279 = vrot.slane %v175, 5
      %v1280 = vsel %vm1269, %v1278, %v1279
      %v1281 = vrot.slane %v1279, 4
      %v1282 = vrot.slane %v213, 5
      %v1283 = vsel %vm1269, %v1281, %v1282
      %v1284 = vrot.slane %v1221, 5
      %v1285 = vrot.slane %v1284, 4
      %v1286 = vrot.slane %v177, 5
      %v1287 = vsel %vm1269, %v1285, %v1286
      %v1288 = vrot.slane %v1286, 4
      %v1289 = vrot.slane %v214, 5
      %v1290 = vsel %vm1269, %v1288, %v1289
      %v1291 = vrot.slane %v1222, 5
      %v1292 = vrot.slane %v1291, 4
      %v1293 = vrot.slane %v179, 5
      %v1294 = vsel %vm1269, %v1292, %v1293
      %v1295 = vrot.slane %v1293, 4
      %v1296 = vrot.slane %v215, 5
      %v1297 = vsel %vm1269, %v1295, %v1296
      %v1298 = vrot.slane %v1223, 5
      %v1299 = vrot.slane %v1298, 4
      %v1300 = vrot.slane %v181, 5
      %v1301 = vsel %vm1269, %v1299, %v1300
      %v1302 = vrot.slane %v1300, 4
      %v1303 = vrot.slane %v216, 5
      %v1304 = vsel %vm1269, %v1302, %v1303
      %v1305 = vrot.slane %v1224, 5
      %v1306 = vrot.slane %v1305, 4
      %v1307 = vrot.slane %v183, 5
      %v1308 = vsel %vm1269, %v1306, %v1307
      %v1309 = vrot.slane %v1307, 4
      %v1310 = vrot.slane %v217, 5
      %v1311 = vsel %vm1269, %v1309, %v1310
      %v1312 = vrot.slane %v1225, 5
      %v1313 = vrot.slane %v1312, 4
      %v1314 = vrot.slane %v185, 5
      %v1315 = vsel %vm1269, %v1313, %v1314
      %v1316 = vrot.slane %v1314, 4
      %v1317 = vrot.slane %v218, 5
      %v1318 = vsel %vm1269, %v1316, %v1317
      %v1319 = vrot.slane %v1226, 5
      %v1320 = vrot.slane %v1319, 4
      %v1321 = vrot.slane %v187, 5
      %v1322 = vsel %vm1269, %v1320, %v1321
      %v1323 = vrot.slane %v1321, 4
      %v1324 = vrot.slane %v219, 5
      %v1325 = vsel %vm1269, %v1323, %v1324
      %v1326 = vrot.slane %v1227, 5
      %v1327 = vrot.slane %v1326, 4
      %v1328 = vrot.slane %v189, 5
      %v1329 = vsel %vm1269, %v1327, %v1328
      %v1330 = vrot.slane %v1328, 4
      %v1331 = vrot.slane %v220, 5
      %v1332 = vsel %vm1269, %v1330, %v1331
      %v1333 = vrot.slane %v1228, 5
      %v1334 = vrot.slane %v1333, 4
      %v1335 = vrot.slane %v191, 5
      %v1336 = vsel %vm1269, %v1334, %v1335
      %v1337 = vrot.slane %v1335, 4
      %v1338 = vrot.slane %v221, 5
      %v1339 = vsel %vm1269, %v1337, %v1338
      %v1340 = vrot.slane %v1229, 5
      %v1341 = vrot.slane %v1340, 4
      %v1342 = vrot.slane %v193, 5
      %v1343 = vsel %vm1269, %v1341, %v1342
      %v1344 = vrot.slane %v1342, 4
      %v1345 = vrot.slane %v222, 5
      %v1346 = vsel %vm1269, %v1344, %v1345
      %v1347 = vrot.slane %v1230, 5
      %v1348 = vrot.slane %v1347, 4
      %v1349 = vrot.slane %v195, 5
      %v1350 = vsel %vm1269, %v1348, %v1349
      %v1351 = vrot.slane %v1349, 4
      %v1352 = vrot.slane %v223, 5
      %v1353 = vsel %vm1269, %v1351, %v1352
      %v1354 = vrot.slane %v1231, 5
      %v1355 = vrot.slane %v1354, 4
      %v1356 = vrot.slane %v197, 5
      %v1357 = vsel %vm1269, %v1355, %v1356
      %v1358 = vrot.slane %v1356, 4
      %v1359 = vrot.slane %v224, 5
      %v1360 = vsel %vm1269, %v1358, %v1359
      %v1361 = vrot.slane %v1232, 5
      %v1362 = vrot.slane %v1361, 4
      %v1363 = vrot.slane %v199, 5
      %v1364 = vsel %vm1269, %v1362, %v1363
      %v1365 = vrot.slane %v1363, 4
      %v1366 = vrot.slane %v225, 5
      %v1367 = vsel %vm1269, %v1365, %v1366
      %v1368 = vrot.slane %v1233, 5
      %v1369 = vrot.slane %v1368, 4
      %v1370 = vrot.slane %v201, 5
      %v1371 = vsel %vm1269, %v1369, %v1370
      %v1372 = vrot.slane %v1370, 4
      %v1373 = vrot.slane %v226, 5
      %v1374 = vsel %vm1269, %v1372, %v1373
      %v1375 = vrot.slane %v1234, 5
      %v1376 = vrot.slane %v1375, 4
      %v1377 = vrot.slane %v203, 5
      %v1378 = vsel %vm1269, %v1376, %v1377
      %v1379 = vrot.slane %v1377, 4
      %v1380 = vrot.slane %v227, 5
      %v1381 = vsel %vm1269, %v1379, %v1380
      %s1382 = scalar_lea.vmem %s1, 64
      %v1383 = vld [vmem:[%s1382] sm:$0xf]
      %v1384 = vld [vmem:[%s1382 + $0x4] sm:$0xf]
      %v1385 = vld [vmem:[%s1382 + $0x8] sm:$0xf]
      %v1386 = vld [vmem:[%s1382 + $0xc] sm:$0xf]
      %v1387 = vld [vmem:[%s1382 + $0x10] sm:$0xf]
      %v1388 = vld [vmem:[%s1382 + $0x14] sm:$0xf]
      %v1389 = vld [vmem:[%s1382 + $0x18] sm:$0xf]
      %v1390 = vld [vmem:[%s1382 + $0x1c] sm:$0xf]
      %v1391 = vunpack.c.l.b16 %v1273
      %v1392 = vunpack.c.l.b16 %v1276
      %v1393 = vunpack.c.l.b16 %v1280
      %v1394 = vunpack.c.l.b16 %v1283
      %v1395 = vunpack.c.l.b16 %v1287
      %v1396 = vunpack.c.l.b16 %v1290
      %v1397 = vunpack.c.l.b16 %v1294
      %v1398 = vunpack.c.l.b16 %v1297
      %v1399 = vunpack.c.l.b16 %v1301
      %v1400 = vunpack.c.l.b16 %v1304
      %v1401 = vunpack.c.l.b16 %v1308
      %v1402 = vunpack.c.l.b16 %v1311
      %v1403 = vunpack.c.l.b16 %v1315
      %v1404 = vunpack.c.l.b16 %v1318
      %v1405 = vunpack.c.l.b16 %v1322
      %v1406 = vunpack.c.l.b16 %v1325
      %v1407 = vunpack.c.l.b16 %v1329
      %v1408 = vunpack.c.l.b16 %v1332
      %v1409 = vunpack.c.l.b16 %v1336
      %v1410 = vunpack.c.l.b16 %v1339
      %v1411 = vunpack.c.l.b16 %v1343
      %v1412 = vunpack.c.l.b16 %v1346
      %v1413 = vunpack.c.l.b16 %v1350
      %v1414 = vunpack.c.l.b16 %v1353
      %v1415 = vunpack.c.l.b16 %v1357
      %v1416 = vunpack.c.l.b16 %v1360
      %v1417 = vunpack.c.l.b16 %v1364
      %v1418 = vunpack.c.l.b16 %v1367
      %v1419 = vunpack.c.l.b16 %v1371
      %v1420 = vunpack.c.l.b16 %v1374
      %v1421 = vunpack.c.l.b16 %v1378
      %v1422 = vunpack.c.l.b16 %v1381
      %v1423 = vpack.c.b16 %v1392, %v1391
      %v1424 = vpack.c.b16 %v1394, %v1393
      %v1425 = vpack.c.b16 %v1396, %v1395
      %v1426 = vpack.c.b16 %v1398, %v1397
      %v1427 = vpack.c.b16 %v1400, %v1399
      %v1428 = vpack.c.b16 %v1402, %v1401
      %v1429 = vpack.c.b16 %v1404, %v1403
      %v1430 = vpack.c.b16 %v1406, %v1405
      %v1431 = vpack.c.b16 %v1408, %v1407
      %v1432 = vpack.c.b16 %v1410, %v1409
      %v1433 = vpack.c.b16 %v1412, %v1411
      %v1434 = vpack.c.b16 %v1414, %v1413
      %v1435 = vpack.c.b16 %v1416, %v1415
      %v1436 = vpack.c.b16 %v1418, %v1417
      %v1437 = vpack.c.b16 %v1420, %v1419
      %v1438 = vpack.c.b16 %v1422, %v1421
      %v1447 = vunpack.c.l.b16 %v1383
      %v1448 = vunpack.c.l.b16 %v1384
      %v1449 = vunpack.c.l.b16 %v1385
      %v1450 = vunpack.c.l.b16 %v1386
      %v1451 = vunpack.c.l.b16 %v1387
      %v1452 = vunpack.c.l.b16 %v1388
      %v1453 = vunpack.c.l.b16 %v1389
      %v1454 = vunpack.c.l.b16 %v1390
      %v1455 = vpack.c.b16 %v1448, %v1447
      %v1456 = vpack.c.b16 %v1450, %v1449
      %v1457 = vpack.c.b16 %v1452, %v1451
      %v1458 = vpack.c.b16 %v1454, %v1453
      %v1464 = vsel %vm696, %v1423, 0
      %v1467 = vsel %vm696, %v1424, 0
      %v1470 = vsel %vm696, %v1425, 0
      %v1473 = vsel %vm696, %v1426, 0
      %v1476 = vsel %vm696, %v1427, 0
      %v1479 = vsel %vm696, %v1428, 0
      %v1482 = vsel %vm696, %v1429, 0
      %v1485 = vsel %vm696, %v1430, 0
      %v1488 = vsel %vm696, %v1431, 0
      %v1491 = vsel %vm696, %v1432, 0
      %v1494 = vsel %vm696, %v1433, 0
      %v1497 = vsel %vm696, %v1434, 0
      %v1500 = vsel %vm696, %v1435, 0
      %v1503 = vsel %vm696, %v1436, 0
      %v1506 = vsel %vm696, %v1437, 0
      %v1509 = vsel %vm696, %v1438, 0
      %1511 = vmatprep.subr.bf16.mxu0 0
      %1512 = vmatpush1.bf16.msra.mxu0 %v1455
      %1513 = vmatprep.subr.bf16.mxu0 0
      %1514 = vmatpush1.bf16.msra.mxu0 %v1456
      %1515 = vmatprep.subr.bf16.mxu0 0
      %1516 = vmatpush1.bf16.msra.mxu0 %v1457
      %1517 = vmatprep.subr.bf16.mxu0 0
      %1518 = vmatpush1.bf16.msra.mxu0 %v1458
      %1519 = vmatprep.subr.bf16.mxu0 0
      %1520 = vmatpush1.bf16.msra.mxu0 0
      %1521 = vmatprep.subr.bf16.mxu0 0
      %1522 = vmatpush1.bf16.msra.mxu0 0
      %1523 = vmatprep.subr.bf16.mxu0 0
      %1524 = vmatpush1.bf16.msra.mxu0 0
      %1525 = vmatprep.subr.bf16.mxu0 0
      %1526 = vmatpush1.bf16.msra.mxu0 0
      %1527 = vmatprep.subr.bf16.mxu0 0
      %1528 = vmatpush1.bf16.msra.mxu0 0
      %1529 = vmatprep.subr.bf16.mxu0 0
      %1530 = vmatpush1.bf16.msra.mxu0 0
      %1531 = vmatprep.subr.bf16.mxu0 0
      %1532 = vmatpush1.bf16.msra.mxu0 0
      %1533 = vmatprep.subr.bf16.mxu0 0
      %1534 = vmatpush1.bf16.msra.mxu0 0
      %1535 = vmatprep.subr.bf16.mxu0 0
      %1536 = vmatpush1.bf16.msra.mxu0 0
      %1537 = vmatprep.subr.bf16.mxu0 0
      %1538 = vmatpush1.bf16.msra.mxu0 0
      %1539 = vmatprep.subr.bf16.mxu0 0
      %1540 = vmatpush1.bf16.msra.mxu0 0
      %1541 = vmatprep.subr.bf16.mxu0 0
      %1542 = vmatpush1.bf16.msra.mxu0 0
      %1543 = vmatprep.mubr.bf16.mxu0 0
      %1544 = vmatmul.mubr.bf16.gmra.mrb[0].mxu0 %v1464
      %v1545 = vpop.f32.mrb[0].mxu0
      %v1546 = vadd.f32 0.0, %v1545
      %v1547 = vpop.f32.mrb[0].mxu0
      %v1548 = vpop.f32.mrb[0].mxu0
      %v1549 = vadd.f32 0.0, %v1548
      %v1550 = vpop.f32.mrb[0].mxu0
      %1551 = vmatprep.mubr.bf16.mxu0 0
      %1552 = vmatmul.mubr.bf16.gmra.mrb[0].mxu0 %v1467
      %v1553 = vpop.f32.mrb[0].mxu0
      %v1554 = vadd.f32 0.0, %v1553
      %v1555 = vpop.f32.mrb[0].mxu0
      %v1556 = vpop.f32.mrb[0].mxu0
      %v1557 = vadd.f32 0.0, %v1556
      %v1558 = vpop.f32.mrb[0].mxu0
      %1559 = vmatprep.mubr.bf16.mxu0 0
      %1560 = vmatmul.mubr.bf16.gmra.mrb[0].mxu0 %v1470
      %v1561 = vpop.f32.mrb[0].mxu0
      %v1562 = vadd.f32 0.0, %v1561
      %v1563 = vpop.f32.mrb[0].mxu0
      %v1564 = vpop.f32.mrb[0].mxu0
      %v1565 = vadd.f32 0.0, %v1564
      %v1566 = vpop.f32.mrb[0].mxu0
      %1567 = vmatprep.mubr.bf16.mxu0 0
      %1568 = vmatmul.mubr.bf16.gmra.mrb[0].mxu0 %v1473
      %v1569 = vpop.f32.mrb[0].mxu0
      %v1570 = vadd.f32 0.0, %v1569
      %v1571 = vpop.f32.mrb[0].mxu0
      %v1572 = vpop.f32.mrb[0].mxu0
      %v1573 = vadd.f32 0.0, %v1572
      %v1574 = vpop.f32.mrb[0].mxu0
      %1575 = vmatprep.mubr.bf16.mxu0 0
      %1576 = vmatmul.mubr.bf16.gmra.mrb[0].mxu0 %v1476
      %v1577 = vpop.f32.mrb[0].mxu0
      %v1578 = vadd.f32 0.0, %v1577
      %v1579 = vpop.f32.mrb[0].mxu0
      %v1580 = vpop.f32.mrb[0].mxu0
      %v1581 = vadd.f32 0.0, %v1580
      %v1582 = vpop.f32.mrb[0].mxu0
      %1583 = vmatprep.mubr.bf16.mxu0 0
      %1584 = vmatmul.mubr.bf16.gmra.mrb[0].mxu0 %v1479
      %v1585 = vpop.f32.mrb[0].mxu0
      %v1586 = vadd.f32 0.0, %v1585
      %v1587 = vpop.f32.mrb[0].mxu0
      %v1588 = vpop.f32.mrb[0].mxu0
      %v1589 = vadd.f32 0.0, %v1588
      %v1590 = vpop.f32.mrb[0].mxu0
      %1591 = vmatprep.mubr.bf16.mxu0 0
      %1592 = vmatmul.mubr.bf16.gmra.mrb[0].mxu0 %v1482
      %v1593 = vpop.f32.mrb[0].mxu0
      %v1594 = vadd.f32 0.0, %v1593
      %v1595 = vpop.f32.mrb[0].mxu0
      %v1596 = vpop.f32.mrb[0].mxu0
      %v1597 = vadd.f32 0.0, %v1596
      %v1598 = vpop.f32.mrb[0].mxu0
      %1599 = vmatprep.mubr.bf16.mxu0 0
      %1600 = vmatmul.mubr.bf16.gmra.mrb[0].mxu0 %v1485
      %v1601 = vpop.f32.mrb[0].mxu0
      %v1602 = vadd.f32 0.0, %v1601
      %v1603 = vpop.f32.mrb[0].mxu0
      %v1604 = vpop.f32.mrb[0].mxu0
      %v1605 = vadd.f32 0.0, %v1604
      %v1606 = vpop.f32.mrb[0].mxu0
      %1607 = vmatprep.mubr.bf16.mxu0 0
      %1608 = vmatmul.mubr.bf16.gmra.mrb[0].mxu0 %v1488
      %v1609 = vpop.f32.mrb[0].mxu0
      %v1610 = vadd.f32 0.0, %v1609
      %v1611 = vpop.f32.mrb[0].mxu0
      %v1612 = vpop.f32.mrb[0].mxu0
      %v1613 = vadd.f32 0.0, %v1612
      %v1614 = vpop.f32.mrb[0].mxu0
      %1615 = vmatprep.mubr.bf16.mxu0 0
      %1616 = vmatmul.mubr.bf16.gmra.mrb[0].mxu0 %v1491
      %v1617 = vpop.f32.mrb[0].mxu0
      %v1618 = vadd.f32 0.0, %v1617
      %v1619 = vpop.f32.mrb[0].mxu0
      %v1620 = vpop.f32.mrb[0].mxu0
      %v1621 = vadd.f32 0.0, %v1620
      %v1622 = vpop.f32.mrb[0].mxu0
      %1623 = vmatprep.mubr.bf16.mxu0 0
      %1624 = vmatmul.mubr.bf16.gmra.mrb[0].mxu0 %v1494
      %v1625 = vpop.f32.mrb[0].mxu0
      %v1626 = vadd.f32 0.0, %v1625
      %v1627 = vpop.f32.mrb[0].mxu0
      %v1628 = vpop.f32.mrb[0].mxu0
      %v1629 = vadd.f32 0.0, %v1628
      %v1630 = vpop.f32.mrb[0].mxu0
      %1631 = vmatprep.mubr.bf16.mxu0 0
      %1632 = vmatmul.mubr.bf16.gmra.mrb[0].mxu0 %v1497
      %v1633 = vpop.f32.mrb[0].mxu0
      %v1634 = vadd.f32 0.0, %v1633
      %v1635 = vpop.f32.mrb[0].mxu0
      %v1636 = vpop.f32.mrb[0].mxu0
      %v1637 = vadd.f32 0.0, %v1636
      %v1638 = vpop.f32.mrb[0].mxu0
      %1639 = vmatprep.mubr.bf16.mxu0 0
      %1640 = vmatmul.mubr.bf16.gmra.mrb[0].mxu0 %v1500
      %v1641 = vpop.f32.mrb[0].mxu0
      %v1642 = vadd.f32 0.0, %v1641
      %v1643 = vpop.f32.mrb[0].mxu0
      %v1644 = vpop.f32.mrb[0].mxu0
      %v1645 = vadd.f32 0.0, %v1644
      %v1646 = vpop.f32.mrb[0].mxu0
      %1647 = vmatprep.mubr.bf16.mxu0 0
      %1648 = vmatmul.mubr.bf16.gmra.mrb[0].mxu0 %v1503
      %v1649 = vpop.f32.mrb[0].mxu0
      %v1650 = vadd.f32 0.0, %v1649
      %v1651 = vpop.f32.mrb[0].mxu0
      %v1652 = vpop.f32.mrb[0].mxu0
      %v1653 = vadd.f32 0.0, %v1652
      %v1654 = vpop.f32.mrb[0].mxu0
      %1655 = vmatprep.mubr.bf16.mxu0 0
      %1656 = vmatmul.mubr.bf16.gmra.mrb[0].mxu0 %v1506
      %v1657 = vpop.f32.mrb[0].mxu0
      %v1658 = vadd.f32 0.0, %v1657
      %v1659 = vpop.f32.mrb[0].mxu0
      %v1660 = vpop.f32.mrb[0].mxu0
      %v1661 = vadd.f32 0.0, %v1660
      %v1662 = vpop.f32.mrb[0].mxu0
      %1663 = vmatprep.mubr.bf16.mxu0 0
      %1664 = vmatmul.mubr.bf16.gmra.mrb[0].mxu0 %v1509
      %v1665 = vpop.f32.mrb[0].mxu0
      %v1666 = vadd.f32 0.0, %v1665
      %v1667 = vpop.f32.mrb[0].mxu0
      %v1668 = vpop.f32.mrb[0].mxu0
      %v1669 = vadd.f32 0.0, %v1668
      %v1670 = vpop.f32.mrb[0].mxu0
      %1671 = vdwg.mxu0
      %v1672 = vadd.f32 %v1093, %v1546
      %v1673 = vadd.f32 %v1096, %v1549
      %v1674 = vadd.f32 %v1101, %v1554
      %v1675 = vadd.f32 %v1104, %v1557
      %v1676 = vadd.f32 %v1109, %v1562
      %v1677 = vadd.f32 %v1112, %v1565
      %v1678 = vadd.f32 %v1117, %v1570
      %v1679 = vadd.f32 %v1120, %v1573
      %v1680 = vadd.f32 %v1125, %v1578
      %v1681 = vadd.f32 %v1128, %v1581
      %v1682 = vadd.f32 %v1133, %v1586
      %v1683 = vadd.f32 %v1136, %v1589
      %v1684 = vadd.f32 %v1141, %v1594
      %v1685 = vadd.f32 %v1144, %v1597
      %v1686 = vadd.f32 %v1149, %v1602
      %v1687 = vadd.f32 %v1152, %v1605
      %v1688 = vadd.f32 %v1157, %v1610
      %v1689 = vadd.f32 %v1160, %v1613
      %v1690 = vadd.f32 %v1165, %v1618
      %v1691 = vadd.f32 %v1168, %v1621
      %v1692 = vadd.f32 %v1173, %v1626
      %v1693 = vadd.f32 %v1176, %v1629
      %v1694 = vadd.f32 %v1181, %v1634
      %v1695 = vadd.f32 %v1184, %v1637
      %v1696 = vadd.f32 %v1189, %v1642
      %v1697 = vadd.f32 %v1192, %v1645
      %v1698 = vadd.f32 %v1197, %v1650
      %v1699 = vadd.f32 %v1200, %v1653
      %v1700 = vadd.f32 %v1205, %v1658
      %v1701 = vadd.f32 %v1208, %v1661
      %v1702 = vadd.f32 %v1213, %v1666
      %v1703 = vadd.f32 %v1216, %v1669
      %s1704 = scalar_lea.vmem %s165, 12
      %v1705 = vld [vmem:[%s1704] sm:$0xf]
      %v1706 = vld [vmem:[%s1704 + $0x4] sm:$0xf]
      %v1707 = vld [vmem:[%s1704 + $0xc] sm:$0xf]
      %v1708 = vld [vmem:[%s1704 + $0x10] sm:$0xf]
      %v1709 = vld [vmem:[%s1704 + $0x18] sm:$0xf]
      %v1710 = vld [vmem:[%s1704 + $0x1c] sm:$0xf]
      %v1711 = vld [vmem:[%s1704 + $0x24] sm:$0xf]
      %v1712 = vld [vmem:[%s1704 + $0x28] sm:$0xf]
      %v1713 = vld [vmem:[%s1704 + $0x30] sm:$0xf]
      %v1714 = vld [vmem:[%s1704 + $0x34] sm:$0xf]
      %v1715 = vld [vmem:[%s1704 + $0x3c] sm:$0xf]
      %v1716 = vld [vmem:[%s1704 + $0x40] sm:$0xf]
      %v1717 = vld [vmem:[%s1704 + $0x48] sm:$0xf]
      %v1718 = vld [vmem:[%s1704 + $0x4c] sm:$0xf]
      %v1719 = vld [vmem:[%s1704 + $0x54] sm:$0xf]
      %v1720 = vld [vmem:[%s1704 + $0x58] sm:$0xf]
      %v1721 = vld [vmem:[%s1704 + $0x60] sm:$0xf]
      %v1722 = vld [vmem:[%s1704 + $0x64] sm:$0xf]
      %v1723 = vld [vmem:[%s1704 + $0x6c] sm:$0xf]
      %v1724 = vld [vmem:[%s1704 + $0x70] sm:$0xf]
      %v1725 = vld [vmem:[%s1704 + $0x78] sm:$0xf]
      %v1726 = vld [vmem:[%s1704 + $0x7c] sm:$0xf]
      %v1727 = vld [vmem:[%s1704 + $0x84] sm:$0xf]
      %v1728 = vld [vmem:[%s1704 + $0x88] sm:$0xf]
      %v1729 = vld [vmem:[%s1704 + $0x90] sm:$0xf]
      %v1730 = vld [vmem:[%s1704 + $0x94] sm:$0xf]
      %v1731 = vld [vmem:[%s1704 + $0x9c] sm:$0xf]
      %v1732 = vld [vmem:[%s1704 + $0xa0] sm:$0xf]
      %v1733 = vld [vmem:[%s1704 + $0xa8] sm:$0xf]
      %v1734 = vld [vmem:[%s1704 + $0xac] sm:$0xf]
      %v1735 = vld [vmem:[%s1704 + $0xb4] sm:$0xf]
      %v1736 = vld [vmem:[%s1704 + $0xb8] sm:$0xf]
      %s1737 = scalar_lea.vmem %s1, 96
      %v1738 = vld [vmem:[%s1737] sm:$0xf]
      %v1739 = vld [vmem:[%s1737 + $0x4] sm:$0xf]
      %v1740 = vld [vmem:[%s1737 + $0x8] sm:$0xf]
      %v1741 = vld [vmem:[%s1737 + $0xc] sm:$0xf]
      %v1742 = vld [vmem:[%s1737 + $0x10] sm:$0xf]
      %v1743 = vld [vmem:[%s1737 + $0x14] sm:$0xf]
      %v1744 = vld [vmem:[%s1737 + $0x18] sm:$0xf]
      %v1745 = vld [vmem:[%s1737 + $0x1c] sm:$0xf]
      %v1778 = vunpack.c.l.b16 %v1705
      %v1779 = vunpack.c.l.b16 %v1706
      %v1780 = vunpack.c.l.b16 %v1707
      %v1781 = vunpack.c.l.b16 %v1708
      %v1782 = vunpack.c.l.b16 %v1709
      %v1783 = vunpack.c.l.b16 %v1710
      %v1784 = vunpack.c.l.b16 %v1711
      %v1785 = vunpack.c.l.b16 %v1712
      %v1786 = vunpack.c.l.b16 %v1713
      %v1787 = vunpack.c.l.b16 %v1714
      %v1788 = vunpack.c.l.b16 %v1715
      %v1789 = vunpack.c.l.b16 %v1716
      %v1790 = vunpack.c.l.b16 %v1717
      %v1791 = vunpack.c.l.b16 %v1718
      %v1792 = vunpack.c.l.b16 %v1719
      %v1793 = vunpack.c.l.b16 %v1720
      %v1794 = vunpack.c.l.b16 %v1721
      %v1795 = vunpack.c.l.b16 %v1722
      %v1796 = vunpack.c.l.b16 %v1723
      %v1797 = vunpack.c.l.b16 %v1724
      %v1798 = vunpack.c.l.b16 %v1725
      %v1799 = vunpack.c.l.b16 %v1726
      %v1800 = vunpack.c.l.b16 %v1727
      %v1801 = vunpack.c.l.b16 %v1728
      %v1802 = vunpack.c.l.b16 %v1729
      %v1803 = vunpack.c.l.b16 %v1730
      %v1804 = vunpack.c.l.b16 %v1731
      %v1805 = vunpack.c.l.b16 %v1732
      %v1806 = vunpack.c.l.b16 %v1733
      %v1807 = vunpack.c.l.b16 %v1734
      %v1808 = vunpack.c.l.b16 %v1735
      %v1809 = vunpack.c.l.b16 %v1736
      %v1810 = vpack.c.b16 %v1779, %v1778
      %v1811 = vpack.c.b16 %v1781, %v1780
      %v1812 = vpack.c.b16 %v1783, %v1782
      %v1813 = vpack.c.b16 %v1785, %v1784
      %v1814 = vpack.c.b16 %v1787, %v1786
      %v1815 = vpack.c.b16 %v1789, %v1788
      %v1816 = vpack.c.b16 %v1791, %v1790
      %v1817 = vpack.c.b16 %v1793, %v1792
      %v1818 = vpack.c.b16 %v1795, %v1794
      %v1819 = vpack.c.b16 %v1797, %v1796
      %v1820 = vpack.c.b16 %v1799, %v1798
      %v1821 = vpack.c.b16 %v1801, %v1800
      %v1822 = vpack.c.b16 %v1803, %v1802
      %v1823 = vpack.c.b16 %v1805, %v1804
      %v1824 = vpack.c.b16 %v1807, %v1806
      %v1825 = vpack.c.b16 %v1809, %v1808
      %v1834 = vunpack.c.l.b16 %v1738
      %v1835 = vunpack.c.l.b16 %v1739
      %v1836 = vunpack.c.l.b16 %v1740
      %v1837 = vunpack.c.l.b16 %v1741
      %v1838 = vunpack.c.l.b16 %v1742
      %v1839 = vunpack.c.l.b16 %v1743
      %v1840 = vunpack.c.l.b16 %v1744
      %v1841 = vunpack.c.l.b16 %v1745
      %v1842 = vpack.c.b16 %v1835, %v1834
      %v1843 = vpack.c.b16 %v1837, %v1836
      %v1844 = vpack.c.b16 %v1839, %v1838
      %v1845 = vpack.c.b16 %v1841, %v1840
      %v1851 = vsel %vm696, %v1810, 0
      %v1854 = vsel %vm696, %v1811, 0
      %v1857 = vsel %vm696, %v1812, 0
      %v1860 = vsel %vm696, %v1813, 0
      %v1863 = vsel %vm696, %v1814, 0
      %v1866 = vsel %vm696, %v1815, 0
      %v1869 = vsel %vm696, %v1816, 0
      %v1872 = vsel %vm696, %v1817, 0
      %v1875 = vsel %vm696, %v1818, 0
      %v1878 = vsel %vm696, %v1819, 0
      %v1881 = vsel %vm696, %v1820, 0
      %v1884 = vsel %vm696, %v1821, 0
      %v1887 = vsel %vm696, %v1822, 0
      %v1890 = vsel %vm696, %v1823, 0
      %v1893 = vsel %vm696, %v1824, 0
      %v1896 = vsel %vm696, %v1825, 0
      %1898 = vmatprep.subr.bf16.mxu0 0
      %1899 = vmatpush1.bf16.msra.mxu0 %v1842
      %1900 = vmatprep.subr.bf16.mxu0 0
      %1901 = vmatpush1.bf16.msra.mxu0 %v1843
      %1902 = vmatprep.subr.bf16.mxu0 0
      %1903 = vmatpush1.bf16.msra.mxu0 %v1844
      %1904 = vmatprep.subr.bf16.mxu0 0
      %1905 = vmatpush1.bf16.msra.mxu0 %v1845
      %1906 = vmatprep.subr.bf16.mxu0 0
      %1907 = vmatpush1.bf16.msra.mxu0 0
      %1908 = vmatprep.subr.bf16.mxu0 0
      %1909 = vmatpush1.bf16.msra.mxu0 0
      %1910 = vmatprep.subr.bf16.mxu0 0
      %1911 = vmatpush1.bf16.msra.mxu0 0
      %1912 = vmatprep.subr.bf16.mxu0 0
      %1913 = vmatpush1.bf16.msra.mxu0 0
      %1914 = vmatprep.subr.bf16.mxu0 0
      %1915 = vmatpush1.bf16.msra.mxu0 0
      %1916 = vmatprep.subr.bf16.mxu0 0
      %1917 = vmatpush1.bf16.msra.mxu0 0
      %1918 = vmatprep.subr.bf16.mxu0 0
      %1919 = vmatpush1.bf16.msra.mxu0 0
      %1920 = vmatprep.subr.bf16.mxu0 0
      %1921 = vmatpush1.bf16.msra.mxu0 0
      %1922 = vmatprep.subr.bf16.mxu0 0
      %1923 = vmatpush1.bf16.msra.mxu0 0
      %1924 = vmatprep.subr.bf16.mxu0 0
      %1925 = vmatpush1.bf16.msra.mxu0 0
      %1926 = vmatprep.subr.bf16.mxu0 0
      %1927 = vmatpush1.bf16.msra.mxu0 0
      %1928 = vmatprep.subr.bf16.mxu0 0
      %1929 = vmatpush1.bf16.msra.mxu0 0
      %1930 = vmatprep.mubr.bf16.mxu0 0
      %1931 = vmatmul.mubr.bf16.gmra.mrb[0].mxu0 %v1851
      %v1932 = vpop.f32.mrb[0].mxu0
      %v1933 = vadd.f32 0.0, %v1932
      %v1934 = vpop.f32.mrb[0].mxu0
      %v1935 = vpop.f32.mrb[0].mxu0
      %v1936 = vadd.f32 0.0, %v1935
      %v1937 = vpop.f32.mrb[0].mxu0
      %1938 = vmatprep.mubr.bf16.mxu0 0
      %1939 = vmatmul.mubr.bf16.gmra.mrb[0].mxu0 %v1854
      %v1940 = vpop.f32.mrb[0].mxu0
      %v1941 = vadd.f32 0.0, %v1940
      %v1942 = vpop.f32.mrb[0].mxu0
      %v1943 = vpop.f32.mrb[0].mxu0
      %v1944 = vadd.f32 0.0, %v1943
      %v1945 = vpop.f32.mrb[0].mxu0
      %1946 = vmatprep.mubr.bf16.mxu0 0
      %1947 = vmatmul.mubr.bf16.gmra.mrb[0].mxu0 %v1857
      %v1948 = vpop.f32.mrb[0].mxu0
      %v1949 = vadd.f32 0.0, %v1948
      %v1950 = vpop.f32.mrb[0].mxu0
      %v1951 = vpop.f32.mrb[0].mxu0
      %v1952 = vadd.f32 0.0, %v1951
      %v1953 = vpop.f32.mrb[0].mxu0
      %1954 = vmatprep.mubr.bf16.mxu0 0
      %1955 = vmatmul.mubr.bf16.gmra.mrb[0].mxu0 %v1860
      %v1956 = vpop.f32.mrb[0].mxu0
      %v1957 = vadd.f32 0.0, %v1956
      %v1958 = vpop.f32.mrb[0].mxu0
      %v1959 = vpop.f32.mrb[0].mxu0
      %v1960 = vadd.f32 0.0, %v1959
      %v1961 = vpop.f32.mrb[0].mxu0
      %1962 = vmatprep.mubr.bf16.mxu0 0
      %1963 = vmatmul.mubr.bf16.gmra.mrb[0].mxu0 %v1863
      %v1964 = vpop.f32.mrb[0].mxu0
      %v1965 = vadd.f32 0.0, %v1964
      %v1966 = vpop.f32.mrb[0].mxu0
      %v1967 = vpop.f32.mrb[0].mxu0
      %v1968 = vadd.f32 0.0, %v1967
      %v1969 = vpop.f32.mrb[0].mxu0
      %1970 = vmatprep.mubr.bf16.mxu0 0
      %1971 = vmatmul.mubr.bf16.gmra.mrb[0].mxu0 %v1866
      %v1972 = vpop.f32.mrb[0].mxu0
      %v1973 = vadd.f32 0.0, %v1972
      %v1974 = vpop.f32.mrb[0].mxu0
      %v1975 = vpop.f32.mrb[0].mxu0
      %v1976 = vadd.f32 0.0, %v1975
      %v1977 = vpop.f32.mrb[0].mxu0
      %1978 = vmatprep.mubr.bf16.mxu0 0
      %1979 = vmatmul.mubr.bf16.gmra.mrb[0].mxu0 %v1869
      %v1980 = vpop.f32.mrb[0].mxu0
      %v1981 = vadd.f32 0.0, %v1980
      %v1982 = vpop.f32.mrb[0].mxu0
      %v1983 = vpop.f32.mrb[0].mxu0
      %v1984 = vadd.f32 0.0, %v1983
      %v1985 = vpop.f32.mrb[0].mxu0
      %1986 = vmatprep.mubr.bf16.mxu0 0
      %1987 = vmatmul.mubr.bf16.gmra.mrb[0].mxu0 %v1872
      %v1988 = vpop.f32.mrb[0].mxu0
      %v1989 = vadd.f32 0.0, %v1988
      %v1990 = vpop.f32.mrb[0].mxu0
      %v1991 = vpop.f32.mrb[0].mxu0
      %v1992 = vadd.f32 0.0, %v1991
      %v1993 = vpop.f32.mrb[0].mxu0
      %1994 = vmatprep.mubr.bf16.mxu0 0
      %1995 = vmatmul.mubr.bf16.gmra.mrb[0].mxu0 %v1875
      %v1996 = vpop.f32.mrb[0].mxu0
      %v1997 = vadd.f32 0.0, %v1996
      %v1998 = vpop.f32.mrb[0].mxu0
      %v1999 = vpop.f32.mrb[0].mxu0
      %v2000 = vadd.f32 0.0, %v1999
      %v2001 = vpop.f32.mrb[0].mxu0
      %2002 = vmatprep.mubr.bf16.mxu0 0
      %2003 = vmatmul.mubr.bf16.gmra.mrb[0].mxu0 %v1878
      %v2004 = vpop.f32.mrb[0].mxu0
      %v2005 = vadd.f32 0.0, %v2004
      %v2006 = vpop.f32.mrb[0].mxu0
      %v2007 = vpop.f32.mrb[0].mxu0
      %v2008 = vadd.f32 0.0, %v2007
      %v2009 = vpop.f32.mrb[0].mxu0
      %2010 = vmatprep.mubr.bf16.mxu0 0
      %2011 = vmatmul.mubr.bf16.gmra.mrb[0].mxu0 %v1881
      %v2012 = vpop.f32.mrb[0].mxu0
      %v2013 = vadd.f32 0.0, %v2012
      %v2014 = vpop.f32.mrb[0].mxu0
      %v2015 = vpop.f32.mrb[0].mxu0
      %v2016 = vadd.f32 0.0, %v2015
      %v2017 = vpop.f32.mrb[0].mxu0
      %2018 = vmatprep.mubr.bf16.mxu0 0
      %2019 = vmatmul.mubr.bf16.gmra.mrb[0].mxu0 %v1884
      %v2020 = vpop.f32.mrb[0].mxu0
      %v2021 = vadd.f32 0.0, %v2020
      %v2022 = vpop.f32.mrb[0].mxu0
      %v2023 = vpop.f32.mrb[0].mxu0
      %v2024 = vadd.f32 0.0, %v2023
      %v2025 = vpop.f32.mrb[0].mxu0
      %2026 = vmatprep.mubr.bf16.mxu0 0
      %2027 = vmatmul.mubr.bf16.gmra.mrb[0].mxu0 %v1887
      %v2028 = vpop.f32.mrb[0].mxu0
      %v2029 = vadd.f32 0.0, %v2028
      %v2030 = vpop.f32.mrb[0].mxu0
      %v2031 = vpop.f32.mrb[0].mxu0
      %v2032 = vadd.f32 0.0, %v2031
      %v2033 = vpop.f32.mrb[0].mxu0
      %2034 = vmatprep.mubr.bf16.mxu0 0
      %2035 = vmatmul.mubr.bf16.gmra.mrb[0].mxu0 %v1890
      %v2036 = vpop.f32.mrb[0].mxu0
      %v2037 = vadd.f32 0.0, %v2036
      %v2038 = vpop.f32.mrb[0].mxu0
      %v2039 = vpop.f32.mrb[0].mxu0
      %v2040 = vadd.f32 0.0, %v2039
      %v2041 = vpop.f32.mrb[0].mxu0
      %2042 = vmatprep.mubr.bf16.mxu0 0
      %2043 = vmatmul.mubr.bf16.gmra.mrb[0].mxu0 %v1893
      %v2044 = vpop.f32.mrb[0].mxu0
      %v2045 = vadd.f32 0.0, %v2044
      %v2046 = vpop.f32.mrb[0].mxu0
      %v2047 = vpop.f32.mrb[0].mxu0
      %v2048 = vadd.f32 0.0, %v2047
      %v2049 = vpop.f32.mrb[0].mxu0
      %2050 = vmatprep.mubr.bf16.mxu0 0
      %2051 = vmatmul.mubr.bf16.gmra.mrb[0].mxu0 %v1896
      %v2052 = vpop.f32.mrb[0].mxu0
      %v2053 = vadd.f32 0.0, %v2052
      %v2054 = vpop.f32.mrb[0].mxu0
      %v2055 = vpop.f32.mrb[0].mxu0
      %v2056 = vadd.f32 0.0, %v2055
      %v2057 = vpop.f32.mrb[0].mxu0
      %2058 = vdwg.mxu0
      %v2059 = vadd.f32 %v1672, %v1933
      %v2060 = vadd.f32 %v1673, %v1936
      %v2061 = vadd.f32 %v1674, %v1941
      %v2062 = vadd.f32 %v1675, %v1944
      %v2063 = vadd.f32 %v1676, %v1949
      %v2064 = vadd.f32 %v1677, %v1952
      %v2065 = vadd.f32 %v1678, %v1957
      %v2066 = vadd.f32 %v1679, %v1960
      %v2067 = vadd.f32 %v1680, %v1965
      %v2068 = vadd.f32 %v1681, %v1968
      %v2069 = vadd.f32 %v1682, %v1973
      %v2070 = vadd.f32 %v1683, %v1976
      %v2071 = vadd.f32 %v1684, %v1981
      %v2072 = vadd.f32 %v1685, %v1984
      %v2073 = vadd.f32 %v1686, %v1989
      %v2074 = vadd.f32 %v1687, %v1992
      %v2075 = vadd.f32 %v1688, %v1997
      %v2076 = vadd.f32 %v1689, %v2000
      %v2077 = vadd.f32 %v1690, %v2005
      %v2078 = vadd.f32 %v1691, %v2008
      %v2079 = vadd.f32 %v1692, %v2013
      %v2080 = vadd.f32 %v1693, %v2016
      %v2081 = vadd.f32 %v1694, %v2021
      %v2082 = vadd.f32 %v1695, %v2024
      %v2083 = vadd.f32 %v1696, %v2029
      %v2084 = vadd.f32 %v1697, %v2032
      %v2085 = vadd.f32 %v1698, %v2037
      %v2086 = vadd.f32 %v1699, %v2040
      %v2087 = vadd.f32 %v1700, %v2045
      %v2088 = vadd.f32 %v1701, %v2048
      %v2089 = vadd.f32 %v1702, %v2053
      %v2090 = vadd.f32 %v1703, %v2056
      %v2091 = vld [vmem:[%s1704] sm:$0xf]
      %v2092 = vld [vmem:[%s1704 + $0x4] sm:$0xf]
      %v2093 = vld [vmem:[%s1704 + $0x8] sm:$0x1]
      %v2094 = vld [vmem:[%s1704 + $0xc] sm:$0xf]
      %v2095 = vld [vmem:[%s1704 + $0x10] sm:$0xf]
      %v2096 = vld [vmem:[%s1704 + $0x14] sm:$0x1]
      %v2097 = vld [vmem:[%s1704 + $0x18] sm:$0xf]
      %v2098 = vld [vmem:[%s1704 + $0x1c] sm:$0xf]
      %v2099 = vld [vmem:[%s1704 + $0x20] sm:$0x1]
      %v2100 = vld [vmem:[%s1704 + $0x24] sm:$0xf]
      %v2101 = vld [vmem:[%s1704 + $0x28] sm:$0xf]
      %v2102 = vld [vmem:[%s1704 + $0x2c] sm:$0x1]
      %v2103 = vld [vmem:[%s1704 + $0x30] sm:$0xf]
      %v2104 = vld [vmem:[%s1704 + $0x34] sm:$0xf]
      %v2105 = vld [vmem:[%s1704 + $0x38] sm:$0x1]
      %v2106 = vld [vmem:[%s1704 + $0x3c] sm:$0xf]
      %v2107 = vld [vmem:[%s1704 + $0x40] sm:$0xf]
      %v2108 = vld [vmem:[%s1704 + $0x44] sm:$0x1]
      %v2109 = vld [vmem:[%s1704 + $0x48] sm:$0xf]
      %v2110 = vld [vmem:[%s1704 + $0x4c] sm:$0xf]
      %v2111 = vld [vmem:[%s1704 + $0x50] sm:$0x1]
      %v2112 = vld [vmem:[%s1704 + $0x54] sm:$0xf]
      %v2113 = vld [vmem:[%s1704 + $0x58] sm:$0xf]
      %v2114 = vld [vmem:[%s1704 + $0x5c] sm:$0x1]
      %v2115 = vld [vmem:[%s1704 + $0x60] sm:$0xf]
      %v2116 = vld [vmem:[%s1704 + $0x64] sm:$0xf]
      %v2117 = vld [vmem:[%s1704 + $0x68] sm:$0x1]
      %v2118 = vld [vmem:[%s1704 + $0x6c] sm:$0xf]
      %v2119 = vld [vmem:[%s1704 + $0x70] sm:$0xf]
      %v2120 = vld [vmem:[%s1704 + $0x74] sm:$0x1]
      %v2121 = vld [vmem:[%s1704 + $0x78] sm:$0xf]
      %v2122 = vld [vmem:[%s1704 + $0x7c] sm:$0xf]
      %v2123 = vld [vmem:[%s1704 + $0x80] sm:$0x1]
      %v2124 = vld [vmem:[%s1704 + $0x84] sm:$0xf]
      %v2125 = vld [vmem:[%s1704 + $0x88] sm:$0xf]
      %v2126 = vld [vmem:[%s1704 + $0x8c] sm:$0x1]
      %v2127 = vld [vmem:[%s1704 + $0x90] sm:$0xf]
      %v2128 = vld [vmem:[%s1704 + $0x94] sm:$0xf]
      %v2129 = vld [vmem:[%s1704 + $0x98] sm:$0x1]
      %v2130 = vld [vmem:[%s1704 + $0x9c] sm:$0xf]
      %v2131 = vld [vmem:[%s1704 + $0xa0] sm:$0xf]
      %v2132 = vld [vmem:[%s1704 + $0xa4] sm:$0x1]
      %v2133 = vld [vmem:[%s1704 + $0xa8] sm:$0xf]
      %v2134 = vld [vmem:[%s1704 + $0xac] sm:$0xf]
      %v2135 = vld [vmem:[%s1704 + $0xb0] sm:$0x1]
      %v2136 = vld [vmem:[%s1704 + $0xb4] sm:$0xf]
      %v2137 = vld [vmem:[%s1704 + $0xb8] sm:$0xf]
      %v2138 = vld [vmem:[%s1704 + $0xbc] sm:$0x1]
      %v2140 = vshrl.u32 %v2091, 16
      %v2142 = vrot.slane %v2140, 4
      %v2143 = vshll.u32 %v2091, 16
      %v2145 = vrot.slane %v2143, 5
      %v2146 = vor.u32 %v2142, %v2145
      %v2147 = vrot.slane %v2146, 4
      %v2149 = vshll.u32 %v2092, 16
      %v2151 = vrot.slane %v2149, 5
      %v2152 = vsel %vm230, %v2147, %v2151
      %v2153 = vshrl.u32 %v2092, 16
      %v2155 = vrot.slane %v2153, 4
      %v2156 = vor.u32 %v2155, %v2151
      %v2157 = vrot.slane %v2156, 4
      %v2159 = vshll.u32 %v2093, 16
      %v2161 = vrot.slane %v2159, 5
      %v2162 = vsel %vm230, %v2157, %v2161
      %v2164 = vshrl.u32 %v2094, 16
      %v2166 = vrot.slane %v2164, 4
      %v2167 = vshll.u32 %v2094, 16
      %v2169 = vrot.slane %v2167, 5
      %v2170 = vor.u32 %v2166, %v2169
      %v2171 = vrot.slane %v2170, 4
      %v2173 = vshll.u32 %v2095, 16
      %v2175 = vrot.slane %v2173, 5
      %v2176 = vsel %vm230, %v2171, %v2175
      %v2177 = vshrl.u32 %v2095, 16
      %v2179 = vrot.slane %v2177, 4
      %v2180 = vor.u32 %v2179, %v2175
      %v2181 = vrot.slane %v2180, 4
      %v2183 = vshll.u32 %v2096, 16
      %v2185 = vrot.slane %v2183, 5
      %v2186 = vsel %vm230, %v2181, %v2185
      %v2188 = vshrl.u32 %v2097, 16
      %v2190 = vrot.slane %v2188, 4
      %v2191 = vshll.u32 %v2097, 16
      %v2193 = vrot.slane %v2191, 5
      %v2194 = vor.u32 %v2190, %v2193
      %v2195 = vrot.slane %v2194, 4
      %v2197 = vshll.u32 %v2098, 16
      %v2199 = vrot.slane %v2197, 5
      %v2200 = vsel %vm230, %v2195, %v2199
      %v2201 = vshrl.u32 %v2098, 16
      %v2203 = vrot.slane %v2201, 4
      %v2204 = vor.u32 %v2203, %v2199
      %v2205 = vrot.slane %v2204, 4
      %v2207 = vshll.u32 %v2099, 16
      %v2209 = vrot.slane %v2207, 5
      %v2210 = vsel %vm230, %v2205, %v2209
      %v2212 = vshrl.u32 %v2100, 16
      %v2214 = vrot.slane %v2212, 4
      %v2215 = vshll.u32 %v2100, 16
      %v2217 = vrot.slane %v2215, 5
      %v2218 = vor.u32 %v2214, %v2217
      %v2219 = vrot.slane %v2218, 4
      %v2221 = vshll.u32 %v2101, 16
      %v2223 = vrot.slane %v2221, 5
      %v2224 = vsel %vm230, %v2219, %v2223
      %v2225 = vshrl.u32 %v2101, 16
      %v2227 = vrot.slane %v2225, 4
      %v2228 = vor.u32 %v2227, %v2223
      %v2229 = vrot.slane %v2228, 4
      %v2231 = vshll.u32 %v2102, 16
      %v2233 = vrot.slane %v2231, 5
      %v2234 = vsel %vm230, %v2229, %v2233
      %v2236 = vshrl.u32 %v2103, 16
      %v2238 = vrot.slane %v2236, 4
      %v2239 = vshll.u32 %v2103, 16
      %v2241 = vrot.slane %v2239, 5
      %v2242 = vor.u32 %v2238, %v2241
      %v2243 = vrot.slane %v2242, 4
      %v2245 = vshll.u32 %v2104, 16
      %v2247 = vrot.slane %v2245, 5
      %v2248 = vsel %vm230, %v2243, %v2247
      %v2249 = vshrl.u32 %v2104, 16
      %v2251 = vrot.slane %v2249, 4
      %v2252 = vor.u32 %v2251, %v2247
      %v2253 = vrot.slane %v2252, 4
      %v2255 = vshll.u32 %v2105, 16
      %v2257 = vrot.slane %v2255, 5
      %v2258 = vsel %vm230, %v2253, %v2257
      %v2260 = vshrl.u32 %v2106, 16
      %v2262 = vrot.slane %v2260, 4
      %v2263 = vshll.u32 %v2106, 16
      %v2265 = vrot.slane %v2263, 5
      %v2266 = vor.u32 %v2262, %v2265
      %v2267 = vrot.slane %v2266, 4
      %v2269 = vshll.u32 %v2107, 16
      %v2271 = vrot.slane %v2269, 5
      %v2272 = vsel %vm230, %v2267, %v2271
      %v2273 = vshrl.u32 %v2107, 16
      %v2275 = vrot.slane %v2273, 4
      %v2276 = vor.u32 %v2275, %v2271
      %v2277 = vrot.slane %v2276, 4
      %v2279 = vshll.u32 %v2108, 16
      %v2281 = vrot.slane %v2279, 5
      %v2282 = vsel %vm230, %v2277, %v2281
      %v2284 = vshrl.u32 %v2109, 16
      %v2286 = vrot.slane %v2284, 4
      %v2287 = vshll.u32 %v2109, 16
      %v2289 = vrot.slane %v2287, 5
      %v2290 = vor.u32 %v2286, %v2289
      %v2291 = vrot.slane %v2290, 4
      %v2293 = vshll.u32 %v2110, 16
      %v2295 = vrot.slane %v2293, 5
      %v2296 = vsel %vm230, %v2291, %v2295
      %v2297 = vshrl.u32 %v2110, 16
      %v2299 = vrot.slane %v2297, 4
      %v2300 = vor.u32 %v2299, %v2295
      %v2301 = vrot.slane %v2300, 4
      %v2303 = vshll.u32 %v2111, 16
      %v2305 = vrot.slane %v2303, 5
      %v2306 = vsel %vm230, %v2301, %v2305
      %v2308 = vshrl.u32 %v2112, 16
      %v2310 = vrot.slane %v2308, 4
      %v2311 = vshll.u32 %v2112, 16
      %v2313 = vrot.slane %v2311, 5
      %v2314 = vor.u32 %v2310, %v2313
      %v2315 = vrot.slane %v2314, 4
      %v2317 = vshll.u32 %v2113, 16
      %v2319 = vrot.slane %v2317, 5
      %v2320 = vsel %vm230, %v2315, %v2319
      %v2321 = vshrl.u32 %v2113, 16
      %v2323 = vrot.slane %v2321, 4
      %v2324 = vor.u32 %v2323, %v2319
      %v2325 = vrot.slane %v2324, 4
      %v2327 = vshll.u32 %v2114, 16
      %v2329 = vrot.slane %v2327, 5
      %v2330 = vsel %vm230, %v2325, %v2329
      %v2332 = vshrl.u32 %v2115, 16
      %v2334 = vrot.slane %v2332, 4
      %v2335 = vshll.u32 %v2115, 16
      %v2337 = vrot.slane %v2335, 5
      %v2338 = vor.u32 %v2334, %v2337
      %v2339 = vrot.slane %v2338, 4
      %v2341 = vshll.u32 %v2116, 16
      %v2343 = vrot.slane %v2341, 5
      %v2344 = vsel %vm230, %v2339, %v2343
      %v2345 = vshrl.u32 %v2116, 16
      %v2347 = vrot.slane %v2345, 4
      %v2348 = vor.u32 %v2347, %v2343
      %v2349 = vrot.slane %v2348, 4
      %v2351 = vshll.u32 %v2117, 16
      %v2353 = vrot.slane %v2351, 5
      %v2354 = vsel %vm230, %v2349, %v2353
      %v2356 = vshrl.u32 %v2118, 16
      %v2358 = vrot.slane %v2356, 4
      %v2359 = vshll.u32 %v2118, 16
      %v2361 = vrot.slane %v2359, 5
      %v2362 = vor.u32 %v2358, %v2361
      %v2363 = vrot.slane %v2362, 4
      %v2365 = vshll.u32 %v2119, 16
      %v2367 = vrot.slane %v2365, 5
      %v2368 = vsel %vm230, %v2363, %v2367
      %v2369 = vshrl.u32 %v2119, 16
      %v2371 = vrot.slane %v2369, 4
      %v2372 = vor.u32 %v2371, %v2367
      %v2373 = vrot.slane %v2372, 4
      %v2375 = vshll.u32 %v2120, 16
      %v2377 = vrot.slane %v2375, 5
      %v2378 = vsel %vm230, %v2373, %v2377
      %v2380 = vshrl.u32 %v2121, 16
      %v2382 = vrot.slane %v2380, 4
      %v2383 = vshll.u32 %v2121, 16
      %v2385 = vrot.slane %v2383, 5
      %v2386 = vor.u32 %v2382, %v2385
      %v2387 = vrot.slane %v2386, 4
      %v2389 = vshll.u32 %v2122, 16
      %v2391 = vrot.slane %v2389, 5
      %v2392 = vsel %vm230, %v2387, %v2391
      %v2393 = vshrl.u32 %v2122, 16
      %v2395 = vrot.slane %v2393, 4
      %v2396 = vor.u32 %v2395, %v2391
      %v2397 = vrot.slane %v2396, 4
      %v2399 = vshll.u32 %v2123, 16
      %v2401 = vrot.slane %v2399, 5
      %v2402 = vsel %vm230, %v2397, %v2401
      %v2404 = vshrl.u32 %v2124, 16
      %v2406 = vrot.slane %v2404, 4
      %v2407 = vshll.u32 %v2124, 16
      %v2409 = vrot.slane %v2407, 5
      %v2410 = vor.u32 %v2406, %v2409
      %v2411 = vrot.slane %v2410, 4
      %v2413 = vshll.u32 %v2125, 16
      %v2415 = vrot.slane %v2413, 5
      %v2416 = vsel %vm230, %v2411, %v2415
      %v2417 = vshrl.u32 %v2125, 16
      %v2419 = vrot.slane %v2417, 4
      %v2420 = vor.u32 %v2419, %v2415
      %v2421 = vrot.slane %v2420, 4
      %v2423 = vshll.u32 %v2126, 16
      %v2425 = vrot.slane %v2423, 5
      %v2426 = vsel %vm230, %v2421, %v2425
      %v2428 = vshrl.u32 %v2127, 16
      %v2430 = vrot.slane %v2428, 4
      %v2431 = vshll.u32 %v2127, 16
      %v2433 = vrot.slane %v2431, 5
      %v2434 = vor.u32 %v2430, %v2433
      %v2435 = vrot.slane %v2434, 4
      %v2437 = vshll.u32 %v2128, 16
      %v2439 = vrot.slane %v2437, 5
      %v2440 = vsel %vm230, %v2435, %v2439
      %v2441 = vshrl.u32 %v2128, 16
      %v2443 = vrot.slane %v2441, 4
      %v2444 = vor.u32 %v2443, %v2439
      %v2445 = vrot.slane %v2444, 4
      %v2447 = vshll.u32 %v2129, 16
      %v2449 = vrot.slane %v2447, 5
      %v2450 = vsel %vm230, %v2445, %v2449
      %v2452 = vshrl.u32 %v2130, 16
      %v2454 = vrot.slane %v2452, 4
      %v2455 = vshll.u32 %v2130, 16
      %v2457 = vrot.slane %v2455, 5
      %v2458 = vor.u32 %v2454, %v2457
      %v2459 = vrot.slane %v2458, 4
      %v2461 = vshll.u32 %v2131, 16
      %v2463 = vrot.slane %v2461, 5
      %v2464 = vsel %vm230, %v2459, %v2463
      %v2465 = vshrl.u32 %v2131, 16
      %v2467 = vrot.slane %v2465, 4
      %v2468 = vor.u32 %v2467, %v2463
      %v2469 = vrot.slane %v2468, 4
      %v2471 = vshll.u32 %v2132, 16
      %v2473 = vrot.slane %v2471, 5
      %v2474 = vsel %vm230, %v2469, %v2473
      %v2476 = vshrl.u32 %v2133, 16
      %v2478 = vrot.slane %v2476, 4
      %v2479 = vshll.u32 %v2133, 16
      %v2481 = vrot.slane %v2479, 5
      %v2482 = vor.u32 %v2478, %v2481
      %v2483 = vrot.slane %v2482, 4
      %v2485 = vshll.u32 %v2134, 16
      %v2487 = vrot.slane %v2485, 5
      %v2488 = vsel %vm230, %v2483, %v2487
      %v2489 = vshrl.u32 %v2134, 16
      %v2491 = vrot.slane %v2489, 4
      %v2492 = vor.u32 %v2491, %v2487
      %v2493 = vrot.slane %v2492, 4
      %v2495 = vshll.u32 %v2135, 16
      %v2497 = vrot.slane %v2495, 5
      %v2498 = vsel %vm230, %v2493, %v2497
      %v2500 = vshrl.u32 %v2136, 16
      %v2502 = vrot.slane %v2500, 4
      %v2503 = vshll.u32 %v2136, 16
      %v2505 = vrot.slane %v2503, 5
      %v2506 = vor.u32 %v2502, %v2505
      %v2507 = vrot.slane %v2506, 4
      %v2509 = vshll.u32 %v2137, 16
      %v2511 = vrot.slane %v2509, 5
      %v2512 = vsel %vm230, %v2507, %v2511
      %v2513 = vshrl.u32 %v2137, 16
      %v2515 = vrot.slane %v2513, 4
      %v2516 = vor.u32 %v2515, %v2511
      %v2517 = vrot.slane %v2516, 4
      %v2519 = vshll.u32 %v2138, 16
      %v2521 = vrot.slane %v2519, 5
      %v2522 = vsel %vm230, %v2517, %v2521
      %s2523 = scalar_lea.vmem %s1, 128
      %v2524 = vld [vmem:[%s2523] sm:$0xf]
      %v2525 = vld [vmem:[%s2523 + $0x4] sm:$0xf]
      %v2526 = vld [vmem:[%s2523 + $0x8] sm:$0xf]
      %v2527 = vld [vmem:[%s2523 + $0xc] sm:$0xf]
      %v2528 = vld [vmem:[%s2523 + $0x10] sm:$0xf]
      %v2529 = vld [vmem:[%s2523 + $0x14] sm:$0xf]
      %v2530 = vld [vmem:[%s2523 + $0x18] sm:$0xf]
      %v2531 = vld [vmem:[%s2523 + $0x1c] sm:$0xf]
      %v2532 = vunpack.c.l.b16 %v2152
      %v2533 = vunpack.c.l.b16 %v2162
      %v2534 = vunpack.c.l.b16 %v2176
      %v2535 = vunpack.c.l.b16 %v2186
      %v2536 = vunpack.c.l.b16 %v2200
      %v2537 = vunpack.c.l.b16 %v2210
      %v2538 = vunpack.c.l.b16 %v2224
      %v2539 = vunpack.c.l.b16 %v2234
      %v2540 = vunpack.c.l.b16 %v2248
      %v2541 = vunpack.c.l.b16 %v2258
      %v2542 = vunpack.c.l.b16 %v2272
      %v2543 = vunpack.c.l.b16 %v2282
      %v2544 = vunpack.c.l.b16 %v2296
      %v2545 = vunpack.c.l.b16 %v2306
      %v2546 = vunpack.c.l.b16 %v2320
      %v2547 = vunpack.c.l.b16 %v2330
      %v2548 = vunpack.c.l.b16 %v2344
      %v2549 = vunpack.c.l.b16 %v2354
      %v2550 = vunpack.c.l.b16 %v2368
      %v2551 = vunpack.c.l.b16 %v2378
      %v2552 = vunpack.c.l.b16 %v2392
      %v2553 = vunpack.c.l.b16 %v2402
      %v2554 = vunpack.c.l.b16 %v2416
      %v2555 = vunpack.c.l.b16 %v2426
      %v2556 = vunpack.c.l.b16 %v2440
      %v2557 = vunpack.c.l.b16 %v2450
      %v2558 = vunpack.c.l.b16 %v2464
      %v2559 = vunpack.c.l.b16 %v2474
      %v2560 = vunpack.c.l.b16 %v2488
      %v2561 = vunpack.c.l.b16 %v2498
      %v2562 = vunpack.c.l.b16 %v2512
      %v2563 = vunpack.c.l.b16 %v2522
      %v2564 = vpack.c.b16 %v2533, %v2532
      %v2565 = vpack.c.b16 %v2535, %v2534
      %v2566 = vpack.c.b16 %v2537, %v2536
      %v2567 = vpack.c.b16 %v2539, %v2538
      %v2568 = vpack.c.b16 %v2541, %v2540
      %v2569 = vpack.c.b16 %v2543, %v2542
      %v2570 = vpack.c.b16 %v2545, %v2544
      %v2571 = vpack.c.b16 %v2547, %v2546
      %v2572 = vpack.c.b16 %v2549, %v2548
      %v2573 = vpack.c.b16 %v2551, %v2550
      %v2574 = vpack.c.b16 %v2553, %v2552
      %v2575 = vpack.c.b16 %v2555, %v2554
      %v2576 = vpack.c.b16 %v2557, %v2556
      %v2577 = vpack.c.b16 %v2559, %v2558
      %v2578 = vpack.c.b16 %v2561, %v2560
      %v2579 = vpack.c.b16 %v2563, %v2562
      %v2588 = vunpack.c.l.b16 %v2524
      %v2589 = vunpack.c.l.b16 %v2525
      %v2590 = vunpack.c.l.b16 %v2526
      %v2591 = vunpack.c.l.b16 %v2527
      %v2592 = vunpack.c.l.b16 %v2528
      %v2593 = vunpack.c.l.b16 %v2529
      %v2594 = vunpack.c.l.b16 %v2530
      %v2595 = vunpack.c.l.b16 %v2531
      %v2596 = vpack.c.b16 %v2589, %v2588
      %v2597 = vpack.c.b16 %v2591, %v2590
      %v2598 = vpack.c.b16 %v2593, %v2592
      %v2599 = vpack.c.b16 %v2595, %v2594
      %v2605 = vsel %vm696, %v2564, 0
      %v2608 = vsel %vm696, %v2565, 0
      %v2611 = vsel %vm696, %v2566, 0
      %v2614 = vsel %vm696, %v2567, 0
      %v2617 = vsel %vm696, %v2568, 0
      %v2620 = vsel %vm696, %v2569, 0
      %v2623 = vsel %vm696, %v2570, 0
      %v2626 = vsel %vm696, %v2571, 0
      %v2629 = vsel %vm696, %v2572, 0
      %v2632 = vsel %vm696, %v2573, 0
      %v2635 = vsel %vm696, %v2574, 0
      %v2638 = vsel %vm696, %v2575, 0
      %v2641 = vsel %vm696, %v2576, 0
      %v2644 = vsel %vm696, %v2577, 0
      %v2647 = vsel %vm696, %v2578, 0
      %v2650 = vsel %vm696, %v2579, 0
      %2652 = vmatprep.subr.bf16.mxu0 0
      %2653 = vmatpush1.bf16.msra.mxu0 %v2596
      %2654 = vmatprep.subr.bf16.mxu0 0
      %2655 = vmatpush1.bf16.msra.mxu0 %v2597
      %2656 = vmatprep.subr.bf16.mxu0 0
      %2657 = vmatpush1.bf16.msra.mxu0 %v2598
      %2658 = vmatprep.subr.bf16.mxu0 0
      %2659 = vmatpush1.bf16.msra.mxu0 %v2599
      %2660 = vmatprep.subr.bf16.mxu0 0
      %2661 = vmatpush1.bf16.msra.mxu0 0
      %2662 = vmatprep.subr.bf16.mxu0 0
      %2663 = vmatpush1.bf16.msra.mxu0 0
      %2664 = vmatprep.subr.bf16.mxu0 0
      %2665 = vmatpush1.bf16.msra.mxu0 0
      %2666 = vmatprep.subr.bf16.mxu0 0
      %2667 = vmatpush1.bf16.msra.mxu0 0
      %2668 = vmatprep.subr.bf16.mxu0 0
      %2669 = vmatpush1.bf16.msra.mxu0 0
      %2670 = vmatprep.subr.bf16.mxu0 0
      %2671 = vmatpush1.bf16.msra.mxu0 0
      %2672 = vmatprep.subr.bf16.mxu0 0
      %2673 = vmatpush1.bf16.msra.mxu0 0
      %2674 = vmatprep.subr.bf16.mxu0 0
      %2675 = vmatpush1.bf16.msra.mxu0 0
      %2676 = vmatprep.subr.bf16.mxu0 0
      %2677 = vmatpush1.bf16.msra.mxu0 0
      %2678 = vmatprep.subr.bf16.mxu0 0
      %2679 = vmatpush1.bf16.msra.mxu0 0
      %2680 = vmatprep.subr.bf16.mxu0 0
      %2681 = vmatpush1.bf16.msra.mxu0 0
      %2682 = vmatprep.subr.bf16.mxu0 0
      %2683 = vmatpush1.bf16.msra.mxu0 0
      %2684 = vmatprep.mubr.bf16.mxu0 0
      %2685 = vmatmul.mubr.bf16.gmra.mrb[0].mxu0 %v2605
      %v2686 = vpop.f32.mrb[0].mxu0
      %v2687 = vadd.f32 0.0, %v2686
      %v2688 = vpop.f32.mrb[0].mxu0
      %v2689 = vpop.f32.mrb[0].mxu0
      %v2690 = vadd.f32 0.0, %v2689
      %v2691 = vpop.f32.mrb[0].mxu0
      %2692 = vmatprep.mubr.bf16.mxu0 0
      %2693 = vmatmul.mubr.bf16.gmra.mrb[0].mxu0 %v2608
      %v2694 = vpop.f32.mrb[0].mxu0
      %v2695 = vadd.f32 0.0, %v2694
      %v2696 = vpop.f32.mrb[0].mxu0
      %v2697 = vpop.f32.mrb[0].mxu0
      %v2698 = vadd.f32 0.0, %v2697
      %v2699 = vpop.f32.mrb[0].mxu0
      %2700 = vmatprep.mubr.bf16.mxu0 0
      %2701 = vmatmul.mubr.bf16.gmra.mrb[0].mxu0 %v2611
      %v2702 = vpop.f32.mrb[0].mxu0
      %v2703 = vadd.f32 0.0, %v2702
      %v2704 = vpop.f32.mrb[0].mxu0
      %v2705 = vpop.f32.mrb[0].mxu0
      %v2706 = vadd.f32 0.0, %v2705
      %v2707 = vpop.f32.mrb[0].mxu0
      %2708 = vmatprep.mubr.bf16.mxu0 0
      %2709 = vmatmul.mubr.bf16.gmra.mrb[0].mxu0 %v2614
      %v2710 = vpop.f32.mrb[0].mxu0
      %v2711 = vadd.f32 0.0, %v2710
      %v2712 = vpop.f32.mrb[0].mxu0
      %v2713 = vpop.f32.mrb[0].mxu0
      %v2714 = vadd.f32 0.0, %v2713
      %v2715 = vpop.f32.mrb[0].mxu0
      %2716 = vmatprep.mubr.bf16.mxu0 0
      %2717 = vmatmul.mubr.bf16.gmra.mrb[0].mxu0 %v2617
      %v2718 = vpop.f32.mrb[0].mxu0
      %v2719 = vadd.f32 0.0, %v2718
      %v2720 = vpop.f32.mrb[0].mxu0
      %v2721 = vpop.f32.mrb[0].mxu0
      %v2722 = vadd.f32 0.0, %v2721
      %v2723 = vpop.f32.mrb[0].mxu0
      %2724 = vmatprep.mubr.bf16.mxu0 0
      %2725 = vmatmul.mubr.bf16.gmra.mrb[0].mxu0 %v2620
      %v2726 = vpop.f32.mrb[0].mxu0
      %v2727 = vadd.f32 0.0, %v2726
      %v2728 = vpop.f32.mrb[0].mxu0
      %v2729 = vpop.f32.mrb[0].mxu0
      %v2730 = vadd.f32 0.0, %v2729
      %v2731 = vpop.f32.mrb[0].mxu0
      %2732 = vmatprep.mubr.bf16.mxu0 0
      %2733 = vmatmul.mubr.bf16.gmra.mrb[0].mxu0 %v2623
      %v2734 = vpop.f32.mrb[0].mxu0
      %v2735 = vadd.f32 0.0, %v2734
      %v2736 = vpop.f32.mrb[0].mxu0
      %v2737 = vpop.f32.mrb[0].mxu0
      %v2738 = vadd.f32 0.0, %v2737
      %v2739 = vpop.f32.mrb[0].mxu0
      %2740 = vmatprep.mubr.bf16.mxu0 0
      %2741 = vmatmul.mubr.bf16.gmra.mrb[0].mxu0 %v2626
      %v2742 = vpop.f32.mrb[0].mxu0
      %v2743 = vadd.f32 0.0, %v2742
      %v2744 = vpop.f32.mrb[0].mxu0
      %v2745 = vpop.f32.mrb[0].mxu0
      %v2746 = vadd.f32 0.0, %v2745
      %v2747 = vpop.f32.mrb[0].mxu0
      %2748 = vmatprep.mubr.bf16.mxu0 0
      %2749 = vmatmul.mubr.bf16.gmra.mrb[0].mxu0 %v2629
      %v2750 = vpop.f32.mrb[0].mxu0
      %v2751 = vadd.f32 0.0, %v2750
      %v2752 = vpop.f32.mrb[0].mxu0
      %v2753 = vpop.f32.mrb[0].mxu0
      %v2754 = vadd.f32 0.0, %v2753
      %v2755 = vpop.f32.mrb[0].mxu0
      %2756 = vmatprep.mubr.bf16.mxu0 0
      %2757 = vmatmul.mubr.bf16.gmra.mrb[0].mxu0 %v2632
      %v2758 = vpop.f32.mrb[0].mxu0
      %v2759 = vadd.f32 0.0, %v2758
      %v2760 = vpop.f32.mrb[0].mxu0
      %v2761 = vpop.f32.mrb[0].mxu0
      %v2762 = vadd.f32 0.0, %v2761
      %v2763 = vpop.f32.mrb[0].mxu0
      %2764 = vmatprep.mubr.bf16.mxu0 0
      %2765 = vmatmul.mubr.bf16.gmra.mrb[0].mxu0 %v2635
      %v2766 = vpop.f32.mrb[0].mxu0
      %v2767 = vadd.f32 0.0, %v2766
      %v2768 = vpop.f32.mrb[0].mxu0
      %v2769 = vpop.f32.mrb[0].mxu0
      %v2770 = vadd.f32 0.0, %v2769
      %v2771 = vpop.f32.mrb[0].mxu0
      %2772 = vmatprep.mubr.bf16.mxu0 0
      %2773 = vmatmul.mubr.bf16.gmra.mrb[0].mxu0 %v2638
      %v2774 = vpop.f32.mrb[0].mxu0
      %v2775 = vadd.f32 0.0, %v2774
      %v2776 = vpop.f32.mrb[0].mxu0
      %v2777 = vpop.f32.mrb[0].mxu0
      %v2778 = vadd.f32 0.0, %v2777
      %v2779 = vpop.f32.mrb[0].mxu0
      %2780 = vmatprep.mubr.bf16.mxu0 0
      %2781 = vmatmul.mubr.bf16.gmra.mrb[0].mxu0 %v2641
      %v2782 = vpop.f32.mrb[0].mxu0
      %v2783 = vadd.f32 0.0, %v2782
      %v2784 = vpop.f32.mrb[0].mxu0
      %v2785 = vpop.f32.mrb[0].mxu0
      %v2786 = vadd.f32 0.0, %v2785
      %v2787 = vpop.f32.mrb[0].mxu0
      %2788 = vmatprep.mubr.bf16.mxu0 0
      %2789 = vmatmul.mubr.bf16.gmra.mrb[0].mxu0 %v2644
      %v2790 = vpop.f32.mrb[0].mxu0
      %v2791 = vadd.f32 0.0, %v2790
      %v2792 = vpop.f32.mrb[0].mxu0
      %v2793 = vpop.f32.mrb[0].mxu0
      %v2794 = vadd.f32 0.0, %v2793
      %v2795 = vpop.f32.mrb[0].mxu0
      %2796 = vmatprep.mubr.bf16.mxu0 0
      %2797 = vmatmul.mubr.bf16.gmra.mrb[0].mxu0 %v2647
      %v2798 = vpop.f32.mrb[0].mxu0
      %v2799 = vadd.f32 0.0, %v2798
      %v2800 = vpop.f32.mrb[0].mxu0
      %v2801 = vpop.f32.mrb[0].mxu0
      %v2802 = vadd.f32 0.0, %v2801
      %v2803 = vpop.f32.mrb[0].mxu0
      %2804 = vmatprep.mubr.bf16.mxu0 0
      %2805 = vmatmul.mubr.bf16.gmra.mrb[0].mxu0 %v2650
      %v2806 = vpop.f32.mrb[0].mxu0
      %v2807 = vadd.f32 0.0, %v2806
      %v2808 = vpop.f32.mrb[0].mxu0
      %v2809 = vpop.f32.mrb[0].mxu0
      %v2810 = vadd.f32 0.0, %v2809
      %v2811 = vpop.f32.mrb[0].mxu0
      %2812 = vdwg.mxu0
      %v2813 = vadd.f32 %v2059, %v2687
      %v2814 = vadd.f32 %v2060, %v2690
      %v2815 = vadd.f32 %v2061, %v2695
      %v2816 = vadd.f32 %v2062, %v2698
      %v2817 = vadd.f32 %v2063, %v2703
      %v2818 = vadd.f32 %v2064, %v2706
      %v2819 = vadd.f32 %v2065, %v2711
      %v2820 = vadd.f32 %v2066, %v2714
      %v2821 = vadd.f32 %v2067, %v2719
      %v2822 = vadd.f32 %v2068, %v2722
      %v2823 = vadd.f32 %v2069, %v2727
      %v2824 = vadd.f32 %v2070, %v2730
      %v2825 = vadd.f32 %v2071, %v2735
      %v2826 = vadd.f32 %v2072, %v2738
      %v2827 = vadd.f32 %v2073, %v2743
      %v2828 = vadd.f32 %v2074, %v2746
      %v2829 = vadd.f32 %v2075, %v2751
      %v2830 = vadd.f32 %v2076, %v2754
      %v2831 = vadd.f32 %v2077, %v2759
      %v2832 = vadd.f32 %v2078, %v2762
      %v2833 = vadd.f32 %v2079, %v2767
      %v2834 = vadd.f32 %v2080, %v2770
      %v2835 = vadd.f32 %v2081, %v2775
      %v2836 = vadd.f32 %v2082, %v2778
      %v2837 = vadd.f32 %v2083, %v2783
      %v2838 = vadd.f32 %v2084, %v2786
      %v2839 = vadd.f32 %v2085, %v2791
      %v2840 = vadd.f32 %v2086, %v2794
      %v2841 = vadd.f32 %v2087, %v2799
      %v2842 = vadd.f32 %v2088, %v2802
      %v2843 = vadd.f32 %v2089, %v2807
      %v2844 = vadd.f32 %v2090, %v2810
      %v2845 = vld [vmem:[%s1704] sm:$0xe]
      %v2846 = vld [vmem:[%s1704 + $0xc] sm:$0xe]
      %v2847 = vld [vmem:[%s1704 + $0x18] sm:$0xe]
      %v2848 = vld [vmem:[%s1704 + $0x24] sm:$0xe]
      %v2849 = vld [vmem:[%s1704 + $0x30] sm:$0xe]
      %v2850 = vld [vmem:[%s1704 + $0x3c] sm:$0xe]
      %v2851 = vld [vmem:[%s1704 + $0x48] sm:$0xe]
      %v2852 = vld [vmem:[%s1704 + $0x54] sm:$0xe]
      %v2853 = vld [vmem:[%s1704 + $0x60] sm:$0xe]
      %v2854 = vld [vmem:[%s1704 + $0x6c] sm:$0xe]
      %v2855 = vld [vmem:[%s1704 + $0x78] sm:$0xe]
      %v2856 = vld [vmem:[%s1704 + $0x84] sm:$0xe]
      %v2857 = vld [vmem:[%s1704 + $0x90] sm:$0xe]
      %v2858 = vld [vmem:[%s1704 + $0x9c] sm:$0xe]
      %v2859 = vld [vmem:[%s1704 + $0xa8] sm:$0xe]
      %v2860 = vld [vmem:[%s1704 + $0xb4] sm:$0xe]
      %v2909 = vrot.slane %v2845, 5
      %v2910 = vrot.slane %v2909, 4
      %v2911 = vrot.slane %v2092, 5
      %v2912 = vsel %vm1269, %v2910, %v2911
      %v2913 = vrot.slane %v2911, 4
      %v2914 = vrot.slane %v2093, 5
      %v2915 = vsel %vm1269, %v2913, %v2914
      %v2916 = vrot.slane %v2846, 5
      %v2917 = vrot.slane %v2916, 4
      %v2918 = vrot.slane %v2095, 5
      %v2919 = vsel %vm1269, %v2917, %v2918
      %v2920 = vrot.slane %v2918, 4
      %v2921 = vrot.slane %v2096, 5
      %v2922 = vsel %vm1269, %v2920, %v2921
      %v2923 = vrot.slane %v2847, 5
      %v2924 = vrot.slane %v2923, 4
      %v2925 = vrot.slane %v2098, 5
      %v2926 = vsel %vm1269, %v2924, %v2925
      %v2927 = vrot.slane %v2925, 4
      %v2928 = vrot.slane %v2099, 5
      %v2929 = vsel %vm1269, %v2927, %v2928
      %v2930 = vrot.slane %v2848, 5
      %v2931 = vrot.slane %v2930, 4
      %v2932 = vrot.slane %v2101, 5
      %v2933 = vsel %vm1269, %v2931, %v2932
      %v2934 = vrot.slane %v2932, 4
      %v2935 = vrot.slane %v2102, 5
      %v2936 = vsel %vm1269, %v2934, %v2935
      %v2937 = vrot.slane %v2849, 5
      %v2938 = vrot.slane %v2937, 4
      %v2939 = vrot.slane %v2104, 5
      %v2940 = vsel %vm1269, %v2938, %v2939
      %v2941 = vrot.slane %v2939, 4
      %v2942 = vrot.slane %v2105, 5
      %v2943 = vsel %vm1269, %v2941, %v2942
      %v2944 = vrot.slane %v2850, 5
      %v2945 = vrot.slane %v2944, 4
      %v2946 = vrot.slane %v2107, 5
      %v2947 = vsel %vm1269, %v2945, %v2946
      %v2948 = vrot.slane %v2946, 4
      %v2949 = vrot.slane %v2108, 5
      %v2950 = vsel %vm1269, %v2948, %v2949
      %v2951 = vrot.slane %v2851, 5
      %v2952 = vrot.slane %v2951, 4
      %v2953 = vrot.slane %v2110, 5
      %v2954 = vsel %vm1269, %v2952, %v2953
      %v2955 = vrot.slane %v2953, 4
      %v2956 = vrot.slane %v2111, 5
      %v2957 = vsel %vm1269, %v2955, %v2956
      %v2958 = vrot.slane %v2852, 5
      %v2959 = vrot.slane %v2958, 4
      %v2960 = vrot.slane %v2113, 5
      %v2961 = vsel %vm1269, %v2959, %v2960
      %v2962 = vrot.slane %v2960, 4
      %v2963 = vrot.slane %v2114, 5
      %v2964 = vsel %vm1269, %v2962, %v2963
      %v2965 = vrot.slane %v2853, 5
      %v2966 = vrot.slane %v2965, 4
      %v2967 = vrot.slane %v2116, 5
      %v2968 = vsel %vm1269, %v2966, %v2967
      %v2969 = vrot.slane %v2967, 4
      %v2970 = vrot.slane %v2117, 5
      %v2971 = vsel %vm1269, %v2969, %v2970
      %v2972 = vrot.slane %v2854, 5
      %v2973 = vrot.slane %v2972, 4
      %v2974 = vrot.slane %v2119, 5
      %v2975 = vsel %vm1269, %v2973, %v2974
      %v2976 = vrot.slane %v2974, 4
      %v2977 = vrot.slane %v2120, 5
      %v2978 = vsel %vm1269, %v2976, %v2977
      %v2979 = vrot.slane %v2855, 5
      %v2980 = vrot.slane %v2979, 4
      %v2981 = vrot.slane %v2122, 5
      %v2982 = vsel %vm1269, %v2980, %v2981
      %v2983 = vrot.slane %v2981, 4
      %v2984 = vrot.slane %v2123, 5
      %v2985 = vsel %vm1269, %v2983, %v2984
      %v2986 = vrot.slane %v2856, 5
      %v2987 = vrot.slane %v2986, 4
      %v2988 = vrot.slane %v2125, 5
      %v2989 = vsel %vm1269, %v2987, %v2988
      %v2990 = vrot.slane %v2988, 4
      %v2991 = vrot.slane %v2126, 5
      %v2992 = vsel %vm1269, %v2990, %v2991
      %v2993 = vrot.slane %v2857, 5
      %v2994 = vrot.slane %v2993, 4
      %v2995 = vrot.slane %v2128, 5
      %v2996 = vsel %vm1269, %v2994, %v2995
      %v2997 = vrot.slane %v2995, 4
      %v2998 = vrot.slane %v2129, 5
      %v2999 = vsel %vm1269, %v2997, %v2998
      %v3000 = vrot.slane %v2858, 5
      %v3001 = vrot.slane %v3000, 4
      %v3002 = vrot.slane %v2131, 5
      %v3003 = vsel %vm1269, %v3001, %v3002
      %v3004 = vrot.slane %v3002, 4
      %v3005 = vrot.slane %v2132, 5
      %v3006 = vsel %vm1269, %v3004, %v3005
      %v3007 = vrot.slane %v2859, 5
      %v3008 = vrot.slane %v3007, 4
      %v3009 = vrot.slane %v2134, 5
      %v3010 = vsel %vm1269, %v3008, %v3009
      %v3011 = vrot.slane %v3009, 4
      %v3012 = vrot.slane %v2135, 5
      %v3013 = vsel %vm1269, %v3011, %v3012
      %v3014 = vrot.slane %v2860, 5
      %v3015 = vrot.slane %v3014, 4
      %v3016 = vrot.slane %v2137, 5
      %v3017 = vsel %vm1269, %v3015, %v3016
      %v3018 = vrot.slane %v3016, 4
      %v3019 = vrot.slane %v2138, 5
      %v3020 = vsel %vm1269, %v3018, %v3019
      %s3021 = scalar_lea.vmem %s1, 160
      %v3022 = vld [vmem:[%s3021] sm:$0xf]
      %v3023 = vld [vmem:[%s3021 + $0x4] sm:$0xf]
      %v3024 = vld [vmem:[%s3021 + $0x8] sm:$0xf]
      %v3025 = vld [vmem:[%s3021 + $0xc] sm:$0xf]
      %v3026 = vld [vmem:[%s3021 + $0x10] sm:$0xf]
      %v3027 = vld [vmem:[%s3021 + $0x14] sm:$0xf]
      %v3028 = vld [vmem:[%s3021 + $0x18] sm:$0xf]
      %v3029 = vld [vmem:[%s3021 + $0x1c] sm:$0xf]
      %v3030 = vunpack.c.l.b16 %v2912
      %v3031 = vunpack.c.l.b16 %v2915
      %v3032 = vunpack.c.l.b16 %v2919
      %v3033 = vunpack.c.l.b16 %v2922
      %v3034 = vunpack.c.l.b16 %v2926
      %v3035 = vunpack.c.l.b16 %v2929
      %v3036 = vunpack.c.l.b16 %v2933
      %v3037 = vunpack.c.l.b16 %v2936
      %v3038 = vunpack.c.l.b16 %v2940
      %v3039 = vunpack.c.l.b16 %v2943
      %v3040 = vunpack.c.l.b16 %v2947
      %v3041 = vunpack.c.l.b16 %v2950
      %v3042 = vunpack.c.l.b16 %v2954
      %v3043 = vunpack.c.l.b16 %v2957
      %v3044 = vunpack.c.l.b16 %v2961
      %v3045 = vunpack.c.l.b16 %v2964
      %v3046 = vunpack.c.l.b16 %v2968
      %v3047 = vunpack.c.l.b16 %v2971
      %v3048 = vunpack.c.l.b16 %v2975
      %v3049 = vunpack.c.l.b16 %v2978
      %v3050 = vunpack.c.l.b16 %v2982
      %v3051 = vunpack.c.l.b16 %v2985
      %v3052 = vunpack.c.l.b16 %v2989
      %v3053 = vunpack.c.l.b16 %v2992
      %v3054 = vunpack.c.l.b16 %v2996
      %v3055 = vunpack.c.l.b16 %v2999
      %v3056 = vunpack.c.l.b16 %v3003
      %v3057 = vunpack.c.l.b16 %v3006
      %v3058 = vunpack.c.l.b16 %v3010
      %v3059 = vunpack.c.l.b16 %v3013
      %v3060 = vunpack.c.l.b16 %v3017
      %v3061 = vunpack.c.l.b16 %v3020
      %v3062 = vpack.c.b16 %v3031, %v3030
      %v3063 = vpack.c.b16 %v3033, %v3032
      %v3064 = vpack.c.b16 %v3035, %v3034
      %v3065 = vpack.c.b16 %v3037, %v3036
      %v3066 = vpack.c.b16 %v3039, %v3038
      %v3067 = vpack.c.b16 %v3041, %v3040
      %v3068 = vpack.c.b16 %v3043, %v3042
      %v3069 = vpack.c.b16 %v3045, %v3044
      %v3070 = vpack.c.b16 %v3047, %v3046
      %v3071 = vpack.c.b16 %v3049, %v3048
      %v3072 = vpack.c.b16 %v3051, %v3050
      %v3073 = vpack.c.b16 %v3053, %v3052
      %v3074 = vpack.c.b16 %v3055, %v3054
      %v3075 = vpack.c.b16 %v3057, %v3056
      %v3076 = vpack.c.b16 %v3059, %v3058
      %v3077 = vpack.c.b16 %v3061, %v3060
      %v3086 = vunpack.c.l.b16 %v3022
      %v3087 = vunpack.c.l.b16 %v3023
      %v3088 = vunpack.c.l.b16 %v3024
      %v3089 = vunpack.c.l.b16 %v3025
      %v3090 = vunpack.c.l.b16 %v3026
      %v3091 = vunpack.c.l.b16 %v3027
      %v3092 = vunpack.c.l.b16 %v3028
      %v3093 = vunpack.c.l.b16 %v3029
      %v3094 = vpack.c.b16 %v3087, %v3086
      %v3095 = vpack.c.b16 %v3089, %v3088
      %v3096 = vpack.c.b16 %v3091, %v3090
      %v3097 = vpack.c.b16 %v3093, %v3092
      %v3103 = vsel %vm696, %v3062, 0
      %v3106 = vsel %vm696, %v3063, 0
      %v3109 = vsel %vm696, %v3064, 0
      %v3112 = vsel %vm696, %v3065, 0
      %v3115 = vsel %vm696, %v3066, 0
      %v3118 = vsel %vm696, %v3067, 0
      %v3121 = vsel %vm696, %v3068, 0
      %v3124 = vsel %vm696, %v3069, 0
      %v3127 = vsel %vm696, %v3070, 0
      %v3130 = vsel %vm696, %v3071, 0
      %v3133 = vsel %vm696, %v3072, 0
      %v3136 = vsel %vm696, %v3073, 0
      %v3139 = vsel %vm696, %v3074, 0
      %v3142 = vsel %vm696, %v3075, 0
      %v3145 = vsel %vm696, %v3076, 0
      %v3148 = vsel %vm696, %v3077, 0
      %3150 = vmatprep.subr.bf16.mxu0 0
      %3151 = vmatpush1.bf16.msra.mxu0 %v3094
      %3152 = vmatprep.subr.bf16.mxu0 0
      %3153 = vmatpush1.bf16.msra.mxu0 %v3095
      %3154 = vmatprep.subr.bf16.mxu0 0
      %3155 = vmatpush1.bf16.msra.mxu0 %v3096
      %3156 = vmatprep.subr.bf16.mxu0 0
      %3157 = vmatpush1.bf16.msra.mxu0 %v3097
      %3158 = vmatprep.subr.bf16.mxu0 0
      %3159 = vmatpush1.bf16.msra.mxu0 0
      %3160 = vmatprep.subr.bf16.mxu0 0
      %3161 = vmatpush1.bf16.msra.mxu0 0
      %3162 = vmatprep.subr.bf16.mxu0 0
      %3163 = vmatpush1.bf16.msra.mxu0 0
      %3164 = vmatprep.subr.bf16.mxu0 0
      %3165 = vmatpush1.bf16.msra.mxu0 0
      %3166 = vmatprep.subr.bf16.mxu0 0
      %3167 = vmatpush1.bf16.msra.mxu0 0
      %3168 = vmatprep.subr.bf16.mxu0 0
      %3169 = vmatpush1.bf16.msra.mxu0 0
      %3170 = vmatprep.subr.bf16.mxu0 0
      %3171 = vmatpush1.bf16.msra.mxu0 0
      %3172 = vmatprep.subr.bf16.mxu0 0
      %3173 = vmatpush1.bf16.msra.mxu0 0
      %3174 = vmatprep.subr.bf16.mxu0 0
      %3175 = vmatpush1.bf16.msra.mxu0 0
      %3176 = vmatprep.subr.bf16.mxu0 0
      %3177 = vmatpush1.bf16.msra.mxu0 0
      %3178 = vmatprep.subr.bf16.mxu0 0
      %3179 = vmatpush1.bf16.msra.mxu0 0
      %3180 = vmatprep.subr.bf16.mxu0 0
      %3181 = vmatpush1.bf16.msra.mxu0 0
      %3182 = vmatprep.mubr.bf16.mxu0 0
      %3183 = vmatmul.mubr.bf16.gmra.mrb[0].mxu0 %v3103
      %v3184 = vpop.f32.mrb[0].mxu0
      %v3185 = vadd.f32 0.0, %v3184
      %v3186 = vpop.f32.mrb[0].mxu0
      %v3187 = vpop.f32.mrb[0].mxu0
      %v3188 = vadd.f32 0.0, %v3187
      %v3189 = vpop.f32.mrb[0].mxu0
      %3190 = vmatprep.mubr.bf16.mxu0 0
      %3191 = vmatmul.mubr.bf16.gmra.mrb[0].mxu0 %v3106
      %v3192 = vpop.f32.mrb[0].mxu0
      %v3193 = vadd.f32 0.0, %v3192
      %v3194 = vpop.f32.mrb[0].mxu0
      %v3195 = vpop.f32.mrb[0].mxu0
      %v3196 = vadd.f32 0.0, %v3195
      %v3197 = vpop.f32.mrb[0].mxu0
      %3198 = vmatprep.mubr.bf16.mxu0 0
      %3199 = vmatmul.mubr.bf16.gmra.mrb[0].mxu0 %v3109
      %v3200 = vpop.f32.mrb[0].mxu0
      %v3201 = vadd.f32 0.0, %v3200
      %v3202 = vpop.f32.mrb[0].mxu0
      %v3203 = vpop.f32.mrb[0].mxu0
      %v3204 = vadd.f32 0.0, %v3203
      %v3205 = vpop.f32.mrb[0].mxu0
      %3206 = vmatprep.mubr.bf16.mxu0 0
      %3207 = vmatmul.mubr.bf16.gmra.mrb[0].mxu0 %v3112
      %v3208 = vpop.f32.mrb[0].mxu0
      %v3209 = vadd.f32 0.0, %v3208
      %v3210 = vpop.f32.mrb[0].mxu0
      %v3211 = vpop.f32.mrb[0].mxu0
      %v3212 = vadd.f32 0.0, %v3211
      %v3213 = vpop.f32.mrb[0].mxu0
      %3214 = vmatprep.mubr.bf16.mxu0 0
      %3215 = vmatmul.mubr.bf16.gmra.mrb[0].mxu0 %v3115
      %v3216 = vpop.f32.mrb[0].mxu0
      %v3217 = vadd.f32 0.0, %v3216
      %v3218 = vpop.f32.mrb[0].mxu0
      %v3219 = vpop.f32.mrb[0].mxu0
      %v3220 = vadd.f32 0.0, %v3219
      %v3221 = vpop.f32.mrb[0].mxu0
      %3222 = vmatprep.mubr.bf16.mxu0 0
      %3223 = vmatmul.mubr.bf16.gmra.mrb[0].mxu0 %v3118
      %v3224 = vpop.f32.mrb[0].mxu0
      %v3225 = vadd.f32 0.0, %v3224
      %v3226 = vpop.f32.mrb[0].mxu0
      %v3227 = vpop.f32.mrb[0].mxu0
      %v3228 = vadd.f32 0.0, %v3227
      %v3229 = vpop.f32.mrb[0].mxu0
      %3230 = vmatprep.mubr.bf16.mxu0 0
      %3231 = vmatmul.mubr.bf16.gmra.mrb[0].mxu0 %v3121
      %v3232 = vpop.f32.mrb[0].mxu0
      %v3233 = vadd.f32 0.0, %v3232
      %v3234 = vpop.f32.mrb[0].mxu0
      %v3235 = vpop.f32.mrb[0].mxu0
      %v3236 = vadd.f32 0.0, %v3235
      %v3237 = vpop.f32.mrb[0].mxu0
      %3238 = vmatprep.mubr.bf16.mxu0 0
      %3239 = vmatmul.mubr.bf16.gmra.mrb[0].mxu0 %v3124
      %v3240 = vpop.f32.mrb[0].mxu0
      %v3241 = vadd.f32 0.0, %v3240
      %v3242 = vpop.f32.mrb[0].mxu0
      %v3243 = vpop.f32.mrb[0].mxu0
      %v3244 = vadd.f32 0.0, %v3243
      %v3245 = vpop.f32.mrb[0].mxu0
      %3246 = vmatprep.mubr.bf16.mxu0 0
      %3247 = vmatmul.mubr.bf16.gmra.mrb[0].mxu0 %v3127
      %v3248 = vpop.f32.mrb[0].mxu0
      %v3249 = vadd.f32 0.0, %v3248
      %v3250 = vpop.f32.mrb[0].mxu0
      %v3251 = vpop.f32.mrb[0].mxu0
      %v3252 = vadd.f32 0.0, %v3251
      %v3253 = vpop.f32.mrb[0].mxu0
      %3254 = vmatprep.mubr.bf16.mxu0 0
      %3255 = vmatmul.mubr.bf16.gmra.mrb[0].mxu0 %v3130
      %v3256 = vpop.f32.mrb[0].mxu0
      %v3257 = vadd.f32 0.0, %v3256
      %v3258 = vpop.f32.mrb[0].mxu0
      %v3259 = vpop.f32.mrb[0].mxu0
      %v3260 = vadd.f32 0.0, %v3259
      %v3261 = vpop.f32.mrb[0].mxu0
      %3262 = vmatprep.mubr.bf16.mxu0 0
      %3263 = vmatmul.mubr.bf16.gmra.mrb[0].mxu0 %v3133
      %v3264 = vpop.f32.mrb[0].mxu0
      %v3265 = vadd.f32 0.0, %v3264
      %v3266 = vpop.f32.mrb[0].mxu0
      %v3267 = vpop.f32.mrb[0].mxu0
      %v3268 = vadd.f32 0.0, %v3267
      %v3269 = vpop.f32.mrb[0].mxu0
      %3270 = vmatprep.mubr.bf16.mxu0 0
      %3271 = vmatmul.mubr.bf16.gmra.mrb[0].mxu0 %v3136
      %v3272 = vpop.f32.mrb[0].mxu0
      %v3273 = vadd.f32 0.0, %v3272
      %v3274 = vpop.f32.mrb[0].mxu0
      %v3275 = vpop.f32.mrb[0].mxu0
      %v3276 = vadd.f32 0.0, %v3275
      %v3277 = vpop.f32.mrb[0].mxu0
      %3278 = vmatprep.mubr.bf16.mxu0 0
      %3279 = vmatmul.mubr.bf16.gmra.mrb[0].mxu0 %v3139
      %v3280 = vpop.f32.mrb[0].mxu0
      %v3281 = vadd.f32 0.0, %v3280
      %v3282 = vpop.f32.mrb[0].mxu0
      %v3283 = vpop.f32.mrb[0].mxu0
      %v3284 = vadd.f32 0.0, %v3283
      %v3285 = vpop.f32.mrb[0].mxu0
      %3286 = vmatprep.mubr.bf16.mxu0 0
      %3287 = vmatmul.mubr.bf16.gmra.mrb[0].mxu0 %v3142
      %v3288 = vpop.f32.mrb[0].mxu0
      %v3289 = vadd.f32 0.0, %v3288
      %v3290 = vpop.f32.mrb[0].mxu0
      %v3291 = vpop.f32.mrb[0].mxu0
      %v3292 = vadd.f32 0.0, %v3291
      %v3293 = vpop.f32.mrb[0].mxu0
      %3294 = vmatprep.mubr.bf16.mxu0 0
      %3295 = vmatmul.mubr.bf16.gmra.mrb[0].mxu0 %v3145
      %v3296 = vpop.f32.mrb[0].mxu0
      %v3297 = vadd.f32 0.0, %v3296
      %v3298 = vpop.f32.mrb[0].mxu0
      %v3299 = vpop.f32.mrb[0].mxu0
      %v3300 = vadd.f32 0.0, %v3299
      %v3301 = vpop.f32.mrb[0].mxu0
      %3302 = vmatprep.mubr.bf16.mxu0 0
      %3303 = vmatmul.mubr.bf16.gmra.mrb[0].mxu0 %v3148
      %v3304 = vpop.f32.mrb[0].mxu0
      %v3305 = vadd.f32 0.0, %v3304
      %v3306 = vpop.f32.mrb[0].mxu0
      %v3307 = vpop.f32.mrb[0].mxu0
      %v3308 = vadd.f32 0.0, %v3307
      %v3309 = vpop.f32.mrb[0].mxu0
      %3310 = vdwg.mxu0
      %v3311 = vadd.f32 %v2813, %v3185
      %v3312 = vadd.f32 %v2814, %v3188
      %v3313 = vadd.f32 %v2815, %v3193
      %v3314 = vadd.f32 %v2816, %v3196
      %v3315 = vadd.f32 %v2817, %v3201
      %v3316 = vadd.f32 %v2818, %v3204
      %v3317 = vadd.f32 %v2819, %v3209
      %v3318 = vadd.f32 %v2820, %v3212
      %v3319 = vadd.f32 %v2821, %v3217
      %v3320 = vadd.f32 %v2822, %v3220
      %v3321 = vadd.f32 %v2823, %v3225
      %v3322 = vadd.f32 %v2824, %v3228
      %v3323 = vadd.f32 %v2825, %v3233
      %v3324 = vadd.f32 %v2826, %v3236
      %v3325 = vadd.f32 %v2827, %v3241
      %v3326 = vadd.f32 %v2828, %v3244
      %v3327 = vadd.f32 %v2829, %v3249
      %v3328 = vadd.f32 %v2830, %v3252
      %v3329 = vadd.f32 %v2831, %v3257
      %v3330 = vadd.f32 %v2832, %v3260
      %v3331 = vadd.f32 %v2833, %v3265
      %v3332 = vadd.f32 %v2834, %v3268
      %v3333 = vadd.f32 %v2835, %v3273
      %v3334 = vadd.f32 %v2836, %v3276
      %v3335 = vadd.f32 %v2837, %v3281
      %v3336 = vadd.f32 %v2838, %v3284
      %v3337 = vadd.f32 %v2839, %v3289
      %v3338 = vadd.f32 %v2840, %v3292
      %v3339 = vadd.f32 %v2841, %v3297
      %v3340 = vadd.f32 %v2842, %v3300
      %v3341 = vadd.f32 %v2843, %v3305
      %v3342 = vadd.f32 %v2844, %v3308
      %s3343 = scalar_lea.vmem %s165, 24
      %v3344 = vld [vmem:[%s3343] sm:$0xf]
      %v3345 = vld [vmem:[%s3343 + $0x4] sm:$0xf]
      %v3346 = vld [vmem:[%s3343 + $0xc] sm:$0xf]
      %v3347 = vld [vmem:[%s3343 + $0x10] sm:$0xf]
      %v3348 = vld [vmem:[%s3343 + $0x18] sm:$0xf]
      %v3349 = vld [vmem:[%s3343 + $0x1c] sm:$0xf]
      %v3350 = vld [vmem:[%s3343 + $0x24] sm:$0xf]
      %v3351 = vld [vmem:[%s3343 + $0x28] sm:$0xf]
      %v3352 = vld [vmem:[%s3343 + $0x30] sm:$0xf]
      %v3353 = vld [vmem:[%s3343 + $0x34] sm:$0xf]
      %v3354 = vld [vmem:[%s3343 + $0x3c] sm:$0xf]
      %v3355 = vld [vmem:[%s3343 + $0x40] sm:$0xf]
      %v3356 = vld [vmem:[%s3343 + $0x48] sm:$0xf]
      %v3357 = vld [vmem:[%s3343 + $0x4c] sm:$0xf]
      %v3358 = vld [vmem:[%s3343 + $0x54] sm:$0xf]
      %v3359 = vld [vmem:[%s3343 + $0x58] sm:$0xf]
      %v3360 = vld [vmem:[%s3343 + $0x60] sm:$0xf]
      %v3361 = vld [vmem:[%s3343 + $0x64] sm:$0xf]
      %v3362 = vld [vmem:[%s3343 + $0x6c] sm:$0xf]
      %v3363 = vld [vmem:[%s3343 + $0x70] sm:$0xf]
      %v3364 = vld [vmem:[%s3343 + $0x78] sm:$0xf]
      %v3365 = vld [vmem:[%s3343 + $0x7c] sm:$0xf]
      %v3366 = vld [vmem:[%s3343 + $0x84] sm:$0xf]
      %v3367 = vld [vmem:[%s3343 + $0x88] sm:$0xf]
      %v3368 = vld [vmem:[%s3343 + $0x90] sm:$0xf]
      %v3369 = vld [vmem:[%s3343 + $0x94] sm:$0xf]
      %v3370 = vld [vmem:[%s3343 + $0x9c] sm:$0xf]
      %v3371 = vld [vmem:[%s3343 + $0xa0] sm:$0xf]
      %v3372 = vld [vmem:[%s3343 + $0xa8] sm:$0xf]
      %v3373 = vld [vmem:[%s3343 + $0xac] sm:$0xf]
      %v3374 = vld [vmem:[%s3343 + $0xb4] sm:$0xf]
      %v3375 = vld [vmem:[%s3343 + $0xb8] sm:$0xf]
      %s3376 = scalar_lea.vmem %s1, 192
      %v3377 = vld [vmem:[%s3376] sm:$0xf]
      %v3378 = vld [vmem:[%s3376 + $0x4] sm:$0xf]
      %v3379 = vld [vmem:[%s3376 + $0x8] sm:$0xf]
      %v3380 = vld [vmem:[%s3376 + $0xc] sm:$0xf]
      %v3381 = vld [vmem:[%s3376 + $0x10] sm:$0xf]
      %v3382 = vld [vmem:[%s3376 + $0x14] sm:$0xf]
      %v3383 = vld [vmem:[%s3376 + $0x18] sm:$0xf]
      %v3384 = vld [vmem:[%s3376 + $0x1c] sm:$0xf]
      %v3417 = vunpack.c.l.b16 %v3344
      %v3418 = vunpack.c.l.b16 %v3345
      %v3419 = vunpack.c.l.b16 %v3346
      %v3420 = vunpack.c.l.b16 %v3347
      %v3421 = vunpack.c.l.b16 %v3348
      %v3422 = vunpack.c.l.b16 %v3349
      %v3423 = vunpack.c.l.b16 %v3350
      %v3424 = vunpack.c.l.b16 %v3351
      %v3425 = vunpack.c.l.b16 %v3352
      %v3426 = vunpack.c.l.b16 %v3353
      %v3427 = vunpack.c.l.b16 %v3354
      %v3428 = vunpack.c.l.b16 %v3355
      %v3429 = vunpack.c.l.b16 %v3356
      %v3430 = vunpack.c.l.b16 %v3357
      %v3431 = vunpack.c.l.b16 %v3358
      %v3432 = vunpack.c.l.b16 %v3359
      %v3433 = vunpack.c.l.b16 %v3360
      %v3434 = vunpack.c.l.b16 %v3361
      %v3435 = vunpack.c.l.b16 %v3362
      %v3436 = vunpack.c.l.b16 %v3363
      %v3437 = vunpack.c.l.b16 %v3364
      %v3438 = vunpack.c.l.b16 %v3365
      %v3439 = vunpack.c.l.b16 %v3366
      %v3440 = vunpack.c.l.b16 %v3367
      %v3441 = vunpack.c.l.b16 %v3368
      %v3442 = vunpack.c.l.b16 %v3369
      %v3443 = vunpack.c.l.b16 %v3370
      %v3444 = vunpack.c.l.b16 %v3371
      %v3445 = vunpack.c.l.b16 %v3372
      %v3446 = vunpack.c.l.b16 %v3373
      %v3447 = vunpack.c.l.b16 %v3374
      %v3448 = vunpack.c.l.b16 %v3375
      %v3449 = vpack.c.b16 %v3418, %v3417
      %v3450 = vpack.c.b16 %v3420, %v3419
      %v3451 = vpack.c.b16 %v3422, %v3421
      %v3452 = vpack.c.b16 %v3424, %v3423
      %v3453 = vpack.c.b16 %v3426, %v3425
      %v3454 = vpack.c.b16 %v3428, %v3427
      %v3455 = vpack.c.b16 %v3430, %v3429
      %v3456 = vpack.c.b16 %v3432, %v3431
      %v3457 = vpack.c.b16 %v3434, %v3433
      %v3458 = vpack.c.b16 %v3436, %v3435
      %v3459 = vpack.c.b16 %v3438, %v3437
      %v3460 = vpack.c.b16 %v3440, %v3439
      %v3461 = vpack.c.b16 %v3442, %v3441
      %v3462 = vpack.c.b16 %v3444, %v3443
      %v3463 = vpack.c.b16 %v3446, %v3445
      %v3464 = vpack.c.b16 %v3448, %v3447
      %v3473 = vunpack.c.l.b16 %v3377
      %v3474 = vunpack.c.l.b16 %v3378
      %v3475 = vunpack.c.l.b16 %v3379
      %v3476 = vunpack.c.l.b16 %v3380
      %v3477 = vunpack.c.l.b16 %v3381
      %v3478 = vunpack.c.l.b16 %v3382
      %v3479 = vunpack.c.l.b16 %v3383
      %v3480 = vunpack.c.l.b16 %v3384
      %v3481 = vpack.c.b16 %v3474, %v3473
      %v3482 = vpack.c.b16 %v3476, %v3475
      %v3483 = vpack.c.b16 %v3478, %v3477
      %v3484 = vpack.c.b16 %v3480, %v3479
      %v3490 = vsel %vm696, %v3449, 0
      %v3493 = vsel %vm696, %v3450, 0
      %v3496 = vsel %vm696, %v3451, 0
      %v3499 = vsel %vm696, %v3452, 0
      %v3502 = vsel %vm696, %v3453, 0
      %v3505 = vsel %vm696, %v3454, 0
      %v3508 = vsel %vm696, %v3455, 0
      %v3511 = vsel %vm696, %v3456, 0
      %v3514 = vsel %vm696, %v3457, 0
      %v3517 = vsel %vm696, %v3458, 0
      %v3520 = vsel %vm696, %v3459, 0
      %v3523 = vsel %vm696, %v3460, 0
      %v3526 = vsel %vm696, %v3461, 0
      %v3529 = vsel %vm696, %v3462, 0
      %v3532 = vsel %vm696, %v3463, 0
      %v3535 = vsel %vm696, %v3464, 0
      %3537 = vmatprep.subr.bf16.mxu0 0
      %3538 = vmatpush1.bf16.msra.mxu0 %v3481
      %3539 = vmatprep.subr.bf16.mxu0 0
      %3540 = vmatpush1.bf16.msra.mxu0 %v3482
      %3541 = vmatprep.subr.bf16.mxu0 0
      %3542 = vmatpush1.bf16.msra.mxu0 %v3483
      %3543 = vmatprep.subr.bf16.mxu0 0
      %3544 = vmatpush1.bf16.msra.mxu0 %v3484
      %3545 = vmatprep.subr.bf16.mxu0 0
      %3546 = vmatpush1.bf16.msra.mxu0 0
      %3547 = vmatprep.subr.bf16.mxu0 0
      %3548 = vmatpush1.bf16.msra.mxu0 0
      %3549 = vmatprep.subr.bf16.mxu0 0
      %3550 = vmatpush1.bf16.msra.mxu0 0
      %3551 = vmatprep.subr.bf16.mxu0 0
      %3552 = vmatpush1.bf16.msra.mxu0 0
      %3553 = vmatprep.subr.bf16.mxu0 0
      %3554 = vmatpush1.bf16.msra.mxu0 0
      %3555 = vmatprep.subr.bf16.mxu0 0
      %3556 = vmatpush1.bf16.msra.mxu0 0
      %3557 = vmatprep.subr.bf16.mxu0 0
      %3558 = vmatpush1.bf16.msra.mxu0 0
      %3559 = vmatprep.subr.bf16.mxu0 0
      %3560 = vmatpush1.bf16.msra.mxu0 0
      %3561 = vmatprep.subr.bf16.mxu0 0
      %3562 = vmatpush1.bf16.msra.mxu0 0
      %3563 = vmatprep.subr.bf16.mxu0 0
      %3564 = vmatpush1.bf16.msra.mxu0 0
      %3565 = vmatprep.subr.bf16.mxu0 0
      %3566 = vmatpush1.bf16.msra.mxu0 0
      %3567 = vmatprep.subr.bf16.mxu0 0
      %3568 = vmatpush1.bf16.msra.mxu0 0
      %3569 = vmatprep.mubr.bf16.mxu0 0
      %3570 = vmatmul.mubr.bf16.gmra.mrb[0].mxu0 %v3490
      %v3571 = vpop.f32.mrb[0].mxu0
      %v3572 = vadd.f32 0.0, %v3571
      %v3573 = vpop.f32.mrb[0].mxu0
      %v3574 = vpop.f32.mrb[0].mxu0
      %v3575 = vadd.f32 0.0, %v3574
      %v3576 = vpop.f32.mrb[0].mxu0
      %3577 = vmatprep.mubr.bf16.mxu0 0
      %3578 = vmatmul.mubr.bf16.gmra.mrb[0].mxu0 %v3493
      %v3579 = vpop.f32.mrb[0].mxu0
      %v3580 = vadd.f32 0.0, %v3579
      %v3581 = vpop.f32.mrb[0].mxu0
      %v3582 = vpop.f32.mrb[0].mxu0
      %v3583 = vadd.f32 0.0, %v3582
      %v3584 = vpop.f32.mrb[0].mxu0
      %3585 = vmatprep.mubr.bf16.mxu0 0
      %3586 = vmatmul.mubr.bf16.gmra.mrb[0].mxu0 %v3496
      %v3587 = vpop.f32.mrb[0].mxu0
      %v3588 = vadd.f32 0.0, %v3587
      %v3589 = vpop.f32.mrb[0].mxu0
      %v3590 = vpop.f32.mrb[0].mxu0
      %v3591 = vadd.f32 0.0, %v3590
      %v3592 = vpop.f32.mrb[0].mxu0
      %3593 = vmatprep.mubr.bf16.mxu0 0
      %3594 = vmatmul.mubr.bf16.gmra.mrb[0].mxu0 %v3499
      %v3595 = vpop.f32.mrb[0].mxu0
      %v3596 = vadd.f32 0.0, %v3595
      %v3597 = vpop.f32.mrb[0].mxu0
      %v3598 = vpop.f32.mrb[0].mxu0
      %v3599 = vadd.f32 0.0, %v3598
      %v3600 = vpop.f32.mrb[0].mxu0
      %3601 = vmatprep.mubr.bf16.mxu0 0
      %3602 = vmatmul.mubr.bf16.gmra.mrb[0].mxu0 %v3502
      %v3603 = vpop.f32.mrb[0].mxu0
      %v3604 = vadd.f32 0.0, %v3603
      %v3605 = vpop.f32.mrb[0].mxu0
      %v3606 = vpop.f32.mrb[0].mxu0
      %v3607 = vadd.f32 0.0, %v3606
      %v3608 = vpop.f32.mrb[0].mxu0
      %3609 = vmatprep.mubr.bf16.mxu0 0
      %3610 = vmatmul.mubr.bf16.gmra.mrb[0].mxu0 %v3505
      %v3611 = vpop.f32.mrb[0].mxu0
      %v3612 = vadd.f32 0.0, %v3611
      %v3613 = vpop.f32.mrb[0].mxu0
      %v3614 = vpop.f32.mrb[0].mxu0
      %v3615 = vadd.f32 0.0, %v3614
      %v3616 = vpop.f32.mrb[0].mxu0
      %3617 = vmatprep.mubr.bf16.mxu0 0
      %3618 = vmatmul.mubr.bf16.gmra.mrb[0].mxu0 %v3508
      %v3619 = vpop.f32.mrb[0].mxu0
      %v3620 = vadd.f32 0.0, %v3619
      %v3621 = vpop.f32.mrb[0].mxu0
      %v3622 = vpop.f32.mrb[0].mxu0
      %v3623 = vadd.f32 0.0, %v3622
      %v3624 = vpop.f32.mrb[0].mxu0
      %3625 = vmatprep.mubr.bf16.mxu0 0
      %3626 = vmatmul.mubr.bf16.gmra.mrb[0].mxu0 %v3511
      %v3627 = vpop.f32.mrb[0].mxu0
      %v3628 = vadd.f32 0.0, %v3627
      %v3629 = vpop.f32.mrb[0].mxu0
      %v3630 = vpop.f32.mrb[0].mxu0
      %v3631 = vadd.f32 0.0, %v3630
      %v3632 = vpop.f32.mrb[0].mxu0
      %3633 = vmatprep.mubr.bf16.mxu0 0
      %3634 = vmatmul.mubr.bf16.gmra.mrb[0].mxu0 %v3514
      %v3635 = vpop.f32.mrb[0].mxu0
      %v3636 = vadd.f32 0.0, %v3635
      %v3637 = vpop.f32.mrb[0].mxu0
      %v3638 = vpop.f32.mrb[0].mxu0
      %v3639 = vadd.f32 0.0, %v3638
      %v3640 = vpop.f32.mrb[0].mxu0
      %3641 = vmatprep.mubr.bf16.mxu0 0
      %3642 = vmatmul.mubr.bf16.gmra.mrb[0].mxu0 %v3517
      %v3643 = vpop.f32.mrb[0].mxu0
      %v3644 = vadd.f32 0.0, %v3643
      %v3645 = vpop.f32.mrb[0].mxu0
      %v3646 = vpop.f32.mrb[0].mxu0
      %v3647 = vadd.f32 0.0, %v3646
      %v3648 = vpop.f32.mrb[0].mxu0
      %3649 = vmatprep.mubr.bf16.mxu0 0
      %3650 = vmatmul.mubr.bf16.gmra.mrb[0].mxu0 %v3520
      %v3651 = vpop.f32.mrb[0].mxu0
      %v3652 = vadd.f32 0.0, %v3651
      %v3653 = vpop.f32.mrb[0].mxu0
      %v3654 = vpop.f32.mrb[0].mxu0
      %v3655 = vadd.f32 0.0, %v3654
      %v3656 = vpop.f32.mrb[0].mxu0
      %3657 = vmatprep.mubr.bf16.mxu0 0
      %3658 = vmatmul.mubr.bf16.gmra.mrb[0].mxu0 %v3523
      %v3659 = vpop.f32.mrb[0].mxu0
      %v3660 = vadd.f32 0.0, %v3659
      %v3661 = vpop.f32.mrb[0].mxu0
      %v3662 = vpop.f32.mrb[0].mxu0
      %v3663 = vadd.f32 0.0, %v3662
      %v3664 = vpop.f32.mrb[0].mxu0
      %3665 = vmatprep.mubr.bf16.mxu0 0
      %3666 = vmatmul.mubr.bf16.gmra.mrb[0].mxu0 %v3526
      %v3667 = vpop.f32.mrb[0].mxu0
      %v3668 = vadd.f32 0.0, %v3667
      %v3669 = vpop.f32.mrb[0].mxu0
      %v3670 = vpop.f32.mrb[0].mxu0
      %v3671 = vadd.f32 0.0, %v3670
      %v3672 = vpop.f32.mrb[0].mxu0
      %3673 = vmatprep.mubr.bf16.mxu0 0
      %3674 = vmatmul.mubr.bf16.gmra.mrb[0].mxu0 %v3529
      %v3675 = vpop.f32.mrb[0].mxu0
      %v3676 = vadd.f32 0.0, %v3675
      %v3677 = vpop.f32.mrb[0].mxu0
      %v3678 = vpop.f32.mrb[0].mxu0
      %v3679 = vadd.f32 0.0, %v3678
      %v3680 = vpop.f32.mrb[0].mxu0
      %3681 = vmatprep.mubr.bf16.mxu0 0
      %3682 = vmatmul.mubr.bf16.gmra.mrb[0].mxu0 %v3532
      %v3683 = vpop.f32.mrb[0].mxu0
      %v3684 = vadd.f32 0.0, %v3683
      %v3685 = vpop.f32.mrb[0].mxu0
      %v3686 = vpop.f32.mrb[0].mxu0
      %v3687 = vadd.f32 0.0, %v3686
      %v3688 = vpop.f32.mrb[0].mxu0
      %3689 = vmatprep.mubr.bf16.mxu0 0
      %3690 = vmatmul.mubr.bf16.gmra.mrb[0].mxu0 %v3535
      %v3691 = vpop.f32.mrb[0].mxu0
      %v3692 = vadd.f32 0.0, %v3691
      %v3693 = vpop.f32.mrb[0].mxu0
      %v3694 = vpop.f32.mrb[0].mxu0
      %v3695 = vadd.f32 0.0, %v3694
      %v3696 = vpop.f32.mrb[0].mxu0
      %3697 = vdwg.mxu0
      %v3698 = vadd.f32 %v3311, %v3572
      %v3699 = vadd.f32 %v3312, %v3575
      %v3700 = vadd.f32 %v3313, %v3580
      %v3701 = vadd.f32 %v3314, %v3583
      %v3702 = vadd.f32 %v3315, %v3588
      %v3703 = vadd.f32 %v3316, %v3591
      %v3704 = vadd.f32 %v3317, %v3596
      %v3705 = vadd.f32 %v3318, %v3599
      %v3706 = vadd.f32 %v3319, %v3604
      %v3707 = vadd.f32 %v3320, %v3607
      %v3708 = vadd.f32 %v3321, %v3612
      %v3709 = vadd.f32 %v3322, %v3615
      %v3710 = vadd.f32 %v3323, %v3620
      %v3711 = vadd.f32 %v3324, %v3623
      %v3712 = vadd.f32 %v3325, %v3628
      %v3713 = vadd.f32 %v3326, %v3631
      %v3714 = vadd.f32 %v3327, %v3636
      %v3715 = vadd.f32 %v3328, %v3639
      %v3716 = vadd.f32 %v3329, %v3644
      %v3717 = vadd.f32 %v3330, %v3647
      %v3718 = vadd.f32 %v3331, %v3652
      %v3719 = vadd.f32 %v3332, %v3655
      %v3720 = vadd.f32 %v3333, %v3660
      %v3721 = vadd.f32 %v3334, %v3663
      %v3722 = vadd.f32 %v3335, %v3668
      %v3723 = vadd.f32 %v3336, %v3671
      %v3724 = vadd.f32 %v3337, %v3676
      %v3725 = vadd.f32 %v3338, %v3679
      %v3726 = vadd.f32 %v3339, %v3684
      %v3727 = vadd.f32 %v3340, %v3687
      %v3728 = vadd.f32 %v3341, %v3692
      %v3729 = vadd.f32 %v3342, %v3695
      %v3730 = vld [vmem:[%s3343] sm:$0xf]
      %v3731 = vld [vmem:[%s3343 + $0x4] sm:$0xf]
      %v3732 = vld [vmem:[%s3343 + $0x8] sm:$0x1]
      %v3733 = vld [vmem:[%s3343 + $0xc] sm:$0xf]
      %v3734 = vld [vmem:[%s3343 + $0x10] sm:$0xf]
      %v3735 = vld [vmem:[%s3343 + $0x14] sm:$0x1]
      %v3736 = vld [vmem:[%s3343 + $0x18] sm:$0xf]
      %v3737 = vld [vmem:[%s3343 + $0x1c] sm:$0xf]
      %v3738 = vld [vmem:[%s3343 + $0x20] sm:$0x1]
      %v3739 = vld [vmem:[%s3343 + $0x24] sm:$0xf]
      %v3740 = vld [vmem:[%s3343 + $0x28] sm:$0xf]
      %v3741 = vld [vmem:[%s3343 + $0x2c] sm:$0x1]
      %v3742 = vld [vmem:[%s3343 + $0x30] sm:$0xf]
      %v3743 = vld [vmem:[%s3343 + $0x34] sm:$0xf]
      %v3744 = vld [vmem:[%s3343 + $0x38] sm:$0x1]
      %v3745 = vld [vmem:[%s3343 + $0x3c] sm:$0xf]
      %v3746 = vld [vmem:[%s3343 + $0x40] sm:$0xf]
      %v3747 = vld [vmem:[%s3343 + $0x44] sm:$0x1]
      %v3748 = vld [vmem:[%s3343 + $0x48] sm:$0xf]
      %v3749 = vld [vmem:[%s3343 + $0x4c] sm:$0xf]
      %v3750 = vld [vmem:[%s3343 + $0x50] sm:$0x1]
      %v3751 = vld [vmem:[%s3343 + $0x54] sm:$0xf]
      %v3752 = vld [vmem:[%s3343 + $0x58] sm:$0xf]
      %v3753 = vld [vmem:[%s3343 + $0x5c] sm:$0x1]
      %v3754 = vld [vmem:[%s3343 + $0x60] sm:$0xf]
      %v3755 = vld [vmem:[%s3343 + $0x64] sm:$0xf]
      %v3756 = vld [vmem:[%s3343 + $0x68] sm:$0x1]
      %v3757 = vld [vmem:[%s3343 + $0x6c] sm:$0xf]
      %v3758 = vld [vmem:[%s3343 + $0x70] sm:$0xf]
      %v3759 = vld [vmem:[%s3343 + $0x74] sm:$0x1]
      %v3760 = vld [vmem:[%s3343 + $0x78] sm:$0xf]
      %v3761 = vld [vmem:[%s3343 + $0x7c] sm:$0xf]
      %v3762 = vld [vmem:[%s3343 + $0x80] sm:$0x1]
      %v3763 = vld [vmem:[%s3343 + $0x84] sm:$0xf]
      %v3764 = vld [vmem:[%s3343 + $0x88] sm:$0xf]
      %v3765 = vld [vmem:[%s3343 + $0x8c] sm:$0x1]
      %v3766 = vld [vmem:[%s3343 + $0x90] sm:$0xf]
      %v3767 = vld [vmem:[%s3343 + $0x94] sm:$0xf]
      %v3768 = vld [vmem:[%s3343 + $0x98] sm:$0x1]
      %v3769 = vld [vmem:[%s3343 + $0x9c] sm:$0xf]
      %v3770 = vld [vmem:[%s3343 + $0xa0] sm:$0xf]
      %v3771 = vld [vmem:[%s3343 + $0xa4] sm:$0x1]
      %v3772 = vld [vmem:[%s3343 + $0xa8] sm:$0xf]
      %v3773 = vld [vmem:[%s3343 + $0xac] sm:$0xf]
      %v3774 = vld [vmem:[%s3343 + $0xb0] sm:$0x1]
      %v3775 = vld [vmem:[%s3343 + $0xb4] sm:$0xf]
      %v3776 = vld [vmem:[%s3343 + $0xb8] sm:$0xf]
      %v3777 = vld [vmem:[%s3343 + $0xbc] sm:$0x1]
      %v3779 = vshrl.u32 %v3730, 16
      %v3781 = vrot.slane %v3779, 4
      %v3782 = vshll.u32 %v3730, 16
      %v3784 = vrot.slane %v3782, 5
      %v3785 = vor.u32 %v3781, %v3784
      %v3786 = vrot.slane %v3785, 4
      %v3788 = vshll.u32 %v3731, 16
      %v3790 = vrot.slane %v3788, 5
      %v3791 = vsel %vm230, %v3786, %v3790
      %v3792 = vshrl.u32 %v3731, 16
      %v3794 = vrot.slane %v3792, 4
      %v3795 = vor.u32 %v3794, %v3790
      %v3796 = vrot.slane %v3795, 4
      %v3798 = vshll.u32 %v3732, 16
      %v3800 = vrot.slane %v3798, 5
      %v3801 = vsel %vm230, %v3796, %v3800
      %v3803 = vshrl.u32 %v3733, 16
      %v3805 = vrot.slane %v3803, 4
      %v3806 = vshll.u32 %v3733, 16
      %v3808 = vrot.slane %v3806, 5
      %v3809 = vor.u32 %v3805, %v3808
      %v3810 = vrot.slane %v3809, 4
      %v3812 = vshll.u32 %v3734, 16
      %v3814 = vrot.slane %v3812, 5
      %v3815 = vsel %vm230, %v3810, %v3814
      %v3816 = vshrl.u32 %v3734, 16
      %v3818 = vrot.slane %v3816, 4
      %v3819 = vor.u32 %v3818, %v3814
      %v3820 = vrot.slane %v3819, 4
      %v3822 = vshll.u32 %v3735, 16
      %v3824 = vrot.slane %v3822, 5
      %v3825 = vsel %vm230, %v3820, %v3824
      %v3827 = vshrl.u32 %v3736, 16
      %v3829 = vrot.slane %v3827, 4
      %v3830 = vshll.u32 %v3736, 16
      %v3832 = vrot.slane %v3830, 5
      %v3833 = vor.u32 %v3829, %v3832
      %v3834 = vrot.slane %v3833, 4
      %v3836 = vshll.u32 %v3737, 16
      %v3838 = vrot.slane %v3836, 5
      %v3839 = vsel %vm230, %v3834, %v3838
      %v3840 = vshrl.u32 %v3737, 16
      %v3842 = vrot.slane %v3840, 4
      %v3843 = vor.u32 %v3842, %v3838
      %v3844 = vrot.slane %v3843, 4
      %v3846 = vshll.u32 %v3738, 16
      %v3848 = vrot.slane %v3846, 5
      %v3849 = vsel %vm230, %v3844, %v3848
      %v3851 = vshrl.u32 %v3739, 16
      %v3853 = vrot.slane %v3851, 4
      %v3854 = vshll.u32 %v3739, 16
      %v3856 = vrot.slane %v3854, 5
      %v3857 = vor.u32 %v3853, %v3856
      %v3858 = vrot.slane %v3857, 4
      %v3860 = vshll.u32 %v3740, 16
      %v3862 = vrot.slane %v3860, 5
      %v3863 = vsel %vm230, %v3858, %v3862
      %v3864 = vshrl.u32 %v3740, 16
      %v3866 = vrot.slane %v3864, 4
      %v3867 = vor.u32 %v3866, %v3862
      %v3868 = vrot.slane %v3867, 4
      %v3870 = vshll.u32 %v3741, 16
      %v3872 = vrot.slane %v3870, 5
      %v3873 = vsel %vm230, %v3868, %v3872
      %v3875 = vshrl.u32 %v3742, 16
      %v3877 = vrot.slane %v3875, 4
      %v3878 = vshll.u32 %v3742, 16
      %v3880 = vrot.slane %v3878, 5
      %v3881 = vor.u32 %v3877, %v3880
      %v3882 = vrot.slane %v3881, 4
      %v3884 = vshll.u32 %v3743, 16
      %v3886 = vrot.slane %v3884, 5
      %v3887 = vsel %vm230, %v3882, %v3886
      %v3888 = vshrl.u32 %v3743, 16
      %v3890 = vrot.slane %v3888, 4
      %v3891 = vor.u32 %v3890, %v3886
      %v3892 = vrot.slane %v3891, 4
      %v3894 = vshll.u32 %v3744, 16
      %v3896 = vrot.slane %v3894, 5
      %v3897 = vsel %vm230, %v3892, %v3896
      %v3899 = vshrl.u32 %v3745, 16
      %v3901 = vrot.slane %v3899, 4
      %v3902 = vshll.u32 %v3745, 16
      %v3904 = vrot.slane %v3902, 5
      %v3905 = vor.u32 %v3901, %v3904
      %v3906 = vrot.slane %v3905, 4
      %v3908 = vshll.u32 %v3746, 16
      %v3910 = vrot.slane %v3908, 5
      %v3911 = vsel %vm230, %v3906, %v3910
      %v3912 = vshrl.u32 %v3746, 16
      %v3914 = vrot.slane %v3912, 4
      %v3915 = vor.u32 %v3914, %v3910
      %v3916 = vrot.slane %v3915, 4
      %v3918 = vshll.u32 %v3747, 16
      %v3920 = vrot.slane %v3918, 5
      %v3921 = vsel %vm230, %v3916, %v3920
      %v3923 = vshrl.u32 %v3748, 16
      %v3925 = vrot.slane %v3923, 4
      %v3926 = vshll.u32 %v3748, 16
      %v3928 = vrot.slane %v3926, 5
      %v3929 = vor.u32 %v3925, %v3928
      %v3930 = vrot.slane %v3929, 4
      %v3932 = vshll.u32 %v3749, 16
      %v3934 = vrot.slane %v3932, 5
      %v3935 = vsel %vm230, %v3930, %v3934
      %v3936 = vshrl.u32 %v3749, 16
      %v3938 = vrot.slane %v3936, 4
      %v3939 = vor.u32 %v3938, %v3934
      %v3940 = vrot.slane %v3939, 4
      %v3942 = vshll.u32 %v3750, 16
      %v3944 = vrot.slane %v3942, 5
      %v3945 = vsel %vm230, %v3940, %v3944
      %v3947 = vshrl.u32 %v3751, 16
      %v3949 = vrot.slane %v3947, 4
      %v3950 = vshll.u32 %v3751, 16
      %v3952 = vrot.slane %v3950, 5
      %v3953 = vor.u32 %v3949, %v3952
      %v3954 = vrot.slane %v3953, 4
      %v3956 = vshll.u32 %v3752, 16
      %v3958 = vrot.slane %v3956, 5
      %v3959 = vsel %vm230, %v3954, %v3958
      %v3960 = vshrl.u32 %v3752, 16
      %v3962 = vrot.slane %v3960, 4
      %v3963 = vor.u32 %v3962, %v3958
      %v3964 = vrot.slane %v3963, 4
      %v3966 = vshll.u32 %v3753, 16
      %v3968 = vrot.slane %v3966, 5
      %v3969 = vsel %vm230, %v3964, %v3968
      %v3971 = vshrl.u32 %v3754, 16
      %v3973 = vrot.slane %v3971, 4
      %v3974 = vshll.u32 %v3754, 16
      %v3976 = vrot.slane %v3974, 5
      %v3977 = vor.u32 %v3973, %v3976
      %v3978 = vrot.slane %v3977, 4
      %v3980 = vshll.u32 %v3755, 16
      %v3982 = vrot.slane %v3980, 5
      %v3983 = vsel %vm230, %v3978, %v3982
      %v3984 = vshrl.u32 %v3755, 16
      %v3986 = vrot.slane %v3984, 4
      %v3987 = vor.u32 %v3986, %v3982
      %v3988 = vrot.slane %v3987, 4
      %v3990 = vshll.u32 %v3756, 16
      %v3992 = vrot.slane %v3990, 5
      %v3993 = vsel %vm230, %v3988, %v3992
      %v3995 = vshrl.u32 %v3757, 16
      %v3997 = vrot.slane %v3995, 4
      %v3998 = vshll.u32 %v3757, 16
      %v4000 = vrot.slane %v3998, 5
      %v4001 = vor.u32 %v3997, %v4000
      %v4002 = vrot.slane %v4001, 4
      %v4004 = vshll.u32 %v3758, 16
      %v4006 = vrot.slane %v4004, 5
      %v4007 = vsel %vm230, %v4002, %v4006
      %v4008 = vshrl.u32 %v3758, 16
      %v4010 = vrot.slane %v4008, 4
      %v4011 = vor.u32 %v4010, %v4006
      %v4012 = vrot.slane %v4011, 4
      %v4014 = vshll.u32 %v3759, 16
      %v4016 = vrot.slane %v4014, 5
      %v4017 = vsel %vm230, %v4012, %v4016
      %v4019 = vshrl.u32 %v3760, 16
      %v4021 = vrot.slane %v4019, 4
      %v4022 = vshll.u32 %v3760, 16
      %v4024 = vrot.slane %v4022, 5
      %v4025 = vor.u32 %v4021, %v4024
      %v4026 = vrot.slane %v4025, 4
      %v4028 = vshll.u32 %v3761, 16
      %v4030 = vrot.slane %v4028, 5
      %v4031 = vsel %vm230, %v4026, %v4030
      %v4032 = vshrl.u32 %v3761, 16
      %v4034 = vrot.slane %v4032, 4
      %v4035 = vor.u32 %v4034, %v4030
      %v4036 = vrot.slane %v4035, 4
      %v4038 = vshll.u32 %v3762, 16
      %v4040 = vrot.slane %v4038, 5
      %v4041 = vsel %vm230, %v4036, %v4040
      %v4043 = vshrl.u32 %v3763, 16
      %v4045 = vrot.slane %v4043, 4
      %v4046 = vshll.u32 %v3763, 16
      %v4048 = vrot.slane %v4046, 5
      %v4049 = vor.u32 %v4045, %v4048
      %v4050 = vrot.slane %v4049, 4
      %v4052 = vshll.u32 %v3764, 16
      %v4054 = vrot.slane %v4052, 5
      %v4055 = vsel %vm230, %v4050, %v4054
      %v4056 = vshrl.u32 %v3764, 16
      %v4058 = vrot.slane %v4056, 4
      %v4059 = vor.u32 %v4058, %v4054
      %v4060 = vrot.slane %v4059, 4
      %v4062 = vshll.u32 %v3765, 16
      %v4064 = vrot.slane %v4062, 5
      %v4065 = vsel %vm230, %v4060, %v4064
      %v4067 = vshrl.u32 %v3766, 16
      %v4069 = vrot.slane %v4067, 4
      %v4070 = vshll.u32 %v3766, 16
      %v4072 = vrot.slane %v4070, 5
      %v4073 = vor.u32 %v4069, %v4072
      %v4074 = vrot.slane %v4073, 4
      %v4076 = vshll.u32 %v3767, 16
      %v4078 = vrot.slane %v4076, 5
      %v4079 = vsel %vm230, %v4074, %v4078
      %v4080 = vshrl.u32 %v3767, 16
      %v4082 = vrot.slane %v4080, 4
      %v4083 = vor.u32 %v4082, %v4078
      %v4084 = vrot.slane %v4083, 4
      %v4086 = vshll.u32 %v3768, 16
      %v4088 = vrot.slane %v4086, 5
      %v4089 = vsel %vm230, %v4084, %v4088
      %v4091 = vshrl.u32 %v3769, 16
      %v4093 = vrot.slane %v4091, 4
      %v4094 = vshll.u32 %v3769, 16
      %v4096 = vrot.slane %v4094, 5
      %v4097 = vor.u32 %v4093, %v4096
      %v4098 = vrot.slane %v4097, 4
      %v4100 = vshll.u32 %v3770, 16
      %v4102 = vrot.slane %v4100, 5
      %v4103 = vsel %vm230, %v4098, %v4102
      %v4104 = vshrl.u32 %v3770, 16
      %v4106 = vrot.slane %v4104, 4
      %v4107 = vor.u32 %v4106, %v4102
      %v4108 = vrot.slane %v4107, 4
      %v4110 = vshll.u32 %v3771, 16
      %v4112 = vrot.slane %v4110, 5
      %v4113 = vsel %vm230, %v4108, %v4112
      %v4115 = vshrl.u32 %v3772, 16
      %v4117 = vrot.slane %v4115, 4
      %v4118 = vshll.u32 %v3772, 16
      %v4120 = vrot.slane %v4118, 5
      %v4121 = vor.u32 %v4117, %v4120
      %v4122 = vrot.slane %v4121, 4
      %v4124 = vshll.u32 %v3773, 16
      %v4126 = vrot.slane %v4124, 5
      %v4127 = vsel %vm230, %v4122, %v4126
      %v4128 = vshrl.u32 %v3773, 16
      %v4130 = vrot.slane %v4128, 4
      %v4131 = vor.u32 %v4130, %v4126
      %v4132 = vrot.slane %v4131, 4
      %v4134 = vshll.u32 %v3774, 16
      %v4136 = vrot.slane %v4134, 5
      %v4137 = vsel %vm230, %v4132, %v4136
      %v4139 = vshrl.u32 %v3775, 16
      %v4141 = vrot.slane %v4139, 4
      %v4142 = vshll.u32 %v3775, 16
      %v4144 = vrot.slane %v4142, 5
      %v4145 = vor.u32 %v4141, %v4144
      %v4146 = vrot.slane %v4145, 4
      %v4148 = vshll.u32 %v3776, 16
      %v4150 = vrot.slane %v4148, 5
      %v4151 = vsel %vm230, %v4146, %v4150
      %v4152 = vshrl.u32 %v3776, 16
      %v4154 = vrot.slane %v4152, 4
      %v4155 = vor.u32 %v4154, %v4150
      %v4156 = vrot.slane %v4155, 4
      %v4158 = vshll.u32 %v3777, 16
      %v4160 = vrot.slane %v4158, 5
      %v4161 = vsel %vm230, %v4156, %v4160
      %s4162 = scalar_lea.vmem %s1, 224
      %v4163 = vld [vmem:[%s4162] sm:$0xf]
      %v4164 = vld [vmem:[%s4162 + $0x4] sm:$0xf]
      %v4165 = vld [vmem:[%s4162 + $0x8] sm:$0xf]
      %v4166 = vld [vmem:[%s4162 + $0xc] sm:$0xf]
      %v4167 = vld [vmem:[%s4162 + $0x10] sm:$0xf]
      %v4168 = vld [vmem:[%s4162 + $0x14] sm:$0xf]
      %v4169 = vld [vmem:[%s4162 + $0x18] sm:$0xf]
      %v4170 = vld [vmem:[%s4162 + $0x1c] sm:$0xf]
      %v4171 = vunpack.c.l.b16 %v3791
      %v4172 = vunpack.c.l.b16 %v3801
      %v4173 = vunpack.c.l.b16 %v3815
      %v4174 = vunpack.c.l.b16 %v3825
      %v4175 = vunpack.c.l.b16 %v3839
      %v4176 = vunpack.c.l.b16 %v3849
      %v4177 = vunpack.c.l.b16 %v3863
      %v4178 = vunpack.c.l.b16 %v3873
      %v4179 = vunpack.c.l.b16 %v3887
      %v4180 = vunpack.c.l.b16 %v3897
      %v4181 = vunpack.c.l.b16 %v3911
      %v4182 = vunpack.c.l.b16 %v3921
      %v4183 = vunpack.c.l.b16 %v3935
      %v4184 = vunpack.c.l.b16 %v3945
      %v4185 = vunpack.c.l.b16 %v3959
      %v4186 = vunpack.c.l.b16 %v3969
      %v4187 = vunpack.c.l.b16 %v3983
      %v4188 = vunpack.c.l.b16 %v3993
      %v4189 = vunpack.c.l.b16 %v4007
      %v4190 = vunpack.c.l.b16 %v4017
      %v4191 = vunpack.c.l.b16 %v4031
      %v4192 = vunpack.c.l.b16 %v4041
      %v4193 = vunpack.c.l.b16 %v4055
      %v4194 = vunpack.c.l.b16 %v4065
      %v4195 = vunpack.c.l.b16 %v4079
      %v4196 = vunpack.c.l.b16 %v4089
      %v4197 = vunpack.c.l.b16 %v4103
      %v4198 = vunpack.c.l.b16 %v4113
      %v4199 = vunpack.c.l.b16 %v4127
      %v4200 = vunpack.c.l.b16 %v4137
      %v4201 = vunpack.c.l.b16 %v4151
      %v4202 = vunpack.c.l.b16 %v4161
      %v4203 = vpack.c.b16 %v4172, %v4171
      %v4204 = vpack.c.b16 %v4174, %v4173
      %v4205 = vpack.c.b16 %v4176, %v4175
      %v4206 = vpack.c.b16 %v4178, %v4177
      %v4207 = vpack.c.b16 %v4180, %v4179
      %v4208 = vpack.c.b16 %v4182, %v4181
      %v4209 = vpack.c.b16 %v4184, %v4183
      %v4210 = vpack.c.b16 %v4186, %v4185
      %v4211 = vpack.c.b16 %v4188, %v4187
      %v4212 = vpack.c.b16 %v4190, %v4189
      %v4213 = vpack.c.b16 %v4192, %v4191
      %v4214 = vpack.c.b16 %v4194, %v4193
      %v4215 = vpack.c.b16 %v4196, %v4195
      %v4216 = vpack.c.b16 %v4198, %v4197
      %v4217 = vpack.c.b16 %v4200, %v4199
      %v4218 = vpack.c.b16 %v4202, %v4201
      %v4227 = vunpack.c.l.b16 %v4163
      %v4228 = vunpack.c.l.b16 %v4164
      %v4229 = vunpack.c.l.b16 %v4165
      %v4230 = vunpack.c.l.b16 %v4166
      %v4231 = vunpack.c.l.b16 %v4167
      %v4232 = vunpack.c.l.b16 %v4168
      %v4233 = vunpack.c.l.b16 %v4169
      %v4234 = vunpack.c.l.b16 %v4170
      %v4235 = vpack.c.b16 %v4228, %v4227
      %v4236 = vpack.c.b16 %v4230, %v4229
      %v4237 = vpack.c.b16 %v4232, %v4231
      %v4238 = vpack.c.b16 %v4234, %v4233
      %v4244 = vsel %vm696, %v4203, 0
      %v4247 = vsel %vm696, %v4204, 0
      %v4250 = vsel %vm696, %v4205, 0
      %v4253 = vsel %vm696, %v4206, 0
      %v4256 = vsel %vm696, %v4207, 0
      %v4259 = vsel %vm696, %v4208, 0
      %v4262 = vsel %vm696, %v4209, 0
      %v4265 = vsel %vm696, %v4210, 0
      %v4268 = vsel %vm696, %v4211, 0
      %v4271 = vsel %vm696, %v4212, 0
      %v4274 = vsel %vm696, %v4213, 0
      %v4277 = vsel %vm696, %v4214, 0
      %v4280 = vsel %vm696, %v4215, 0
      %v4283 = vsel %vm696, %v4216, 0
      %v4286 = vsel %vm696, %v4217, 0
      %v4289 = vsel %vm696, %v4218, 0
      %4291 = vmatprep.subr.bf16.mxu0 0
      %4292 = vmatpush1.bf16.msra.mxu0 %v4235
      %4293 = vmatprep.subr.bf16.mxu0 0
      %4294 = vmatpush1.bf16.msra.mxu0 %v4236
      %4295 = vmatprep.subr.bf16.mxu0 0
      %4296 = vmatpush1.bf16.msra.mxu0 %v4237
      %4297 = vmatprep.subr.bf16.mxu0 0
      %4298 = vmatpush1.bf16.msra.mxu0 %v4238
      %4299 = vmatprep.subr.bf16.mxu0 0
      %4300 = vmatpush1.bf16.msra.mxu0 0
      %4301 = vmatprep.subr.bf16.mxu0 0
      %4302 = vmatpush1.bf16.msra.mxu0 0
      %4303 = vmatprep.subr.bf16.mxu0 0
      %4304 = vmatpush1.bf16.msra.mxu0 0
      %4305 = vmatprep.subr.bf16.mxu0 0
      %4306 = vmatpush1.bf16.msra.mxu0 0
      %4307 = vmatprep.subr.bf16.mxu0 0
      %4308 = vmatpush1.bf16.msra.mxu0 0
      %4309 = vmatprep.subr.bf16.mxu0 0
      %4310 = vmatpush1.bf16.msra.mxu0 0
      %4311 = vmatprep.subr.bf16.mxu0 0
      %4312 = vmatpush1.bf16.msra.mxu0 0
      %4313 = vmatprep.subr.bf16.mxu0 0
      %4314 = vmatpush1.bf16.msra.mxu0 0
      %4315 = vmatprep.subr.bf16.mxu0 0
      %4316 = vmatpush1.bf16.msra.mxu0 0
      %4317 = vmatprep.subr.bf16.mxu0 0
      %4318 = vmatpush1.bf16.msra.mxu0 0
      %4319 = vmatprep.subr.bf16.mxu0 0
      %4320 = vmatpush1.bf16.msra.mxu0 0
      %4321 = vmatprep.subr.bf16.mxu0 0
      %4322 = vmatpush1.bf16.msra.mxu0 0
      %4323 = vmatprep.mubr.bf16.mxu0 0
      %4324 = vmatmul.mubr.bf16.gmra.mrb[0].mxu0 %v4244
      %v4325 = vpop.f32.mrb[0].mxu0
      %v4326 = vadd.f32 0.0, %v4325
      %v4327 = vpop.f32.mrb[0].mxu0
      %v4328 = vpop.f32.mrb[0].mxu0
      %v4329 = vadd.f32 0.0, %v4328
      %v4330 = vpop.f32.mrb[0].mxu0
      %4331 = vmatprep.mubr.bf16.mxu0 0
      %4332 = vmatmul.mubr.bf16.gmra.mrb[0].mxu0 %v4247
      %v4333 = vpop.f32.mrb[0].mxu0
      %v4334 = vadd.f32 0.0, %v4333
      %v4335 = vpop.f32.mrb[0].mxu0
      %v4336 = vpop.f32.mrb[0].mxu0
      %v4337 = vadd.f32 0.0, %v4336
      %v4338 = vpop.f32.mrb[0].mxu0
      %4339 = vmatprep.mubr.bf16.mxu0 0
      %4340 = vmatmul.mubr.bf16.gmra.mrb[0].mxu0 %v4250
      %v4341 = vpop.f32.mrb[0].mxu0
      %v4342 = vadd.f32 0.0, %v4341
      %v4343 = vpop.f32.mrb[0].mxu0
      %v4344 = vpop.f32.mrb[0].mxu0
      %v4345 = vadd.f32 0.0, %v4344
      %v4346 = vpop.f32.mrb[0].mxu0
      %4347 = vmatprep.mubr.bf16.mxu0 0
      %4348 = vmatmul.mubr.bf16.gmra.mrb[0].mxu0 %v4253
      %v4349 = vpop.f32.mrb[0].mxu0
      %v4350 = vadd.f32 0.0, %v4349
      %v4351 = vpop.f32.mrb[0].mxu0
      %v4352 = vpop.f32.mrb[0].mxu0
      %v4353 = vadd.f32 0.0, %v4352
      %v4354 = vpop.f32.mrb[0].mxu0
      %4355 = vmatprep.mubr.bf16.mxu0 0
      %4356 = vmatmul.mubr.bf16.gmra.mrb[0].mxu0 %v4256
      %v4357 = vpop.f32.mrb[0].mxu0
      %v4358 = vadd.f32 0.0, %v4357
      %v4359 = vpop.f32.mrb[0].mxu0
      %v4360 = vpop.f32.mrb[0].mxu0
      %v4361 = vadd.f32 0.0, %v4360
      %v4362 = vpop.f32.mrb[0].mxu0
      %4363 = vmatprep.mubr.bf16.mxu0 0
      %4364 = vmatmul.mubr.bf16.gmra.mrb[0].mxu0 %v4259
      %v4365 = vpop.f32.mrb[0].mxu0
      %v4366 = vadd.f32 0.0, %v4365
      %v4367 = vpop.f32.mrb[0].mxu0
      %v4368 = vpop.f32.mrb[0].mxu0
      %v4369 = vadd.f32 0.0, %v4368
      %v4370 = vpop.f32.mrb[0].mxu0
      %4371 = vmatprep.mubr.bf16.mxu0 0
      %4372 = vmatmul.mubr.bf16.gmra.mrb[0].mxu0 %v4262
      %v4373 = vpop.f32.mrb[0].mxu0
      %v4374 = vadd.f32 0.0, %v4373
      %v4375 = vpop.f32.mrb[0].mxu0
      %v4376 = vpop.f32.mrb[0].mxu0
      %v4377 = vadd.f32 0.0, %v4376
      %v4378 = vpop.f32.mrb[0].mxu0
      %4379 = vmatprep.mubr.bf16.mxu0 0
      %4380 = vmatmul.mubr.bf16.gmra.mrb[0].mxu0 %v4265
      %v4381 = vpop.f32.mrb[0].mxu0
      %v4382 = vadd.f32 0.0, %v4381
      %v4383 = vpop.f32.mrb[0].mxu0
      %v4384 = vpop.f32.mrb[0].mxu0
      %v4385 = vadd.f32 0.0, %v4384
      %v4386 = vpop.f32.mrb[0].mxu0
      %4387 = vmatprep.mubr.bf16.mxu0 0
      %4388 = vmatmul.mubr.bf16.gmra.mrb[0].mxu0 %v4268
      %v4389 = vpop.f32.mrb[0].mxu0
      %v4390 = vadd.f32 0.0, %v4389
      %v4391 = vpop.f32.mrb[0].mxu0
      %v4392 = vpop.f32.mrb[0].mxu0
      %v4393 = vadd.f32 0.0, %v4392
      %v4394 = vpop.f32.mrb[0].mxu0
      %4395 = vmatprep.mubr.bf16.mxu0 0
      %4396 = vmatmul.mubr.bf16.gmra.mrb[0].mxu0 %v4271
      %v4397 = vpop.f32.mrb[0].mxu0
      %v4398 = vadd.f32 0.0, %v4397
      %v4399 = vpop.f32.mrb[0].mxu0
      %v4400 = vpop.f32.mrb[0].mxu0
      %v4401 = vadd.f32 0.0, %v4400
      %v4402 = vpop.f32.mrb[0].mxu0
      %4403 = vmatprep.mubr.bf16.mxu0 0
      %4404 = vmatmul.mubr.bf16.gmra.mrb[0].mxu0 %v4274
      %v4405 = vpop.f32.mrb[0].mxu0
      %v4406 = vadd.f32 0.0, %v4405
      %v4407 = vpop.f32.mrb[0].mxu0
      %v4408 = vpop.f32.mrb[0].mxu0
      %v4409 = vadd.f32 0.0, %v4408
      %v4410 = vpop.f32.mrb[0].mxu0
      %4411 = vmatprep.mubr.bf16.mxu0 0
      %4412 = vmatmul.mubr.bf16.gmra.mrb[0].mxu0 %v4277
      %v4413 = vpop.f32.mrb[0].mxu0
      %v4414 = vadd.f32 0.0, %v4413
      %v4415 = vpop.f32.mrb[0].mxu0
      %v4416 = vpop.f32.mrb[0].mxu0
      %v4417 = vadd.f32 0.0, %v4416
      %v4418 = vpop.f32.mrb[0].mxu0
      %4419 = vmatprep.mubr.bf16.mxu0 0
      %4420 = vmatmul.mubr.bf16.gmra.mrb[0].mxu0 %v4280
      %v4421 = vpop.f32.mrb[0].mxu0
      %v4422 = vadd.f32 0.0, %v4421
      %v4423 = vpop.f32.mrb[0].mxu0
      %v4424 = vpop.f32.mrb[0].mxu0
      %v4425 = vadd.f32 0.0, %v4424
      %v4426 = vpop.f32.mrb[0].mxu0
      %4427 = vmatprep.mubr.bf16.mxu0 0
      %4428 = vmatmul.mubr.bf16.gmra.mrb[0].mxu0 %v4283
      %v4429 = vpop.f32.mrb[0].mxu0
      %v4430 = vadd.f32 0.0, %v4429
      %v4431 = vpop.f32.mrb[0].mxu0
      %v4432 = vpop.f32.mrb[0].mxu0
      %v4433 = vadd.f32 0.0, %v4432
      %v4434 = vpop.f32.mrb[0].mxu0
      %4435 = vmatprep.mubr.bf16.mxu0 0
      %4436 = vmatmul.mubr.bf16.gmra.mrb[0].mxu0 %v4286
      %v4437 = vpop.f32.mrb[0].mxu0
      %v4438 = vadd.f32 0.0, %v4437
      %v4439 = vpop.f32.mrb[0].mxu0
      %v4440 = vpop.f32.mrb[0].mxu0
      %v4441 = vadd.f32 0.0, %v4440
      %v4442 = vpop.f32.mrb[0].mxu0
      %4443 = vmatprep.mubr.bf16.mxu0 0
      %4444 = vmatmul.mubr.bf16.gmra.mrb[0].mxu0 %v4289
      %v4445 = vpop.f32.mrb[0].mxu0
      %v4446 = vadd.f32 0.0, %v4445
      %v4447 = vpop.f32.mrb[0].mxu0
      %v4448 = vpop.f32.mrb[0].mxu0
      %v4449 = vadd.f32 0.0, %v4448
      %v4450 = vpop.f32.mrb[0].mxu0
      %4451 = vdwg.mxu0
      %v4452 = vadd.f32 %v3698, %v4326
      %v4453 = vadd.f32 %v3699, %v4329
      %v4454 = vadd.f32 %v3700, %v4334
      %v4455 = vadd.f32 %v3701, %v4337
      %v4456 = vadd.f32 %v3702, %v4342
      %v4457 = vadd.f32 %v3703, %v4345
      %v4458 = vadd.f32 %v3704, %v4350
      %v4459 = vadd.f32 %v3705, %v4353
      %v4460 = vadd.f32 %v3706, %v4358
      %v4461 = vadd.f32 %v3707, %v4361
      %v4462 = vadd.f32 %v3708, %v4366
      %v4463 = vadd.f32 %v3709, %v4369
      %v4464 = vadd.f32 %v3710, %v4374
      %v4465 = vadd.f32 %v3711, %v4377
      %v4466 = vadd.f32 %v3712, %v4382
      %v4467 = vadd.f32 %v3713, %v4385
      %v4468 = vadd.f32 %v3714, %v4390
      %v4469 = vadd.f32 %v3715, %v4393
      %v4470 = vadd.f32 %v3716, %v4398
      %v4471 = vadd.f32 %v3717, %v4401
      %v4472 = vadd.f32 %v3718, %v4406
      %v4473 = vadd.f32 %v3719, %v4409
      %v4474 = vadd.f32 %v3720, %v4414
      %v4475 = vadd.f32 %v3721, %v4417
      %v4476 = vadd.f32 %v3722, %v4422
      %v4477 = vadd.f32 %v3723, %v4425
      %v4478 = vadd.f32 %v3724, %v4430
      %v4479 = vadd.f32 %v3725, %v4433
      %v4480 = vadd.f32 %v3726, %v4438
      %v4481 = vadd.f32 %v3727, %v4441
      %v4482 = vadd.f32 %v3728, %v4446
      %v4483 = vadd.f32 %v3729, %v4449
      %v4484 = vld [vmem:[%s3343] sm:$0xe]
      %v4485 = vld [vmem:[%s3343 + $0xc] sm:$0xe]
      %v4486 = vld [vmem:[%s3343 + $0x18] sm:$0xe]
      %v4487 = vld [vmem:[%s3343 + $0x24] sm:$0xe]
      %v4488 = vld [vmem:[%s3343 + $0x30] sm:$0xe]
      %v4489 = vld [vmem:[%s3343 + $0x3c] sm:$0xe]
      %v4490 = vld [vmem:[%s3343 + $0x48] sm:$0xe]
      %v4491 = vld [vmem:[%s3343 + $0x54] sm:$0xe]
      %v4492 = vld [vmem:[%s3343 + $0x60] sm:$0xe]
      %v4493 = vld [vmem:[%s3343 + $0x6c] sm:$0xe]
      %v4494 = vld [vmem:[%s3343 + $0x78] sm:$0xe]
      %v4495 = vld [vmem:[%s3343 + $0x84] sm:$0xe]
      %v4496 = vld [vmem:[%s3343 + $0x90] sm:$0xe]
      %v4497 = vld [vmem:[%s3343 + $0x9c] sm:$0xe]
      %v4498 = vld [vmem:[%s3343 + $0xa8] sm:$0xe]
      %v4499 = vld [vmem:[%s3343 + $0xb4] sm:$0xe]
      %v4548 = vrot.slane %v4484, 5
      %v4549 = vrot.slane %v4548, 4
      %v4550 = vrot.slane %v3731, 5
      %v4551 = vsel %vm1269, %v4549, %v4550
      %v4552 = vrot.slane %v4550, 4
      %v4553 = vrot.slane %v3732, 5
      %v4554 = vsel %vm1269, %v4552, %v4553
      %v4555 = vrot.slane %v4485, 5
      %v4556 = vrot.slane %v4555, 4
      %v4557 = vrot.slane %v3734, 5
      %v4558 = vsel %vm1269, %v4556, %v4557
      %v4559 = vrot.slane %v4557, 4
      %v4560 = vrot.slane %v3735, 5
      %v4561 = vsel %vm1269, %v4559, %v4560
      %v4562 = vrot.slane %v4486, 5
      %v4563 = vrot.slane %v4562, 4
      %v4564 = vrot.slane %v3737, 5
      %v4565 = vsel %vm1269, %v4563, %v4564
      %v4566 = vrot.slane %v4564, 4
      %v4567 = vrot.slane %v3738, 5
      %v4568 = vsel %vm1269, %v4566, %v4567
      %v4569 = vrot.slane %v4487, 5
      %v4570 = vrot.slane %v4569, 4
      %v4571 = vrot.slane %v3740, 5
      %v4572 = vsel %vm1269, %v4570, %v4571
      %v4573 = vrot.slane %v4571, 4
      %v4574 = vrot.slane %v3741, 5
      %v4575 = vsel %vm1269, %v4573, %v4574
      %v4576 = vrot.slane %v4488, 5
      %v4577 = vrot.slane %v4576, 4
      %v4578 = vrot.slane %v3743, 5
      %v4579 = vsel %vm1269, %v4577, %v4578
      %v4580 = vrot.slane %v4578, 4
      %v4581 = vrot.slane %v3744, 5
      %v4582 = vsel %vm1269, %v4580, %v4581
      %v4583 = vrot.slane %v4489, 5
      %v4584 = vrot.slane %v4583, 4
      %v4585 = vrot.slane %v3746, 5
      %v4586 = vsel %vm1269, %v4584, %v4585
      %v4587 = vrot.slane %v4585, 4
      %v4588 = vrot.slane %v3747, 5
      %v4589 = vsel %vm1269, %v4587, %v4588
      %v4590 = vrot.slane %v4490, 5
      %v4591 = vrot.slane %v4590, 4
      %v4592 = vrot.slane %v3749, 5
      %v4593 = vsel %vm1269, %v4591, %v4592
      %v4594 = vrot.slane %v4592, 4
      %v4595 = vrot.slane %v3750, 5
      %v4596 = vsel %vm1269, %v4594, %v4595
      %v4597 = vrot.slane %v4491, 5
      %v4598 = vrot.slane %v4597, 4
      %v4599 = vrot.slane %v3752, 5
      %v4600 = vsel %vm1269, %v4598, %v4599
      %v4601 = vrot.slane %v4599, 4
      %v4602 = vrot.slane %v3753, 5
      %v4603 = vsel %vm1269, %v4601, %v4602
      %v4604 = vrot.slane %v4492, 5
      %v4605 = vrot.slane %v4604, 4
      %v4606 = vrot.slane %v3755, 5
      %v4607 = vsel %vm1269, %v4605, %v4606
      %v4608 = vrot.slane %v4606, 4
      %v4609 = vrot.slane %v3756, 5
      %v4610 = vsel %vm1269, %v4608, %v4609
      %v4611 = vrot.slane %v4493, 5
      %v4612 = vrot.slane %v4611, 4
      %v4613 = vrot.slane %v3758, 5
      %v4614 = vsel %vm1269, %v4612, %v4613
      %v4615 = vrot.slane %v4613, 4
      %v4616 = vrot.slane %v3759, 5
      %v4617 = vsel %vm1269, %v4615, %v4616
      %v4618 = vrot.slane %v4494, 5
      %v4619 = vrot.slane %v4618, 4
      %v4620 = vrot.slane %v3761, 5
      %v4621 = vsel %vm1269, %v4619, %v4620
      %v4622 = vrot.slane %v4620, 4
      %v4623 = vrot.slane %v3762, 5
      %v4624 = vsel %vm1269, %v4622, %v4623
      %v4625 = vrot.slane %v4495, 5
      %v4626 = vrot.slane %v4625, 4
      %v4627 = vrot.slane %v3764, 5
      %v4628 = vsel %vm1269, %v4626, %v4627
      %v4629 = vrot.slane %v4627, 4
      %v4630 = vrot.slane %v3765, 5
      %v4631 = vsel %vm1269, %v4629, %v4630
      %v4632 = vrot.slane %v4496, 5
      %v4633 = vrot.slane %v4632, 4
      %v4634 = vrot.slane %v3767, 5
      %v4635 = vsel %vm1269, %v4633, %v4634
      %v4636 = vrot.slane %v4634, 4
      %v4637 = vrot.slane %v3768, 5
      %v4638 = vsel %vm1269, %v4636, %v4637
      %v4639 = vrot.slane %v4497, 5
      %v4640 = vrot.slane %v4639, 4
      %v4641 = vrot.slane %v3770, 5
      %v4642 = vsel %vm1269, %v4640, %v4641
      %v4643 = vrot.slane %v4641, 4
      %v4644 = vrot.slane %v3771, 5
      %v4645 = vsel %vm1269, %v4643, %v4644
      %v4646 = vrot.slane %v4498, 5
      %v4647 = vrot.slane %v4646, 4
      %v4648 = vrot.slane %v3773, 5
      %v4649 = vsel %vm1269, %v4647, %v4648
      %v4650 = vrot.slane %v4648, 4
      %v4651 = vrot.slane %v3774, 5
      %v4652 = vsel %vm1269, %v4650, %v4651
      %v4653 = vrot.slane %v4499, 5
      %v4654 = vrot.slane %v4653, 4
      %v4655 = vrot.slane %v3776, 5
      %v4656 = vsel %vm1269, %v4654, %v4655
      %v4657 = vrot.slane %v4655, 4
      %v4658 = vrot.slane %v3777, 5
      %v4659 = vsel %vm1269, %v4657, %v4658
      %s4660 = scalar_lea.vmem %s1, 256
      %v4661 = vld [vmem:[%s4660] sm:$0xf]
      %v4662 = vld [vmem:[%s4660 + $0x4] sm:$0xf]
      %v4663 = vld [vmem:[%s4660 + $0x8] sm:$0xf]
      %v4664 = vld [vmem:[%s4660 + $0xc] sm:$0xf]
      %v4665 = vld [vmem:[%s4660 + $0x10] sm:$0xf]
      %v4666 = vld [vmem:[%s4660 + $0x14] sm:$0xf]
      %v4667 = vld [vmem:[%s4660 + $0x18] sm:$0xf]
      %v4668 = vld [vmem:[%s4660 + $0x1c] sm:$0xf]
      %v4669 = vunpack.c.l.b16 %v4551
      %v4670 = vunpack.c.l.b16 %v4554
      %v4671 = vunpack.c.l.b16 %v4558
      %v4672 = vunpack.c.l.b16 %v4561
      %v4673 = vunpack.c.l.b16 %v4565
      %v4674 = vunpack.c.l.b16 %v4568
      %v4675 = vunpack.c.l.b16 %v4572
      %v4676 = vunpack.c.l.b16 %v4575
      %v4677 = vunpack.c.l.b16 %v4579
      %v4678 = vunpack.c.l.b16 %v4582
      %v4679 = vunpack.c.l.b16 %v4586
      %v4680 = vunpack.c.l.b16 %v4589
      %v4681 = vunpack.c.l.b16 %v4593
      %v4682 = vunpack.c.l.b16 %v4596
      %v4683 = vunpack.c.l.b16 %v4600
      %v4684 = vunpack.c.l.b16 %v4603
      %v4685 = vunpack.c.l.b16 %v4607
      %v4686 = vunpack.c.l.b16 %v4610
      %v4687 = vunpack.c.l.b16 %v4614
      %v4688 = vunpack.c.l.b16 %v4617
      %v4689 = vunpack.c.l.b16 %v4621
      %v4690 = vunpack.c.l.b16 %v4624
      %v4691 = vunpack.c.l.b16 %v4628
      %v4692 = vunpack.c.l.b16 %v4631
      %v4693 = vunpack.c.l.b16 %v4635
      %v4694 = vunpack.c.l.b16 %v4638
      %v4695 = vunpack.c.l.b16 %v4642
      %v4696 = vunpack.c.l.b16 %v4645
      %v4697 = vunpack.c.l.b16 %v4649
      %v4698 = vunpack.c.l.b16 %v4652
      %v4699 = vunpack.c.l.b16 %v4656
      %v4700 = vunpack.c.l.b16 %v4659
      %v4701 = vpack.c.b16 %v4670, %v4669
      %v4702 = vpack.c.b16 %v4672, %v4671
      %v4703 = vpack.c.b16 %v4674, %v4673
      %v4704 = vpack.c.b16 %v4676, %v4675
      %v4705 = vpack.c.b16 %v4678, %v4677
      %v4706 = vpack.c.b16 %v4680, %v4679
      %v4707 = vpack.c.b16 %v4682, %v4681
      %v4708 = vpack.c.b16 %v4684, %v4683
      %v4709 = vpack.c.b16 %v4686, %v4685
      %v4710 = vpack.c.b16 %v4688, %v4687
      %v4711 = vpack.c.b16 %v4690, %v4689
      %v4712 = vpack.c.b16 %v4692, %v4691
      %v4713 = vpack.c.b16 %v4694, %v4693
      %v4714 = vpack.c.b16 %v4696, %v4695
      %v4715 = vpack.c.b16 %v4698, %v4697
      %v4716 = vpack.c.b16 %v4700, %v4699
      %v4725 = vunpack.c.l.b16 %v4661
      %v4726 = vunpack.c.l.b16 %v4662
      %v4727 = vunpack.c.l.b16 %v4663
      %v4728 = vunpack.c.l.b16 %v4664
      %v4729 = vunpack.c.l.b16 %v4665
      %v4730 = vunpack.c.l.b16 %v4666
      %v4731 = vunpack.c.l.b16 %v4667
      %v4732 = vunpack.c.l.b16 %v4668
      %v4733 = vpack.c.b16 %v4726, %v4725
      %v4734 = vpack.c.b16 %v4728, %v4727
      %v4735 = vpack.c.b16 %v4730, %v4729
      %v4736 = vpack.c.b16 %v4732, %v4731
      %v4742 = vsel %vm696, %v4701, 0
      %v4745 = vsel %vm696, %v4702, 0
      %v4748 = vsel %vm696, %v4703, 0
      %v4751 = vsel %vm696, %v4704, 0
      %v4754 = vsel %vm696, %v4705, 0
      %v4757 = vsel %vm696, %v4706, 0
      %v4760 = vsel %vm696, %v4707, 0
      %v4763 = vsel %vm696, %v4708, 0
      %v4766 = vsel %vm696, %v4709, 0
      %v4769 = vsel %vm696, %v4710, 0
      %v4772 = vsel %vm696, %v4711, 0
      %v4775 = vsel %vm696, %v4712, 0
      %v4778 = vsel %vm696, %v4713, 0
      %v4781 = vsel %vm696, %v4714, 0
      %v4784 = vsel %vm696, %v4715, 0
      %v4787 = vsel %vm696, %v4716, 0
      %4789 = vmatprep.subr.bf16.mxu0 0
      %4790 = vmatpush1.bf16.msra.mxu0 %v4733
      %4791 = vmatprep.subr.bf16.mxu0 0
      %4792 = vmatpush1.bf16.msra.mxu0 %v4734
      %4793 = vmatprep.subr.bf16.mxu0 0
      %4794 = vmatpush1.bf16.msra.mxu0 %v4735
      %4795 = vmatprep.subr.bf16.mxu0 0
      %4796 = vmatpush1.bf16.msra.mxu0 %v4736
      %4797 = vmatprep.subr.bf16.mxu0 0
      %4798 = vmatpush1.bf16.msra.mxu0 0
      %4799 = vmatprep.subr.bf16.mxu0 0
      %4800 = vmatpush1.bf16.msra.mxu0 0
      %4801 = vmatprep.subr.bf16.mxu0 0
      %4802 = vmatpush1.bf16.msra.mxu0 0
      %4803 = vmatprep.subr.bf16.mxu0 0
      %4804 = vmatpush1.bf16.msra.mxu0 0
      %4805 = vmatprep.subr.bf16.mxu0 0
      %4806 = vmatpush1.bf16.msra.mxu0 0
      %4807 = vmatprep.subr.bf16.mxu0 0
      %4808 = vmatpush1.bf16.msra.mxu0 0
      %4809 = vmatprep.subr.bf16.mxu0 0
      %4810 = vmatpush1.bf16.msra.mxu0 0
      %4811 = vmatprep.subr.bf16.mxu0 0
      %4812 = vmatpush1.bf16.msra.mxu0 0
      %4813 = vmatprep.subr.bf16.mxu0 0
      %4814 = vmatpush1.bf16.msra.mxu0 0
      %4815 = vmatprep.subr.bf16.mxu0 0
      %4816 = vmatpush1.bf16.msra.mxu0 0
      %4817 = vmatprep.subr.bf16.mxu0 0
      %4818 = vmatpush1.bf16.msra.mxu0 0
      %4819 = vmatprep.subr.bf16.mxu0 0
      %4820 = vmatpush1.bf16.msra.mxu0 0
      %4821 = vmatprep.mubr.bf16.mxu0 0
      %4822 = vmatmul.mubr.bf16.gmra.mrb[0].mxu0 %v4742
      %v4823 = vpop.f32.mrb[0].mxu0
      %v4824 = vadd.f32 0.0, %v4823
      %v4825 = vpop.f32.mrb[0].mxu0
      %v4826 = vpop.f32.mrb[0].mxu0
      %v4827 = vadd.f32 0.0, %v4826
      %v4828 = vpop.f32.mrb[0].mxu0
      %4829 = vmatprep.mubr.bf16.mxu0 0
      %4830 = vmatmul.mubr.bf16.gmra.mrb[0].mxu0 %v4745
      %v4831 = vpop.f32.mrb[0].mxu0
      %v4832 = vadd.f32 0.0, %v4831
      %v4833 = vpop.f32.mrb[0].mxu0
      %v4834 = vpop.f32.mrb[0].mxu0
      %v4835 = vadd.f32 0.0, %v4834
      %v4836 = vpop.f32.mrb[0].mxu0
      %4837 = vmatprep.mubr.bf16.mxu0 0
      %4838 = vmatmul.mubr.bf16.gmra.mrb[0].mxu0 %v4748
      %v4839 = vpop.f32.mrb[0].mxu0
      %v4840 = vadd.f32 0.0, %v4839
      %v4841 = vpop.f32.mrb[0].mxu0
      %v4842 = vpop.f32.mrb[0].mxu0
      %v4843 = vadd.f32 0.0, %v4842
      %v4844 = vpop.f32.mrb[0].mxu0
      %4845 = vmatprep.mubr.bf16.mxu0 0
      %4846 = vmatmul.mubr.bf16.gmra.mrb[0].mxu0 %v4751
      %v4847 = vpop.f32.mrb[0].mxu0
      %v4848 = vadd.f32 0.0, %v4847
      %v4849 = vpop.f32.mrb[0].mxu0
      %v4850 = vpop.f32.mrb[0].mxu0
      %v4851 = vadd.f32 0.0, %v4850
      %v4852 = vpop.f32.mrb[0].mxu0
      %4853 = vmatprep.mubr.bf16.mxu0 0
      %4854 = vmatmul.mubr.bf16.gmra.mrb[0].mxu0 %v4754
      %v4855 = vpop.f32.mrb[0].mxu0
      %v4856 = vadd.f32 0.0, %v4855
      %v4857 = vpop.f32.mrb[0].mxu0
      %v4858 = vpop.f32.mrb[0].mxu0
      %v4859 = vadd.f32 0.0, %v4858
      %v4860 = vpop.f32.mrb[0].mxu0
      %4861 = vmatprep.mubr.bf16.mxu0 0
      %4862 = vmatmul.mubr.bf16.gmra.mrb[0].mxu0 %v4757
      %v4863 = vpop.f32.mrb[0].mxu0
      %v4864 = vadd.f32 0.0, %v4863
      %v4865 = vpop.f32.mrb[0].mxu0
      %v4866 = vpop.f32.mrb[0].mxu0
      %v4867 = vadd.f32 0.0, %v4866
      %v4868 = vpop.f32.mrb[0].mxu0
      %4869 = vmatprep.mubr.bf16.mxu0 0
      %4870 = vmatmul.mubr.bf16.gmra.mrb[0].mxu0 %v4760
      %v4871 = vpop.f32.mrb[0].mxu0
      %v4872 = vadd.f32 0.0, %v4871
      %v4873 = vpop.f32.mrb[0].mxu0
      %v4874 = vpop.f32.mrb[0].mxu0
      %v4875 = vadd.f32 0.0, %v4874
      %v4876 = vpop.f32.mrb[0].mxu0
      %4877 = vmatprep.mubr.bf16.mxu0 0
      %4878 = vmatmul.mubr.bf16.gmra.mrb[0].mxu0 %v4763
      %v4879 = vpop.f32.mrb[0].mxu0
      %v4880 = vadd.f32 0.0, %v4879
      %v4881 = vpop.f32.mrb[0].mxu0
      %v4882 = vpop.f32.mrb[0].mxu0
      %v4883 = vadd.f32 0.0, %v4882
      %v4884 = vpop.f32.mrb[0].mxu0
      %4885 = vmatprep.mubr.bf16.mxu0 0
      %4886 = vmatmul.mubr.bf16.gmra.mrb[0].mxu0 %v4766
      %v4887 = vpop.f32.mrb[0].mxu0
      %v4888 = vadd.f32 0.0, %v4887
      %v4889 = vpop.f32.mrb[0].mxu0
      %v4890 = vpop.f32.mrb[0].mxu0
      %v4891 = vadd.f32 0.0, %v4890
      %v4892 = vpop.f32.mrb[0].mxu0
      %4893 = vmatprep.mubr.bf16.mxu0 0
      %4894 = vmatmul.mubr.bf16.gmra.mrb[0].mxu0 %v4769
      %v4895 = vpop.f32.mrb[0].mxu0
      %v4896 = vadd.f32 0.0, %v4895
      %v4897 = vpop.f32.mrb[0].mxu0
      %v4898 = vpop.f32.mrb[0].mxu0
      %v4899 = vadd.f32 0.0, %v4898
      %v4900 = vpop.f32.mrb[0].mxu0
      %4901 = vmatprep.mubr.bf16.mxu0 0
      %4902 = vmatmul.mubr.bf16.gmra.mrb[0].mxu0 %v4772
      %v4903 = vpop.f32.mrb[0].mxu0
      %v4904 = vadd.f32 0.0, %v4903
      %v4905 = vpop.f32.mrb[0].mxu0
      %v4906 = vpop.f32.mrb[0].mxu0
      %v4907 = vadd.f32 0.0, %v4906
      %v4908 = vpop.f32.mrb[0].mxu0
      %4909 = vmatprep.mubr.bf16.mxu0 0
      %4910 = vmatmul.mubr.bf16.gmra.mrb[0].mxu0 %v4775
      %v4911 = vpop.f32.mrb[0].mxu0
      %v4912 = vadd.f32 0.0, %v4911
      %v4913 = vpop.f32.mrb[0].mxu0
      %v4914 = vpop.f32.mrb[0].mxu0
      %v4915 = vadd.f32 0.0, %v4914
      %v4916 = vpop.f32.mrb[0].mxu0
      %4917 = vmatprep.mubr.bf16.mxu0 0
      %4918 = vmatmul.mubr.bf16.gmra.mrb[0].mxu0 %v4778
      %v4919 = vpop.f32.mrb[0].mxu0
      %v4920 = vadd.f32 0.0, %v4919
      %v4921 = vpop.f32.mrb[0].mxu0
      %v4922 = vpop.f32.mrb[0].mxu0
      %v4923 = vadd.f32 0.0, %v4922
      %v4924 = vpop.f32.mrb[0].mxu0
      %4925 = vmatprep.mubr.bf16.mxu0 0
      %4926 = vmatmul.mubr.bf16.gmra.mrb[0].mxu0 %v4781
      %v4927 = vpop.f32.mrb[0].mxu0
      %v4928 = vadd.f32 0.0, %v4927
      %v4929 = vpop.f32.mrb[0].mxu0
      %v4930 = vpop.f32.mrb[0].mxu0
      %v4931 = vadd.f32 0.0, %v4930
      %v4932 = vpop.f32.mrb[0].mxu0
      %4933 = vmatprep.mubr.bf16.mxu0 0
      %4934 = vmatmul.mubr.bf16.gmra.mrb[0].mxu0 %v4784
      %v4935 = vpop.f32.mrb[0].mxu0
      %v4936 = vadd.f32 0.0, %v4935
      %v4937 = vpop.f32.mrb[0].mxu0
      %v4938 = vpop.f32.mrb[0].mxu0
      %v4939 = vadd.f32 0.0, %v4938
      %v4940 = vpop.f32.mrb[0].mxu0
      %4941 = vmatprep.mubr.bf16.mxu0 0
      %4942 = vmatmul.mubr.bf16.gmra.mrb[0].mxu0 %v4787
      %v4943 = vpop.f32.mrb[0].mxu0
      %v4944 = vadd.f32 0.0, %v4943
      %v4945 = vpop.f32.mrb[0].mxu0
      %v4946 = vpop.f32.mrb[0].mxu0
      %v4947 = vadd.f32 0.0, %v4946
      %v4948 = vpop.f32.mrb[0].mxu0
      %4949 = vdwg.mxu0
      %v4950 = vadd.f32 %v4452, %v4824
      %v4951 = vadd.f32 %v4453, %v4827
      %v4952 = vadd.f32 %v4454, %v4832
      %v4953 = vadd.f32 %v4455, %v4835
      %v4954 = vadd.f32 %v4456, %v4840
      %v4955 = vadd.f32 %v4457, %v4843
      %v4956 = vadd.f32 %v4458, %v4848
      %v4957 = vadd.f32 %v4459, %v4851
      %v4958 = vadd.f32 %v4460, %v4856
      %v4959 = vadd.f32 %v4461, %v4859
      %v4960 = vadd.f32 %v4462, %v4864
      %v4961 = vadd.f32 %v4463, %v4867
      %v4962 = vadd.f32 %v4464, %v4872
      %v4963 = vadd.f32 %v4465, %v4875
      %v4964 = vadd.f32 %v4466, %v4880
      %v4965 = vadd.f32 %v4467, %v4883
      %v4966 = vadd.f32 %v4468, %v4888
      %v4967 = vadd.f32 %v4469, %v4891
      %v4968 = vadd.f32 %v4470, %v4896
      %v4969 = vadd.f32 %v4471, %v4899
      %v4970 = vadd.f32 %v4472, %v4904
      %v4971 = vadd.f32 %v4473, %v4907
      %v4972 = vadd.f32 %v4474, %v4912
      %v4973 = vadd.f32 %v4475, %v4915
      %v4974 = vadd.f32 %v4476, %v4920
      %v4975 = vadd.f32 %v4477, %v4923
      %v4976 = vadd.f32 %v4478, %v4928
      %v4977 = vadd.f32 %v4479, %v4931
      %v4978 = vadd.f32 %v4480, %v4936
      %v4979 = vadd.f32 %v4481, %v4939
      %v4980 = vadd.f32 %v4482, %v4944
      %v4981 = vadd.f32 %v4483, %v4947
      %v4982 = vld [vmem:[%s2] sm:$0x1]
      %v4984 = vlaneseq
      %v4985 = vshrl.u32 %v4984, 7
      %v4986 = vsub.s32 0, %v4985
      %v4987 = vrot.slane %v4982, %v4986
      %v4989 = vadd.f32 %v4950, %v4987
      %v4990 = vadd.f32 %v4951, %v4987
      %v4991 = vadd.f32 %v4952, %v4987
      %v4992 = vadd.f32 %v4953, %v4987
      %v4993 = vadd.f32 %v4954, %v4987
      %v4994 = vadd.f32 %v4955, %v4987
      %v4995 = vadd.f32 %v4956, %v4987
      %v4996 = vadd.f32 %v4957, %v4987
      %v4997 = vadd.f32 %v4958, %v4987
      %v4998 = vadd.f32 %v4959, %v4987
      %v4999 = vadd.f32 %v4960, %v4987
      %v5000 = vadd.f32 %v4961, %v4987
      %v5001 = vadd.f32 %v4962, %v4987
      %v5002 = vadd.f32 %v4963, %v4987
      %v5003 = vadd.f32 %v4964, %v4987
      %v5004 = vadd.f32 %v4965, %v4987
      %v5005 = vadd.f32 %v4966, %v4987
      %v5006 = vadd.f32 %v4967, %v4987
      %v5007 = vadd.f32 %v4968, %v4987
      %v5008 = vadd.f32 %v4969, %v4987
      %v5009 = vadd.f32 %v4970, %v4987
      %v5010 = vadd.f32 %v4971, %v4987
      %v5011 = vadd.f32 %v4972, %v4987
      %v5012 = vadd.f32 %v4973, %v4987
      %v5013 = vadd.f32 %v4974, %v4987
      %v5014 = vadd.f32 %v4975, %v4987
      %v5015 = vadd.f32 %v4976, %v4987
      %v5016 = vadd.f32 %v4977, %v4987
      %v5017 = vadd.f32 %v4978, %v4987
      %v5018 = vadd.f32 %v4979, %v4987
      %v5019 = vadd.f32 %v4980, %v4987
      %v5020 = vadd.f32 %v4981, %v4987
      %v5021 = vmax.f32 %v4989, 0.0
      %v5022 = vmax.f32 %v4990, 0.0
      %v5023 = vmax.f32 %v4991, 0.0
      %v5024 = vmax.f32 %v4992, 0.0
      %v5025 = vmax.f32 %v4993, 0.0
      %v5026 = vmax.f32 %v4994, 0.0
      %v5027 = vmax.f32 %v4995, 0.0
      %v5028 = vmax.f32 %v4996, 0.0
      %v5029 = vmax.f32 %v4997, 0.0
      %v5030 = vmax.f32 %v4998, 0.0
      %v5031 = vmax.f32 %v4999, 0.0
      %v5032 = vmax.f32 %v5000, 0.0
      %v5033 = vmax.f32 %v5001, 0.0
      %v5034 = vmax.f32 %v5002, 0.0
      %v5035 = vmax.f32 %v5003, 0.0
      %v5036 = vmax.f32 %v5004, 0.0
      %v5037 = vmax.f32 %v5005, 0.0
      %v5038 = vmax.f32 %v5006, 0.0
      %v5039 = vmax.f32 %v5007, 0.0
      %v5040 = vmax.f32 %v5008, 0.0
      %v5041 = vmax.f32 %v5009, 0.0
      %v5042 = vmax.f32 %v5010, 0.0
      %v5043 = vmax.f32 %v5011, 0.0
      %v5044 = vmax.f32 %v5012, 0.0
      %v5045 = vmax.f32 %v5013, 0.0
      %v5046 = vmax.f32 %v5014, 0.0
      %v5047 = vmax.f32 %v5015, 0.0
      %v5048 = vmax.f32 %v5016, 0.0
      %v5049 = vmax.f32 %v5017, 0.0
      %v5050 = vmax.f32 %v5018, 0.0
      %v5051 = vmax.f32 %v5019, 0.0
      %v5052 = vmax.f32 %v5020, 0.0
      %v5053 = vsel %vm696, %v5021, -inf
      %v5054 = vsel %vm696, %v5023, -inf
      %v5055 = vmax.f32 %v5053, %v5054
      %v5056 = vsel %vm696, %v5022, -inf
      %v5057 = vsel %vm696, %v5024, -inf
      %v5058 = vmax.f32 %v5056, %v5057
      %v5059 = vsel %vm696, %v5025, -inf
      %v5060 = vsel %vm696, %v5027, -inf
      %v5061 = vmax.f32 %v5059, %v5060
      %v5062 = vsel %vm696, %v5026, -inf
      %v5063 = vsel %vm696, %v5028, -inf
      %v5064 = vmax.f32 %v5062, %v5063
      %v5065 = vsel %vm696, %v5029, -inf
      %v5066 = vsel %vm696, %v5031, -inf
      %v5067 = vmax.f32 %v5065, %v5066
      %v5068 = vsel %vm696, %v5030, -inf
      %v5069 = vsel %vm696, %v5032, -inf
      %v5070 = vmax.f32 %v5068, %v5069
      %v5071 = vsel %vm696, %v5033, -inf
      %v5072 = vsel %vm696, %v5035, -inf
      %v5073 = vmax.f32 %v5071, %v5072
      %v5074 = vsel %vm696, %v5034, -inf
      %v5075 = vsel %vm696, %v5036, -inf
      %v5076 = vmax.f32 %v5074, %v5075
      %v5077 = vsel %vm696, %v5037, -inf
      %v5078 = vsel %vm696, %v5039, -inf
      %v5079 = vmax.f32 %v5077, %v5078
      %v5080 = vsel %vm696, %v5038, -inf
      %v5081 = vsel %vm696, %v5040, -inf
      %v5082 = vmax.f32 %v5080, %v5081
      %v5083 = vsel %vm696, %v5041, -inf
      %v5084 = vsel %vm696, %v5043, -inf
      %v5085 = vmax.f32 %v5083, %v5084
      %v5086 = vsel %vm696, %v5042, -inf
      %v5087 = vsel %vm696, %v5044, -inf
      %v5088 = vmax.f32 %v5086, %v5087
      %v5089 = vsel %vm696, %v5045, -inf
      %v5090 = vsel %vm696, %v5047, -inf
      %v5091 = vmax.f32 %v5089, %v5090
      %v5092 = vsel %vm696, %v5046, -inf
      %v5093 = vsel %vm696, %v5048, -inf
      %v5094 = vmax.f32 %v5092, %v5093
      %v5095 = vsel %vm696, %v5049, -inf
      %v5096 = vsel %vm696, %v5051, -inf
      %v5097 = vmax.f32 %v5095, %v5096
      %v5098 = vsel %vm696, %v5050, -inf
      %v5099 = vsel %vm696, %v5052, -inf
      %v5100 = vmax.f32 %v5098, %v5099
      %v5101 = vpack.c.bf16 %v5058, %v5055
      %v5102 = vpack.c.bf16 %v5064, %v5061
      %v5103 = vpack.c.bf16 %v5070, %v5067
      %v5104 = vpack.c.bf16 %v5076, %v5073
      %v5105 = vpack.c.bf16 %v5082, %v5079
      %v5106 = vpack.c.bf16 %v5088, %v5085
      %v5107 = vpack.c.bf16 %v5094, %v5091
      %v5108 = vpack.c.bf16 %v5100, %v5097
      %v5117 = vunpack.c.l.b16 %v5101
      %v5118 = vunpack.c.h.b16 %v5101
      %v5119 = vunpack.c.l.b16 %v5102
      %v5120 = vunpack.c.h.b16 %v5102
      %v5121 = vunpack.c.l.b16 %v5103
      %v5122 = vunpack.c.h.b16 %v5103
      %v5123 = vunpack.c.l.b16 %v5104
      %v5124 = vunpack.c.h.b16 %v5104
      %v5125 = vunpack.c.l.b16 %v5105
      %v5126 = vunpack.c.h.b16 %v5105
      %v5127 = vunpack.c.l.b16 %v5106
      %v5128 = vunpack.c.h.b16 %v5106
      %v5129 = vunpack.c.l.b16 %v5107
      %v5130 = vunpack.c.h.b16 %v5107
      %v5131 = vunpack.c.l.b16 %v5108
      %v5132 = vunpack.c.h.b16 %v5108
      %v5133 = vpack.c.b16 %v5117, %v5117
      %v5134 = vpack.c.b16 %v5118, %v5118
      %v5135 = vpack.c.b16 %v5119, %v5119
      %v5136 = vpack.c.b16 %v5120, %v5120
      %v5137 = vpack.c.b16 %v5121, %v5121
      %v5138 = vpack.c.b16 %v5122, %v5122
      %v5139 = vpack.c.b16 %v5123, %v5123
      %v5140 = vpack.c.b16 %v5124, %v5124
      %v5141 = vpack.c.b16 %v5125, %v5125
      %v5142 = vpack.c.b16 %v5126, %v5126
      %v5143 = vpack.c.b16 %v5127, %v5127
      %v5144 = vpack.c.b16 %v5128, %v5128
      %v5145 = vpack.c.b16 %v5129, %v5129
      %v5146 = vpack.c.b16 %v5130, %v5130
      %v5147 = vpack.c.b16 %v5131, %v5131
      %v5148 = vpack.c.b16 %v5132, %v5132
      %vm5165 = vcmask 519168
      %5166 = vst.msk [vmem:[%s170] sm:$0xf] %vm5165, %v5133
      %5167 = vst.msk [vmem:[%s170 + $0x4] sm:$0xf] %vm5165, %v5134
      %5168 = vst.msk [vmem:[%s170 + $0x8] sm:$0xf] %vm5165, %v5135
      %5169 = vst.msk [vmem:[%s170 + $0xc] sm:$0xf] %vm5165, %v5136
      %5170 = vst.msk [vmem:[%s170 + $0x10] sm:$0xf] %vm5165, %v5137
      %5171 = vst.msk [vmem:[%s170 + $0x14] sm:$0xf] %vm5165, %v5138
      %5172 = vst.msk [vmem:[%s170 + $0x18] sm:$0xf] %vm5165, %v5139
      %5173 = vst.msk [vmem:[%s170 + $0x1c] sm:$0xf] %vm5165, %v5140
      %5174 = vst.msk [vmem:[%s170 + $0x20] sm:$0xf] %vm5165, %v5141
      %5175 = vst.msk [vmem:[%s170 + $0x24] sm:$0xf] %vm5165, %v5142
      %5176 = vst.msk [vmem:[%s170 + $0x28] sm:$0xf] %vm5165, %v5143
      %5177 = vst.msk [vmem:[%s170 + $0x2c] sm:$0xf] %vm5165, %v5144
      %5178 = vst.msk [vmem:[%s170 + $0x30] sm:$0xf] %vm5165, %v5145
      %5179 = vst.msk [vmem:[%s170 + $0x34] sm:$0xf] %vm5165, %v5146
      %5180 = vst.msk [vmem:[%s170 + $0x38] sm:$0xf] %vm5165, %v5147
      %5181 = vst.msk [vmem:[%s170 + $0x3c] sm:$0xf] %vm5165, %v5148
      %p5182 = scmp.lt.s32.totalorder %s14, 1
      %s5183 = scalar_select %p5182, %s14, 1
      %s5184 = smul.addr %s5183, 16
      %s5185 = smul.addr %s5184, 4
      %s5186 = scalar_lea.vmem %s3, %s5185
      // Predicated region
      $region33: #{generator_loss.12} parent=31 // pred_check
        %p5187 = pneg %p100
      $region34: #{generator_loss.12} parent=31 // pred_check_branch
        %5189 = sbr.rel (%p5187) target = $region36
      $region35: #{generator_loss.12} parent=31 // pred_region
        _
      $region36: #{generator_loss.12} parent=31 // pred_fallthru
        _
    $region32: #{generator_loss.12} parent=5 // pred_fallthru
      _
    %p5190 = scmp.le.s32.totalorder 2, %s9
    // Predicated region
    $region37: #{generator_loss.12} parent=5 // pred_check
      %p5191 = pneg %p5190
    $region38: #{generator_loss.12} parent=5 // pred_check_branch
      %5193 = sbr.rel (%p5191) target = $region40
    $region39: #{generator_loss.12} parent=5 // pred_region
      %s5194 = ssub.s32 %s9, 2
      // Predicated region
      $region41: #{generator_loss.12} parent=39 // pred_check
        %p5195 = pneg %p106
      $region42: #{generator_loss.12} parent=39 // pred_check_branch
        %5197 = sbr.rel (%p5195) target = $region44
      $region43: #{generator_loss.12} parent=39 // pred_region
        %p5198 = scmp.lt.s32.totalorder %s15, 1
        %s5199 = scalar_select %p5198, %s15, 1
        %s5200 = smul.addr %s5199, 16
        %s5201 = smul.addr %s5200, 4
        %s5202 = scalar_lea.vmem %s3, %s5201
      $region44: #{generator_loss.12} parent=39 // pred_fallthru
        _
    $region40: #{generator_loss.12} parent=5 // pred_fallthru
      _
  $region6: #{generator_loss.12} parent=0 // loop_footer
    %s13 = sadd.s32 1, %s9
  $region7: #{generator_loss.12} parent=0 // loop_footer_branch
    %8 = sbr.rel target = $region3
  $region8: #{generator_loss.12} parent=0 // loop_exit
    _

// kernel: generator_loss.14
$region0: #{generator_loss.14}
  #allocation0 [shape = 'u32[]', space=smem, size = 0x4, offset = 0x4, fixed_abs, tag = 'smem constant byte address 0x4 - core index']
  #allocation1 [shape = 'u32[144,128]{1,0:T(1,128)}', space=vmem, size = 0x12000, scoped, tag = 'internal scratch']
  %s0 = inlined_call_operand.vmem [shape: bf16[2,10,10,128], index: 0, kind: input, shape index: {}]
  %s1 = inlined_call_operand.vmem [shape: bf16[2,10,10,128], index: 1, kind: input, shape index: {}]
  %s2 = inlined_call_operand.vmem [shape: bf16[9,128,128], index: 2, kind: input, shape index: {}]
  %s3 = inlined_call_operand.vmem [shape: f32[1,128], index: 3, kind: input, shape index: {}]
  %s4 = inlined_call_operand.vmem [shape: f32[2,1,128], index: 4, kind: output, shape index: {}]
  %s5 = sld [smem:[#allocation0]]
  $region49: #{generator_loss.14} parent=0
    _
  %s7 = ssub.s32 1, %s5
  %s8 = scalar_select 0, %s7, %s5
  loop: start=0, step=1, limit=4
  $region2: #{generator_loss.14} parent=0 // loop_pre_header
    _
  $region3: #{generator_loss.14} parent=0 // loop_header
    %s10 = sphi 0, %s14
    %p11 = scmp.ge.s32.totalorder %s10, 4
    %s20 = sphi 0, %s22
    %s23 = sphi 0, %s20
    %s24 = sphi 0, %s23
    %s40 = sphi 0, %s24
    %s46 = sphi 0, %s48
    %s49 = sphi 0, %s46
    %s50 = sphi 0, %s49
    %s66 = sphi 0, %s50
    %s70 = sphi 0, %s70
    %s72 = sphi 0, %s70
    %s73 = sphi 0, %s72
    %s87 = sphi 0, %s73
    %s91 = sphi 0, %s91
    %s93 = sphi 0, %s91
    %s94 = sphi 0, %s93
    %s108 = sphi 0, %s94
    %s114 = sphi 0, %s116
    %s117 = sphi 0, %s114
    %s118 = sphi 0, %s117
    %s134 = sphi 0, %s118
  $region4: #{generator_loss.14} parent=0 // loop_header_branch
    %13 = sbr.rel (%p11) target = $region8
  $region5: #{generator_loss.14} parent=0 // loop_body
    %s15 = ssub.s32 %s10, 1
    %s16 = ssub.s32 %s10, 2
    %s17 = sadd.s32 %s10, 1
    %s18 = ssub.s32 %s10, %s17
    %p19 = scmp.eq.s32.totalorder %s18, 0
    %s21 = sadd.s32 %s20, 1
    %s22 = scalar_select %p19, %s20, %s21
    %p25 = pneg %p19
    %p26 = scmp.eq.s32.totalorder %s10, 1
    %p27 = por %p25, %p26
    %p28 = scmp.ne.s32.totalorder %s20, %s23
    %p29 = scmp.eq.s32.totalorder %s10, 0
    %p30 = por %p28, %p29
    %p31 = scmp.ne.s32.totalorder %s20, %s23
    %p32 = scmp.eq.s32.totalorder %s15, 1
    %p33 = por %p31, %p32
    %p34 = scmp.ne.s32.totalorder %s23, %s24
    %p35 = scmp.eq.s32.totalorder %s15, 0
    %p36 = por %p34, %p35
    %p37 = scmp.ne.s32.totalorder %s23, %s24
    %p38 = scmp.eq.s32.totalorder %s16, 1
    %p39 = por %p37, %p38
    %p41 = scmp.ne.s32.totalorder %s24, %s40
    %p42 = scmp.eq.s32.totalorder %s16, 0
    %p43 = por %p41, %p42
    %s44 = ssub.s32 %s10, %s17
    %p45 = scmp.eq.s32.totalorder %s44, 0
    %s47 = sadd.s32 %s46, 1
    %s48 = scalar_select %p45, %s46, %s47
    %p51 = pneg %p45
    %p52 = scmp.eq.s32.totalorder %s10, 1
    %p53 = por %p51, %p52
    %p54 = scmp.ne.s32.totalorder %s46, %s49
    %p55 = scmp.eq.s32.totalorder %s10, 0
    %p56 = por %p54, %p55
    %p57 = scmp.ne.s32.totalorder %s46, %s49
    %p58 = scmp.eq.s32.totalorder %s15, 1
    %p59 = por %p57, %p58
    %p60 = scmp.ne.s32.totalorder %s49, %s50
    %p61 = scmp.eq.s32.totalorder %s15, 0
    %p62 = por %p60, %p61
    %p63 = scmp.ne.s32.totalorder %s49, %s50
    %p64 = scmp.eq.s32.totalorder %s16, 1
    %p65 = por %p63, %p64
    %p67 = scmp.ne.s32.totalorder %s50, %s66
    %p68 = scmp.eq.s32.totalorder %s16, 0
    %p69 = por %p67, %p68
    %s71 = sadd.s32 %s70, 1
    %p74 = scmp.eq.s32.totalorder %s10, 1
    %p75 = scmp.ne.s32.totalorder %s70, %s72
    %p76 = scmp.eq.s32.totalorder %s10, 0
    %p77 = por %p75, %p76
    %p78 = scmp.ne.s32.totalorder %s70, %s72
    %p79 = scmp.eq.s32.totalorder %s15, 1
    %p80 = por %p78, %p79
    %p81 = scmp.ne.s32.totalorder %s72, %s73
    %p82 = scmp.eq.s32.totalorder %s15, 0
    %p83 = por %p81, %p82
    %p84 = scmp.ne.s32.totalorder %s72, %s73
    %p85 = scmp.eq.s32.totalorder %s16, 1
    %p86 = por %p84, %p85
    %p88 = scmp.ne.s32.totalorder %s73, %s87
    %p89 = scmp.eq.s32.totalorder %s16, 0
    %p90 = por %p88, %p89
    %s92 = sadd.s32 %s91, 1
    %p95 = scmp.eq.s32.totalorder %s10, 1
    %p96 = scmp.ne.s32.totalorder %s91, %s93
    %p97 = scmp.eq.s32.totalorder %s10, 0
    %p98 = por %p96, %p97
    %p99 = scmp.ne.s32.totalorder %s91, %s93
    %p100 = scmp.eq.s32.totalorder %s15, 1
    %p101 = por %p99, %p100
    %p102 = scmp.ne.s32.totalorder %s93, %s94
    %p103 = scmp.eq.s32.totalorder %s15, 0
    %p104 = por %p102, %p103
    %p105 = scmp.ne.s32.totalorder %s93, %s94
    %p106 = scmp.eq.s32.totalorder %s16, 1
    %p107 = por %p105, %p106
    %p109 = scmp.ne.s32.totalorder %s94, %s108
    %p110 = scmp.eq.s32.totalorder %s16, 0
    %p111 = por %p109, %p110
    %s112 = ssub.s32 %s10, %s17
    %p113 = scmp.eq.s32.totalorder %s112, 0
    %s115 = sadd.s32 %s114, 1
    %s116 = scalar_select %p113, %s114, %s115
    %p119 = pneg %p113
    %p120 = scmp.eq.s32.totalorder %s10, 1
    %p121 = por %p119, %p120
    %p122 = scmp.ne.s32.totalorder %s114, %s117
    %p123 = scmp.eq.s32.totalorder %s10, 0
    %p124 = por %p122, %p123
    %p125 = scmp.ne.s32.totalorder %s114, %s117
    %p126 = scmp.eq.s32.totalorder %s15, 1
    %p127 = por %p125, %p126
    %p128 = scmp.ne.s32.totalorder %s117, %s118
    %p129 = scmp.eq.s32.totalorder %s15, 0
    %p130 = por %p128, %p129
    %p131 = scmp.ne.s32.totalorder %s117, %s118
    %p132 = scmp.eq.s32.totalorder %s16, 1
    %p133 = por %p131, %p132
    %p135 = scmp.ne.s32.totalorder %s118, %s134
    %p136 = scmp.eq.s32.totalorder %s16, 0
    %p137 = por %p135, %p136
    %p138 = scmp.le.s32.totalorder 1, %s10
    %p139 = scmp.lt.s32.totalorder %s10, 3
    %p140 = pnand %p138, %p139
    %p141 = pneg %p140
    // Predicated region
    $region9: #{generator_loss.14} parent=5 // pred_check
      _
    $region10: #{generator_loss.14} parent=5 // pred_check_branch
      %143 = sbr.rel (%p140) target = $region12
    $region11: #{generator_loss.14} parent=5 // pred_region
      %s144 = ssub.s32 %s10, 1
      // Predicated region
      $region13: #{generator_loss.14} parent=11 // pred_check
        %p145 = pneg %p83
      $region14: #{generator_loss.14} parent=11 // pred_check_branch
        %147 = sbr.rel (%p145) target = $region16
      $region15: #{generator_loss.14} parent=11 // pred_region
        _
      $region16: #{generator_loss.14} parent=11 // pred_fallthru
        _
      // Predicated region
      $region17: #{generator_loss.14} parent=11 // pred_check
        %p148 = pneg %p104
      $region18: #{generator_loss.14} parent=11 // pred_check_branch
        %150 = sbr.rel (%p148) target = $region20
      $region19: #{generator_loss.14} parent=11 // pred_region
        _
      $region20: #{generator_loss.14} parent=11 // pred_fallthru
        _
    $region12: #{generator_loss.14} parent=5 // pred_fallthru
      _
    %p151 = scmp.lt.s32.totalorder %s10, 2
    // Predicated region
    $region21: #{generator_loss.14} parent=5 // pred_check
      %p152 = pneg %p151
    $region22: #{generator_loss.14} parent=5 // pred_check_branch
      %154 = sbr.rel (%p152) target = $region24
    $region23: #{generator_loss.14} parent=5 // pred_region
      // Predicated region
      $region25: #{generator_loss.14} parent=23 // pred_check
        %p155 = pneg %p30
      $region26: #{generator_loss.14} parent=23 // pred_check_branch
        %157 = sbr.rel (%p155) target = $region28
      $region27: #{generator_loss.14} parent=23 // pred_region
        %p158 = scmp.lt.s32.totalorder %s10, 1
        %s159 = scalar_select %p158, %s10, 1
        %s160 = smul.addr %s159, 20
        %s161 = smul.addr %s160, 4
        %s162 = scalar_lea.vmem %s0, %s161
      $region28: #{generator_loss.14} parent=23 // pred_fallthru
        _
      // Predicated region
      $region29: #{generator_loss.14} parent=23 // pred_check
        %p163 = pneg %p56
      $region30: #{generator_loss.14} parent=23 // pred_check_branch
        %165 = sbr.rel (%p163) target = $region32
      $region31: #{generator_loss.14} parent=23 // pred_region
        %p166 = scmp.lt.s32.totalorder %s10, 1
        %s167 = scalar_select %p166, %s10, 1
        %s168 = smul.addr %s167, 20
        %s169 = smul.addr %s168, 4
        %s170 = scalar_lea.vmem %s1, %s169
      $region32: #{generator_loss.14} parent=23 // pred_fallthru
        _
    $region24: #{generator_loss.14} parent=5 // pred_fallthru
      _
    %p171 = scmp.le.s32.totalorder 1, %s10
    %p172 = scmp.lt.s32.totalorder %s10, 3
    %p173 = pnand %p171, %p172
    %p174 = pneg %p173
    // Predicated region
    $region33: #{generator_loss.14} parent=5 // pred_check
      _
    $region34: #{generator_loss.14} parent=5 // pred_check_branch
      %176 = sbr.rel (%p173) target = $region36
    $region35: #{generator_loss.14} parent=5 // pred_region
      %s177 = ssub.s32 %s10, 1
      %p178 = scmp.lt.s32.totalorder %s15, 1
      %s179 = scalar_select %p178, %s15, 1
      %s180 = smul.addr %s179, 20
      %s181 = smul.addr %s180, 4
      %s182 = scalar_lea.vmem %s0, %s181
      %p183 = pneg %p36
      %p184 = pneg %p33
      %p185 = scmp.lt.s32.totalorder %s15, 1
      %s186 = scalar_select %p185, %s15, 1
      %s187 = smul.addr %s186, 20
      %s188 = smul.addr %s187, 4
      %s189 = scalar_lea.vmem %s1, %s188
      %p190 = pneg %p62
      %p191 = pneg %p59
      %p192 = pneg %p83
      %p193 = pneg %p80
      %p194 = pneg %p104
      %p195 = pneg %p101
      %p196 = pneg %p130
      %p197 = pneg %p127
      %p198 = scmp.lt.s32.totalorder %s15, 1
      %s199 = scalar_select %p198, %s15, 1
      %s200 = scalar_lea.vmem %s4, %s199
      %p201 = scmp.lt.s32.totalorder %s15, 1
      %s202 = scalar_select %p201, %s15, 1
      %s203 = smul.addr %s202, 20
      %s204 = smul.addr %s203, 4
      %s205 = scalar_lea.vmem %s0, %s204
      %p206 = scmp.lt.s32.totalorder %s15, 1
      %s207 = scalar_select %p206, %s15, 1
      %s208 = smul.addr %s207, 20
      %s209 = smul.addr %s208, 4
      %s210 = scalar_lea.vmem %s1, %s209
      %p211 = scmp.lt.s32.totalorder %s15, 1
      %s212 = scalar_select %p211, %s15, 1
      %s213 = scalar_lea.vmem %s4, %s212
      %v215 = vld [vmem:[%s205] sm:$0xf]
      %v216 = vld [vmem:[%s205 + $0x8] sm:$0xf]
      %v217 = vld [vmem:[%s205 + $0x10] sm:$0xf]
      %v218 = vld [vmem:[%s205 + $0x18] sm:$0xf]
      %v219 = vld [vmem:[%s205 + $0x20] sm:$0xf]
      %v220 = vld [vmem:[%s205 + $0x28] sm:$0xf]
      %v221 = vld [vmem:[%s205 + $0x30] sm:$0xf]
      %v222 = vld [vmem:[%s205 + $0x38] sm:$0xf]
      %v223 = vld [vmem:[%s2] sm:$0xf]
      %v224 = vld [vmem:[%s2 + $0x4] sm:$0xf]
      %v225 = vld [vmem:[%s2 + $0x8] sm:$0xf]
      %v226 = vld [vmem:[%s2 + $0xc] sm:$0xf]
      %v227 = vld [vmem:[%s2 + $0x10] sm:$0xf]
      %v228 = vld [vmem:[%s2 + $0x14] sm:$0xf]
      %v229 = vld [vmem:[%s2 + $0x18] sm:$0xf]
      %v230 = vld [vmem:[%s2 + $0x1c] sm:$0xf]
      %v231 = vld [vmem:[%s2 + $0x20] sm:$0xf]
      %v232 = vld [vmem:[%s2 + $0x24] sm:$0xf]
      %v233 = vld [vmem:[%s2 + $0x28] sm:$0xf]
      %v234 = vld [vmem:[%s2 + $0x2c] sm:$0xf]
      %v235 = vld [vmem:[%s2 + $0x30] sm:$0xf]
      %v236 = vld [vmem:[%s2 + $0x34] sm:$0xf]
      %v237 = vld [vmem:[%s2 + $0x38] sm:$0xf]
      %v238 = vld [vmem:[%s2 + $0x3c] sm:$0xf]
      %v239 = vld [vmem:[%s205 + $0x4] sm:$0x1]
      %v240 = vld [vmem:[%s205 + $0xc] sm:$0x1]
      %v241 = vld [vmem:[%s205 + $0x14] sm:$0x1]
      %v242 = vld [vmem:[%s205 + $0x1c] sm:$0x1]
      %v243 = vld [vmem:[%s205 + $0x24] sm:$0x1]
      %v244 = vld [vmem:[%s205 + $0x2c] sm:$0x1]
      %v245 = vld [vmem:[%s205 + $0x34] sm:$0x1]
      %v246 = vld [vmem:[%s205 + $0x3c] sm:$0x1]
      %vm247 = vsmask.f32 3328
      %vm248 = vsmask.f32 7440
      %vm249 = vmor %vm247, %vm248
      %v251 = vshrl.u32 %v215, 16
      %v253 = vrot.slane %v251, 4
      %v254 = vshll.u32 %v215, 16
      %v256 = vrot.slane %v254, 5
      %v257 = vor.u32 %v253, %v256
      %v258 = vrot.slane %v257, 4
      %v260 = vshll.u32 %v239, 16
      %v262 = vrot.slane %v260, 5
      %v263 = vsel %vm249, %v258, %v262
      %v265 = vshrl.u32 %v216, 16
      %v267 = vrot.slane %v265, 4
      %v268 = vshll.u32 %v216, 16
      %v270 = vrot.slane %v268, 5
      %v271 = vor.u32 %v267, %v270
      %v272 = vrot.slane %v271, 4
      %v274 = vshll.u32 %v240, 16
      %v276 = vrot.slane %v274, 5
      %v277 = vsel %vm249, %v272, %v276
      %v279 = vshrl.u32 %v217, 16
      %v281 = vrot.slane %v279, 4
      %v282 = vshll.u32 %v217, 16
      %v284 = vrot.slane %v282, 5
      %v285 = vor.u32 %v281, %v284
      %v286 = vrot.slane %v285, 4
      %v288 = vshll.u32 %v241, 16
      %v290 = vrot.slane %v288, 5
      %v291 = vsel %vm249, %v286, %v290
      %v293 = vshrl.u32 %v218, 16
      %v295 = vrot.slane %v293, 4
      %v296 = vshll.u32 %v218, 16
      %v298 = vrot.slane %v296, 5
      %v299 = vor.u32 %v295, %v298
      %v300 = vrot.slane %v299, 4
      %v302 = vshll.u32 %v242, 16
      %v304 = vrot.slane %v302, 5
      %v305 = vsel %vm249, %v300, %v304
      %v307 = vshrl.u32 %v219, 16
      %v309 = vrot.slane %v307, 4
      %v310 = vshll.u32 %v219, 16
      %v312 = vrot.slane %v310, 5
      %v313 = vor.u32 %v309, %v312
      %v314 = vrot.slane %v313, 4
      %v316 = vshll.u32 %v243, 16
      %v318 = vrot.slane %v316, 5
      %v319 = vsel %vm249, %v314, %v318
      %v321 = vshrl.u32 %v220, 16
      %v323 = vrot.slane %v321, 4
      %v324 = vshll.u32 %v220, 16
      %v326 = vrot.slane %v324, 5
      %v327 = vor.u32 %v323, %v326
      %v328 = vrot.slane %v327, 4
      %v330 = vshll.u32 %v244, 16
      %v332 = vrot.slane %v330, 5
      %v333 = vsel %vm249, %v328, %v332
      %v335 = vshrl.u32 %v221, 16
      %v337 = vrot.slane %v335, 4
      %v338 = vshll.u32 %v221, 16
      %v340 = vrot.slane %v338, 5
      %v341 = vor.u32 %v337, %v340
      %v342 = vrot.slane %v341, 4
      %v344 = vshll.u32 %v245, 16
      %v346 = vrot.slane %v344, 5
      %v347 = vsel %vm249, %v342, %v346
      %v349 = vshrl.u32 %v222, 16
      %v351 = vrot.slane %v349, 4
      %v352 = vshll.u32 %v222, 16
      %v354 = vrot.slane %v352, 5
      %v355 = vor.u32 %v351, %v354
      %v356 = vrot.slane %v355, 4
      %v358 = vshll.u32 %v246, 16
      %v360 = vrot.slane %v358, 5
      %v361 = vsel %vm249, %v356, %v360
      %s362 = scalar_lea.vmem %s2, 64
      %v363 = vld [vmem:[%s362] sm:$0xf]
      %v364 = vld [vmem:[%s362 + $0x4] sm:$0xf]
      %v365 = vld [vmem:[%s362 + $0x8] sm:$0xf]
      %v366 = vld [vmem:[%s362 + $0xc] sm:$0xf]
      %v367 = vld [vmem:[%s362 + $0x10] sm:$0xf]
      %v368 = vld [vmem:[%s362 + $0x14] sm:$0xf]
      %v369 = vld [vmem:[%s362 + $0x18] sm:$0xf]
      %v370 = vld [vmem:[%s362 + $0x1c] sm:$0xf]
      %v371 = vld [vmem:[%s362 + $0x20] sm:$0xf]
      %v372 = vld [vmem:[%s362 + $0x24] sm:$0xf]
      %v373 = vld [vmem:[%s362 + $0x28] sm:$0xf]
      %v374 = vld [vmem:[%s362 + $0x2c] sm:$0xf]
      %v375 = vld [vmem:[%s362 + $0x30] sm:$0xf]
      %v376 = vld [vmem:[%s362 + $0x34] sm:$0xf]
      %v377 = vld [vmem:[%s362 + $0x38] sm:$0xf]
      %v378 = vld [vmem:[%s362 + $0x3c] sm:$0xf]
      %v379 = vunpack.c.l.b16 %v263
      %v380 = vunpack.c.l.b16 %v277
      %v381 = vunpack.c.l.b16 %v291
      %v382 = vunpack.c.l.b16 %v305
      %v383 = vunpack.c.l.b16 %v319
      %v384 = vunpack.c.l.b16 %v333
      %v385 = vunpack.c.l.b16 %v347
      %v386 = vunpack.c.l.b16 %v361
      %v387 = vpack.c.b16 %v380, %v379
      %v388 = vpack.c.b16 %v382, %v381
      %v389 = vpack.c.b16 %v384, %v383
      %v390 = vpack.c.b16 %v386, %v385
      %v411 = vunpack.c.l.b16 %v363
      %v412 = vunpack.c.l.b16 %v364
      %v413 = vunpack.c.l.b16 %v365
      %v414 = vunpack.c.l.b16 %v366
      %v415 = vunpack.c.l.b16 %v367
      %v416 = vunpack.c.l.b16 %v368
      %v417 = vunpack.c.l.b16 %v369
      %v418 = vunpack.c.l.b16 %v370
      %v419 = vunpack.c.l.b16 %v371
      %v420 = vunpack.c.l.b16 %v372
      %v421 = vunpack.c.l.b16 %v373
      %v422 = vunpack.c.l.b16 %v374
      %v423 = vunpack.c.l.b16 %v375
      %v424 = vunpack.c.l.b16 %v376
      %v425 = vunpack.c.l.b16 %v377
      %v426 = vunpack.c.l.b16 %v378
      %v427 = vpack.c.b16 %v412, %v411
      %v428 = vpack.c.b16 %v414, %v413
      %v429 = vpack.c.b16 %v416, %v415
      %v430 = vpack.c.b16 %v418, %v417
      %v431 = vpack.c.b16 %v420, %v419
      %v432 = vpack.c.b16 %v422, %v421
      %v433 = vpack.c.b16 %v424, %v423
      %v434 = vpack.c.b16 %v426, %v425
      %443 = vmatprep.subr.bf16.mxu0 0
      %444 = vmatpush1.bf16.msra.mxu0 %v427
      %445 = vmatprep.subr.bf16.mxu0 0
      %446 = vmatpush1.bf16.msra.mxu0 %v428
      %447 = vmatprep.subr.bf16.mxu0 0
      %448 = vmatpush1.bf16.msra.mxu0 %v429
      %449 = vmatprep.subr.bf16.mxu0 0
      %450 = vmatpush1.bf16.msra.mxu0 %v430
      %451 = vmatprep.subr.bf16.mxu0 0
      %452 = vmatpush1.bf16.msra.mxu0 %v431
      %453 = vmatprep.subr.bf16.mxu0 0
      %454 = vmatpush1.bf16.msra.mxu0 %v432
      %455 = vmatprep.subr.bf16.mxu0 0
      %456 = vmatpush1.bf16.msra.mxu0 %v433
      %457 = vmatprep.subr.bf16.mxu0 0
      %458 = vmatpush1.bf16.msra.mxu0 %v434
      %459 = vmatprep.subr.bf16.mxu0 0
      %460 = vmatpush1.bf16.msra.mxu0 0
      %461 = vmatprep.subr.bf16.mxu0 0
      %462 = vmatpush1.bf16.msra.mxu0 0
      %463 = vmatprep.subr.bf16.mxu0 0
      %464 = vmatpush1.bf16.msra.mxu0 0
      %465 = vmatprep.subr.bf16.mxu0 0
      %466 = vmatpush1.bf16.msra.mxu0 0
      %467 = vmatprep.subr.bf16.mxu0 0
      %468 = vmatpush1.bf16.msra.mxu0 0
      %469 = vmatprep.subr.bf16.mxu0 0
      %470 = vmatpush1.bf16.msra.mxu0 0
      %471 = vmatprep.subr.bf16.mxu0 0
      %472 = vmatpush1.bf16.msra.mxu0 0
      %473 = vmatprep.subr.bf16.mxu0 0
      %474 = vmatpush1.bf16.msra.mxu0 0
      %475 = vmatprep.mubr.bf16.mxu0 0
      %476 = vmatmul.mubr.bf16.gmra.mrb[0].mxu0 %v387
      %v477 = vpop.f32.mrb[0].mxu0
      %v478 = vadd.f32 0.0, %v477
      %v479 = vpop.f32.mrb[0].mxu0
      %v480 = vpop.f32.mrb[0].mxu0
      %v481 = vadd.f32 0.0, %v480
      %v482 = vpop.f32.mrb[0].mxu0
      %483 = vmatprep.mubr.bf16.mxu0 0
      %484 = vmatmul.mubr.bf16.gmra.mrb[0].mxu0 %v388
      %v485 = vpop.f32.mrb[0].mxu0
      %v486 = vadd.f32 0.0, %v485
      %v487 = vpop.f32.mrb[0].mxu0
      %v488 = vpop.f32.mrb[0].mxu0
      %v489 = vadd.f32 0.0, %v488
      %v490 = vpop.f32.mrb[0].mxu0
      %491 = vmatprep.mubr.bf16.mxu0 0
      %492 = vmatmul.mubr.bf16.gmra.mrb[0].mxu0 %v389
      %v493 = vpop.f32.mrb[0].mxu0
      %v494 = vadd.f32 0.0, %v493
      %v495 = vpop.f32.mrb[0].mxu0
      %v496 = vpop.f32.mrb[0].mxu0
      %v497 = vadd.f32 0.0, %v496
      %v498 = vpop.f32.mrb[0].mxu0
      %499 = vmatprep.mubr.bf16.mxu0 0
      %500 = vmatmul.mubr.bf16.gmra.mrb[0].mxu0 %v390
      %v501 = vpop.f32.mrb[0].mxu0
      %v502 = vadd.f32 0.0, %v501
      %v503 = vpop.f32.mrb[0].mxu0
      %v504 = vpop.f32.mrb[0].mxu0
      %v505 = vadd.f32 0.0, %v504
      %v506 = vpop.f32.mrb[0].mxu0
      %507 = vdwg.mxu0
      %v516 = vunpack.c.l.b16 %v215
      %v517 = vunpack.c.l.b16 %v216
      %v518 = vunpack.c.l.b16 %v217
      %v519 = vunpack.c.l.b16 %v218
      %v520 = vunpack.c.l.b16 %v219
      %v521 = vunpack.c.l.b16 %v220
      %v522 = vunpack.c.l.b16 %v221
      %v523 = vunpack.c.l.b16 %v222
      %v524 = vpack.c.b16 %v517, %v516
      %v525 = vpack.c.b16 %v519, %v518
      %v526 = vpack.c.b16 %v521, %v520
      %v527 = vpack.c.b16 %v523, %v522
      %v548 = vunpack.c.l.b16 %v223
      %v549 = vunpack.c.l.b16 %v224
      %v550 = vunpack.c.l.b16 %v225
      %v551 = vunpack.c.l.b16 %v226
      %v552 = vunpack.c.l.b16 %v227
      %v553 = vunpack.c.l.b16 %v228
      %v554 = vunpack.c.l.b16 %v229
      %v555 = vunpack.c.l.b16 %v230
      %v556 = vunpack.c.l.b16 %v231
      %v557 = vunpack.c.l.b16 %v232
      %v558 = vunpack.c.l.b16 %v233
      %v559 = vunpack.c.l.b16 %v234
      %v560 = vunpack.c.l.b16 %v235
      %v561 = vunpack.c.l.b16 %v236
      %v562 = vunpack.c.l.b16 %v237
      %v563 = vunpack.c.l.b16 %v238
      %v564 = vpack.c.b16 %v549, %v548
      %v565 = vpack.c.b16 %v551, %v550
      %v566 = vpack.c.b16 %v553, %v552
      %v567 = vpack.c.b16 %v555, %v554
      %v568 = vpack.c.b16 %v557, %v556
      %v569 = vpack.c.b16 %v559, %v558
      %v570 = vpack.c.b16 %v561, %v560
      %v571 = vpack.c.b16 %v563, %v562
      %580 = vmatprep.subr.bf16.mxu0 0
      %581 = vmatpush1.bf16.msra.mxu0 %v564
      %582 = vmatprep.subr.bf16.mxu0 0
      %583 = vmatpush1.bf16.msra.mxu0 %v565
      %584 = vmatprep.subr.bf16.mxu0 0
      %585 = vmatpush1.bf16.msra.mxu0 %v566
      %586 = vmatprep.subr.bf16.mxu0 0
      %587 = vmatpush1.bf16.msra.mxu0 %v567
      %588 = vmatprep.subr.bf16.mxu0 0
      %589 = vmatpush1.bf16.msra.mxu0 %v568
      %590 = vmatprep.subr.bf16.mxu0 0
      %591 = vmatpush1.bf16.msra.mxu0 %v569
      %592 = vmatprep.subr.bf16.mxu0 0
      %593 = vmatpush1.bf16.msra.mxu0 %v570
      %594 = vmatprep.subr.bf16.mxu0 0
      %595 = vmatpush1.bf16.msra.mxu0 %v571
      %596 = vmatprep.subr.bf16.mxu0 0
      %597 = vmatpush1.bf16.msra.mxu0 0
      %598 = vmatprep.subr.bf16.mxu0 0
      %599 = vmatpush1.bf16.msra.mxu0 0
      %600 = vmatprep.subr.bf16.mxu0 0
      %601 = vmatpush1.bf16.msra.mxu0 0
      %602 = vmatprep.subr.bf16.mxu0 0
      %603 = vmatpush1.bf16.msra.mxu0 0
      %604 = vmatprep.subr.bf16.mxu0 0
      %605 = vmatpush1.bf16.msra.mxu0 0
      %606 = vmatprep.subr.bf16.mxu0 0
      %607 = vmatpush1.bf16.msra.mxu0 0
      %608 = vmatprep.subr.bf16.mxu0 0
      %609 = vmatpush1.bf16.msra.mxu0 0
      %610 = vmatprep.subr.bf16.mxu0 0
      %611 = vmatpush1.bf16.msra.mxu0 0
      %612 = vmatprep.mubr.bf16.mxu0 0
      %613 = vmatmul.mubr.bf16.gmra.mrb[0].mxu0 %v524
      %v614 = vpop.f32.mrb[0].mxu0
      %v615 = vadd.f32 %v478, %v614
      %v616 = vpop.f32.mrb[0].mxu0
      %v617 = vpop.f32.mrb[0].mxu0
      %v618 = vadd.f32 %v481, %v617
      %v619 = vpop.f32.mrb[0].mxu0
      %620 = vmatprep.mubr.bf16.mxu0 0
      %621 = vmatmul.mubr.bf16.gmra.mrb[0].mxu0 %v525
      %v622 = vpop.f32.mrb[0].mxu0
      %v623 = vadd.f32 %v486, %v622
      %v624 = vpop.f32.mrb[0].mxu0
      %v625 = vpop.f32.mrb[0].mxu0
      %v626 = vadd.f32 %v489, %v625
      %v627 = vpop.f32.mrb[0].mxu0
      %628 = vmatprep.mubr.bf16.mxu0 0
      %629 = vmatmul.mubr.bf16.gmra.mrb[0].mxu0 %v526
      %v630 = vpop.f32.mrb[0].mxu0
      %v631 = vadd.f32 %v494, %v630
      %v632 = vpop.f32.mrb[0].mxu0
      %v633 = vpop.f32.mrb[0].mxu0
      %v634 = vadd.f32 %v497, %v633
      %v635 = vpop.f32.mrb[0].mxu0
      %636 = vmatprep.mubr.bf16.mxu0 0
      %637 = vmatmul.mubr.bf16.gmra.mrb[0].mxu0 %v527
      %v638 = vpop.f32.mrb[0].mxu0
      %v639 = vadd.f32 %v502, %v638
      %v640 = vpop.f32.mrb[0].mxu0
      %v641 = vpop.f32.mrb[0].mxu0
      %v642 = vadd.f32 %v505, %v641
      %v643 = vpop.f32.mrb[0].mxu0
      %644 = vdwg.mxu0
      %v645 = vld [vmem:[%s205] sm:$0xe]
      %v646 = vld [vmem:[%s205 + $0x8] sm:$0xe]
      %v647 = vld [vmem:[%s205 + $0x10] sm:$0xe]
      %v648 = vld [vmem:[%s205 + $0x18] sm:$0xe]
      %v649 = vld [vmem:[%s205 + $0x20] sm:$0xe]
      %v650 = vld [vmem:[%s205 + $0x28] sm:$0xe]
      %v651 = vld [vmem:[%s205 + $0x30] sm:$0xe]
      %v652 = vld [vmem:[%s205 + $0x38] sm:$0xe]
      %vm669 = vcmask 1042432
      %vm670 = vcmask 1046532
      %vm671 = vmor %vm669, %vm670
      %v672 = vrot.slane %v645, 5
      %v673 = vrot.slane %v672, 4
      %v674 = vrot.slane %v239, 5
      %v675 = vsel %vm671, %v673, %v674
      %v676 = vrot.slane %v646, 5
      %v677 = vrot.slane %v676, 4
      %v678 = vrot.slane %v240, 5
      %v679 = vsel %vm671, %v677, %v678
      %v680 = vrot.slane %v647, 5
      %v681 = vrot.slane %v680, 4
      %v682 = vrot.slane %v241, 5
      %v683 = vsel %vm671, %v681, %v682
      %v684 = vrot.slane %v648, 5
      %v685 = vrot.slane %v684, 4
      %v686 = vrot.slane %v242, 5
      %v687 = vsel %vm671, %v685, %v686
      %v688 = vrot.slane %v649, 5
      %v689 = vrot.slane %v688, 4
      %v690 = vrot.slane %v243, 5
      %v691 = vsel %vm671, %v689, %v690
      %v692 = vrot.slane %v650, 5
      %v693 = vrot.slane %v692, 4
      %v694 = vrot.slane %v244, 5
      %v695 = vsel %vm671, %v693, %v694
      %v696 = vrot.slane %v651, 5
      %v697 = vrot.slane %v696, 4
      %v698 = vrot.slane %v245, 5
      %v699 = vsel %vm671, %v697, %v698
      %v700 = vrot.slane %v652, 5
      %v701 = vrot.slane %v700, 4
      %v702 = vrot.slane %v246, 5
      %v703 = vsel %vm671, %v701, %v702
      %s704 = scalar_lea.vmem %s2, 128
      %v705 = vld [vmem:[%s704] sm:$0xf]
      %v706 = vld [vmem:[%s704 + $0x4] sm:$0xf]
      %v707 = vld [vmem:[%s704 + $0x8] sm:$0xf]
      %v708 = vld [vmem:[%s704 + $0xc] sm:$0xf]
      %v709 = vld [vmem:[%s704 + $0x10] sm:$0xf]
      %v710 = vld [vmem:[%s704 + $0x14] sm:$0xf]
      %v711 = vld [vmem:[%s704 + $0x18] sm:$0xf]
      %v712 = vld [vmem:[%s704 + $0x1c] sm:$0xf]
      %v713 = vld [vmem:[%s704 + $0x20] sm:$0xf]
      %v714 = vld [vmem:[%s704 + $0x24] sm:$0xf]
      %v715 = vld [vmem:[%s704 + $0x28] sm:$0xf]
      %v716 = vld [vmem:[%s704 + $0x2c] sm:$0xf]
      %v717 = vld [vmem:[%s704 + $0x30] sm:$0xf]
      %v718 = vld [vmem:[%s704 + $0x34] sm:$0xf]
      %v719 = vld [vmem:[%s704 + $0x38] sm:$0xf]
      %v720 = vld [vmem:[%s704 + $0x3c] sm:$0xf]
      %v721 = vunpack.c.l.b16 %v675
      %v722 = vunpack.c.l.b16 %v679
      %v723 = vunpack.c.l.b16 %v683
      %v724 = vunpack.c.l.b16 %v687
      %v725 = vunpack.c.l.b16 %v691
      %v726 = vunpack.c.l.b16 %v695
      %v727 = vunpack.c.l.b16 %v699
      %v728 = vunpack.c.l.b16 %v703
      %v729 = vpack.c.b16 %v722, %v721
      %v730 = vpack.c.b16 %v724, %v723
      %v731 = vpack.c.b16 %v726, %v725
      %v732 = vpack.c.b16 %v728, %v727
      %v753 = vunpack.c.l.b16 %v705
      %v754 = vunpack.c.l.b16 %v706
      %v755 = vunpack.c.l.b16 %v707
      %v756 = vunpack.c.l.b16 %v708
      %v757 = vunpack.c.l.b16 %v709
      %v758 = vunpack.c.l.b16 %v710
      %v759 = vunpack.c.l.b16 %v711
      %v760 = vunpack.c.l.b16 %v712
      %v761 = vunpack.c.l.b16 %v713
      %v762 = vunpack.c.l.b16 %v714
      %v763 = vunpack.c.l.b16 %v715
      %v764 = vunpack.c.l.b16 %v716
      %v765 = vunpack.c.l.b16 %v717
      %v766 = vunpack.c.l.b16 %v718
      %v767 = vunpack.c.l.b16 %v719
      %v768 = vunpack.c.l.b16 %v720
      %v769 = vpack.c.b16 %v754, %v753
      %v770 = vpack.c.b16 %v756, %v755
      %v771 = vpack.c.b16 %v758, %v757
      %v772 = vpack.c.b16 %v760, %v759
      %v773 = vpack.c.b16 %v762, %v761
      %v774 = vpack.c.b16 %v764, %v763
      %v775 = vpack.c.b16 %v766, %v765
      %v776 = vpack.c.b16 %v768, %v767
      %785 = vmatprep.subr.bf16.mxu0 0
      %786 = vmatpush1.bf16.msra.mxu0 %v769
      %787 = vmatprep.subr.bf16.mxu0 0
      %788 = vmatpush1.bf16.msra.mxu0 %v770
      %789 = vmatprep.subr.bf16.mxu0 0
      %790 = vmatpush1.bf16.msra.mxu0 %v771
      %791 = vmatprep.subr.bf16.mxu0 0
      %792 = vmatpush1.bf16.msra.mxu0 %v772
      %793 = vmatprep.subr.bf16.mxu0 0
      %794 = vmatpush1.bf16.msra.mxu0 %v773
      %795 = vmatprep.subr.bf16.mxu0 0
      %796 = vmatpush1.bf16.msra.mxu0 %v774
      %797 = vmatprep.subr.bf16.mxu0 0
      %798 = vmatpush1.bf16.msra.mxu0 %v775
      %799 = vmatprep.subr.bf16.mxu0 0
      %800 = vmatpush1.bf16.msra.mxu0 %v776
      %801 = vmatprep.subr.bf16.mxu0 0
      %802 = vmatpush1.bf16.msra.mxu0 0
      %803 = vmatprep.subr.bf16.mxu0 0
      %804 = vmatpush1.bf16.msra.mxu0 0
      %805 = vmatprep.subr.bf16.mxu0 0
      %806 = vmatpush1.bf16.msra.mxu0 0
      %807 = vmatprep.subr.bf16.mxu0 0
      %808 = vmatpush1.bf16.msra.mxu0 0
      %809 = vmatprep.subr.bf16.mxu0 0
      %810 = vmatpush1.bf16.msra.mxu0 0
      %811 = vmatprep.subr.bf16.mxu0 0
      %812 = vmatpush1.bf16.msra.mxu0 0
      %813 = vmatprep.subr.bf16.mxu0 0
      %814 = vmatpush1.bf16.msra.mxu0 0
      %815 = vmatprep.subr.bf16.mxu0 0
      %816 = vmatpush1.bf16.msra.mxu0 0
      %817 = vmatprep.mubr.bf16.mxu0 0
      %818 = vmatmul.mubr.bf16.gmra.mrb[0].mxu0 %v729
      %v819 = vpop.f32.mrb[0].mxu0
      %v820 = vadd.f32 0.0, %v819
      %v821 = vpop.f32.mrb[0].mxu0
      %v822 = vpop.f32.mrb[0].mxu0
      %v823 = vadd.f32 0.0, %v822
      %v824 = vpop.f32.mrb[0].mxu0
      %825 = vmatprep.mubr.bf16.mxu0 0
      %826 = vmatmul.mubr.bf16.gmra.mrb[0].mxu0 %v730
      %v827 = vpop.f32.mrb[0].mxu0
      %v828 = vadd.f32 0.0, %v827
      %v829 = vpop.f32.mrb[0].mxu0
      %v830 = vpop.f32.mrb[0].mxu0
      %v831 = vadd.f32 0.0, %v830
      %v832 = vpop.f32.mrb[0].mxu0
      %833 = vmatprep.mubr.bf16.mxu0 0
      %834 = vmatmul.mubr.bf16.gmra.mrb[0].mxu0 %v731
      %v835 = vpop.f32.mrb[0].mxu0
      %v836 = vadd.f32 0.0, %v835
      %v837 = vpop.f32.mrb[0].mxu0
      %v838 = vpop.f32.mrb[0].mxu0
      %v839 = vadd.f32 0.0, %v838
      %v840 = vpop.f32.mrb[0].mxu0
      %841 = vmatprep.mubr.bf16.mxu0 0
      %842 = vmatmul.mubr.bf16.gmra.mrb[0].mxu0 %v732
      %v843 = vpop.f32.mrb[0].mxu0
      %v844 = vadd.f32 0.0, %v843
      %v845 = vpop.f32.mrb[0].mxu0
      %v846 = vpop.f32.mrb[0].mxu0
      %v847 = vadd.f32 0.0, %v846
      %v848 = vpop.f32.mrb[0].mxu0
      %849 = vdwg.mxu0
      %v850 = vadd.f32 %v615, %v820
      %v851 = vadd.f32 %v618, %v823
      %v852 = vadd.f32 %v623, %v828
      %v853 = vadd.f32 %v626, %v831
      %v854 = vadd.f32 %v631, %v836
      %v855 = vadd.f32 %v634, %v839
      %v856 = vadd.f32 %v639, %v844
      %v857 = vadd.f32 %v642, %v847
      %s858 = scalar_lea.vmem %s205, 8
      %v859 = vld [vmem:[%s858] sm:$0xf]
      %v860 = vld [vmem:[%s858 + $0x8] sm:$0xf]
      %v861 = vld [vmem:[%s858 + $0x10] sm:$0xf]
      %v862 = vld [vmem:[%s858 + $0x18] sm:$0xf]
      %v863 = vld [vmem:[%s858 + $0x20] sm:$0xf]
      %v864 = vld [vmem:[%s858 + $0x28] sm:$0xf]
      %v865 = vld [vmem:[%s858 + $0x30] sm:$0xf]
      %v866 = vld [vmem:[%s858 + $0x38] sm:$0xf]
      %s867 = scalar_lea.vmem %s2, 192
      %v868 = vld [vmem:[%s867] sm:$0xf]
      %v869 = vld [vmem:[%s867 + $0x4] sm:$0xf]
      %v870 = vld [vmem:[%s867 + $0x8] sm:$0xf]
      %v871 = vld [vmem:[%s867 + $0xc] sm:$0xf]
      %v872 = vld [vmem:[%s867 + $0x10] sm:$0xf]
      %v873 = vld [vmem:[%s867 + $0x14] sm:$0xf]
      %v874 = vld [vmem:[%s867 + $0x18] sm:$0xf]
      %v875 = vld [vmem:[%s867 + $0x1c] sm:$0xf]
      %v876 = vld [vmem:[%s867 + $0x20] sm:$0xf]
      %v877 = vld [vmem:[%s867 + $0x24] sm:$0xf]
      %v878 = vld [vmem:[%s867 + $0x28] sm:$0xf]
      %v879 = vld [vmem:[%s867 + $0x2c] sm:$0xf]
      %v880 = vld [vmem:[%s867 + $0x30] sm:$0xf]
      %v881 = vld [vmem:[%s867 + $0x34] sm:$0xf]
      %v882 = vld [vmem:[%s867 + $0x38] sm:$0xf]
      %v883 = vld [vmem:[%s867 + $0x3c] sm:$0xf]
      %v892 = vunpack.c.l.b16 %v859
      %v893 = vunpack.c.l.b16 %v860
      %v894 = vunpack.c.l.b16 %v861
      %v895 = vunpack.c.l.b16 %v862
      %v896 = vunpack.c.l.b16 %v863
      %v897 = vunpack.c.l.b16 %v864
      %v898 = vunpack.c.l.b16 %v865
      %v899 = vunpack.c.l.b16 %v866
      %v900 = vpack.c.b16 %v893, %v892
      %v901 = vpack.c.b16 %v895, %v894
      %v902 = vpack.c.b16 %v897, %v896
      %v903 = vpack.c.b16 %v899, %v898
      %v924 = vunpack.c.l.b16 %v868
      %v925 = vunpack.c.l.b16 %v869
      %v926 = vunpack.c.l.b16 %v870
      %v927 = vunpack.c.l.b16 %v871
      %v928 = vunpack.c.l.b16 %v872
      %v929 = vunpack.c.l.b16 %v873
      %v930 = vunpack.c.l.b16 %v874
      %v931 = vunpack.c.l.b16 %v875
      %v932 = vunpack.c.l.b16 %v876
      %v933 = vunpack.c.l.b16 %v877
      %v934 = vunpack.c.l.b16 %v878
      %v935 = vunpack.c.l.b16 %v879
      %v936 = vunpack.c.l.b16 %v880
      %v937 = vunpack.c.l.b16 %v881
      %v938 = vunpack.c.l.b16 %v882
      %v939 = vunpack.c.l.b16 %v883
      %v940 = vpack.c.b16 %v925, %v924
      %v941 = vpack.c.b16 %v927, %v926
      %v942 = vpack.c.b16 %v929, %v928
      %v943 = vpack.c.b16 %v931, %v930
      %v944 = vpack.c.b16 %v933, %v932
      %v945 = vpack.c.b16 %v935, %v934
      %v946 = vpack.c.b16 %v937, %v936
      %v947 = vpack.c.b16 %v939, %v938
      %956 = vmatprep.subr.bf16.mxu0 0
      %957 = vmatpush1.bf16.msra.mxu0 %v940
      %958 = vmatprep.subr.bf16.mxu0 0
      %959 = vmatpush1.bf16.msra.mxu0 %v941
      %960 = vmatprep.subr.bf16.mxu0 0
      %961 = vmatpush1.bf16.msra.mxu0 %v942
      %962 = vmatprep.subr.bf16.mxu0 0
      %963 = vmatpush1.bf16.msra.mxu0 %v943
      %964 = vmatprep.subr.bf16.mxu0 0
      %965 = vmatpush1.bf16.msra.mxu0 %v944
      %966 = vmatprep.subr.bf16.mxu0 0
      %967 = vmatpush1.bf16.msra.mxu0 %v945
      %968 = vmatprep.subr.bf16.mxu0 0
      %969 = vmatpush1.bf16.msra.mxu0 %v946
      %970 = vmatprep.subr.bf16.mxu0 0
      %971 = vmatpush1.bf16.msra.mxu0 %v947
      %972 = vmatprep.subr.bf16.mxu0 0
      %973 = vmatpush1.bf16.msra.mxu0 0
      %974 = vmatprep.subr.bf16.mxu0 0
      %975 = vmatpush1.bf16.msra.mxu0 0
      %976 = vmatprep.subr.bf16.mxu0 0
      %977 = vmatpush1.bf16.msra.mxu0 0
      %978 = vmatprep.subr.bf16.mxu0 0
      %979 = vmatpush1.bf16.msra.mxu0 0
      %980 = vmatprep.subr.bf16.mxu0 0
      %981 = vmatpush1.bf16.msra.mxu0 0
      %982 = vmatprep.subr.bf16.mxu0 0
      %983 = vmatpush1.bf16.msra.mxu0 0
      %984 = vmatprep.subr.bf16.mxu0 0
      %985 = vmatpush1.bf16.msra.mxu0 0
      %986 = vmatprep.subr.bf16.mxu0 0
      %987 = vmatpush1.bf16.msra.mxu0 0
      %988 = vmatprep.mubr.bf16.mxu0 0
      %989 = vmatmul.mubr.bf16.gmra.mrb[0].mxu0 %v900
      %v990 = vpop.f32.mrb[0].mxu0
      %v991 = vadd.f32 0.0, %v990
      %v992 = vpop.f32.mrb[0].mxu0
      %v993 = vpop.f32.mrb[0].mxu0
      %v994 = vadd.f32 0.0, %v993
      %v995 = vpop.f32.mrb[0].mxu0
      %996 = vmatprep.mubr.bf16.mxu0 0
      %997 = vmatmul.mubr.bf16.gmra.mrb[0].mxu0 %v901
      %v998 = vpop.f32.mrb[0].mxu0
      %v999 = vadd.f32 0.0, %v998
      %v1000 = vpop.f32.mrb[0].mxu0
      %v1001 = vpop.f32.mrb[0].mxu0
      %v1002 = vadd.f32 0.0, %v1001
      %v1003 = vpop.f32.mrb[0].mxu0
      %1004 = vmatprep.mubr.bf16.mxu0 0
      %1005 = vmatmul.mubr.bf16.gmra.mrb[0].mxu0 %v902
      %v1006 = vpop.f32.mrb[0].mxu0
      %v1007 = vadd.f32 0.0, %v1006
      %v1008 = vpop.f32.mrb[0].mxu0
      %v1009 = vpop.f32.mrb[0].mxu0
      %v1010 = vadd.f32 0.0, %v1009
      %v1011 = vpop.f32.mrb[0].mxu0
      %1012 = vmatprep.mubr.bf16.mxu0 0
      %1013 = vmatmul.mubr.bf16.gmra.mrb[0].mxu0 %v903
      %v1014 = vpop.f32.mrb[0].mxu0
      %v1015 = vadd.f32 0.0, %v1014
      %v1016 = vpop.f32.mrb[0].mxu0
      %v1017 = vpop.f32.mrb[0].mxu0
      %v1018 = vadd.f32 0.0, %v1017
      %v1019 = vpop.f32.mrb[0].mxu0
      %1020 = vdwg.mxu0
      %v1021 = vadd.f32 %v850, %v991
      %v1022 = vadd.f32 %v851, %v994
      %v1023 = vadd.f32 %v852, %v999
      %v1024 = vadd.f32 %v853, %v1002
      %v1025 = vadd.f32 %v854, %v1007
      %v1026 = vadd.f32 %v855, %v1010
      %v1027 = vadd.f32 %v856, %v1015
      %v1028 = vadd.f32 %v857, %v1018
      %v1029 = vld [vmem:[%s858] sm:$0xf]
      %v1030 = vld [vmem:[%s858 + $0x4] sm:$0x1]
      %v1031 = vld [vmem:[%s858 + $0x8] sm:$0xf]
      %v1032 = vld [vmem:[%s858 + $0xc] sm:$0x1]
      %v1033 = vld [vmem:[%s858 + $0x10] sm:$0xf]
      %v1034 = vld [vmem:[%s858 + $0x14] sm:$0x1]
      %v1035 = vld [vmem:[%s858 + $0x18] sm:$0xf]
      %v1036 = vld [vmem:[%s858 + $0x1c] sm:$0x1]
      %v1037 = vld [vmem:[%s858 + $0x20] sm:$0xf]
      %v1038 = vld [vmem:[%s858 + $0x24] sm:$0x1]
      %v1039 = vld [vmem:[%s858 + $0x28] sm:$0xf]
      %v1040 = vld [vmem:[%s858 + $0x2c] sm:$0x1]
      %v1041 = vld [vmem:[%s858 + $0x30] sm:$0xf]
      %v1042 = vld [vmem:[%s858 + $0x34] sm:$0x1]
      %v1043 = vld [vmem:[%s858 + $0x38] sm:$0xf]
      %v1044 = vld [vmem:[%s858 + $0x3c] sm:$0x1]
      %v1046 = vshrl.u32 %v1029, 16
      %v1048 = vrot.slane %v1046, 4
      %v1049 = vshll.u32 %v1029, 16
      %v1051 = vrot.slane %v1049, 5
      %v1052 = vor.u32 %v1048, %v1051
      %v1053 = vrot.slane %v1052, 4
      %v1055 = vshll.u32 %v1030, 16
      %v1057 = vrot.slane %v1055, 5
      %v1058 = vsel %vm249, %v1053, %v1057
      %v1060 = vshrl.u32 %v1031, 16
      %v1062 = vrot.slane %v1060, 4
      %v1063 = vshll.u32 %v1031, 16
      %v1065 = vrot.slane %v1063, 5
      %v1066 = vor.u32 %v1062, %v1065
      %v1067 = vrot.slane %v1066, 4
      %v1069 = vshll.u32 %v1032, 16
      %v1071 = vrot.slane %v1069, 5
      %v1072 = vsel %vm249, %v1067, %v1071
      %v1074 = vshrl.u32 %v1033, 16
      %v1076 = vrot.slane %v1074, 4
      %v1077 = vshll.u32 %v1033, 16
      %v1079 = vrot.slane %v1077, 5
      %v1080 = vor.u32 %v1076, %v1079
      %v1081 = vrot.slane %v1080, 4
      %v1083 = vshll.u32 %v1034, 16
      %v1085 = vrot.slane %v1083, 5
      %v1086 = vsel %vm249, %v1081, %v1085
      %v1088 = vshrl.u32 %v1035, 16
      %v1090 = vrot.slane %v1088, 4
      %v1091 = vshll.u32 %v1035, 16
      %v1093 = vrot.slane %v1091, 5
      %v1094 = vor.u32 %v1090, %v1093
      %v1095 = vrot.slane %v1094, 4
      %v1097 = vshll.u32 %v1036, 16
      %v1099 = vrot.slane %v1097, 5
      %v1100 = vsel %vm249, %v1095, %v1099
      %v1102 = vshrl.u32 %v1037, 16
      %v1104 = vrot.slane %v1102, 4
      %v1105 = vshll.u32 %v1037, 16
      %v1107 = vrot.slane %v1105, 5
      %v1108 = vor.u32 %v1104, %v1107
      %v1109 = vrot.slane %v1108, 4
      %v1111 = vshll.u32 %v1038, 16
      %v1113 = vrot.slane %v1111, 5
      %v1114 = vsel %vm249, %v1109, %v1113
      %v1116 = vshrl.u32 %v1039, 16
      %v1118 = vrot.slane %v1116, 4
      %v1119 = vshll.u32 %v1039, 16
      %v1121 = vrot.slane %v1119, 5
      %v1122 = vor.u32 %v1118, %v1121
      %v1123 = vrot.slane %v1122, 4
      %v1125 = vshll.u32 %v1040, 16
      %v1127 = vrot.slane %v1125, 5
      %v1128 = vsel %vm249, %v1123, %v1127
      %v1130 = vshrl.u32 %v1041, 16
      %v1132 = vrot.slane %v1130, 4
      %v1133 = vshll.u32 %v1041, 16
      %v1135 = vrot.slane %v1133, 5
      %v1136 = vor.u32 %v1132, %v1135
      %v1137 = vrot.slane %v1136, 4
      %v1139 = vshll.u32 %v1042, 16
      %v1141 = vrot.slane %v1139, 5
      %v1142 = vsel %vm249, %v1137, %v1141
      %v1144 = vshrl.u32 %v1043, 16
      %v1146 = vrot.slane %v1144, 4
      %v1147 = vshll.u32 %v1043, 16
      %v1149 = vrot.slane %v1147, 5
      %v1150 = vor.u32 %v1146, %v1149
      %v1151 = vrot.slane %v1150, 4
      %v1153 = vshll.u32 %v1044, 16
      %v1155 = vrot.slane %v1153, 5
      %v1156 = vsel %vm249, %v1151, %v1155
      %s1157 = scalar_lea.vmem %s2, 256
      %v1158 = vld [vmem:[%s1157] sm:$0xf]
      %v1159 = vld [vmem:[%s1157 + $0x4] sm:$0xf]
      %v1160 = vld [vmem:[%s1157 + $0x8] sm:$0xf]
      %v1161 = vld [vmem:[%s1157 + $0xc] sm:$0xf]
      %v1162 = vld [vmem:[%s1157 + $0x10] sm:$0xf]
      %v1163 = vld [vmem:[%s1157 + $0x14] sm:$0xf]
      %v1164 = vld [vmem:[%s1157 + $0x18] sm:$0xf]
      %v1165 = vld [vmem:[%s1157 + $0x1c] sm:$0xf]
      %v1166 = vld [vmem:[%s1157 + $0x20] sm:$0xf]
      %v1167 = vld [vmem:[%s1157 + $0x24] sm:$0xf]
      %v1168 = vld [vmem:[%s1157 + $0x28] sm:$0xf]
      %v1169 = vld [vmem:[%s1157 + $0x2c] sm:$0xf]
      %v1170 = vld [vmem:[%s1157 + $0x30] sm:$0xf]
      %v1171 = vld [vmem:[%s1157 + $0x34] sm:$0xf]
      %v1172 = vld [vmem:[%s1157 + $0x38] sm:$0xf]
      %v1173 = vld [vmem:[%s1157 + $0x3c] sm:$0xf]
      %v1174 = vunpack.c.l.b16 %v1058
      %v1175 = vunpack.c.l.b16 %v1072
      %v1176 = vunpack.c.l.b16 %v1086
      %v1177 = vunpack.c.l.b16 %v1100
      %v1178 = vunpack.c.l.b16 %v1114
      %v1179 = vunpack.c.l.b16 %v1128
      %v1180 = vunpack.c.l.b16 %v1142
      %v1181 = vunpack.c.l.b16 %v1156
      %v1182 = vpack.c.b16 %v1175, %v1174
      %v1183 = vpack.c.b16 %v1177, %v1176
      %v1184 = vpack.c.b16 %v1179, %v1178
      %v1185 = vpack.c.b16 %v1181, %v1180
      %v1206 = vunpack.c.l.b16 %v1158
      %v1207 = vunpack.c.l.b16 %v1159
      %v1208 = vunpack.c.l.b16 %v1160
      %v1209 = vunpack.c.l.b16 %v1161
      %v1210 = vunpack.c.l.b16 %v1162
      %v1211 = vunpack.c.l.b16 %v1163
      %v1212 = vunpack.c.l.b16 %v1164
      %v1213 = vunpack.c.l.b16 %v1165
      %v1214 = vunpack.c.l.b16 %v1166
      %v1215 = vunpack.c.l.b16 %v1167
      %v1216 = vunpack.c.l.b16 %v1168
      %v1217 = vunpack.c.l.b16 %v1169
      %v1218 = vunpack.c.l.b16 %v1170
      %v1219 = vunpack.c.l.b16 %v1171
      %v1220 = vunpack.c.l.b16 %v1172
      %v1221 = vunpack.c.l.b16 %v1173
      %v1222 = vpack.c.b16 %v1207, %v1206
      %v1223 = vpack.c.b16 %v1209, %v1208
      %v1224 = vpack.c.b16 %v1211, %v1210
      %v1225 = vpack.c.b16 %v1213, %v1212
      %v1226 = vpack.c.b16 %v1215, %v1214
      %v1227 = vpack.c.b16 %v1217, %v1216
      %v1228 = vpack.c.b16 %v1219, %v1218
      %v1229 = vpack.c.b16 %v1221, %v1220
      %1238 = vmatprep.subr.bf16.mxu0 0
      %1239 = vmatpush1.bf16.msra.mxu0 %v1222
      %1240 = vmatprep.subr.bf16.mxu0 0
      %1241 = vmatpush1.bf16.msra.mxu0 %v1223
      %1242 = vmatprep.subr.bf16.mxu0 0
      %1243 = vmatpush1.bf16.msra.mxu0 %v1224
      %1244 = vmatprep.subr.bf16.mxu0 0
      %1245 = vmatpush1.bf16.msra.mxu0 %v1225
      %1246 = vmatprep.subr.bf16.mxu0 0
      %1247 = vmatpush1.bf16.msra.mxu0 %v1226
      %1248 = vmatprep.subr.bf16.mxu0 0
      %1249 = vmatpush1.bf16.msra.mxu0 %v1227
      %1250 = vmatprep.subr.bf16.mxu0 0
      %1251 = vmatpush1.bf16.msra.mxu0 %v1228
      %1252 = vmatprep.subr.bf16.mxu0 0
      %1253 = vmatpush1.bf16.msra.mxu0 %v1229
      %1254 = vmatprep.subr.bf16.mxu0 0
      %1255 = vmatpush1.bf16.msra.mxu0 0
      %1256 = vmatprep.subr.bf16.mxu0 0
      %1257 = vmatpush1.bf16.msra.mxu0 0
      %1258 = vmatprep.subr.bf16.mxu0 0
      %1259 = vmatpush1.bf16.msra.mxu0 0
      %1260 = vmatprep.subr.bf16.mxu0 0
      %1261 = vmatpush1.bf16.msra.mxu0 0
      %1262 = vmatprep.subr.bf16.mxu0 0
      %1263 = vmatpush1.bf16.msra.mxu0 0
      %1264 = vmatprep.subr.bf16.mxu0 0
      %1265 = vmatpush1.bf16.msra.mxu0 0
      %1266 = vmatprep.subr.bf16.mxu0 0
      %1267 = vmatpush1.bf16.msra.mxu0 0
      %1268 = vmatprep.subr.bf16.mxu0 0
      %1269 = vmatpush1.bf16.msra.mxu0 0
      %1270 = vmatprep.mubr.bf16.mxu0 0
      %1271 = vmatmul.mubr.bf16.gmra.mrb[0].mxu0 %v1182
      %v1272 = vpop.f32.mrb[0].mxu0
      %v1273 = vadd.f32 0.0, %v1272
      %v1274 = vpop.f32.mrb[0].mxu0
      %v1275 = vpop.f32.mrb[0].mxu0
      %v1276 = vadd.f32 0.0, %v1275
      %v1277 = vpop.f32.mrb[0].mxu0
      %1278 = vmatprep.mubr.bf16.mxu0 0
      %1279 = vmatmul.mubr.bf16.gmra.mrb[0].mxu0 %v1183
      %v1280 = vpop.f32.mrb[0].mxu0
      %v1281 = vadd.f32 0.0, %v1280
      %v1282 = vpop.f32.mrb[0].mxu0
      %v1283 = vpop.f32.mrb[0].mxu0
      %v1284 = vadd.f32 0.0, %v1283
      %v1285 = vpop.f32.mrb[0].mxu0
      %1286 = vmatprep.mubr.bf16.mxu0 0
      %1287 = vmatmul.mubr.bf16.gmra.mrb[0].mxu0 %v1184
      %v1288 = vpop.f32.mrb[0].mxu0
      %v1289 = vadd.f32 0.0, %v1288
      %v1290 = vpop.f32.mrb[0].mxu0
      %v1291 = vpop.f32.mrb[0].mxu0
      %v1292 = vadd.f32 0.0, %v1291
      %v1293 = vpop.f32.mrb[0].mxu0
      %1294 = vmatprep.mubr.bf16.mxu0 0
      %1295 = vmatmul.mubr.bf16.gmra.mrb[0].mxu0 %v1185
      %v1296 = vpop.f32.mrb[0].mxu0
      %v1297 = vadd.f32 0.0, %v1296
      %v1298 = vpop.f32.mrb[0].mxu0
      %v1299 = vpop.f32.mrb[0].mxu0
      %v1300 = vadd.f32 0.0, %v1299
      %v1301 = vpop.f32.mrb[0].mxu0
      %1302 = vdwg.mxu0
      %v1303 = vadd.f32 %v1021, %v1273
      %v1304 = vadd.f32 %v1022, %v1276
      %v1305 = vadd.f32 %v1023, %v1281
      %v1306 = vadd.f32 %v1024, %v1284
      %v1307 = vadd.f32 %v1025, %v1289
      %v1308 = vadd.f32 %v1026, %v1292
      %v1309 = vadd.f32 %v1027, %v1297
      %v1310 = vadd.f32 %v1028, %v1300
      %v1311 = vld [vmem:[%s858] sm:$0xe]
      %v1312 = vld [vmem:[%s858 + $0x8] sm:$0xe]
      %v1313 = vld [vmem:[%s858 + $0x10] sm:$0xe]
      %v1314 = vld [vmem:[%s858 + $0x18] sm:$0xe]
      %v1315 = vld [vmem:[%s858 + $0x20] sm:$0xe]
      %v1316 = vld [vmem:[%s858 + $0x28] sm:$0xe]
      %v1317 = vld [vmem:[%s858 + $0x30] sm:$0xe]
      %v1318 = vld [vmem:[%s858 + $0x38] sm:$0xe]
      %v1335 = vrot.slane %v1311, 5
      %v1336 = vrot.slane %v1335, 4
      %v1337 = vrot.slane %v1030, 5
      %v1338 = vsel %vm671, %v1336, %v1337
      %v1339 = vrot.slane %v1312, 5
      %v1340 = vrot.slane %v1339, 4
      %v1341 = vrot.slane %v1032, 5
      %v1342 = vsel %vm671, %v1340, %v1341
      %v1343 = vrot.slane %v1313, 5
      %v1344 = vrot.slane %v1343, 4
      %v1345 = vrot.slane %v1034, 5
      %v1346 = vsel %vm671, %v1344, %v1345
      %v1347 = vrot.slane %v1314, 5
      %v1348 = vrot.slane %v1347, 4
      %v1349 = vrot.slane %v1036, 5
      %v1350 = vsel %vm671, %v1348, %v1349
      %v1351 = vrot.slane %v1315, 5
      %v1352 = vrot.slane %v1351, 4
      %v1353 = vrot.slane %v1038, 5
      %v1354 = vsel %vm671, %v1352, %v1353
      %v1355 = vrot.slane %v1316, 5
      %v1356 = vrot.slane %v1355, 4
      %v1357 = vrot.slane %v1040, 5
      %v1358 = vsel %vm671, %v1356, %v1357
      %v1359 = vrot.slane %v1317, 5
      %v1360 = vrot.slane %v1359, 4
      %v1361 = vrot.slane %v1042, 5
      %v1362 = vsel %vm671, %v1360, %v1361
      %v1363 = vrot.slane %v1318, 5
      %v1364 = vrot.slane %v1363, 4
      %v1365 = vrot.slane %v1044, 5
      %v1366 = vsel %vm671, %v1364, %v1365
      %s1367 = scalar_lea.vmem %s2, 320
      %v1368 = vld [vmem:[%s1367] sm:$0xf]
      %v1369 = vld [vmem:[%s1367 + $0x4] sm:$0xf]
      %v1370 = vld [vmem:[%s1367 + $0x8] sm:$0xf]
      %v1371 = vld [vmem:[%s1367 + $0xc] sm:$0xf]
      %v1372 = vld [vmem:[%s1367 + $0x10] sm:$0xf]
      %v1373 = vld [vmem:[%s1367 + $0x14] sm:$0xf]
      %v1374 = vld [vmem:[%s1367 + $0x18] sm:$0xf]
      %v1375 = vld [vmem:[%s1367 + $0x1c] sm:$0xf]
      %v1376 = vld [vmem:[%s1367 + $0x20] sm:$0xf]
      %v1377 = vld [vmem:[%s1367 + $0x24] sm:$0xf]
      %v1378 = vld [vmem:[%s1367 + $0x28] sm:$0xf]
      %v1379 = vld [vmem:[%s1367 + $0x2c] sm:$0xf]
      %v1380 = vld [vmem:[%s1367 + $0x30] sm:$0xf]
      %v1381 = vld [vmem:[%s1367 + $0x34] sm:$0xf]
      %v1382 = vld [vmem:[%s1367 + $0x38] sm:$0xf]
      %v1383 = vld [vmem:[%s1367 + $0x3c] sm:$0xf]
      %v1384 = vunpack.c.l.b16 %v1338
      %v1385 = vunpack.c.l.b16 %v1342
      %v1386 = vunpack.c.l.b16 %v1346
      %v1387 = vunpack.c.l.b16 %v1350
      %v1388 = vunpack.c.l.b16 %v1354
      %v1389 = vunpack.c.l.b16 %v1358
      %v1390 = vunpack.c.l.b16 %v1362
      %v1391 = vunpack.c.l.b16 %v1366
      %v1392 = vpack.c.b16 %v1385, %v1384
      %v1393 = vpack.c.b16 %v1387, %v1386
      %v1394 = vpack.c.b16 %v1389, %v1388
      %v1395 = vpack.c.b16 %v1391, %v1390
      %v1416 = vunpack.c.l.b16 %v1368
      %v1417 = vunpack.c.l.b16 %v1369
      %v1418 = vunpack.c.l.b16 %v1370
      %v1419 = vunpack.c.l.b16 %v1371
      %v1420 = vunpack.c.l.b16 %v1372
      %v1421 = vunpack.c.l.b16 %v1373
      %v1422 = vunpack.c.l.b16 %v1374
      %v1423 = vunpack.c.l.b16 %v1375
      %v1424 = vunpack.c.l.b16 %v1376
      %v1425 = vunpack.c.l.b16 %v1377
      %v1426 = vunpack.c.l.b16 %v1378
      %v1427 = vunpack.c.l.b16 %v1379
      %v1428 = vunpack.c.l.b16 %v1380
      %v1429 = vunpack.c.l.b16 %v1381
      %v1430 = vunpack.c.l.b16 %v1382
      %v1431 = vunpack.c.l.b16 %v1383
      %v1432 = vpack.c.b16 %v1417, %v1416
      %v1433 = vpack.c.b16 %v1419, %v1418
      %v1434 = vpack.c.b16 %v1421, %v1420
      %v1435 = vpack.c.b16 %v1423, %v1422
      %v1436 = vpack.c.b16 %v1425, %v1424
      %v1437 = vpack.c.b16 %v1427, %v1426
      %v1438 = vpack.c.b16 %v1429, %v1428
      %v1439 = vpack.c.b16 %v1431, %v1430
      %1448 = vmatprep.subr.bf16.mxu0 0
      %1449 = vmatpush1.bf16.msra.mxu0 %v1432
      %1450 = vmatprep.subr.bf16.mxu0 0
      %1451 = vmatpush1.bf16.msra.mxu0 %v1433
      %1452 = vmatprep.subr.bf16.mxu0 0
      %1453 = vmatpush1.bf16.msra.mxu0 %v1434
      %1454 = vmatprep.subr.bf16.mxu0 0
      %1455 = vmatpush1.bf16.msra.mxu0 %v1435
      %1456 = vmatprep.subr.bf16.mxu0 0
      %1457 = vmatpush1.bf16.msra.mxu0 %v1436
      %1458 = vmatprep.subr.bf16.mxu0 0
      %1459 = vmatpush1.bf16.msra.mxu0 %v1437
      %1460 = vmatprep.subr.bf16.mxu0 0
      %1461 = vmatpush1.bf16.msra.mxu0 %v1438
      %1462 = vmatprep.subr.bf16.mxu0 0
      %1463 = vmatpush1.bf16.msra.mxu0 %v1439
      %1464 = vmatprep.subr.bf16.mxu0 0
      %1465 = vmatpush1.bf16.msra.mxu0 0
      %1466 = vmatprep.subr.bf16.mxu0 0
      %1467 = vmatpush1.bf16.msra.mxu0 0
      %1468 = vmatprep.subr.bf16.mxu0 0
      %1469 = vmatpush1.bf16.msra.mxu0 0
      %1470 = vmatprep.subr.bf16.mxu0 0
      %1471 = vmatpush1.bf16.msra.mxu0 0
      %1472 = vmatprep.subr.bf16.mxu0 0
      %1473 = vmatpush1.bf16.msra.mxu0 0
      %1474 = vmatprep.subr.bf16.mxu0 0
      %1475 = vmatpush1.bf16.msra.mxu0 0
      %1476 = vmatprep.subr.bf16.mxu0 0
      %1477 = vmatpush1.bf16.msra.mxu0 0
      %1478 = vmatprep.subr.bf16.mxu0 0
      %1479 = vmatpush1.bf16.msra.mxu0 0
      %1480 = vmatprep.mubr.bf16.mxu0 0
      %1481 = vmatmul.mubr.bf16.gmra.mrb[0].mxu0 %v1392
      %v1482 = vpop.f32.mrb[0].mxu0
      %v1483 = vadd.f32 0.0, %v1482
      %v1484 = vpop.f32.mrb[0].mxu0
      %v1485 = vpop.f32.mrb[0].mxu0
      %v1486 = vadd.f32 0.0, %v1485
      %v1487 = vpop.f32.mrb[0].mxu0
      %1488 = vmatprep.mubr.bf16.mxu0 0
      %1489 = vmatmul.mubr.bf16.gmra.mrb[0].mxu0 %v1393
      %v1490 = vpop.f32.mrb[0].mxu0
      %v1491 = vadd.f32 0.0, %v1490
      %v1492 = vpop.f32.mrb[0].mxu0
      %v1493 = vpop.f32.mrb[0].mxu0
      %v1494 = vadd.f32 0.0, %v1493
      %v1495 = vpop.f32.mrb[0].mxu0
      %1496 = vmatprep.mubr.bf16.mxu0 0
      %1497 = vmatmul.mubr.bf16.gmra.mrb[0].mxu0 %v1394
      %v1498 = vpop.f32.mrb[0].mxu0
      %v1499 = vadd.f32 0.0, %v1498
      %v1500 = vpop.f32.mrb[0].mxu0
      %v1501 = vpop.f32.mrb[0].mxu0
      %v1502 = vadd.f32 0.0, %v1501
      %v1503 = vpop.f32.mrb[0].mxu0
      %1504 = vmatprep.mubr.bf16.mxu0 0
      %1505 = vmatmul.mubr.bf16.gmra.mrb[0].mxu0 %v1395
      %v1506 = vpop.f32.mrb[0].mxu0
      %v1507 = vadd.f32 0.0, %v1506
      %v1508 = vpop.f32.mrb[0].mxu0
      %v1509 = vpop.f32.mrb[0].mxu0
      %v1510 = vadd.f32 0.0, %v1509
      %v1511 = vpop.f32.mrb[0].mxu0
      %1512 = vdwg.mxu0
      %v1513 = vadd.f32 %v1303, %v1483
      %v1514 = vadd.f32 %v1304, %v1486
      %v1515 = vadd.f32 %v1305, %v1491
      %v1516 = vadd.f32 %v1306, %v1494
      %v1517 = vadd.f32 %v1307, %v1499
      %v1518 = vadd.f32 %v1308, %v1502
      %v1519 = vadd.f32 %v1309, %v1507
      %v1520 = vadd.f32 %v1310, %v1510
      %s1521 = scalar_lea.vmem %s205, 16
      %v1522 = vld [vmem:[%s1521] sm:$0xf]
      %v1523 = vld [vmem:[%s1521 + $0x8] sm:$0xf]
      %v1524 = vld [vmem:[%s1521 + $0x10] sm:$0xf]
      %v1525 = vld [vmem:[%s1521 + $0x18] sm:$0xf]
      %v1526 = vld [vmem:[%s1521 + $0x20] sm:$0xf]
      %v1527 = vld [vmem:[%s1521 + $0x28] sm:$0xf]
      %v1528 = vld [vmem:[%s1521 + $0x30] sm:$0xf]
      %v1529 = vld [vmem:[%s1521 + $0x38] sm:$0xf]
      %s1530 = scalar_lea.vmem %s2, 384
      %v1531 = vld [vmem:[%s1530] sm:$0xf]
      %v1532 = vld [vmem:[%s1530 + $0x4] sm:$0xf]
      %v1533 = vld [vmem:[%s1530 + $0x8] sm:$0xf]
      %v1534 = vld [vmem:[%s1530 + $0xc] sm:$0xf]
      %v1535 = vld [vmem:[%s1530 + $0x10] sm:$0xf]
      %v1536 = vld [vmem:[%s1530 + $0x14] sm:$0xf]
      %v1537 = vld [vmem:[%s1530 + $0x18] sm:$0xf]
      %v1538 = vld [vmem:[%s1530 + $0x1c] sm:$0xf]
      %v1539 = vld [vmem:[%s1530 + $0x20] sm:$0xf]
      %v1540 = vld [vmem:[%s1530 + $0x24] sm:$0xf]
      %v1541 = vld [vmem:[%s1530 + $0x28] sm:$0xf]
      %v1542 = vld [vmem:[%s1530 + $0x2c] sm:$0xf]
      %v1543 = vld [vmem:[%s1530 + $0x30] sm:$0xf]
      %v1544 = vld [vmem:[%s1530 + $0x34] sm:$0xf]
      %v1545 = vld [vmem:[%s1530 + $0x38] sm:$0xf]
      %v1546 = vld [vmem:[%s1530 + $0x3c] sm:$0xf]
      %v1555 = vunpack.c.l.b16 %v1522
      %v1556 = vunpack.c.l.b16 %v1523
      %v1557 = vunpack.c.l.b16 %v1524
      %v1558 = vunpack.c.l.b16 %v1525
      %v1559 = vunpack.c.l.b16 %v1526
      %v1560 = vunpack.c.l.b16 %v1527
      %v1561 = vunpack.c.l.b16 %v1528
      %v1562 = vunpack.c.l.b16 %v1529
      %v1563 = vpack.c.b16 %v1556, %v1555
      %v1564 = vpack.c.b16 %v1558, %v1557
      %v1565 = vpack.c.b16 %v1560, %v1559
      %v1566 = vpack.c.b16 %v1562, %v1561
      %v1587 = vunpack.c.l.b16 %v1531
      %v1588 = vunpack.c.l.b16 %v1532
      %v1589 = vunpack.c.l.b16 %v1533
      %v1590 = vunpack.c.l.b16 %v1534
      %v1591 = vunpack.c.l.b16 %v1535
      %v1592 = vunpack.c.l.b16 %v1536
      %v1593 = vunpack.c.l.b16 %v1537
      %v1594 = vunpack.c.l.b16 %v1538
      %v1595 = vunpack.c.l.b16 %v1539
      %v1596 = vunpack.c.l.b16 %v1540
      %v1597 = vunpack.c.l.b16 %v1541
      %v1598 = vunpack.c.l.b16 %v1542
      %v1599 = vunpack.c.l.b16 %v1543
      %v1600 = vunpack.c.l.b16 %v1544
      %v1601 = vunpack.c.l.b16 %v1545
      %v1602 = vunpack.c.l.b16 %v1546
      %v1603 = vpack.c.b16 %v1588, %v1587
      %v1604 = vpack.c.b16 %v1590, %v1589
      %v1605 = vpack.c.b16 %v1592, %v1591
      %v1606 = vpack.c.b16 %v1594, %v1593
      %v1607 = vpack.c.b16 %v1596, %v1595
      %v1608 = vpack.c.b16 %v1598, %v1597
      %v1609 = vpack.c.b16 %v1600, %v1599
      %v1610 = vpack.c.b16 %v1602, %v1601
      %1619 = vmatprep.subr.bf16.mxu0 0
      %1620 = vmatpush1.bf16.msra.mxu0 %v1603
      %1621 = vmatprep.subr.bf16.mxu0 0
      %1622 = vmatpush1.bf16.msra.mxu0 %v1604
      %1623 = vmatprep.subr.bf16.mxu0 0
      %1624 = vmatpush1.bf16.msra.mxu0 %v1605
      %1625 = vmatprep.subr.bf16.mxu0 0
      %1626 = vmatpush1.bf16.msra.mxu0 %v1606
      %1627 = vmatprep.subr.bf16.mxu0 0
      %1628 = vmatpush1.bf16.msra.mxu0 %v1607
      %1629 = vmatprep.subr.bf16.mxu0 0
      %1630 = vmatpush1.bf16.msra.mxu0 %v1608
      %1631 = vmatprep.subr.bf16.mxu0 0
      %1632 = vmatpush1.bf16.msra.mxu0 %v1609
      %1633 = vmatprep.subr.bf16.mxu0 0
      %1634 = vmatpush1.bf16.msra.mxu0 %v1610
      %1635 = vmatprep.subr.bf16.mxu0 0
      %1636 = vmatpush1.bf16.msra.mxu0 0
      %1637 = vmatprep.subr.bf16.mxu0 0
      %1638 = vmatpush1.bf16.msra.mxu0 0
      %1639 = vmatprep.subr.bf16.mxu0 0
      %1640 = vmatpush1.bf16.msra.mxu0 0
      %1641 = vmatprep.subr.bf16.mxu0 0
      %1642 = vmatpush1.bf16.msra.mxu0 0
      %1643 = vmatprep.subr.bf16.mxu0 0
      %1644 = vmatpush1.bf16.msra.mxu0 0
      %1645 = vmatprep.subr.bf16.mxu0 0
      %1646 = vmatpush1.bf16.msra.mxu0 0
      %1647 = vmatprep.subr.bf16.mxu0 0
      %1648 = vmatpush1.bf16.msra.mxu0 0
      %1649 = vmatprep.subr.bf16.mxu0 0
      %1650 = vmatpush1.bf16.msra.mxu0 0
      %1651 = vmatprep.mubr.bf16.mxu0 0
      %1652 = vmatmul.mubr.bf16.gmra.mrb[0].mxu0 %v1563
      %v1653 = vpop.f32.mrb[0].mxu0
      %v1654 = vadd.f32 0.0, %v1653
      %v1655 = vpop.f32.mrb[0].mxu0
      %v1656 = vpop.f32.mrb[0].mxu0
      %v1657 = vadd.f32 0.0, %v1656
      %v1658 = vpop.f32.mrb[0].mxu0
      %1659 = vmatprep.mubr.bf16.mxu0 0
      %1660 = vmatmul.mubr.bf16.gmra.mrb[0].mxu0 %v1564
      %v1661 = vpop.f32.mrb[0].mxu0
      %v1662 = vadd.f32 0.0, %v1661
      %v1663 = vpop.f32.mrb[0].mxu0
      %v1664 = vpop.f32.mrb[0].mxu0
      %v1665 = vadd.f32 0.0, %v1664
      %v1666 = vpop.f32.mrb[0].mxu0
      %1667 = vmatprep.mubr.bf16.mxu0 0
      %1668 = vmatmul.mubr.bf16.gmra.mrb[0].mxu0 %v1565
      %v1669 = vpop.f32.mrb[0].mxu0
      %v1670 = vadd.f32 0.0, %v1669
      %v1671 = vpop.f32.mrb[0].mxu0
      %v1672 = vpop.f32.mrb[0].mxu0
      %v1673 = vadd.f32 0.0, %v1672
      %v1674 = vpop.f32.mrb[0].mxu0
      %1675 = vmatprep.mubr.bf16.mxu0 0
      %1676 = vmatmul.mubr.bf16.gmra.mrb[0].mxu0 %v1566
      %v1677 = vpop.f32.mrb[0].mxu0
      %v1678 = vadd.f32 0.0, %v1677
      %v1679 = vpop.f32.mrb[0].mxu0
      %v1680 = vpop.f32.mrb[0].mxu0
      %v1681 = vadd.f32 0.0, %v1680
      %v1682 = vpop.f32.mrb[0].mxu0
      %1683 = vdwg.mxu0
      %v1684 = vadd.f32 %v1513, %v1654
      %v1685 = vadd.f32 %v1514, %v1657
      %v1686 = vadd.f32 %v1515, %v1662
      %v1687 = vadd.f32 %v1516, %v1665
      %v1688 = vadd.f32 %v1517, %v1670
      %v1689 = vadd.f32 %v1518, %v1673
      %v1690 = vadd.f32 %v1519, %v1678
      %v1691 = vadd.f32 %v1520, %v1681
      %v1692 = vld [vmem:[%s1521] sm:$0xf]
      %v1693 = vld [vmem:[%s1521 + $0x4] sm:$0x1]
      %v1694 = vld [vmem:[%s1521 + $0x8] sm:$0xf]
      %v1695 = vld [vmem:[%s1521 + $0xc] sm:$0x1]
      %v1696 = vld [vmem:[%s1521 + $0x10] sm:$0xf]
      %v1697 = vld [vmem:[%s1521 + $0x14] sm:$0x1]
      %v1698 = vld [vmem:[%s1521 + $0x18] sm:$0xf]
      %v1699 = vld [vmem:[%s1521 + $0x1c] sm:$0x1]
      %v1700 = vld [vmem:[%s1521 + $0x20] sm:$0xf]
      %v1701 = vld [vmem:[%s1521 + $0x24] sm:$0x1]
      %v1702 = vld [vmem:[%s1521 + $0x28] sm:$0xf]
      %v1703 = vld [vmem:[%s1521 + $0x2c] sm:$0x1]
      %v1704 = vld [vmem:[%s1521 + $0x30] sm:$0xf]
      %v1705 = vld [vmem:[%s1521 + $0x34] sm:$0x1]
      %v1706 = vld [vmem:[%s1521 + $0x38] sm:$0xf]
      %v1707 = vld [vmem:[%s1521 + $0x3c] sm:$0x1]
      %v1709 = vshrl.u32 %v1692, 16
      %v1711 = vrot.slane %v1709, 4
      %v1712 = vshll.u32 %v1692, 16
      %v1714 = vrot.slane %v1712, 5
      %v1715 = vor.u32 %v1711, %v1714
      %v1716 = vrot.slane %v1715, 4
      %v1718 = vshll.u32 %v1693, 16
      %v1720 = vrot.slane %v1718, 5
      %v1721 = vsel %vm249, %v1716, %v1720
      %v1723 = vshrl.u32 %v1694, 16
      %v1725 = vrot.slane %v1723, 4
      %v1726 = vshll.u32 %v1694, 16
      %v1728 = vrot.slane %v1726, 5
      %v1729 = vor.u32 %v1725, %v1728
      %v1730 = vrot.slane %v1729, 4
      %v1732 = vshll.u32 %v1695, 16
      %v1734 = vrot.slane %v1732, 5
      %v1735 = vsel %vm249, %v1730, %v1734
      %v1737 = vshrl.u32 %v1696, 16
      %v1739 = vrot.slane %v1737, 4
      %v1740 = vshll.u32 %v1696, 16
      %v1742 = vrot.slane %v1740, 5
      %v1743 = vor.u32 %v1739, %v1742
      %v1744 = vrot.slane %v1743, 4
      %v1746 = vshll.u32 %v1697, 16
      %v1748 = vrot.slane %v1746, 5
      %v1749 = vsel %vm249, %v1744, %v1748
      %v1751 = vshrl.u32 %v1698, 16
      %v1753 = vrot.slane %v1751, 4
      %v1754 = vshll.u32 %v1698, 16
      %v1756 = vrot.slane %v1754, 5
      %v1757 = vor.u32 %v1753, %v1756
      %v1758 = vrot.slane %v1757, 4
      %v1760 = vshll.u32 %v1699, 16
      %v1762 = vrot.slane %v1760, 5
      %v1763 = vsel %vm249, %v1758, %v1762
      %v1765 = vshrl.u32 %v1700, 16
      %v1767 = vrot.slane %v1765, 4
      %v1768 = vshll.u32 %v1700, 16
      %v1770 = vrot.slane %v1768, 5
      %v1771 = vor.u32 %v1767, %v1770
      %v1772 = vrot.slane %v1771, 4
      %v1774 = vshll.u32 %v1701, 16
      %v1776 = vrot.slane %v1774, 5
      %v1777 = vsel %vm249, %v1772, %v1776
      %v1779 = vshrl.u32 %v1702, 16
      %v1781 = vrot.slane %v1779, 4
      %v1782 = vshll.u32 %v1702, 16
      %v1784 = vrot.slane %v1782, 5
      %v1785 = vor.u32 %v1781, %v1784
      %v1786 = vrot.slane %v1785, 4
      %v1788 = vshll.u32 %v1703, 16
      %v1790 = vrot.slane %v1788, 5
      %v1791 = vsel %vm249, %v1786, %v1790
      %v1793 = vshrl.u32 %v1704, 16
      %v1795 = vrot.slane %v1793, 4
      %v1796 = vshll.u32 %v1704, 16
      %v1798 = vrot.slane %v1796, 5
      %v1799 = vor.u32 %v1795, %v1798
      %v1800 = vrot.slane %v1799, 4
      %v1802 = vshll.u32 %v1705, 16
      %v1804 = vrot.slane %v1802, 5
      %v1805 = vsel %vm249, %v1800, %v1804
      %v1807 = vshrl.u32 %v1706, 16
      %v1809 = vrot.slane %v1807, 4
      %v1810 = vshll.u32 %v1706, 16
      %v1812 = vrot.slane %v1810, 5
      %v1813 = vor.u32 %v1809, %v1812
      %v1814 = vrot.slane %v1813, 4
      %v1816 = vshll.u32 %v1707, 16
      %v1818 = vrot.slane %v1816, 5
      %v1819 = vsel %vm249, %v1814, %v1818
      %s1820 = scalar_lea.vmem %s2, 448
      %v1821 = vld [vmem:[%s1820] sm:$0xf]
      %v1822 = vld [vmem:[%s1820 + $0x4] sm:$0xf]
      %v1823 = vld [vmem:[%s1820 + $0x8] sm:$0xf]
      %v1824 = vld [vmem:[%s1820 + $0xc] sm:$0xf]
      %v1825 = vld [vmem:[%s1820 + $0x10] sm:$0xf]
      %v1826 = vld [vmem:[%s1820 + $0x14] sm:$0xf]
      %v1827 = vld [vmem:[%s1820 + $0x18] sm:$0xf]
      %v1828 = vld [vmem:[%s1820 + $0x1c] sm:$0xf]
      %v1829 = vld [vmem:[%s1820 + $0x20] sm:$0xf]
      %v1830 = vld [vmem:[%s1820 + $0x24] sm:$0xf]
      %v1831 = vld [vmem:[%s1820 + $0x28] sm:$0xf]
      %v1832 = vld [vmem:[%s1820 + $0x2c] sm:$0xf]
      %v1833 = vld [vmem:[%s1820 + $0x30] sm:$0xf]
      %v1834 = vld [vmem:[%s1820 + $0x34] sm:$0xf]
      %v1835 = vld [vmem:[%s1820 + $0x38] sm:$0xf]
      %v1836 = vld [vmem:[%s1820 + $0x3c] sm:$0xf]
      %v1837 = vunpack.c.l.b16 %v1721
      %v1838 = vunpack.c.l.b16 %v1735
      %v1839 = vunpack.c.l.b16 %v1749
      %v1840 = vunpack.c.l.b16 %v1763
      %v1841 = vunpack.c.l.b16 %v1777
      %v1842 = vunpack.c.l.b16 %v1791
      %v1843 = vunpack.c.l.b16 %v1805
      %v1844 = vunpack.c.l.b16 %v1819
      %v1845 = vpack.c.b16 %v1838, %v1837
      %v1846 = vpack.c.b16 %v1840, %v1839
      %v1847 = vpack.c.b16 %v1842, %v1841
      %v1848 = vpack.c.b16 %v1844, %v1843
      %v1869 = vunpack.c.l.b16 %v1821
      %v1870 = vunpack.c.l.b16 %v1822
      %v1871 = vunpack.c.l.b16 %v1823
      %v1872 = vunpack.c.l.b16 %v1824
      %v1873 = vunpack.c.l.b16 %v1825
      %v1874 = vunpack.c.l.b16 %v1826
      %v1875 = vunpack.c.l.b16 %v1827
      %v1876 = vunpack.c.l.b16 %v1828
      %v1877 = vunpack.c.l.b16 %v1829
      %v1878 = vunpack.c.l.b16 %v1830
      %v1879 = vunpack.c.l.b16 %v1831
      %v1880 = vunpack.c.l.b16 %v1832
      %v1881 = vunpack.c.l.b16 %v1833
      %v1882 = vunpack.c.l.b16 %v1834
      %v1883 = vunpack.c.l.b16 %v1835
      %v1884 = vunpack.c.l.b16 %v1836
      %v1885 = vpack.c.b16 %v1870, %v1869
      %v1886 = vpack.c.b16 %v1872, %v1871
      %v1887 = vpack.c.b16 %v1874, %v1873
      %v1888 = vpack.c.b16 %v1876, %v1875
      %v1889 = vpack.c.b16 %v1878, %v1877
      %v1890 = vpack.c.b16 %v1880, %v1879
      %v1891 = vpack.c.b16 %v1882, %v1881
      %v1892 = vpack.c.b16 %v1884, %v1883
      %1901 = vmatprep.subr.bf16.mxu0 0
      %1902 = vmatpush1.bf16.msra.mxu0 %v1885
      %1903 = vmatprep.subr.bf16.mxu0 0
      %1904 = vmatpush1.bf16.msra.mxu0 %v1886
      %1905 = vmatprep.subr.bf16.mxu0 0
      %1906 = vmatpush1.bf16.msra.mxu0 %v1887
      %1907 = vmatprep.subr.bf16.mxu0 0
      %1908 = vmatpush1.bf16.msra.mxu0 %v1888
      %1909 = vmatprep.subr.bf16.mxu0 0
      %1910 = vmatpush1.bf16.msra.mxu0 %v1889
      %1911 = vmatprep.subr.bf16.mxu0 0
      %1912 = vmatpush1.bf16.msra.mxu0 %v1890
      %1913 = vmatprep.subr.bf16.mxu0 0
      %1914 = vmatpush1.bf16.msra.mxu0 %v1891
      %1915 = vmatprep.subr.bf16.mxu0 0
      %1916 = vmatpush1.bf16.msra.mxu0 %v1892
      %1917 = vmatprep.subr.bf16.mxu0 0
      %1918 = vmatpush1.bf16.msra.mxu0 0
      %1919 = vmatprep.subr.bf16.mxu0 0
      %1920 = vmatpush1.bf16.msra.mxu0 0
      %1921 = vmatprep.subr.bf16.mxu0 0
      %1922 = vmatpush1.bf16.msra.mxu0 0
      %1923 = vmatprep.subr.bf16.mxu0 0
      %1924 = vmatpush1.bf16.msra.mxu0 0
      %1925 = vmatprep.subr.bf16.mxu0 0
      %1926 = vmatpush1.bf16.msra.mxu0 0
      %1927 = vmatprep.subr.bf16.mxu0 0
      %1928 = vmatpush1.bf16.msra.mxu0 0
      %1929 = vmatprep.subr.bf16.mxu0 0
      %1930 = vmatpush1.bf16.msra.mxu0 0
      %1931 = vmatprep.subr.bf16.mxu0 0
      %1932 = vmatpush1.bf16.msra.mxu0 0
      %1933 = vmatprep.mubr.bf16.mxu0 0
      %1934 = vmatmul.mubr.bf16.gmra.mrb[0].mxu0 %v1845
      %v1935 = vpop.f32.mrb[0].mxu0
      %v1936 = vadd.f32 0.0, %v1935
      %v1937 = vpop.f32.mrb[0].mxu0
      %v1938 = vpop.f32.mrb[0].mxu0
      %v1939 = vadd.f32 0.0, %v1938
      %v1940 = vpop.f32.mrb[0].mxu0
      %1941 = vmatprep.mubr.bf16.mxu0 0
      %1942 = vmatmul.mubr.bf16.gmra.mrb[0].mxu0 %v1846
      %v1943 = vpop.f32.mrb[0].mxu0
      %v1944 = vadd.f32 0.0, %v1943
      %v1945 = vpop.f32.mrb[0].mxu0
      %v1946 = vpop.f32.mrb[0].mxu0
      %v1947 = vadd.f32 0.0, %v1946
      %v1948 = vpop.f32.mrb[0].mxu0
      %1949 = vmatprep.mubr.bf16.mxu0 0
      %1950 = vmatmul.mubr.bf16.gmra.mrb[0].mxu0 %v1847
      %v1951 = vpop.f32.mrb[0].mxu0
      %v1952 = vadd.f32 0.0, %v1951
      %v1953 = vpop.f32.mrb[0].mxu0
      %v1954 = vpop.f32.mrb[0].mxu0
      %v1955 = vadd.f32 0.0, %v1954
      %v1956 = vpop.f32.mrb[0].mxu0
      %1957 = vmatprep.mubr.bf16.mxu0 0
      %1958 = vmatmul.mubr.bf16.gmra.mrb[0].mxu0 %v1848
      %v1959 = vpop.f32.mrb[0].mxu0
      %v1960 = vadd.f32 0.0, %v1959
      %v1961 = vpop.f32.mrb[0].mxu0
      %v1962 = vpop.f32.mrb[0].mxu0
      %v1963 = vadd.f32 0.0, %v1962
      %v1964 = vpop.f32.mrb[0].mxu0
      %1965 = vdwg.mxu0
      %v1966 = vadd.f32 %v1684, %v1936
      %v1967 = vadd.f32 %v1685, %v1939
      %v1968 = vadd.f32 %v1686, %v1944
      %v1969 = vadd.f32 %v1687, %v1947
      %v1970 = vadd.f32 %v1688, %v1952
      %v1971 = vadd.f32 %v1689, %v1955
      %v1972 = vadd.f32 %v1690, %v1960
      %v1973 = vadd.f32 %v1691, %v1963
      %v1974 = vld [vmem:[%s1521] sm:$0xe]
      %v1975 = vld [vmem:[%s1521 + $0x8] sm:$0xe]
      %v1976 = vld [vmem:[%s1521 + $0x10] sm:$0xe]
      %v1977 = vld [vmem:[%s1521 + $0x18] sm:$0xe]
      %v1978 = vld [vmem:[%s1521 + $0x20] sm:$0xe]
      %v1979 = vld [vmem:[%s1521 + $0x28] sm:$0xe]
      %v1980 = vld [vmem:[%s1521 + $0x30] sm:$0xe]
      %v1981 = vld [vmem:[%s1521 + $0x38] sm:$0xe]
      %v1998 = vrot.slane %v1974, 5
      %v1999 = vrot.slane %v1998, 4
      %v2000 = vrot.slane %v1693, 5
      %v2001 = vsel %vm671, %v1999, %v2000
      %v2002 = vrot.slane %v1975, 5
      %v2003 = vrot.slane %v2002, 4
      %v2004 = vrot.slane %v1695, 5
      %v2005 = vsel %vm671, %v2003, %v2004
      %v2006 = vrot.slane %v1976, 5
      %v2007 = vrot.slane %v2006, 4
      %v2008 = vrot.slane %v1697, 5
      %v2009 = vsel %vm671, %v2007, %v2008
      %v2010 = vrot.slane %v1977, 5
      %v2011 = vrot.slane %v2010, 4
      %v2012 = vrot.slane %v1699, 5
      %v2013 = vsel %vm671, %v2011, %v2012
      %v2014 = vrot.slane %v1978, 5
      %v2015 = vrot.slane %v2014, 4
      %v2016 = vrot.slane %v1701, 5
      %v2017 = vsel %vm671, %v2015, %v2016
      %v2018 = vrot.slane %v1979, 5
      %v2019 = vrot.slane %v2018, 4
      %v2020 = vrot.slane %v1703, 5
      %v2021 = vsel %vm671, %v2019, %v2020
      %v2022 = vrot.slane %v1980, 5
      %v2023 = vrot.slane %v2022, 4
      %v2024 = vrot.slane %v1705, 5
      %v2025 = vsel %vm671, %v2023, %v2024
      %v2026 = vrot.slane %v1981, 5
      %v2027 = vrot.slane %v2026, 4
      %v2028 = vrot.slane %v1707, 5
      %v2029 = vsel %vm671, %v2027, %v2028
      %s2030 = scalar_lea.vmem %s2, 512
      %v2031 = vld [vmem:[%s2030] sm:$0xf]
      %v2032 = vld [vmem:[%s2030 + $0x4] sm:$0xf]
      %v2033 = vld [vmem:[%s2030 + $0x8] sm:$0xf]
      %v2034 = vld [vmem:[%s2030 + $0xc] sm:$0xf]
      %v2035 = vld [vmem:[%s2030 + $0x10] sm:$0xf]
      %v2036 = vld [vmem:[%s2030 + $0x14] sm:$0xf]
      %v2037 = vld [vmem:[%s2030 + $0x18] sm:$0xf]
      %v2038 = vld [vmem:[%s2030 + $0x1c] sm:$0xf]
      %v2039 = vld [vmem:[%s2030 + $0x20] sm:$0xf]
      %v2040 = vld [vmem:[%s2030 + $0x24] sm:$0xf]
      %v2041 = vld [vmem:[%s2030 + $0x28] sm:$0xf]
      %v2042 = vld [vmem:[%s2030 + $0x2c] sm:$0xf]
      %v2043 = vld [vmem:[%s2030 + $0x30] sm:$0xf]
      %v2044 = vld [vmem:[%s2030 + $0x34] sm:$0xf]
      %v2045 = vld [vmem:[%s2030 + $0x38] sm:$0xf]
      %v2046 = vld [vmem:[%s2030 + $0x3c] sm:$0xf]
      %v2047 = vunpack.c.l.b16 %v2001
      %v2048 = vunpack.c.l.b16 %v2005
      %v2049 = vunpack.c.l.b16 %v2009
      %v2050 = vunpack.c.l.b16 %v2013
      %v2051 = vunpack.c.l.b16 %v2017
      %v2052 = vunpack.c.l.b16 %v2021
      %v2053 = vunpack.c.l.b16 %v2025
      %v2054 = vunpack.c.l.b16 %v2029
      %v2055 = vpack.c.b16 %v2048, %v2047
      %v2056 = vpack.c.b16 %v2050, %v2049
      %v2057 = vpack.c.b16 %v2052, %v2051
      %v2058 = vpack.c.b16 %v2054, %v2053
      %v2079 = vunpack.c.l.b16 %v2031
      %v2080 = vunpack.c.l.b16 %v2032
      %v2081 = vunpack.c.l.b16 %v2033
      %v2082 = vunpack.c.l.b16 %v2034
      %v2083 = vunpack.c.l.b16 %v2035
      %v2084 = vunpack.c.l.b16 %v2036
      %v2085 = vunpack.c.l.b16 %v2037
      %v2086 = vunpack.c.l.b16 %v2038
      %v2087 = vunpack.c.l.b16 %v2039
      %v2088 = vunpack.c.l.b16 %v2040
      %v2089 = vunpack.c.l.b16 %v2041
      %v2090 = vunpack.c.l.b16 %v2042
      %v2091 = vunpack.c.l.b16 %v2043
      %v2092 = vunpack.c.l.b16 %v2044
      %v2093 = vunpack.c.l.b16 %v2045
      %v2094 = vunpack.c.l.b16 %v2046
      %v2095 = vpack.c.b16 %v2080, %v2079
      %v2096 = vpack.c.b16 %v2082, %v2081
      %v2097 = vpack.c.b16 %v2084, %v2083
      %v2098 = vpack.c.b16 %v2086, %v2085
      %v2099 = vpack.c.b16 %v2088, %v2087
      %v2100 = vpack.c.b16 %v2090, %v2089
      %v2101 = vpack.c.b16 %v2092, %v2091
      %v2102 = vpack.c.b16 %v2094, %v2093
      %2111 = vmatprep.subr.bf16.mxu0 0
      %2112 = vmatpush1.bf16.msra.mxu0 %v2095
      %2113 = vmatprep.subr.bf16.mxu0 0
      %2114 = vmatpush1.bf16.msra.mxu0 %v2096
      %2115 = vmatprep.subr.bf16.mxu0 0
      %2116 = vmatpush1.bf16.msra.mxu0 %v2097
      %2117 = vmatprep.subr.bf16.mxu0 0
      %2118 = vmatpush1.bf16.msra.mxu0 %v2098
      %2119 = vmatprep.subr.bf16.mxu0 0
      %2120 = vmatpush1.bf16.msra.mxu0 %v2099
      %2121 = vmatprep.subr.bf16.mxu0 0
      %2122 = vmatpush1.bf16.msra.mxu0 %v2100
      %2123 = vmatprep.subr.bf16.mxu0 0
      %2124 = vmatpush1.bf16.msra.mxu0 %v2101
      %2125 = vmatprep.subr.bf16.mxu0 0
      %2126 = vmatpush1.bf16.msra.mxu0 %v2102
      %2127 = vmatprep.subr.bf16.mxu0 0
      %2128 = vmatpush1.bf16.msra.mxu0 0
      %2129 = vmatprep.subr.bf16.mxu0 0
      %2130 = vmatpush1.bf16.msra.mxu0 0
      %2131 = vmatprep.subr.bf16.mxu0 0
      %2132 = vmatpush1.bf16.msra.mxu0 0
      %2133 = vmatprep.subr.bf16.mxu0 0
      %2134 = vmatpush1.bf16.msra.mxu0 0
      %2135 = vmatprep.subr.bf16.mxu0 0
      %2136 = vmatpush1.bf16.msra.mxu0 0
      %2137 = vmatprep.subr.bf16.mxu0 0
      %2138 = vmatpush1.bf16.msra.mxu0 0
      %2139 = vmatprep.subr.bf16.mxu0 0
      %2140 = vmatpush1.bf16.msra.mxu0 0
      %2141 = vmatprep.subr.bf16.mxu0 0
      %2142 = vmatpush1.bf16.msra.mxu0 0
      %2143 = vmatprep.mubr.bf16.mxu0 0
      %2144 = vmatmul.mubr.bf16.gmra.mrb[0].mxu0 %v2055
      %v2145 = vpop.f32.mrb[0].mxu0
      %v2146 = vadd.f32 0.0, %v2145
      %v2147 = vpop.f32.mrb[0].mxu0
      %v2148 = vpop.f32.mrb[0].mxu0
      %v2149 = vadd.f32 0.0, %v2148
      %v2150 = vpop.f32.mrb[0].mxu0
      %2151 = vmatprep.mubr.bf16.mxu0 0
      %2152 = vmatmul.mubr.bf16.gmra.mrb[0].mxu0 %v2056
      %v2153 = vpop.f32.mrb[0].mxu0
      %v2154 = vadd.f32 0.0, %v2153
      %v2155 = vpop.f32.mrb[0].mxu0
      %v2156 = vpop.f32.mrb[0].mxu0
      %v2157 = vadd.f32 0.0, %v2156
      %v2158 = vpop.f32.mrb[0].mxu0
      %2159 = vmatprep.mubr.bf16.mxu0 0
      %2160 = vmatmul.mubr.bf16.gmra.mrb[0].mxu0 %v2057
      %v2161 = vpop.f32.mrb[0].mxu0
      %v2162 = vadd.f32 0.0, %v2161
      %v2163 = vpop.f32.mrb[0].mxu0
      %v2164 = vpop.f32.mrb[0].mxu0
      %v2165 = vadd.f32 0.0, %v2164
      %v2166 = vpop.f32.mrb[0].mxu0
      %2167 = vmatprep.mubr.bf16.mxu0 0
      %2168 = vmatmul.mubr.bf16.gmra.mrb[0].mxu0 %v2058
      %v2169 = vpop.f32.mrb[0].mxu0
      %v2170 = vadd.f32 0.0, %v2169
      %v2171 = vpop.f32.mrb[0].mxu0
      %v2172 = vpop.f32.mrb[0].mxu0
      %v2173 = vadd.f32 0.0, %v2172
      %v2174 = vpop.f32.mrb[0].mxu0
      %2175 = vdwg.mxu0
      %v2176 = vadd.f32 %v1966, %v2146
      %v2177 = vadd.f32 %v1967, %v2149
      %v2178 = vadd.f32 %v1968, %v2154
      %v2179 = vadd.f32 %v1969, %v2157
      %v2180 = vadd.f32 %v1970, %v2162
      %v2181 = vadd.f32 %v1971, %v2165
      %v2182 = vadd.f32 %v1972, %v2170
      %v2183 = vadd.f32 %v1973, %v2173
      %v2184 = vld [vmem:[%s3] sm:$0x1]
      %v2186 = vlaneseq
      %v2187 = vshrl.u32 %v2186, 7
      %v2188 = vsub.s32 0, %v2187
      %v2189 = vrot.slane %v2184, %v2188
      %v2191 = vadd.f32 %v2176, %v2189
      %v2192 = vadd.f32 %v2177, %v2189
      %v2193 = vadd.f32 %v2178, %v2189
      %v2194 = vadd.f32 %v2179, %v2189
      %v2195 = vadd.f32 %v2180, %v2189
      %v2196 = vadd.f32 %v2181, %v2189
      %v2197 = vadd.f32 %v2182, %v2189
      %v2198 = vadd.f32 %v2183, %v2189
      %v2199 = vmax.f32 %v2191, 0.0
      %v2200 = vmax.f32 %v2192, 0.0
      %v2201 = vmax.f32 %v2193, 0.0
      %v2202 = vmax.f32 %v2194, 0.0
      %v2203 = vmax.f32 %v2195, 0.0
      %v2204 = vmax.f32 %v2196, 0.0
      %v2205 = vmax.f32 %v2197, 0.0
      %v2206 = vmax.f32 %v2198, 0.0
      %v2207 = vld [vmem:[%s210] sm:$0xf]
      %v2208 = vld [vmem:[%s210 + $0x8] sm:$0xf]
      %v2209 = vld [vmem:[%s210 + $0x10] sm:$0xf]
      %v2210 = vld [vmem:[%s210 + $0x18] sm:$0xf]
      %v2211 = vld [vmem:[%s210 + $0x20] sm:$0xf]
      %v2212 = vld [vmem:[%s210 + $0x28] sm:$0xf]
      %v2213 = vld [vmem:[%s210 + $0x30] sm:$0xf]
      %v2214 = vld [vmem:[%s210 + $0x38] sm:$0xf]
      %v2215 = vld [vmem:[%s210 + $0x4] sm:$0x1]
      %v2216 = vld [vmem:[%s210 + $0xc] sm:$0x1]
      %v2217 = vld [vmem:[%s210 + $0x14] sm:$0x1]
      %v2218 = vld [vmem:[%s210 + $0x1c] sm:$0x1]
      %v2219 = vld [vmem:[%s210 + $0x24] sm:$0x1]
      %v2220 = vld [vmem:[%s210 + $0x2c] sm:$0x1]
      %v2221 = vld [vmem:[%s210 + $0x34] sm:$0x1]
      %v2222 = vld [vmem:[%s210 + $0x3c] sm:$0x1]
      %v2224 = vshrl.u32 %v2207, 16
      %v2226 = vrot.slane %v2224, 4
      %v2227 = vshll.u32 %v2207, 16
      %v2229 = vrot.slane %v2227, 5
      %v2230 = vor.u32 %v2226, %v2229
      %v2231 = vrot.slane %v2230, 4
      %v2233 = vshll.u32 %v2215, 16
      %v2235 = vrot.slane %v2233, 5
      %v2236 = vsel %vm249, %v2231, %v2235
      %v2238 = vshrl.u32 %v2208, 16
      %v2240 = vrot.slane %v2238, 4
      %v2241 = vshll.u32 %v2208, 16
      %v2243 = vrot.slane %v2241, 5
      %v2244 = vor.u32 %v2240, %v2243
      %v2245 = vrot.slane %v2244, 4
      %v2247 = vshll.u32 %v2216, 16
      %v2249 = vrot.slane %v2247, 5
      %v2250 = vsel %vm249, %v2245, %v2249
      %v2252 = vshrl.u32 %v2209, 16
      %v2254 = vrot.slane %v2252, 4
      %v2255 = vshll.u32 %v2209, 16
      %v2257 = vrot.slane %v2255, 5
      %v2258 = vor.u32 %v2254, %v2257
      %v2259 = vrot.slane %v2258, 4
      %v2261 = vshll.u32 %v2217, 16
      %v2263 = vrot.slane %v2261, 5
      %v2264 = vsel %vm249, %v2259, %v2263
      %v2266 = vshrl.u32 %v2210, 16
      %v2268 = vrot.slane %v2266, 4
      %v2269 = vshll.u32 %v2210, 16
      %v2271 = vrot.slane %v2269, 5
      %v2272 = vor.u32 %v2268, %v2271
      %v2273 = vrot.slane %v2272, 4
      %v2275 = vshll.u32 %v2218, 16
      %v2277 = vrot.slane %v2275, 5
      %v2278 = vsel %vm249, %v2273, %v2277
      %v2280 = vshrl.u32 %v2211, 16
      %v2282 = vrot.slane %v2280, 4
      %v2283 = vshll.u32 %v2211, 16
      %v2285 = vrot.slane %v2283, 5
      %v2286 = vor.u32 %v2282, %v2285
      %v2287 = vrot.slane %v2286, 4
      %v2289 = vshll.u32 %v2219, 16
      %v2291 = vrot.slane %v2289, 5
      %v2292 = vsel %vm249, %v2287, %v2291
      %v2294 = vshrl.u32 %v2212, 16
      %v2296 = vrot.slane %v2294, 4
      %v2297 = vshll.u32 %v2212, 16
      %v2299 = vrot.slane %v2297, 5
      %v2300 = vor.u32 %v2296, %v2299
      %v2301 = vrot.slane %v2300, 4
      %v2303 = vshll.u32 %v2220, 16
      %v2305 = vrot.slane %v2303, 5
      %v2306 = vsel %vm249, %v2301, %v2305
      %v2308 = vshrl.u32 %v2213, 16
      %v2310 = vrot.slane %v2308, 4
      %v2311 = vshll.u32 %v2213, 16
      %v2313 = vrot.slane %v2311, 5
      %v2314 = vor.u32 %v2310, %v2313
      %v2315 = vrot.slane %v2314, 4
      %v2317 = vshll.u32 %v2221, 16
      %v2319 = vrot.slane %v2317, 5
      %v2320 = vsel %vm249, %v2315, %v2319
      %v2322 = vshrl.u32 %v2214, 16
      %v2324 = vrot.slane %v2322, 4
      %v2325 = vshll.u32 %v2214, 16
      %v2327 = vrot.slane %v2325, 5
      %v2328 = vor.u32 %v2324, %v2327
      %v2329 = vrot.slane %v2328, 4
      %v2331 = vshll.u32 %v2222, 16
      %v2333 = vrot.slane %v2331, 5
      %v2334 = vsel %vm249, %v2329, %v2333
      %v2335 = vunpack.c.l.b16 %v2236
      %v2336 = vunpack.c.l.b16 %v2250
      %v2337 = vunpack.c.l.b16 %v2264
      %v2338 = vunpack.c.l.b16 %v2278
      %v2339 = vunpack.c.l.b16 %v2292
      %v2340 = vunpack.c.l.b16 %v2306
      %v2341 = vunpack.c.l.b16 %v2320
      %v2342 = vunpack.c.l.b16 %v2334
      %v2343 = vpack.c.b16 %v2336, %v2335
      %v2344 = vpack.c.b16 %v2338, %v2337
      %v2345 = vpack.c.b16 %v2340, %v2339
      %v2346 = vpack.c.b16 %v2342, %v2341
      %2351 = vmatprep.subr.bf16.mxu0 0
      %2352 = vmatpush1.bf16.msra.mxu0 %v427
      %2353 = vmatprep.subr.bf16.mxu0 0
      %2354 = vmatpush1.bf16.msra.mxu0 %v428
      %2355 = vmatprep.subr.bf16.mxu0 0
      %2356 = vmatpush1.bf16.msra.mxu0 %v429
      %2357 = vmatprep.subr.bf16.mxu0 0
      %2358 = vmatpush1.bf16.msra.mxu0 %v430
      %2359 = vmatprep.subr.bf16.mxu0 0
      %2360 = vmatpush1.bf16.msra.mxu0 %v431
      %2361 = vmatprep.subr.bf16.mxu0 0
      %2362 = vmatpush1.bf16.msra.mxu0 %v432
      %2363 = vmatprep.subr.bf16.mxu0 0
      %2364 = vmatpush1.bf16.msra.mxu0 %v433
      %2365 = vmatprep.subr.bf16.mxu0 0
      %2366 = vmatpush1.bf16.msra.mxu0 %v434
      %2367 = vmatprep.subr.bf16.mxu0 0
      %2368 = vmatpush1.bf16.msra.mxu0 0
      %2369 = vmatprep.subr.bf16.mxu0 0
      %2370 = vmatpush1.bf16.msra.mxu0 0
      %2371 = vmatprep.subr.bf16.mxu0 0
      %2372 = vmatpush1.bf16.msra.mxu0 0
      %2373 = vmatprep.subr.bf16.mxu0 0
      %2374 = vmatpush1.bf16.msra.mxu0 0
      %2375 = vmatprep.subr.bf16.mxu0 0
      %2376 = vmatpush1.bf16.msra.mxu0 0
      %2377 = vmatprep.subr.bf16.mxu0 0
      %2378 = vmatpush1.bf16.msra.mxu0 0
      %2379 = vmatprep.subr.bf16.mxu0 0
      %2380 = vmatpush1.bf16.msra.mxu0 0
      %2381 = vmatprep.subr.bf16.mxu0 0
      %2382 = vmatpush1.bf16.msra.mxu0 0
      %2383 = vmatprep.mubr.bf16.mxu0 0
      %2384 = vmatmul.mubr.bf16.gmra.mrb[0].mxu0 %v2343
      %v2385 = vpop.f32.mrb[0].mxu0
      %v2386 = vadd.f32 0.0, %v2385
      %v2387 = vpop.f32.mrb[0].mxu0
      %v2388 = vpop.f32.mrb[0].mxu0
      %v2389 = vadd.f32 0.0, %v2388
      %v2390 = vpop.f32.mrb[0].mxu0
      %2391 = vmatprep.mubr.bf16.mxu0 0
      %2392 = vmatmul.mubr.bf16.gmra.mrb[0].mxu0 %v2344
      %v2393 = vpop.f32.mrb[0].mxu0
      %v2394 = vadd.f32 0.0, %v2393
      %v2395 = vpop.f32.mrb[0].mxu0
      %v2396 = vpop.f32.mrb[0].mxu0
      %v2397 = vadd.f32 0.0, %v2396
      %v2398 = vpop.f32.mrb[0].mxu0
      %2399 = vmatprep.mubr.bf16.mxu0 0
      %2400 = vmatmul.mubr.bf16.gmra.mrb[0].mxu0 %v2345
      %v2401 = vpop.f32.mrb[0].mxu0
      %v2402 = vadd.f32 0.0, %v2401
      %v2403 = vpop.f32.mrb[0].mxu0
      %v2404 = vpop.f32.mrb[0].mxu0
      %v2405 = vadd.f32 0.0, %v2404
      %v2406 = vpop.f32.mrb[0].mxu0
      %2407 = vmatprep.mubr.bf16.mxu0 0
      %2408 = vmatmul.mubr.bf16.gmra.mrb[0].mxu0 %v2346
      %v2409 = vpop.f32.mrb[0].mxu0
      %v2410 = vadd.f32 0.0, %v2409
      %v2411 = vpop.f32.mrb[0].mxu0
      %v2412 = vpop.f32.mrb[0].mxu0
      %v2413 = vadd.f32 0.0, %v2412
      %v2414 = vpop.f32.mrb[0].mxu0
      %2415 = vdwg.mxu0
      %v2424 = vunpack.c.l.b16 %v2207
      %v2425 = vunpack.c.l.b16 %v2208
      %v2426 = vunpack.c.l.b16 %v2209
      %v2427 = vunpack.c.l.b16 %v2210
      %v2428 = vunpack.c.l.b16 %v2211
      %v2429 = vunpack.c.l.b16 %v2212
      %v2430 = vunpack.c.l.b16 %v2213
      %v2431 = vunpack.c.l.b16 %v2214
      %v2432 = vpack.c.b16 %v2425, %v2424
      %v2433 = vpack.c.b16 %v2427, %v2426
      %v2434 = vpack.c.b16 %v2429, %v2428
      %v2435 = vpack.c.b16 %v2431, %v2430
      %2440 = vmatprep.subr.bf16.mxu0 0
      %2441 = vmatpush1.bf16.msra.mxu0 %v564
      %2442 = vmatprep.subr.bf16.mxu0 0
      %2443 = vmatpush1.bf16.msra.mxu0 %v565
      %2444 = vmatprep.subr.bf16.mxu0 0
      %2445 = vmatpush1.bf16.msra.mxu0 %v566
      %2446 = vmatprep.subr.bf16.mxu0 0
      %2447 = vmatpush1.bf16.msra.mxu0 %v567
      %2448 = vmatprep.subr.bf16.mxu0 0
      %2449 = vmatpush1.bf16.msra.mxu0 %v568
      %2450 = vmatprep.subr.bf16.mxu0 0
      %2451 = vmatpush1.bf16.msra.mxu0 %v569
      %2452 = vmatprep.subr.bf16.mxu0 0
      %2453 = vmatpush1.bf16.msra.mxu0 %v570
      %2454 = vmatprep.subr.bf16.mxu0 0
      %2455 = vmatpush1.bf16.msra.mxu0 %v571
      %2456 = vmatprep.subr.bf16.mxu0 0
      %2457 = vmatpush1.bf16.msra.mxu0 0
      %2458 = vmatprep.subr.bf16.mxu0 0
      %2459 = vmatpush1.bf16.msra.mxu0 0
      %2460 = vmatprep.subr.bf16.mxu0 0
      %2461 = vmatpush1.bf16.msra.mxu0 0
      %2462 = vmatprep.subr.bf16.mxu0 0
      %2463 = vmatpush1.bf16.msra.mxu0 0
      %2464 = vmatprep.subr.bf16.mxu0 0
      %2465 = vmatpush1.bf16.msra.mxu0 0
      %2466 = vmatprep.subr.bf16.mxu0 0
      %2467 = vmatpush1.bf16.msra.mxu0 0
      %2468 = vmatprep.subr.bf16.mxu0 0
      %2469 = vmatpush1.bf16.msra.mxu0 0
      %2470 = vmatprep.subr.bf16.mxu0 0
      %2471 = vmatpush1.bf16.msra.mxu0 0
      %2472 = vmatprep.mubr.bf16.mxu0 0
      %2473 = vmatmul.mubr.bf16.gmra.mrb[0].mxu0 %v2432
      %v2474 = vpop.f32.mrb[0].mxu0
      %v2475 = vadd.f32 %v2386, %v2474
      %v2476 = vpop.f32.mrb[0].mxu0
      %v2477 = vpop.f32.mrb[0].mxu0
      %v2478 = vadd.f32 %v2389, %v2477
      %v2479 = vpop.f32.mrb[0].mxu0
      %2480 = vmatprep.mubr.bf16.mxu0 0
      %2481 = vmatmul.mubr.bf16.gmra.mrb[0].mxu0 %v2433
      %v2482 = vpop.f32.mrb[0].mxu0
      %v2483 = vadd.f32 %v2394, %v2482
      %v2484 = vpop.f32.mrb[0].mxu0
      %v2485 = vpop.f32.mrb[0].mxu0
      %v2486 = vadd.f32 %v2397, %v2485
      %v2487 = vpop.f32.mrb[0].mxu0
      %2488 = vmatprep.mubr.bf16.mxu0 0
      %2489 = vmatmul.mubr.bf16.gmra.mrb[0].mxu0 %v2434
      %v2490 = vpop.f32.mrb[0].mxu0
      %v2491 = vadd.f32 %v2402, %v2490
      %v2492 = vpop.f32.mrb[0].mxu0
      %v2493 = vpop.f32.mrb[0].mxu0
      %v2494 = vadd.f32 %v2405, %v2493
      %v2495 = vpop.f32.mrb[0].mxu0
      %2496 = vmatprep.mubr.bf16.mxu0 0
      %2497 = vmatmul.mubr.bf16.gmra.mrb[0].mxu0 %v2435
      %v2498 = vpop.f32.mrb[0].mxu0
      %v2499 = vadd.f32 %v2410, %v2498
      %v2500 = vpop.f32.mrb[0].mxu0
      %v2501 = vpop.f32.mrb[0].mxu0
      %v2502 = vadd.f32 %v2413, %v2501
      %v2503 = vpop.f32.mrb[0].mxu0
      %2504 = vdwg.mxu0
      %v2505 = vld [vmem:[%s210] sm:$0xe]
      %v2506 = vld [vmem:[%s210 + $0x8] sm:$0xe]
      %v2507 = vld [vmem:[%s210 + $0x10] sm:$0xe]
      %v2508 = vld [vmem:[%s210 + $0x18] sm:$0xe]
      %v2509 = vld [vmem:[%s210 + $0x20] sm:$0xe]
      %v2510 = vld [vmem:[%s210 + $0x28] sm:$0xe]
      %v2511 = vld [vmem:[%s210 + $0x30] sm:$0xe]
      %v2512 = vld [vmem:[%s210 + $0x38] sm:$0xe]
      %v2529 = vrot.slane %v2505, 5
      %v2530 = vrot.slane %v2529, 4
      %v2531 = vrot.slane %v2215, 5
      %v2532 = vsel %vm671, %v2530, %v2531
      %v2533 = vrot.slane %v2506, 5
      %v2534 = vrot.slane %v2533, 4
      %v2535 = vrot.slane %v2216, 5
      %v2536 = vsel %vm671, %v2534, %v2535
      %v2537 = vrot.slane %v2507, 5
      %v2538 = vrot.slane %v2537, 4
      %v2539 = vrot.slane %v2217, 5
      %v2540 = vsel %vm671, %v2538, %v2539
      %v2541 = vrot.slane %v2508, 5
      %v2542 = vrot.slane %v2541, 4
      %v2543 = vrot.slane %v2218, 5
      %v2544 = vsel %vm671, %v2542, %v2543
      %v2545 = vrot.slane %v2509, 5
      %v2546 = vrot.slane %v2545, 4
      %v2547 = vrot.slane %v2219, 5
      %v2548 = vsel %vm671, %v2546, %v2547
      %v2549 = vrot.slane %v2510, 5
      %v2550 = vrot.slane %v2549, 4
      %v2551 = vrot.slane %v2220, 5
      %v2552 = vsel %vm671, %v2550, %v2551
      %v2553 = vrot.slane %v2511, 5
      %v2554 = vrot.slane %v2553, 4
      %v2555 = vrot.slane %v2221, 5
      %v2556 = vsel %vm671, %v2554, %v2555
      %v2557 = vrot.slane %v2512, 5
      %v2558 = vrot.slane %v2557, 4
      %v2559 = vrot.slane %v2222, 5
      %v2560 = vsel %vm671, %v2558, %v2559
      %v2561 = vunpack.c.l.b16 %v2532
      %v2562 = vunpack.c.l.b16 %v2536
      %v2563 = vunpack.c.l.b16 %v2540
      %v2564 = vunpack.c.l.b16 %v2544
      %v2565 = vunpack.c.l.b16 %v2548
      %v2566 = vunpack.c.l.b16 %v2552
      %v2567 = vunpack.c.l.b16 %v2556
      %v2568 = vunpack.c.l.b16 %v2560
      %v2569 = vpack.c.b16 %v2562, %v2561
      %v2570 = vpack.c.b16 %v2564, %v2563
      %v2571 = vpack.c.b16 %v2566, %v2565
      %v2572 = vpack.c.b16 %v2568, %v2567
      %2577 = vmatprep.subr.bf16.mxu0 0
      %2578 = vmatpush1.bf16.msra.mxu0 %v769
      %2579 = vmatprep.subr.bf16.mxu0 0
      %2580 = vmatpush1.bf16.msra.mxu0 %v770
      %2581 = vmatprep.subr.bf16.mxu0 0
      %2582 = vmatpush1.bf16.msra.mxu0 %v771
      %2583 = vmatprep.subr.bf16.mxu0 0
      %2584 = vmatpush1.bf16.msra.mxu0 %v772
      %2585 = vmatprep.subr.bf16.mxu0 0
      %2586 = vmatpush1.bf16.msra.mxu0 %v773
      %2587 = vmatprep.subr.bf16.mxu0 0
      %2588 = vmatpush1.bf16.msra.mxu0 %v774
      %2589 = vmatprep.subr.bf16.mxu0 0
      %2590 = vmatpush1.bf16.msra.mxu0 %v775
      %2591 = vmatprep.subr.bf16.mxu0 0
      %2592 = vmatpush1.bf16.msra.mxu0 %v776
      %2593 = vmatprep.subr.bf16.mxu0 0
      %2594 = vmatpush1.bf16.msra.mxu0 0
      %2595 = vmatprep.subr.bf16.mxu0 0
      %2596 = vmatpush1.bf16.msra.mxu0 0
      %2597 = vmatprep.subr.bf16.mxu0 0
      %2598 = vmatpush1.bf16.msra.mxu0 0
      %2599 = vmatprep.subr.bf16.mxu0 0
      %2600 = vmatpush1.bf16.msra.mxu0 0
      %2601 = vmatprep.subr.bf16.mxu0 0
      %2602 = vmatpush1.bf16.msra.mxu0 0
      %2603 = vmatprep.subr.bf16.mxu0 0
      %2604 = vmatpush1.bf16.msra.mxu0 0
      %2605 = vmatprep.subr.bf16.mxu0 0
      %2606 = vmatpush1.bf16.msra.mxu0 0
      %2607 = vmatprep.subr.bf16.mxu0 0
      %2608 = vmatpush1.bf16.msra.mxu0 0
      %2609 = vmatprep.mubr.bf16.mxu0 0
      %2610 = vmatmul.mubr.bf16.gmra.mrb[0].mxu0 %v2569
      %v2611 = vpop.f32.mrb[0].mxu0
      %v2612 = vadd.f32 0.0, %v2611
      %v2613 = vpop.f32.mrb[0].mxu0
      %v2614 = vpop.f32.mrb[0].mxu0
      %v2615 = vadd.f32 0.0, %v2614
      %v2616 = vpop.f32.mrb[0].mxu0
      %2617 = vmatprep.mubr.bf16.mxu0 0
      %2618 = vmatmul.mubr.bf16.gmra.mrb[0].mxu0 %v2570
      %v2619 = vpop.f32.mrb[0].mxu0
      %v2620 = vadd.f32 0.0, %v2619
      %v2621 = vpop.f32.mrb[0].mxu0
      %v2622 = vpop.f32.mrb[0].mxu0
      %v2623 = vadd.f32 0.0, %v2622
      %v2624 = vpop.f32.mrb[0].mxu0
      %2625 = vmatprep.mubr.bf16.mxu0 0
      %2626 = vmatmul.mubr.bf16.gmra.mrb[0].mxu0 %v2571
      %v2627 = vpop.f32.mrb[0].mxu0
      %v2628 = vadd.f32 0.0, %v2627
      %v2629 = vpop.f32.mrb[0].mxu0
      %v2630 = vpop.f32.mrb[0].mxu0
      %v2631 = vadd.f32 0.0, %v2630
      %v2632 = vpop.f32.mrb[0].mxu0
      %2633 = vmatprep.mubr.bf16.mxu0 0
      %2634 = vmatmul.mubr.bf16.gmra.mrb[0].mxu0 %v2572
      %v2635 = vpop.f32.mrb[0].mxu0
      %v2636 = vadd.f32 0.0, %v2635
      %v2637 = vpop.f32.mrb[0].mxu0
      %v2638 = vpop.f32.mrb[0].mxu0
      %v2639 = vadd.f32 0.0, %v2638
      %v2640 = vpop.f32.mrb[0].mxu0
      %2641 = vdwg.mxu0
      %v2642 = vadd.f32 %v2475, %v2612
      %v2643 = vadd.f32 %v2478, %v2615
      %v2644 = vadd.f32 %v2483, %v2620
      %v2645 = vadd.f32 %v2486, %v2623
      %v2646 = vadd.f32 %v2491, %v2628
      %v2647 = vadd.f32 %v2494, %v2631
      %v2648 = vadd.f32 %v2499, %v2636
      %v2649 = vadd.f32 %v2502, %v2639
      %s2650 = scalar_lea.vmem %s210, 8
      %v2651 = vld [vmem:[%s2650] sm:$0xf]
      %v2652 = vld [vmem:[%s2650 + $0x8] sm:$0xf]
      %v2653 = vld [vmem:[%s2650 + $0x10] sm:$0xf]
      %v2654 = vld [vmem:[%s2650 + $0x18] sm:$0xf]
      %v2655 = vld [vmem:[%s2650 + $0x20] sm:$0xf]
      %v2656 = vld [vmem:[%s2650 + $0x28] sm:$0xf]
      %v2657 = vld [vmem:[%s2650 + $0x30] sm:$0xf]
      %v2658 = vld [vmem:[%s2650 + $0x38] sm:$0xf]
      %v2667 = vunpack.c.l.b16 %v2651
      %v2668 = vunpack.c.l.b16 %v2652
      %v2669 = vunpack.c.l.b16 %v2653
      %v2670 = vunpack.c.l.b16 %v2654
      %v2671 = vunpack.c.l.b16 %v2655
      %v2672 = vunpack.c.l.b16 %v2656
      %v2673 = vunpack.c.l.b16 %v2657
      %v2674 = vunpack.c.l.b16 %v2658
      %v2675 = vpack.c.b16 %v2668, %v2667
      %v2676 = vpack.c.b16 %v2670, %v2669
      %v2677 = vpack.c.b16 %v2672, %v2671
      %v2678 = vpack.c.b16 %v2674, %v2673
      %2683 = vmatprep.subr.bf16.mxu0 0
      %2684 = vmatpush1.bf16.msra.mxu0 %v940
      %2685 = vmatprep.subr.bf16.mxu0 0
      %2686 = vmatpush1.bf16.msra.mxu0 %v941
      %2687 = vmatprep.subr.bf16.mxu0 0
      %2688 = vmatpush1.bf16.msra.mxu0 %v942
      %2689 = vmatprep.subr.bf16.mxu0 0
      %2690 = vmatpush1.bf16.msra.mxu0 %v943
      %2691 = vmatprep.subr.bf16.mxu0 0
      %2692 = vmatpush1.bf16.msra.mxu0 %v944
      %2693 = vmatprep.subr.bf16.mxu0 0
      %2694 = vmatpush1.bf16.msra.mxu0 %v945
      %2695 = vmatprep.subr.bf16.mxu0 0
      %2696 = vmatpush1.bf16.msra.mxu0 %v946
      %2697 = vmatprep.subr.bf16.mxu0 0
      %2698 = vmatpush1.bf16.msra.mxu0 %v947
      %2699 = vmatprep.subr.bf16.mxu0 0
      %2700 = vmatpush1.bf16.msra.mxu0 0
      %2701 = vmatprep.subr.bf16.mxu0 0
      %2702 = vmatpush1.bf16.msra.mxu0 0
      %2703 = vmatprep.subr.bf16.mxu0 0
      %2704 = vmatpush1.bf16.msra.mxu0 0
      %2705 = vmatprep.subr.bf16.mxu0 0
      %2706 = vmatpush1.bf16.msra.mxu0 0
      %2707 = vmatprep.subr.bf16.mxu0 0
      %2708 = vmatpush1.bf16.msra.mxu0 0
      %2709 = vmatprep.subr.bf16.mxu0 0
      %2710 = vmatpush1.bf16.msra.mxu0 0
      %2711 = vmatprep.subr.bf16.mxu0 0
      %2712 = vmatpush1.bf16.msra.mxu0 0
      %2713 = vmatprep.subr.bf16.mxu0 0
      %2714 = vmatpush1.bf16.msra.mxu0 0
      %2715 = vmatprep.mubr.bf16.mxu0 0
      %2716 = vmatmul.mubr.bf16.gmra.mrb[0].mxu0 %v2675
      %v2717 = vpop.f32.mrb[0].mxu0
      %v2718 = vadd.f32 0.0, %v2717
      %v2719 = vpop.f32.mrb[0].mxu0
      %v2720 = vpop.f32.mrb[0].mxu0
      %v2721 = vadd.f32 0.0, %v2720
      %v2722 = vpop.f32.mrb[0].mxu0
      %2723 = vmatprep.mubr.bf16.mxu0 0
      %2724 = vmatmul.mubr.bf16.gmra.mrb[0].mxu0 %v2676
      %v2725 = vpop.f32.mrb[0].mxu0
      %v2726 = vadd.f32 0.0, %v2725
      %v2727 = vpop.f32.mrb[0].mxu0
      %v2728 = vpop.f32.mrb[0].mxu0
      %v2729 = vadd.f32 0.0, %v2728
      %v2730 = vpop.f32.mrb[0].mxu0
      %2731 = vmatprep.mubr.bf16.mxu0 0
      %2732 = vmatmul.mubr.bf16.gmra.mrb[0].mxu0 %v2677
      %v2733 = vpop.f32.mrb[0].mxu0
      %v2734 = vadd.f32 0.0, %v2733
      %v2735 = vpop.f32.mrb[0].mxu0
      %v2736 = vpop.f32.mrb[0].mxu0
      %v2737 = vadd.f32 0.0, %v2736
      %v2738 = vpop.f32.mrb[0].mxu0
      %2739 = vmatprep.mubr.bf16.mxu0 0
      %2740 = vmatmul.mubr.bf16.gmra.mrb[0].mxu0 %v2678
      %v2741 = vpop.f32.mrb[0].mxu0
      %v2742 = vadd.f32 0.0, %v2741
      %v2743 = vpop.f32.mrb[0].mxu0
      %v2744 = vpop.f32.mrb[0].mxu0
      %v2745 = vadd.f32 0.0, %v2744
      %v2746 = vpop.f32.mrb[0].mxu0
      %2747 = vdwg.mxu0
      %v2748 = vadd.f32 %v2642, %v2718
      %v2749 = vadd.f32 %v2643, %v2721
      %v2750 = vadd.f32 %v2644, %v2726
      %v2751 = vadd.f32 %v2645, %v2729
      %v2752 = vadd.f32 %v2646, %v2734
      %v2753 = vadd.f32 %v2647, %v2737
      %v2754 = vadd.f32 %v2648, %v2742
      %v2755 = vadd.f32 %v2649, %v2745
      %v2756 = vld [vmem:[%s2650] sm:$0xf]
      %v2757 = vld [vmem:[%s2650 + $0x4] sm:$0x1]
      %v2758 = vld [vmem:[%s2650 + $0x8] sm:$0xf]
      %v2759 = vld [vmem:[%s2650 + $0xc] sm:$0x1]
      %v2760 = vld [vmem:[%s2650 + $0x10] sm:$0xf]
      %v2761 = vld [vmem:[%s2650 + $0x14] sm:$0x1]
      %v2762 = vld [vmem:[%s2650 + $0x18] sm:$0xf]
      %v2763 = vld [vmem:[%s2650 + $0x1c] sm:$0x1]
      %v2764 = vld [vmem:[%s2650 + $0x20] sm:$0xf]
      %v2765 = vld [vmem:[%s2650 + $0x24] sm:$0x1]
      %v2766 = vld [vmem:[%s2650 + $0x28] sm:$0xf]
      %v2767 = vld [vmem:[%s2650 + $0x2c] sm:$0x1]
      %v2768 = vld [vmem:[%s2650 + $0x30] sm:$0xf]
      %v2769 = vld [vmem:[%s2650 + $0x34] sm:$0x1]
      %v2770 = vld [vmem:[%s2650 + $0x38] sm:$0xf]
      %v2771 = vld [vmem:[%s2650 + $0x3c] sm:$0x1]
      %v2773 = vshrl.u32 %v2756, 16
      %v2775 = vrot.slane %v2773, 4
      %v2776 = vshll.u32 %v2756, 16
      %v2778 = vrot.slane %v2776, 5
      %v2779 = vor.u32 %v2775, %v2778
      %v2780 = vrot.slane %v2779, 4
      %v2782 = vshll.u32 %v2757, 16
      %v2784 = vrot.slane %v2782, 5
      %v2785 = vsel %vm249, %v2780, %v2784
      %v2787 = vshrl.u32 %v2758, 16
      %v2789 = vrot.slane %v2787, 4
      %v2790 = vshll.u32 %v2758, 16
      %v2792 = vrot.slane %v2790, 5
      %v2793 = vor.u32 %v2789, %v2792
      %v2794 = vrot.slane %v2793, 4
      %v2796 = vshll.u32 %v2759, 16
      %v2798 = vrot.slane %v2796, 5
      %v2799 = vsel %vm249, %v2794, %v2798
      %v2801 = vshrl.u32 %v2760, 16
      %v2803 = vrot.slane %v2801, 4
      %v2804 = vshll.u32 %v2760, 16
      %v2806 = vrot.slane %v2804, 5
      %v2807 = vor.u32 %v2803, %v2806
      %v2808 = vrot.slane %v2807, 4
      %v2810 = vshll.u32 %v2761, 16
      %v2812 = vrot.slane %v2810, 5
      %v2813 = vsel %vm249, %v2808, %v2812
      %v2815 = vshrl.u32 %v2762, 16
      %v2817 = vrot.slane %v2815, 4
      %v2818 = vshll.u32 %v2762, 16
      %v2820 = vrot.slane %v2818, 5
      %v2821 = vor.u32 %v2817, %v2820
      %v2822 = vrot.slane %v2821, 4
      %v2824 = vshll.u32 %v2763, 16
      %v2826 = vrot.slane %v2824, 5
      %v2827 = vsel %vm249, %v2822, %v2826
      %v2829 = vshrl.u32 %v2764, 16
      %v2831 = vrot.slane %v2829, 4
      %v2832 = vshll.u32 %v2764, 16
      %v2834 = vrot.slane %v2832, 5
      %v2835 = vor.u32 %v2831, %v2834
      %v2836 = vrot.slane %v2835, 4
      %v2838 = vshll.u32 %v2765, 16
      %v2840 = vrot.slane %v2838, 5
      %v2841 = vsel %vm249, %v2836, %v2840
      %v2843 = vshrl.u32 %v2766, 16
      %v2845 = vrot.slane %v2843, 4
      %v2846 = vshll.u32 %v2766, 16
      %v2848 = vrot.slane %v2846, 5
      %v2849 = vor.u32 %v2845, %v2848
      %v2850 = vrot.slane %v2849, 4
      %v2852 = vshll.u32 %v2767, 16
      %v2854 = vrot.slane %v2852, 5
      %v2855 = vsel %vm249, %v2850, %v2854
      %v2857 = vshrl.u32 %v2768, 16
      %v2859 = vrot.slane %v2857, 4
      %v2860 = vshll.u32 %v2768, 16
      %v2862 = vrot.slane %v2860, 5
      %v2863 = vor.u32 %v2859, %v2862
      %v2864 = vrot.slane %v2863, 4
      %v2866 = vshll.u32 %v2769, 16
      %v2868 = vrot.slane %v2866, 5
      %v2869 = vsel %vm249, %v2864, %v2868
      %v2871 = vshrl.u32 %v2770, 16
      %v2873 = vrot.slane %v2871, 4
      %v2874 = vshll.u32 %v2770, 16
      %v2876 = vrot.slane %v2874, 5
      %v2877 = vor.u32 %v2873, %v2876
      %v2878 = vrot.slane %v2877, 4
      %v2880 = vshll.u32 %v2771, 16
      %v2882 = vrot.slane %v2880, 5
      %v2883 = vsel %vm249, %v2878, %v2882
      %v2884 = vunpack.c.l.b16 %v2785
      %v2885 = vunpack.c.l.b16 %v2799
      %v2886 = vunpack.c.l.b16 %v2813
      %v2887 = vunpack.c.l.b16 %v2827
      %v2888 = vunpack.c.l.b16 %v2841
      %v2889 = vunpack.c.l.b16 %v2855
      %v2890 = vunpack.c.l.b16 %v2869
      %v2891 = vunpack.c.l.b16 %v2883
      %v2892 = vpack.c.b16 %v2885, %v2884
      %v2893 = vpack.c.b16 %v2887, %v2886
      %v2894 = vpack.c.b16 %v2889, %v2888
      %v2895 = vpack.c.b16 %v2891, %v2890
      %2900 = vmatprep.subr.bf16.mxu0 0
      %2901 = vmatpush1.bf16.msra.mxu0 %v1222
      %2902 = vmatprep.subr.bf16.mxu0 0
      %2903 = vmatpush1.bf16.msra.mxu0 %v1223
      %2904 = vmatprep.subr.bf16.mxu0 0
      %2905 = vmatpush1.bf16.msra.mxu0 %v1224
      %2906 = vmatprep.subr.bf16.mxu0 0
      %2907 = vmatpush1.bf16.msra.mxu0 %v1225
      %2908 = vmatprep.subr.bf16.mxu0 0
      %2909 = vmatpush1.bf16.msra.mxu0 %v1226
      %2910 = vmatprep.subr.bf16.mxu0 0
      %2911 = vmatpush1.bf16.msra.mxu0 %v1227
      %2912 = vmatprep.subr.bf16.mxu0 0
      %2913 = vmatpush1.bf16.msra.mxu0 %v1228
      %2914 = vmatprep.subr.bf16.mxu0 0
      %2915 = vmatpush1.bf16.msra.mxu0 %v1229
      %2916 = vmatprep.subr.bf16.mxu0 0
      %2917 = vmatpush1.bf16.msra.mxu0 0
      %2918 = vmatprep.subr.bf16.mxu0 0
      %2919 = vmatpush1.bf16.msra.mxu0 0
      %2920 = vmatprep.subr.bf16.mxu0 0
      %2921 = vmatpush1.bf16.msra.mxu0 0
      %2922 = vmatprep.subr.bf16.mxu0 0
      %2923 = vmatpush1.bf16.msra.mxu0 0
      %2924 = vmatprep.subr.bf16.mxu0 0
      %2925 = vmatpush1.bf16.msra.mxu0 0
      %2926 = vmatprep.subr.bf16.mxu0 0
      %2927 = vmatpush1.bf16.msra.mxu0 0
      %2928 = vmatprep.subr.bf16.mxu0 0
      %2929 = vmatpush1.bf16.msra.mxu0 0
      %2930 = vmatprep.subr.bf16.mxu0 0
      %2931 = vmatpush1.bf16.msra.mxu0 0
      %2932 = vmatprep.mubr.bf16.mxu0 0
      %2933 = vmatmul.mubr.bf16.gmra.mrb[0].mxu0 %v2892
      %v2934 = vpop.f32.mrb[0].mxu0
      %v2935 = vadd.f32 0.0, %v2934
      %v2936 = vpop.f32.mrb[0].mxu0
      %v2937 = vpop.f32.mrb[0].mxu0
      %v2938 = vadd.f32 0.0, %v2937
      %v2939 = vpop.f32.mrb[0].mxu0
      %2940 = vmatprep.mubr.bf16.mxu0 0
      %2941 = vmatmul.mubr.bf16.gmra.mrb[0].mxu0 %v2893
      %v2942 = vpop.f32.mrb[0].mxu0
      %v2943 = vadd.f32 0.0, %v2942
      %v2944 = vpop.f32.mrb[0].mxu0
      %v2945 = vpop.f32.mrb[0].mxu0
      %v2946 = vadd.f32 0.0, %v2945
      %v2947 = vpop.f32.mrb[0].mxu0
      %2948 = vmatprep.mubr.bf16.mxu0 0
      %2949 = vmatmul.mubr.bf16.gmra.mrb[0].mxu0 %v2894
      %v2950 = vpop.f32.mrb[0].mxu0
      %v2951 = vadd.f32 0.0, %v2950
      %v2952 = vpop.f32.mrb[0].mxu0
      %v2953 = vpop.f32.mrb[0].mxu0
      %v2954 = vadd.f32 0.0, %v2953
      %v2955 = vpop.f32.mrb[0].mxu0
      %2956 = vmatprep.mubr.bf16.mxu0 0
      %2957 = vmatmul.mubr.bf16.gmra.mrb[0].mxu0 %v2895
      %v2958 = vpop.f32.mrb[0].mxu0
      %v2959 = vadd.f32 0.0, %v2958
      %v2960 = vpop.f32.mrb[0].mxu0
      %v2961 = vpop.f32.mrb[0].mxu0
      %v2962 = vadd.f32 0.0, %v2961
      %v2963 = vpop.f32.mrb[0].mxu0
      %2964 = vdwg.mxu0
      %v2965 = vadd.f32 %v2748, %v2935
      %v2966 = vadd.f32 %v2749, %v2938
      %v2967 = vadd.f32 %v2750, %v2943
      %v2968 = vadd.f32 %v2751, %v2946
      %v2969 = vadd.f32 %v2752, %v2951
      %v2970 = vadd.f32 %v2753, %v2954
      %v2971 = vadd.f32 %v2754, %v2959
      %v2972 = vadd.f32 %v2755, %v2962
      %v2973 = vld [vmem:[%s2650] sm:$0xe]
      %v2974 = vld [vmem:[%s2650 + $0x8] sm:$0xe]
      %v2975 = vld [vmem:[%s2650 + $0x10] sm:$0xe]
      %v2976 = vld [vmem:[%s2650 + $0x18] sm:$0xe]
      %v2977 = vld [vmem:[%s2650 + $0x20] sm:$0xe]
      %v2978 = vld [vmem:[%s2650 + $0x28] sm:$0xe]
      %v2979 = vld [vmem:[%s2650 + $0x30] sm:$0xe]
      %v2980 = vld [vmem:[%s2650 + $0x38] sm:$0xe]
      %v2997 = vrot.slane %v2973, 5
      %v2998 = vrot.slane %v2997, 4
      %v2999 = vrot.slane %v2757, 5
      %v3000 = vsel %vm671, %v2998, %v2999
      %v3001 = vrot.slane %v2974, 5
      %v3002 = vrot.slane %v3001, 4
      %v3003 = vrot.slane %v2759, 5
      %v3004 = vsel %vm671, %v3002, %v3003
      %v3005 = vrot.slane %v2975, 5
      %v3006 = vrot.slane %v3005, 4
      %v3007 = vrot.slane %v2761, 5
      %v3008 = vsel %vm671, %v3006, %v3007
      %v3009 = vrot.slane %v2976, 5
      %v3010 = vrot.slane %v3009, 4
      %v3011 = vrot.slane %v2763, 5
      %v3012 = vsel %vm671, %v3010, %v3011
      %v3013 = vrot.slane %v2977, 5
      %v3014 = vrot.slane %v3013, 4
      %v3015 = vrot.slane %v2765, 5
      %v3016 = vsel %vm671, %v3014, %v3015
      %v3017 = vrot.slane %v2978, 5
      %v3018 = vrot.slane %v3017, 4
      %v3019 = vrot.slane %v2767, 5
      %v3020 = vsel %vm671, %v3018, %v3019
      %v3021 = vrot.slane %v2979, 5
      %v3022 = vrot.slane %v3021, 4
      %v3023 = vrot.slane %v2769, 5
      %v3024 = vsel %vm671, %v3022, %v3023
      %v3025 = vrot.slane %v2980, 5
      %v3026 = vrot.slane %v3025, 4
      %v3027 = vrot.slane %v2771, 5
      %v3028 = vsel %vm671, %v3026, %v3027
      %v3029 = vunpack.c.l.b16 %v3000
      %v3030 = vunpack.c.l.b16 %v3004
      %v3031 = vunpack.c.l.b16 %v3008
      %v3032 = vunpack.c.l.b16 %v3012
      %v3033 = vunpack.c.l.b16 %v3016
      %v3034 = vunpack.c.l.b16 %v3020
      %v3035 = vunpack.c.l.b16 %v3024
      %v3036 = vunpack.c.l.b16 %v3028
      %v3037 = vpack.c.b16 %v3030, %v3029
      %v3038 = vpack.c.b16 %v3032, %v3031
      %v3039 = vpack.c.b16 %v3034, %v3033
      %v3040 = vpack.c.b16 %v3036, %v3035
      %3045 = vmatprep.subr.bf16.mxu0 0
      %3046 = vmatpush1.bf16.msra.mxu0 %v1432
      %3047 = vmatprep.subr.bf16.mxu0 0
      %3048 = vmatpush1.bf16.msra.mxu0 %v1433
      %3049 = vmatprep.subr.bf16.mxu0 0
      %3050 = vmatpush1.bf16.msra.mxu0 %v1434
      %3051 = vmatprep.subr.bf16.mxu0 0
      %3052 = vmatpush1.bf16.msra.mxu0 %v1435
      %3053 = vmatprep.subr.bf16.mxu0 0
      %3054 = vmatpush1.bf16.msra.mxu0 %v1436
      %3055 = vmatprep.subr.bf16.mxu0 0
      %3056 = vmatpush1.bf16.msra.mxu0 %v1437
      %3057 = vmatprep.subr.bf16.mxu0 0
      %3058 = vmatpush1.bf16.msra.mxu0 %v1438
      %3059 = vmatprep.subr.bf16.mxu0 0
      %3060 = vmatpush1.bf16.msra.mxu0 %v1439
      %3061 = vmatprep.subr.bf16.mxu0 0
      %3062 = vmatpush1.bf16.msra.mxu0 0
      %3063 = vmatprep.subr.bf16.mxu0 0
      %3064 = vmatpush1.bf16.msra.mxu0 0
      %3065 = vmatprep.subr.bf16.mxu0 0
      %3066 = vmatpush1.bf16.msra.mxu0 0
      %3067 = vmatprep.subr.bf16.mxu0 0
      %3068 = vmatpush1.bf16.msra.mxu0 0
      %3069 = vmatprep.subr.bf16.mxu0 0
      %3070 = vmatpush1.bf16.msra.mxu0 0
      %3071 = vmatprep.subr.bf16.mxu0 0
      %3072 = vmatpush1.bf16.msra.mxu0 0
      %3073 = vmatprep.subr.bf16.mxu0 0
      %3074 = vmatpush1.bf16.msra.mxu0 0
      %3075 = vmatprep.subr.bf16.mxu0 0
      %3076 = vmatpush1.bf16.msra.mxu0 0
      %3077 = vmatprep.mubr.bf16.mxu0 0
      %3078 = vmatmul.mubr.bf16.gmra.mrb[0].mxu0 %v3037
      %v3079 = vpop.f32.mrb[0].mxu0
      %v3080 = vadd.f32 0.0, %v3079
      %v3081 = vpop.f32.mrb[0].mxu0
      %v3082 = vpop.f32.mrb[0].mxu0
      %v3083 = vadd.f32 0.0, %v3082
      %v3084 = vpop.f32.mrb[0].mxu0
      %3085 = vmatprep.mubr.bf16.mxu0 0
      %3086 = vmatmul.mubr.bf16.gmra.mrb[0].mxu0 %v3038
      %v3087 = vpop.f32.mrb[0].mxu0
      %v3088 = vadd.f32 0.0, %v3087
      %v3089 = vpop.f32.mrb[0].mxu0
      %v3090 = vpop.f32.mrb[0].mxu0
      %v3091 = vadd.f32 0.0, %v3090
      %v3092 = vpop.f32.mrb[0].mxu0
      %3093 = vmatprep.mubr.bf16.mxu0 0
      %3094 = vmatmul.mubr.bf16.gmra.mrb[0].mxu0 %v3039
      %v3095 = vpop.f32.mrb[0].mxu0
      %v3096 = vadd.f32 0.0, %v3095
      %v3097 = vpop.f32.mrb[0].mxu0
      %v3098 = vpop.f32.mrb[0].mxu0
      %v3099 = vadd.f32 0.0, %v3098
      %v3100 = vpop.f32.mrb[0].mxu0
      %3101 = vmatprep.mubr.bf16.mxu0 0
      %3102 = vmatmul.mubr.bf16.gmra.mrb[0].mxu0 %v3040
      %v3103 = vpop.f32.mrb[0].mxu0
      %v3104 = vadd.f32 0.0, %v3103
      %v3105 = vpop.f32.mrb[0].mxu0
      %v3106 = vpop.f32.mrb[0].mxu0
      %v3107 = vadd.f32 0.0, %v3106
      %v3108 = vpop.f32.mrb[0].mxu0
      %3109 = vdwg.mxu0
      %v3110 = vadd.f32 %v2965, %v3080
      %v3111 = vadd.f32 %v2966, %v3083
      %v3112 = vadd.f32 %v2967, %v3088
      %v3113 = vadd.f32 %v2968, %v3091
      %v3114 = vadd.f32 %v2969, %v3096
      %v3115 = vadd.f32 %v2970, %v3099
      %v3116 = vadd.f32 %v2971, %v3104
      %v3117 = vadd.f32 %v2972, %v3107
      %s3118 = scalar_lea.vmem %s210, 16
      %v3119 = vld [vmem:[%s3118] sm:$0xf]
      %v3120 = vld [vmem:[%s3118 + $0x8] sm:$0xf]
      %v3121 = vld [vmem:[%s3118 + $0x10] sm:$0xf]
      %v3122 = vld [vmem:[%s3118 + $0x18] sm:$0xf]
      %v3123 = vld [vmem:[%s3118 + $0x20] sm:$0xf]
      %v3124 = vld [vmem:[%s3118 + $0x28] sm:$0xf]
      %v3125 = vld [vmem:[%s3118 + $0x30] sm:$0xf]
      %v3126 = vld [vmem:[%s3118 + $0x38] sm:$0xf]
      %v3135 = vunpack.c.l.b16 %v3119
      %v3136 = vunpack.c.l.b16 %v3120
      %v3137 = vunpack.c.l.b16 %v3121
      %v3138 = vunpack.c.l.b16 %v3122
      %v3139 = vunpack.c.l.b16 %v3123
      %v3140 = vunpack.c.l.b16 %v3124
      %v3141 = vunpack.c.l.b16 %v3125
      %v3142 = vunpack.c.l.b16 %v3126
      %v3143 = vpack.c.b16 %v3136, %v3135
      %v3144 = vpack.c.b16 %v3138, %v3137
      %v3145 = vpack.c.b16 %v3140, %v3139
      %v3146 = vpack.c.b16 %v3142, %v3141
      %3151 = vmatprep.subr.bf16.mxu0 0
      %3152 = vmatpush1.bf16.msra.mxu0 %v1603
      %3153 = vmatprep.subr.bf16.mxu0 0
      %3154 = vmatpush1.bf16.msra.mxu0 %v1604
      %3155 = vmatprep.subr.bf16.mxu0 0
      %3156 = vmatpush1.bf16.msra.mxu0 %v1605
      %3157 = vmatprep.subr.bf16.mxu0 0
      %3158 = vmatpush1.bf16.msra.mxu0 %v1606
      %3159 = vmatprep.subr.bf16.mxu0 0
      %3160 = vmatpush1.bf16.msra.mxu0 %v1607
      %3161 = vmatprep.subr.bf16.mxu0 0
      %3162 = vmatpush1.bf16.msra.mxu0 %v1608
      %3163 = vmatprep.subr.bf16.mxu0 0
      %3164 = vmatpush1.bf16.msra.mxu0 %v1609
      %3165 = vmatprep.subr.bf16.mxu0 0
      %3166 = vmatpush1.bf16.msra.mxu0 %v1610
      %3167 = vmatprep.subr.bf16.mxu0 0
      %3168 = vmatpush1.bf16.msra.mxu0 0
      %3169 = vmatprep.subr.bf16.mxu0 0
      %3170 = vmatpush1.bf16.msra.mxu0 0
      %3171 = vmatprep.subr.bf16.mxu0 0
      %3172 = vmatpush1.bf16.msra.mxu0 0
      %3173 = vmatprep.subr.bf16.mxu0 0
      %3174 = vmatpush1.bf16.msra.mxu0 0
      %3175 = vmatprep.subr.bf16.mxu0 0
      %3176 = vmatpush1.bf16.msra.mxu0 0
      %3177 = vmatprep.subr.bf16.mxu0 0
      %3178 = vmatpush1.bf16.msra.mxu0 0
      %3179 = vmatprep.subr.bf16.mxu0 0
      %3180 = vmatpush1.bf16.msra.mxu0 0
      %3181 = vmatprep.subr.bf16.mxu0 0
      %3182 = vmatpush1.bf16.msra.mxu0 0
      %3183 = vmatprep.mubr.bf16.mxu0 0
      %3184 = vmatmul.mubr.bf16.gmra.mrb[0].mxu0 %v3143
      %v3185 = vpop.f32.mrb[0].mxu0
      %v3186 = vadd.f32 0.0, %v3185
      %v3187 = vpop.f32.mrb[0].mxu0
      %v3188 = vpop.f32.mrb[0].mxu0
      %v3189 = vadd.f32 0.0, %v3188
      %v3190 = vpop.f32.mrb[0].mxu0
      %3191 = vmatprep.mubr.bf16.mxu0 0
      %3192 = vmatmul.mubr.bf16.gmra.mrb[0].mxu0 %v3144
      %v3193 = vpop.f32.mrb[0].mxu0
      %v3194 = vadd.f32 0.0, %v3193
      %v3195 = vpop.f32.mrb[0].mxu0
      %v3196 = vpop.f32.mrb[0].mxu0
      %v3197 = vadd.f32 0.0, %v3196
      %v3198 = vpop.f32.mrb[0].mxu0
      %3199 = vmatprep.mubr.bf16.mxu0 0
      %3200 = vmatmul.mubr.bf16.gmra.mrb[0].mxu0 %v3145
      %v3201 = vpop.f32.mrb[0].mxu0
      %v3202 = vadd.f32 0.0, %v3201
      %v3203 = vpop.f32.mrb[0].mxu0
      %v3204 = vpop.f32.mrb[0].mxu0
      %v3205 = vadd.f32 0.0, %v3204
      %v3206 = vpop.f32.mrb[0].mxu0
      %3207 = vmatprep.mubr.bf16.mxu0 0
      %3208 = vmatmul.mubr.bf16.gmra.mrb[0].mxu0 %v3146
      %v3209 = vpop.f32.mrb[0].mxu0
      %v3210 = vadd.f32 0.0, %v3209
      %v3211 = vpop.f32.mrb[0].mxu0
      %v3212 = vpop.f32.mrb[0].mxu0
      %v3213 = vadd.f32 0.0, %v3212
      %v3214 = vpop.f32.mrb[0].mxu0
      %3215 = vdwg.mxu0
      %v3216 = vadd.f32 %v3110, %v3186
      %v3217 = vadd.f32 %v3111, %v3189
      %v3218 = vadd.f32 %v3112, %v3194
      %v3219 = vadd.f32 %v3113, %v3197
      %v3220 = vadd.f32 %v3114, %v3202
      %v3221 = vadd.f32 %v3115, %v3205
      %v3222 = vadd.f32 %v3116, %v3210
      %v3223 = vadd.f32 %v3117, %v3213
      %v3224 = vld [vmem:[%s3118] sm:$0xf]
      %v3225 = vld [vmem:[%s3118 + $0x4] sm:$0x1]
      %v3226 = vld [vmem:[%s3118 + $0x8] sm:$0xf]
      %v3227 = vld [vmem:[%s3118 + $0xc] sm:$0x1]
      %v3228 = vld [vmem:[%s3118 + $0x10] sm:$0xf]
      %v3229 = vld [vmem:[%s3118 + $0x14] sm:$0x1]
      %v3230 = vld [vmem:[%s3118 + $0x18] sm:$0xf]
      %v3231 = vld [vmem:[%s3118 + $0x1c] sm:$0x1]
      %v3232 = vld [vmem:[%s3118 + $0x20] sm:$0xf]
      %v3233 = vld [vmem:[%s3118 + $0x24] sm:$0x1]
      %v3234 = vld [vmem:[%s3118 + $0x28] sm:$0xf]
      %v3235 = vld [vmem:[%s3118 + $0x2c] sm:$0x1]
      %v3236 = vld [vmem:[%s3118 + $0x30] sm:$0xf]
      %v3237 = vld [vmem:[%s3118 + $0x34] sm:$0x1]
      %v3238 = vld [vmem:[%s3118 + $0x38] sm:$0xf]
      %v3239 = vld [vmem:[%s3118 + $0x3c] sm:$0x1]
      %v3241 = vshrl.u32 %v3224, 16
      %v3243 = vrot.slane %v3241, 4
      %v3244 = vshll.u32 %v3224, 16
      %v3246 = vrot.slane %v3244, 5
      %v3247 = vor.u32 %v3243, %v3246
      %v3248 = vrot.slane %v3247, 4
      %v3250 = vshll.u32 %v3225, 16
      %v3252 = vrot.slane %v3250, 5
      %v3253 = vsel %vm249, %v3248, %v3252
      %v3255 = vshrl.u32 %v3226, 16
      %v3257 = vrot.slane %v3255, 4
      %v3258 = vshll.u32 %v3226, 16
      %v3260 = vrot.slane %v3258, 5
      %v3261 = vor.u32 %v3257, %v3260
      %v3262 = vrot.slane %v3261, 4
      %v3264 = vshll.u32 %v3227, 16
      %v3266 = vrot.slane %v3264, 5
      %v3267 = vsel %vm249, %v3262, %v3266
      %v3269 = vshrl.u32 %v3228, 16
      %v3271 = vrot.slane %v3269, 4
      %v3272 = vshll.u32 %v3228, 16
      %v3274 = vrot.slane %v3272, 5
      %v3275 = vor.u32 %v3271, %v3274
      %v3276 = vrot.slane %v3275, 4
      %v3278 = vshll.u32 %v3229, 16
      %v3280 = vrot.slane %v3278, 5
      %v3281 = vsel %vm249, %v3276, %v3280
      %v3283 = vshrl.u32 %v3230, 16
      %v3285 = vrot.slane %v3283, 4
      %v3286 = vshll.u32 %v3230, 16
      %v3288 = vrot.slane %v3286, 5
      %v3289 = vor.u32 %v3285, %v3288
      %v3290 = vrot.slane %v3289, 4
      %v3292 = vshll.u32 %v3231, 16
      %v3294 = vrot.slane %v3292, 5
      %v3295 = vsel %vm249, %v3290, %v3294
      %v3297 = vshrl.u32 %v3232, 16
      %v3299 = vrot.slane %v3297, 4
      %v3300 = vshll.u32 %v3232, 16
      %v3302 = vrot.slane %v3300, 5
      %v3303 = vor.u32 %v3299, %v3302
      %v3304 = vrot.slane %v3303, 4
      %v3306 = vshll.u32 %v3233, 16
      %v3308 = vrot.slane %v3306, 5
      %v3309 = vsel %vm249, %v3304, %v3308
      %v3311 = vshrl.u32 %v3234, 16
      %v3313 = vrot.slane %v3311, 4
      %v3314 = vshll.u32 %v3234, 16
      %v3316 = vrot.slane %v3314, 5
      %v3317 = vor.u32 %v3313, %v3316
      %v3318 = vrot.slane %v3317, 4
      %v3320 = vshll.u32 %v3235, 16
      %v3322 = vrot.slane %v3320, 5
      %v3323 = vsel %vm249, %v3318, %v3322
      %v3325 = vshrl.u32 %v3236, 16
      %v3327 = vrot.slane %v3325, 4
      %v3328 = vshll.u32 %v3236, 16
      %v3330 = vrot.slane %v3328, 5
      %v3331 = vor.u32 %v3327, %v3330
      %v3332 = vrot.slane %v3331, 4
      %v3334 = vshll.u32 %v3237, 16
      %v3336 = vrot.slane %v3334, 5
      %v3337 = vsel %vm249, %v3332, %v3336
      %v3339 = vshrl.u32 %v3238, 16
      %v3341 = vrot.slane %v3339, 4
      %v3342 = vshll.u32 %v3238, 16
      %v3344 = vrot.slane %v3342, 5
      %v3345 = vor.u32 %v3341, %v3344
      %v3346 = vrot.slane %v3345, 4
      %v3348 = vshll.u32 %v3239, 16
      %v3350 = vrot.slane %v3348, 5
      %v3351 = vsel %vm249, %v3346, %v3350
      %v3352 = vunpack.c.l.b16 %v3253
      %v3353 = vunpack.c.l.b16 %v3267
      %v3354 = vunpack.c.l.b16 %v3281
      %v3355 = vunpack.c.l.b16 %v3295
      %v3356 = vunpack.c.l.b16 %v3309
      %v3357 = vunpack.c.l.b16 %v3323
      %v3358 = vunpack.c.l.b16 %v3337
      %v3359 = vunpack.c.l.b16 %v3351
      %v3360 = vpack.c.b16 %v3353, %v3352
      %v3361 = vpack.c.b16 %v3355, %v3354
      %v3362 = vpack.c.b16 %v3357, %v3356
      %v3363 = vpack.c.b16 %v3359, %v3358
      %3368 = vmatprep.subr.bf16.mxu0 0
      %3369 = vmatpush1.bf16.msra.mxu0 %v1885
      %3370 = vmatprep.subr.bf16.mxu0 0
      %3371 = vmatpush1.bf16.msra.mxu0 %v1886
      %3372 = vmatprep.subr.bf16.mxu0 0
      %3373 = vmatpush1.bf16.msra.mxu0 %v1887
      %3374 = vmatprep.subr.bf16.mxu0 0
      %3375 = vmatpush1.bf16.msra.mxu0 %v1888
      %3376 = vmatprep.subr.bf16.mxu0 0
      %3377 = vmatpush1.bf16.msra.mxu0 %v1889
      %3378 = vmatprep.subr.bf16.mxu0 0
      %3379 = vmatpush1.bf16.msra.mxu0 %v1890
      %3380 = vmatprep.subr.bf16.mxu0 0
      %3381 = vmatpush1.bf16.msra.mxu0 %v1891
      %3382 = vmatprep.subr.bf16.mxu0 0
      %3383 = vmatpush1.bf16.msra.mxu0 %v1892
      %3384 = vmatprep.subr.bf16.mxu0 0
      %3385 = vmatpush1.bf16.msra.mxu0 0
      %3386 = vmatprep.subr.bf16.mxu0 0
      %3387 = vmatpush1.bf16.msra.mxu0 0
      %3388 = vmatprep.subr.bf16.mxu0 0
      %3389 = vmatpush1.bf16.msra.mxu0 0
      %3390 = vmatprep.subr.bf16.mxu0 0
      %3391 = vmatpush1.bf16.msra.mxu0 0
      %3392 = vmatprep.subr.bf16.mxu0 0
      %3393 = vmatpush1.bf16.msra.mxu0 0
      %3394 = vmatprep.subr.bf16.mxu0 0
      %3395 = vmatpush1.bf16.msra.mxu0 0
      %3396 = vmatprep.subr.bf16.mxu0 0
      %3397 = vmatpush1.bf16.msra.mxu0 0
      %3398 = vmatprep.subr.bf16.mxu0 0
      %3399 = vmatpush1.bf16.msra.mxu0 0
      %3400 = vmatprep.mubr.bf16.mxu0 0
      %3401 = vmatmul.mubr.bf16.gmra.mrb[0].mxu0 %v3360
      %v3402 = vpop.f32.mrb[0].mxu0
      %v3403 = vadd.f32 0.0, %v3402
      %v3404 = vpop.f32.mrb[0].mxu0
      %v3405 = vpop.f32.mrb[0].mxu0
      %v3406 = vadd.f32 0.0, %v3405
      %v3407 = vpop.f32.mrb[0].mxu0
      %3408 = vmatprep.mubr.bf16.mxu0 0
      %3409 = vmatmul.mubr.bf16.gmra.mrb[0].mxu0 %v3361
      %v3410 = vpop.f32.mrb[0].mxu0
      %v3411 = vadd.f32 0.0, %v3410
      %v3412 = vpop.f32.mrb[0].mxu0
      %v3413 = vpop.f32.mrb[0].mxu0
      %v3414 = vadd.f32 0.0, %v3413
      %v3415 = vpop.f32.mrb[0].mxu0
      %3416 = vmatprep.mubr.bf16.mxu0 0
      %3417 = vmatmul.mubr.bf16.gmra.mrb[0].mxu0 %v3362
      %v3418 = vpop.f32.mrb[0].mxu0
      %v3419 = vadd.f32 0.0, %v3418
      %v3420 = vpop.f32.mrb[0].mxu0
      %v3421 = vpop.f32.mrb[0].mxu0
      %v3422 = vadd.f32 0.0, %v3421
      %v3423 = vpop.f32.mrb[0].mxu0
      %3424 = vmatprep.mubr.bf16.mxu0 0
      %3425 = vmatmul.mubr.bf16.gmra.mrb[0].mxu0 %v3363
      %v3426 = vpop.f32.mrb[0].mxu0
      %v3427 = vadd.f32 0.0, %v3426
      %v3428 = vpop.f32.mrb[0].mxu0
      %v3429 = vpop.f32.mrb[0].mxu0
      %v3430 = vadd.f32 0.0, %v3429
      %v3431 = vpop.f32.mrb[0].mxu0
      %3432 = vdwg.mxu0
      %v3433 = vadd.f32 %v3216, %v3403
      %v3434 = vadd.f32 %v3217, %v3406
      %v3435 = vadd.f32 %v3218, %v3411
      %v3436 = vadd.f32 %v3219, %v3414
      %v3437 = vadd.f32 %v3220, %v3419
      %v3438 = vadd.f32 %v3221, %v3422
      %v3439 = vadd.f32 %v3222, %v3427
      %v3440 = vadd.f32 %v3223, %v3430
      %v3441 = vld [vmem:[%s3118] sm:$0xe]
      %v3442 = vld [vmem:[%s3118 + $0x8] sm:$0xe]
      %v3443 = vld [vmem:[%s3118 + $0x10] sm:$0xe]
      %v3444 = vld [vmem:[%s3118 + $0x18] sm:$0xe]
      %v3445 = vld [vmem:[%s3118 + $0x20] sm:$0xe]
      %v3446 = vld [vmem:[%s3118 + $0x28] sm:$0xe]
      %v3447 = vld [vmem:[%s3118 + $0x30] sm:$0xe]
      %v3448 = vld [vmem:[%s3118 + $0x38] sm:$0xe]
      %v3465 = vrot.slane %v3441, 5
      %v3466 = vrot.slane %v3465, 4
      %v3467 = vrot.slane %v3225, 5
      %v3468 = vsel %vm671, %v3466, %v3467
      %v3469 = vrot.slane %v3442, 5
      %v3470 = vrot.slane %v3469, 4
      %v3471 = vrot.slane %v3227, 5
      %v3472 = vsel %vm671, %v3470, %v3471
      %v3473 = vrot.slane %v3443, 5
      %v3474 = vrot.slane %v3473, 4
      %v3475 = vrot.slane %v3229, 5
      %v3476 = vsel %vm671, %v3474, %v3475
      %v3477 = vrot.slane %v3444, 5
      %v3478 = vrot.slane %v3477, 4
      %v3479 = vrot.slane %v3231, 5
      %v3480 = vsel %vm671, %v3478, %v3479
      %v3481 = vrot.slane %v3445, 5
      %v3482 = vrot.slane %v3481, 4
      %v3483 = vrot.slane %v3233, 5
      %v3484 = vsel %vm671, %v3482, %v3483
      %v3485 = vrot.slane %v3446, 5
      %v3486 = vrot.slane %v3485, 4
      %v3487 = vrot.slane %v3235, 5
      %v3488 = vsel %vm671, %v3486, %v3487
      %v3489 = vrot.slane %v3447, 5
      %v3490 = vrot.slane %v3489, 4
      %v3491 = vrot.slane %v3237, 5
      %v3492 = vsel %vm671, %v3490, %v3491
      %v3493 = vrot.slane %v3448, 5
      %v3494 = vrot.slane %v3493, 4
      %v3495 = vrot.slane %v3239, 5
      %v3496 = vsel %vm671, %v3494, %v3495
      %v3497 = vunpack.c.l.b16 %v3468
      %v3498 = vunpack.c.l.b16 %v3472
      %v3499 = vunpack.c.l.b16 %v3476
      %v3500 = vunpack.c.l.b16 %v3480
      %v3501 = vunpack.c.l.b16 %v3484
      %v3502 = vunpack.c.l.b16 %v3488
      %v3503 = vunpack.c.l.b16 %v3492
      %v3504 = vunpack.c.l.b16 %v3496
      %v3505 = vpack.c.b16 %v3498, %v3497
      %v3506 = vpack.c.b16 %v3500, %v3499
      %v3507 = vpack.c.b16 %v3502, %v3501
      %v3508 = vpack.c.b16 %v3504, %v3503
      %3513 = vmatprep.subr.bf16.mxu0 0
      %3514 = vmatpush1.bf16.msra.mxu0 %v2095
      %3515 = vmatprep.subr.bf16.mxu0 0
      %3516 = vmatpush1.bf16.msra.mxu0 %v2096
      %3517 = vmatprep.subr.bf16.mxu0 0
      %3518 = vmatpush1.bf16.msra.mxu0 %v2097
      %3519 = vmatprep.subr.bf16.mxu0 0
      %3520 = vmatpush1.bf16.msra.mxu0 %v2098
      %3521 = vmatprep.subr.bf16.mxu0 0
      %3522 = vmatpush1.bf16.msra.mxu0 %v2099
      %3523 = vmatprep.subr.bf16.mxu0 0
      %3524 = vmatpush1.bf16.msra.mxu0 %v2100
      %3525 = vmatprep.subr.bf16.mxu0 0
      %3526 = vmatpush1.bf16.msra.mxu0 %v2101
      %3527 = vmatprep.subr.bf16.mxu0 0
      %3528 = vmatpush1.bf16.msra.mxu0 %v2102
      %3529 = vmatprep.subr.bf16.mxu0 0
      %3530 = vmatpush1.bf16.msra.mxu0 0
      %3531 = vmatprep.subr.bf16.mxu0 0
      %3532 = vmatpush1.bf16.msra.mxu0 0
      %3533 = vmatprep.subr.bf16.mxu0 0
      %3534 = vmatpush1.bf16.msra.mxu0 0
      %3535 = vmatprep.subr.bf16.mxu0 0
      %3536 = vmatpush1.bf16.msra.mxu0 0
      %3537 = vmatprep.subr.bf16.mxu0 0
      %3538 = vmatpush1.bf16.msra.mxu0 0
      %3539 = vmatprep.subr.bf16.mxu0 0
      %3540 = vmatpush1.bf16.msra.mxu0 0
      %3541 = vmatprep.subr.bf16.mxu0 0
      %3542 = vmatpush1.bf16.msra.mxu0 0
      %3543 = vmatprep.subr.bf16.mxu0 0
      %3544 = vmatpush1.bf16.msra.mxu0 0
      %3545 = vmatprep.mubr.bf16.mxu0 0
      %3546 = vmatmul.mubr.bf16.gmra.mrb[0].mxu0 %v3505
      %v3547 = vpop.f32.mrb[0].mxu0
      %v3548 = vadd.f32 0.0, %v3547
      %v3549 = vpop.f32.mrb[0].mxu0
      %v3550 = vpop.f32.mrb[0].mxu0
      %v3551 = vadd.f32 0.0, %v3550
      %v3552 = vpop.f32.mrb[0].mxu0
      %3553 = vmatprep.mubr.bf16.mxu0 0
      %3554 = vmatmul.mubr.bf16.gmra.mrb[0].mxu0 %v3506
      %v3555 = vpop.f32.mrb[0].mxu0
      %v3556 = vadd.f32 0.0, %v3555
      %v3557 = vpop.f32.mrb[0].mxu0
      %v3558 = vpop.f32.mrb[0].mxu0
      %v3559 = vadd.f32 0.0, %v3558
      %v3560 = vpop.f32.mrb[0].mxu0
      %3561 = vmatprep.mubr.bf16.mxu0 0
      %3562 = vmatmul.mubr.bf16.gmra.mrb[0].mxu0 %v3507
      %v3563 = vpop.f32.mrb[0].mxu0
      %v3564 = vadd.f32 0.0, %v3563
      %v3565 = vpop.f32.mrb[0].mxu0
      %v3566 = vpop.f32.mrb[0].mxu0
      %v3567 = vadd.f32 0.0, %v3566
      %v3568 = vpop.f32.mrb[0].mxu0
      %3569 = vmatprep.mubr.bf16.mxu0 0
      %3570 = vmatmul.mubr.bf16.gmra.mrb[0].mxu0 %v3508
      %v3571 = vpop.f32.mrb[0].mxu0
      %v3572 = vadd.f32 0.0, %v3571
      %v3573 = vpop.f32.mrb[0].mxu0
      %v3574 = vpop.f32.mrb[0].mxu0
      %v3575 = vadd.f32 0.0, %v3574
      %v3576 = vpop.f32.mrb[0].mxu0
      %3577 = vdwg.mxu0
      %v3578 = vadd.f32 %v3433, %v3548
      %v3579 = vadd.f32 %v3434, %v3551
      %v3580 = vadd.f32 %v3435, %v3556
      %v3581 = vadd.f32 %v3436, %v3559
      %v3582 = vadd.f32 %v3437, %v3564
      %v3583 = vadd.f32 %v3438, %v3567
      %v3584 = vadd.f32 %v3439, %v3572
      %v3585 = vadd.f32 %v3440, %v3575
      %v3586 = vadd.f32 %v3578, %v2189
      %v3587 = vadd.f32 %v3579, %v2189
      %v3588 = vadd.f32 %v3580, %v2189
      %v3589 = vadd.f32 %v3581, %v2189
      %v3590 = vadd.f32 %v3582, %v2189
      %v3591 = vadd.f32 %v3583, %v2189
      %v3592 = vadd.f32 %v3584, %v2189
      %v3593 = vadd.f32 %v3585, %v2189
      %v3594 = vmax.f32 %v3586, 0.0
      %v3595 = vmax.f32 %v3587, 0.0
      %v3596 = vmax.f32 %v3588, 0.0
      %v3597 = vmax.f32 %v3589, 0.0
      %v3598 = vmax.f32 %v3590, 0.0
      %v3599 = vmax.f32 %v3591, 0.0
      %v3600 = vmax.f32 %v3592, 0.0
      %v3601 = vmax.f32 %v3593, 0.0
      %v3602 = vsub.f32 %v2199, %v3594
      %v3603 = vsub.f32 %v2200, %v3595
      %v3604 = vsub.f32 %v2201, %v3596
      %v3605 = vsub.f32 %v2202, %v3597
      %v3606 = vsub.f32 %v2203, %v3598
      %v3607 = vsub.f32 %v2204, %v3599
      %v3608 = vsub.f32 %v2205, %v3600
      %v3609 = vsub.f32 %v2206, %v3601
      %v3610 = vmul.f32 %v3602, %v3602
      %v3611 = vmul.f32 %v3603, %v3603
      %v3612 = vmul.f32 %v3604, %v3604
      %v3613 = vmul.f32 %v3605, %v3605
      %v3614 = vmul.f32 %v3606, %v3606
      %v3615 = vmul.f32 %v3607, %v3607
      %v3616 = vmul.f32 %v3608, %v3608
      %v3617 = vmul.f32 %v3609, %v3609
      %v3618 = vadd.f32 %v3610, %v3611
      %v3619 = vadd.f32 %v3618, %v3612
      %v3620 = vadd.f32 %v3619, %v3613
      %v3621 = vadd.f32 %v3620, %v3614
      %v3622 = vadd.f32 %v3621, %v3615
      %v3623 = vadd.f32 %v3622, %v3616
      %v3624 = vadd.f32 %v3623, %v3617
      %v3625 = vrot.slane %v3624, 4
      %v3626 = vadd.f32 %v3624, %v3625
      %v3627 = vrot.slane %v3626, 2
      %v3628 = vadd.f32 %v3626, %v3627
      %v3629 = vrot.slane %v3628, 1
      %v3630 = vadd.f32 %v3628, %v3629
      %3631 = vst [vmem:[%s213] sm:$0x1] %v3630
      %p3632 = scmp.lt.s32.totalorder %s15, 1
      %s3633 = scalar_select %p3632, %s15, 1
      %s3634 = scalar_lea.vmem %s4, %s3633
      // Predicated region
      $region37: #{generator_loss.14} parent=35 // pred_check
        %p3635 = pneg %p127
      $region38: #{generator_loss.14} parent=35 // pred_check_branch
        %3637 = sbr.rel (%p3635) target = $region40
      $region39: #{generator_loss.14} parent=35 // pred_region
        _
      $region40: #{generator_loss.14} parent=35 // pred_fallthru
        _
    $region36: #{generator_loss.14} parent=5 // pred_fallthru
      _
    %p3638 = scmp.le.s32.totalorder 2, %s10
    // Predicated region
    $region41: #{generator_loss.14} parent=5 // pred_check
      %p3639 = pneg %p3638
    $region42: #{generator_loss.14} parent=5 // pred_check_branch
      %3641 = sbr.rel (%p3639) target = $region44
    $region43: #{generator_loss.14} parent=5 // pred_region
      %s3642 = ssub.s32 %s10, 2
      // Predicated region
      $region45: #{generator_loss.14} parent=43 // pred_check
        %p3643 = pneg %p133
      $region46: #{generator_loss.14} parent=43 // pred_check_branch
        %3645 = sbr.rel (%p3643) target = $region48
      $region47: #{generator_loss.14} parent=43 // pred_region
        %p3646 = scmp.lt.s32.totalorder %s16, 1
        %s3647 = scalar_select %p3646, %s16, 1
        %s3648 = scalar_lea.vmem %s4, %s3647
      $region48: #{generator_loss.14} parent=43 // pred_fallthru
        _
    $region44: #{generator_loss.14} parent=5 // pred_fallthru
      _
  $region6: #{generator_loss.14} parent=0 // loop_footer
    %s14 = sadd.s32 1, %s10
  $region7: #{generator_loss.14} parent=0 // loop_footer_branch
    %9 = sbr.rel target = $region3
  $region8: #{generator_loss.14} parent=0 // loop_exit
    _

</llo_original>
